<compile_context>
chip_gen: v5e
topology: v5e:2x2
jax: 0.10.0
libtpu: 0.0.40
codegen_flags: <defaults>
</compile_context>

<pallas_src>
import functools

import numpy as np
import jax
import jax.numpy as jnp
from jax import lax
from jax.experimental import pallas as pl
from jax.experimental.pallas import tpu as pltpu


# -----------------------------------------------------------------------------
# In-kernel math helpers (erf-accurate GELU, softmax, sigmoid, layernorm).
# -----------------------------------------------------------------------------
_INV_SQRT2 = 0.7071067811865476


def _erf(x):
  # Abramowitz & Stegun 7.1.26 rational approximation (|err| < 1.5e-7).
  ax = jnp.abs(x)
  t = 1.0 / (1.0 + 0.3275911 * ax)
  poly = ((((1.061405429 * t - 1.453152027) * t + 1.421413741) * t
           - 0.284496736) * t + 0.254829592) * t
  y = 1.0 - poly * jnp.exp(-ax * ax)
  return jnp.where(x >= 0.0, y, -y)


def _gelu(x):
  # exact (erf-based) GELU, matching torch.nn.GELU() default
  return 0.5 * x * (1.0 + _erf(x * _INV_SQRT2))


def _softmax(x):
  m = jnp.max(x, axis=-1, keepdims=True)
  e = jnp.exp(x - m)
  return e / jnp.sum(e, axis=-1, keepdims=True)


def _sigmoid(x):
  return 1.0 / (1.0 + jnp.exp(-x))


def _layernorm(x, w, b, eps=1e-5):
  mu = jnp.mean(x, axis=-1, keepdims=True)
  var = jnp.mean((x - mu) ** 2, axis=-1, keepdims=True)
  return (x - mu) * lax.rsqrt(var + eps) * w + b


def _full_spec(arr):
  """Full-array block with a constant index map (DMA'd once, stays resident)."""
  nd = arr.ndim

  def idx(b):
    return (0,) * nd

  return pl.BlockSpec(arr.shape, idx)


# -----------------------------------------------------------------------------
# Depthwise 3x3 (stride 1, pad 1) on flattened [HW, C] activations.
# A zero halo of PAD rows on each side of a VMEM scratch handles the H border;
# wrap-around across the W border is killed with precomputed column masks.
# taps: [9, C] per-channel weights, row t = 3*dy + dx (BN scale pre-folded).
# -----------------------------------------------------------------------------
def _dw3x3_flat(f, taps, mask, pad_ref, H, W, PAD):
  HW = H * W
  pad_ref[...] = jnp.zeros_like(pad_ref)
  pad_ref[PAD:PAD + HW, :] = f            # sublane-aligned interior store
  sp = pad_ref[...]
  left_ok = mask[:, 0:1]                  # (x != 0)
  right_ok = mask[:, 1:2]                 # (x != W-1)
  acc = jnp.zeros_like(f)
  for dy in range(3):
    for dx in range(3):
      start = PAD + (dy - 1) * W + (dx - 1)
      v = sp[start:start + HW, :]
      if dx == 0:
        v = v * left_ok
      elif dx == 2:
        v = v * right_ok
      acc = acc + v * taps[3 * dy + dx:3 * dy + dx + 1, :]
  return acc


_TOKEN_KEYS = ("m2f_ln_w", "m2f_ln_b", "m2f_wq", "m2f_wfc",
               "ln1_w", "ln1_b", "wq", "wk", "wv", "wp", "bp",
               "ln2_w", "ln2_b", "wfc1", "wfc2")

_MOB_KEYS = ("ka1_wz", "ka1_wx", "ka1_b", "ka1_w2",
             "ka2_wz", "ka2_wx", "ka2_b", "ka2_w2",
             "ka3_wz", "ka3_wx", "ka3_b", "ka3_w2",
             "pw1_d", "pw1_s", "bn1_b",
             "dw_d", "dw_s", "bn2_b",
             "pw2_d", "pw2_s", "bn3_b")

_FFN_KEYS = ("gn_w", "gn_b", "pw1_w", "bn1_b", "dw_w",
             "grn_g", "grn_b", "pw2_w", "bn3_b")


# -----------------------------------------------------------------------------
# Single fused kernel: Mobile2Former + Former  ->  DynamicMobile (3x CondConv)
# -> GroupNorm + BottleNeck FFN (GRN, hidden shortcut) + residual.
# All per-batch intermediates stay in VMEM.
# -----------------------------------------------------------------------------
def _dmf_kernel(tok_ref, x_ref, mask_ref, *refs,
                num_heads, m2f_scale, attn_scale,
                H, W, PAD, fc_K, conv_K, gn_eps):
  nt, nm, nf = len(_TOKEN_KEYS), len(_MOB_KEYS), len(_FFN_KEYS)
  tw = dict(zip(_TOKEN_KEYS, refs[:nt]))
  mw = dict(zip(_MOB_KEYS, refs[nt:nt + nm]))
  fw = dict(zip(_FFN_KEYS, refs[nt + nm:nt + nm + nf]))
  tok_o_ref, x_o_ref, pad_mob, pad_ffn = refs[nt + nm + nf:]

  t = tok_ref[0]                                       # [N, D]
  x = x_ref[0]                                         # [HW, Cin]
  mask = mask_ref[...]                                 # [HW, 2]

  # ===================== token path =====================
  # ---- Mobile2Former (num_heads = 1) ----
  tn = _layernorm(t, tw["m2f_ln_w"][...], tw["m2f_ln_b"][...])
  q = jnp.dot(tn, tw["m2f_wq"][...], preferred_element_type=jnp.float32)
  a = lax.dot_general(q, x, (((1,), (1,)), ((), ())),
                      preferred_element_type=jnp.float32) * m2f_scale   # [N,HW]
  a = _softmax(a)
  zz = jnp.dot(a, x, preferred_element_type=jnp.float32)                # [N,C]
  # residual with NORMED tokens (module-as-written: `tokens = self.norm(tokens)`)
  t = jnp.dot(zz, tw["m2f_wfc"][...], preferred_element_type=jnp.float32) + tn

  # ---- Former: pre-norm MHSA ----
  t1 = _layernorm(t, tw["ln1_w"][...], tw["ln1_b"][...])
  qf = jnp.dot(t1, tw["wq"][...], preferred_element_type=jnp.float32)
  kf = jnp.dot(t1, tw["wk"][...], preferred_element_type=jnp.float32)
  vf = jnp.dot(t1, tw["wv"][...], preferred_element_type=jnp.float32)
  wp = tw["wp"][...]
  dh = qf.shape[-1] // num_heads
  attn_out = jnp.zeros(t.shape, jnp.float32)
  for hd in range(num_heads):                          # tiny [N,N] per head
    lo, hi = hd * dh, (hd + 1) * dh
    qh, kh, vh = qf[:, lo:hi], kf[:, lo:hi], vf[:, lo:hi]
    ah = lax.dot_general(qh, kh, (((1,), (1,)), ((), ())),
                         preferred_element_type=jnp.float32) * attn_scale
    ah = _softmax(ah)
    oh = jnp.dot(ah, vh, preferred_element_type=jnp.float32)
    attn_out = attn_out + jnp.dot(oh, wp[lo:hi, :],
                                  preferred_element_type=jnp.float32)
  t = t + attn_out + tw["bp"][...]

  # ---- Former: pre-norm MLP ----
  t2 = _layernorm(t, tw["ln2_w"][...], tw["ln2_b"][...])
  hmid = _gelu(jnp.dot(t2, tw["wfc1"][...], preferred_element_type=jnp.float32))
  t = t + jnp.dot(hmid, tw["wfc2"][...], preferred_element_type=jnp.float32)
  tok_o_ref[0] = t

  z = t[0:1, :]                                        # [1, D], first token

  # ===================== dynamic mobile =====================
  def kernel_att(feat_avg, wz, wx, b, w2):
    # sigmoid(net2(relu(bn(net1([z ; avgpool]))))), BN scale folded into net1.
    hh = (jnp.dot(z, wz[...], preferred_element_type=jnp.float32)
          + jnp.dot(feat_avg, wx[...], preferred_element_type=jnp.float32))
    hh = jnp.maximum(hh + b[...], 0.0)
    return _sigmoid(jnp.dot(hh, w2[...], preferred_element_type=jnp.float32))

  def agg_weight(att, dyn_ref, sta_ref, K):
    # static + sum_k att[k] * dyn[k]  (0.1 and BN scale baked into dyn/static)
    w = sta_ref[...]
    for k in range(K):
      w = w + att[:, k:k + 1] * dyn_ref[k]
    return w

  # --- CondConv pw1 + folded BN1 + GELU ---
  att1 = kernel_att(jnp.mean(x, axis=0, keepdims=True),
                    mw["ka1_wz"], mw["ka1_wx"], mw["ka1_b"], mw["ka1_w2"])
  w1 = agg_weight(att1, mw["pw1_d"], mw["pw1_s"], fc_K)          # [Cin, Chid]
  h = _gelu(jnp.dot(x, w1, preferred_element_type=jnp.float32) + mw["bn1_b"][...])

  # --- CondConv depthwise 3x3 + folded BN2 + GELU ---
  att2 = kernel_att(jnp.mean(h, axis=0, keepdims=True),
                    mw["ka2_wz"], mw["ka2_wx"], mw["ka2_b"], mw["ka2_w2"])
  wd = agg_weight(att2, mw["dw_d"], mw["dw_s"], conv_K)          # [9, Chid]
  h = _gelu(_dw3x3_flat(h, wd, mask, pad_mob, H, W, PAD) + mw["bn2_b"][...])

  # --- CondConv pw2 + folded BN3 ---
  att3 = kernel_att(jnp.mean(h, axis=0, keepdims=True),
                    mw["ka3_wz"], mw["ka3_wx"], mw["ka3_b"], mw["ka3_w2"])
  w2m = agg_weight(att3, mw["pw2_d"], mw["pw2_s"], fc_K)         # [Chid, Cout]
  y = jnp.dot(h, w2m, preferred_element_type=jnp.float32) + mw["bn3_b"][...]

  # ===================== FFN branch =====================
  # GroupNorm (1 group): per-sample mean/var over (HW, C)
  mean_all = lambda v: jnp.mean(jnp.mean(v, axis=1, keepdims=True),
                                axis=0, keepdims=True)
  mu = mean_all(y)
  var = mean_all((y - mu) ** 2)
  n = (y - mu) * lax.rsqrt(var + gn_eps) * fw["gn_w"][...] + fw["gn_b"][...]

  # pw1 + folded BN1 + GELU
  f = _gelu(jnp.dot(n, fw["pw1_w"][...], preferred_element_type=jnp.float32)
            + fw["bn1_b"][...])

  # depthwise 3x3 + hidden shortcut (no BN, is_grn=True path)
  d = _dw3x3_flat(f, fw["dw_w"][...], mask, pad_ffn, H, W, PAD) + f

  # GRN (module-as-written: Nx = Gx / (Gx + 1e-6)) fused with the GELU
  gx = jnp.sqrt(jnp.sum(d * d, axis=0, keepdims=True))           # [1, Cffn]
  nx = gx / (gx + 1e-6)
  g = _gelu(fw["grn_g"][...] * (d * nx) + fw["grn_b"][...] + d)

  # pw2 + folded BN3 + outer residual (drop_path = identity at inference)
  x_o_ref[0] = (jnp.dot(g, fw["pw2_w"][...], preferred_element_type=jnp.float32)
                + fw["bn3_b"][...] + y)


# -----------------------------------------------------------------------------
# DMFBlock forward (single pallas_call).
# -----------------------------------------------------------------------------
def dmf_block_forward(params, x_nchw, tokens):
  B, C_in, H, W = x_nchw.shape
  HW = H * W
  x_flat = jnp.transpose(x_nchw, (0, 2, 3, 1)).reshape(B, HW, C_in)

  # trace-time column-boundary masks for the flattened depthwise conv
  col = np.arange(HW) % W
  mask = jnp.asarray(
      np.stack([(col != 0), (col != W - 1)], axis=1).astype(np.float32))

  p_tok, p_mob, p_ffn = params["tok"], params["mob"], params["ffn"]
  _, N, D = tokens.shape
  Chid = p_mob["pw1_s"].shape[-1]
  Cout = p_mob["pw2_s"].shape[-1]
  Cffn = p_ffn["pw1_w"].shape[-1]
  fc_K = p_mob["pw1_d"].shape[0]
  conv_K = p_mob["dw_d"].shape[0]
  nh = max(D // 32, 1)                                 # Former num_heads
  dh = D // nh
  PAD = ((W + 1 + 7) // 8) * 8                         # >= W+1, sublane aligned

  weights = ([p_tok[k] for k in _TOKEN_KEYS]
             + [p_mob[k] for k in _MOB_KEYS]
             + [p_ffn[k] for k in _FFN_KEYS])

  kern = functools.partial(
      _dmf_kernel, num_heads=nh,
      m2f_scale=float(C_in) ** -0.5, attn_scale=float(dh) ** -0.5,
      H=H, W=W, PAD=PAD, fc_K=fc_K, conv_K=conv_K, gn_eps=1e-5)

  in_specs = ([pl.BlockSpec((1, N, D), lambda b: (b, 0, 0)),
               pl.BlockSpec((1, HW, C_in), lambda b: (b, 0, 0)),
               _full_spec(mask)]
              + [_full_spec(w) for w in weights])
  out_shape = (jax.ShapeDtypeStruct((B, N, D), jnp.float32),
               jax.ShapeDtypeStruct((B, HW, Cout), jnp.float32))
  out_specs = (pl.BlockSpec((1, N, D), lambda b: (b, 0, 0)),
               pl.BlockSpec((1, HW, Cout), lambda b: (b, 0, 0)))

  tok_out, y_out = pl.pallas_call(
      kern,
      out_shape=out_shape,
      grid=(B,),
      in_specs=in_specs,
      out_specs=out_specs,
      scratch_shapes=[pltpu.VMEM((HW + 2 * PAD, Chid), jnp.float32),
                      pltpu.VMEM((HW + 2 * PAD, Cffn), jnp.float32)],
      compiler_params=pltpu.CompilerParams(dimension_semantics=("parallel",)),
  )(tokens, x_flat, mask, *weights)

  x_out = jnp.transpose(y_out.reshape(B, H, W, Cout), (0, 3, 1, 2))
  return x_out, tok_out


# -----------------------------------------------------------------------------
# Deterministic synthetic parameters, pre-arranged in kernel layout:
# 1x1 weights stored transposed ([in, out]); depthwise taps as [9, C];
# CondConv 0.1 factor and every folded-BN scale baked into the weights.
# -----------------------------------------------------------------------------
def init_params(key, C_in, C_hid, C_out, token_dims, fc_K, conv_K,
                ffn_expansion=3, mlp_ratio=2):
  keys = iter(jax.random.split(key, 160))
  nk = lambda: next(keys)

  def dense(shape, s=0.1):
    return (s * jax.random.normal(nk(), shape)).astype(jnp.float32)

  def bn_fold(c, eps=1e-5):
    # TODO(synk): BatchNorm reproduced in inference mode (running stats folded
    # into per-channel scale/bias); training-mode batch statistics not modelled.
    gamma = 1.0 + dense((c,))
    beta = dense((c,))
    rm = dense((c,))
    rv = 0.8 + 0.4 * jax.random.uniform(nk(), (c,), jnp.float32)
    scale = gamma / jnp.sqrt(rv + eps)
    return scale.astype(jnp.float32), (beta - rm * scale).astype(jnp.float32)

  D = token_dims
  E = int(D * mlp_ratio)
  C_ffn = C_out * ffn_expansion

  tok = {
      "m2f_ln_w": (1.0 + dense((D,))).reshape(1, D),
      "m2f_ln_b": dense((D,)).reshape(1, D),
      "m2f_wq": dense((D, C_in)),        # Linear(token_dims -> in_channels)^T
      "m2f_wfc": dense((C_in, D)),       # Linear(in_channels -> token_dims)^T
      "ln1_w": (1.0 + dense((D,))).reshape(1, D),
      "ln1_b": dense((D,)).reshape(1, D),
      "wq": dense((D, D)), "wk": dense((D, D)), "wv": dense((D, D)),
      "wp": dense((D, D)), "bp": dense((D,)).reshape(1, D),
      "ln2_w": (1.0 + dense((D,))).reshape(1, D),
      "ln2_b": dense((D,)).reshape(1, D),
      "wfc1": dense((D, E)), "wfc2": dense((E, D)),
  }

  mob = {}

  def ka(cx, K, prefix):
    s, b = bn_fold(D)                    # KernelAttention BN folded into net1
    mob[prefix + "_wz"] = dense((D, D)) * s[None, :]
    mob[prefix + "_wx"] = dense((cx, D)) * s[None, :]
    mob[prefix + "_b"] = b.reshape(1, D)
    mob[prefix + "_w2"] = dense((D, K))

  ka(C_in, fc_K, "ka1")
  ka(C_hid, conv_K, "ka2")
  ka(C_hid, fc_K, "ka3")

  bn1_s, bn1_b = bn_fold(C_hid)
  bn2_s, bn2_b = bn_fold(C_hid)
  bn3_s, bn3_b = bn_fold(C_out)
  mob.update({
      "pw1_d": dense((fc_K, C_in, C_hid)) * 0.1 * bn1_s[None, None, :],
      "pw1_s": dense((C_in, C_hid), 0.2) * bn1_s[None, :],
      "bn1_b": bn1_b.reshape(1, C_hid),
      "dw_d": dense((conv_K, 9, C_hid)) * 0.1 * bn2_s[None, None, :],
      "dw_s": dense((9, C_hid), 0.2) * bn2_s[None, :],
      "bn2_b": bn2_b.reshape(1, C_hid),
      "pw2_d": dense((fc_K, C_hid, C_out)) * 0.1 * bn3_s[None, None, :],
      "pw2_s": dense((C_hid, C_out), 0.2) * bn3_s[None, :],
      "bn3_b": bn3_b.reshape(1, C_out),
  })

  fbn1_s, fbn1_b = bn_fold(C_ffn)
  fbn3_s, fbn3_b = bn_fold(C_out)
  ffn = {
      "gn_w": (1.0 + dense((C_out,))).reshape(1, C_out),
      "gn_b": dense((C_out,)).reshape(1, C_out),
      "pw1_w": dense((C_out, C_ffn)) * fbn1_s[None, :],
      "bn1_b": fbn1_b.reshape(1, C_ffn),
      "dw_w": dense((9, C_ffn), 0.2),
      "grn_g": dense((C_ffn,)).reshape(1, C_ffn),
      "grn_b": dense((C_ffn,)).reshape(1, C_ffn),
      "pw2_w": dense((C_ffn, C_out)) * fbn3_s[None, :],
      "bn3_b": fbn3_b.reshape(1, C_out),
  }
  return {"tok": tok, "mob": mob, "ffn": ffn}


if __name__ == "__main__":
  B, C_in, C_hid, C_out = 2, 32, 64, 32
  H = W = 8
  token_dims = 64                        # -> Former num_heads = 64 // 32 = 2
  n_tokens = 4
  fc_K, conv_K = 4, 16

  root = jax.random.PRNGKey(0)
  kx, kt, kp = jax.random.split(root, 3)
  x = jax.random.normal(kx, (B, C_in, H, W), jnp.float32)        # NCHW input
  tokens = jax.random.normal(kt, (B, n_tokens, token_dims), jnp.float32)
  params = init_params(kp, C_in, C_hid, C_out, token_dims, fc_K, conv_K)

  fwd = jax.jit(dmf_block_forward)
  x_out, tok_out = fwd(params, x, tokens)
  jax.block_until_ready((x_out, tok_out))

  assert x_out.shape == (B, C_out, H, W), x_out.shape
  assert tok_out.shape == (B, n_tokens, token_dims), tok_out.shape
  assert bool(jnp.all(jnp.isfinite(x_out))) and bool(jnp.all(jnp.isfinite(tok_out)))
  print("KERNEL_OK")
</pallas_src>

<mosaic_0001>
module attributes {stable_mosaic.version = 11 : i64} {
  func.func @_dmf_kernel(%arg0: i32, %arg1: memref<1x4x64xf32, #tpu.memory_space<vmem>>, %arg2: memref<1x64x32xf32, #tpu.memory_space<vmem>>, %arg3: memref<64x2xf32, #tpu.memory_space<vmem>>, %arg4: memref<1x64xf32, #tpu.memory_space<vmem>>, %arg5: memref<1x64xf32, #tpu.memory_space<vmem>>, %arg6: memref<64x32xf32, #tpu.memory_space<vmem>>, %arg7: memref<32x64xf32, #tpu.memory_space<vmem>>, %arg8: memref<1x64xf32, #tpu.memory_space<vmem>>, %arg9: memref<1x64xf32, #tpu.memory_space<vmem>>, %arg10: memref<64x64xf32, #tpu.memory_space<vmem>>, %arg11: memref<64x64xf32, #tpu.memory_space<vmem>>, %arg12: memref<64x64xf32, #tpu.memory_space<vmem>>, %arg13: memref<64x64xf32, #tpu.memory_space<vmem>>, %arg14: memref<1x64xf32, #tpu.memory_space<vmem>>, %arg15: memref<1x64xf32, #tpu.memory_space<vmem>>, %arg16: memref<1x64xf32, #tpu.memory_space<vmem>>, %arg17: memref<64x128xf32, #tpu.memory_space<vmem>>, %arg18: memref<128x64xf32, #tpu.memory_space<vmem>>, %arg19: memref<64x64xf32, #tpu.memory_space<vmem>>, %arg20: memref<32x64xf32, #tpu.memory_space<vmem>>, %arg21: memref<1x64xf32, #tpu.memory_space<vmem>>, %arg22: memref<64x4xf32, #tpu.memory_space<vmem>>, %arg23: memref<64x64xf32, #tpu.memory_space<vmem>>, %arg24: memref<64x64xf32, #tpu.memory_space<vmem>>, %arg25: memref<1x64xf32, #tpu.memory_space<vmem>>, %arg26: memref<64x16xf32, #tpu.memory_space<vmem>>, %arg27: memref<64x64xf32, #tpu.memory_space<vmem>>, %arg28: memref<64x64xf32, #tpu.memory_space<vmem>>, %arg29: memref<1x64xf32, #tpu.memory_space<vmem>>, %arg30: memref<64x4xf32, #tpu.memory_space<vmem>>, %arg31: memref<4x32x64xf32, #tpu.memory_space<vmem>>, %arg32: memref<32x64xf32, #tpu.memory_space<vmem>>, %arg33: memref<1x64xf32, #tpu.memory_space<vmem>>, %arg34: memref<16x9x64xf32, #tpu.memory_space<vmem>>, %arg35: memref<9x64xf32, #tpu.memory_space<vmem>>, %arg36: memref<1x64xf32, #tpu.memory_space<vmem>>, %arg37: memref<4x64x32xf32, #tpu.memory_space<vmem>>, %arg38: memref<64x32xf32, #tpu.memory_space<vmem>>, %arg39: memref<1x32xf32, #tpu.memory_space<vmem>>, %arg40: memref<1x32xf32, #tpu.memory_space<vmem>>, %arg41: memref<1x32xf32, #tpu.memory_space<vmem>>, %arg42: memref<32x96xf32, #tpu.memory_space<vmem>>, %arg43: memref<1x96xf32, #tpu.memory_space<vmem>>, %arg44: memref<9x96xf32, #tpu.memory_space<vmem>>, %arg45: memref<1x96xf32, #tpu.memory_space<vmem>>, %arg46: memref<1x96xf32, #tpu.memory_space<vmem>>, %arg47: memref<96x32xf32, #tpu.memory_space<vmem>>, %arg48: memref<1x32xf32, #tpu.memory_space<vmem>>, %arg49: memref<1x4x64xf32, #tpu.memory_space<vmem>>, %arg50: memref<1x64x32xf32, #tpu.memory_space<vmem>>, %arg51: memref<96x64xf32, #tpu.memory_space<vmem>>, %arg52: memref<96x96xf32, #tpu.memory_space<vmem>>) attributes {dimension_semantics = [#tpu.dimension_semantics<parallel>], iteration_bounds = array<i64: 2>, scalar_prefetch = 0 : i64, scratch_operands = 2 : i64, tpu.core_type = #tpu.core_type<tc>, window_params = [{transform_indices = @transform_0, window_bounds = array<i64: 1, 4, 64>}, {transform_indices = @transform_1, window_bounds = array<i64: 1, 64, 32>}, {pipeline_mode = #tpu.pipeline_mode<synchronous>, transform_indices = @transform_2, window_bounds = array<i64: 64, 2>}, {pipeline_mode = #tpu.pipeline_mode<synchronous>, transform_indices = @transform_3, window_bounds = array<i64: 1, 64>}, {pipeline_mode = #tpu.pipeline_mode<synchronous>, transform_indices = @transform_4, window_bounds = array<i64: 1, 64>}, {pipeline_mode = #tpu.pipeline_mode<synchronous>, transform_indices = @transform_5, window_bounds = array<i64: 64, 32>}, {pipeline_mode = #tpu.pipeline_mode<synchronous>, transform_indices = @transform_6, window_bounds = array<i64: 32, 64>}, {pipeline_mode = #tpu.pipeline_mode<synchronous>, transform_indices = @transform_7, window_bounds = array<i64: 1, 64>}, {pipeline_mode = #tpu.pipeline_mode<synchronous>, transform_indices = @transform_8, window_bounds = array<i64: 1, 64>}, {pipeline_mode = #tpu.pipeline_mode<synchronous>, transform_indices = @transform_9, window_bounds = array<i64: 64, 64>}, {pipeline_mode = #tpu.pipeline_mode<synchronous>, transform_indices = @transform_10, window_bounds = array<i64: 64, 64>}, {pipeline_mode = #tpu.pipeline_mode<synchronous>, transform_indices = @transform_11, window_bounds = array<i64: 64, 64>}, {pipeline_mode = #tpu.pipeline_mode<synchronous>, transform_indices = @transform_12, window_bounds = array<i64: 64, 64>}, {pipeline_mode = #tpu.pipeline_mode<synchronous>, transform_indices = @transform_13, window_bounds = array<i64: 1, 64>}, {pipeline_mode = #tpu.pipeline_mode<synchronous>, transform_indices = @transform_14, window_bounds = array<i64: 1, 64>}, {pipeline_mode = #tpu.pipeline_mode<synchronous>, transform_indices = @transform_15, window_bounds = array<i64: 1, 64>}, {pipeline_mode = #tpu.pipeline_mode<synchronous>, transform_indices = @transform_16, window_bounds = array<i64: 64, 128>}, {pipeline_mode = #tpu.pipeline_mode<synchronous>, transform_indices = @transform_17, window_bounds = array<i64: 128, 64>}, {pipeline_mode = #tpu.pipeline_mode<synchronous>, transform_indices = @transform_18, window_bounds = array<i64: 64, 64>}, {pipeline_mode = #tpu.pipeline_mode<synchronous>, transform_indices = @transform_19, window_bounds = array<i64: 32, 64>}, {pipeline_mode = #tpu.pipeline_mode<synchronous>, transform_indices = @transform_20, window_bounds = array<i64: 1, 64>}, {pipeline_mode = #tpu.pipeline_mode<synchronous>, transform_indices = @transform_21, window_bounds = array<i64: 64, 4>}, {pipeline_mode = #tpu.pipeline_mode<synchronous>, transform_indices = @transform_22, window_bounds = array<i64: 64, 64>}, {pipeline_mode = #tpu.pipeline_mode<synchronous>, transform_indices = @transform_23, window_bounds = array<i64: 64, 64>}, {pipeline_mode = #tpu.pipeline_mode<synchronous>, transform_indices = @transform_24, window_bounds = array<i64: 1, 64>}, {pipeline_mode = #tpu.pipeline_mode<synchronous>, transform_indices = @transform_25, window_bounds = array<i64: 64, 16>}, {pipeline_mode = #tpu.pipeline_mode<synchronous>, transform_indices = @transform_26, window_bounds = array<i64: 64, 64>}, {pipeline_mode = #tpu.pipeline_mode<synchronous>, transform_indices = @transform_27, window_bounds = array<i64: 64, 64>}, {pipeline_mode = #tpu.pipeline_mode<synchronous>, transform_indices = @transform_28, window_bounds = array<i64: 1, 64>}, {pipeline_mode = #tpu.pipeline_mode<synchronous>, transform_indices = @transform_29, window_bounds = array<i64: 64, 4>}, {pipeline_mode = #tpu.pipeline_mode<synchronous>, transform_indices = @transform_30, window_bounds = array<i64: 4, 32, 64>}, {pipeline_mode = #tpu.pipeline_mode<synchronous>, transform_indices = @transform_31, window_bounds = array<i64: 32, 64>}, {pipeline_mode = #tpu.pipeline_mode<synchronous>, transform_indices = @transform_32, window_bounds = array<i64: 1, 64>}, {pipeline_mode = #tpu.pipeline_mode<synchronous>, transform_indices = @transform_33, window_bounds = array<i64: 16, 9, 64>}, {pipeline_mode = #tpu.pipeline_mode<synchronous>, transform_indices = @transform_34, window_bounds = array<i64: 9, 64>}, {pipeline_mode = #tpu.pipeline_mode<synchronous>, transform_indices = @transform_35, window_bounds = array<i64: 1, 64>}, {pipeline_mode = #tpu.pipeline_mode<synchronous>, transform_indices = @transform_36, window_bounds = array<i64: 4, 64, 32>}, {pipeline_mode = #tpu.pipeline_mode<synchronous>, transform_indices = @transform_37, window_bounds = array<i64: 64, 32>}, {pipeline_mode = #tpu.pipeline_mode<synchronous>, transform_indices = @transform_38, window_bounds = array<i64: 1, 32>}, {pipeline_mode = #tpu.pipeline_mode<synchronous>, transform_indices = @transform_39, window_bounds = array<i64: 1, 32>}, {pipeline_mode = #tpu.pipeline_mode<synchronous>, transform_indices = @transform_40, window_bounds = array<i64: 1, 32>}, {pipeline_mode = #tpu.pipeline_mode<synchronous>, transform_indices = @transform_41, window_bounds = array<i64: 32, 96>}, {pipeline_mode = #tpu.pipeline_mode<synchronous>, transform_indices = @transform_42, window_bounds = array<i64: 1, 96>}, {pipeline_mode = #tpu.pipeline_mode<synchronous>, transform_indices = @transform_43, window_bounds = array<i64: 9, 96>}, {pipeline_mode = #tpu.pipeline_mode<synchronous>, transform_indices = @transform_44, window_bounds = array<i64: 1, 96>}, {pipeline_mode = #tpu.pipeline_mode<synchronous>, transform_indices = @transform_45, window_bounds = array<i64: 1, 96>}, {pipeline_mode = #tpu.pipeline_mode<synchronous>, transform_indices = @transform_46, window_bounds = array<i64: 96, 32>}, {pipeline_mode = #tpu.pipeline_mode<synchronous>, transform_indices = @transform_47, window_bounds = array<i64: 1, 32>}, {transform_indices = @transform_48, window_bounds = array<i64: 1, 4, 64>}, {transform_indices = @transform_49, window_bounds = array<i64: 1, 64, 32>}]} {
    %c0 = arith.constant 0 : index
    %c0_0 = arith.constant 0 : index
    %c0_1 = arith.constant 0 : index
    %0 = vector.load %arg1[%c0, %c0_0, %c0_1] : memref<1x4x64xf32, #tpu.memory_space<vmem>>, vector<1x4x64xf32>
    %1 = vector.shape_cast %0 : vector<1x4x64xf32> to vector<4x64xf32>
    %c0_2 = arith.constant 0 : index
    %c0_3 = arith.constant 0 : index
    %c0_4 = arith.constant 0 : index
    %2 = vector.load %arg2[%c0_2, %c0_3, %c0_4] : memref<1x64x32xf32, #tpu.memory_space<vmem>>, vector<1x64x32xf32>
    %3 = vector.shape_cast %2 : vector<1x64x32xf32> to vector<64x32xf32>
    %c0_5 = arith.constant 0 : index
    %c0_6 = arith.constant 0 : index
    %4 = vector.load %arg3[%c0_5, %c0_6] : memref<64x2xf32, #tpu.memory_space<vmem>>, vector<64x2xf32>
    %c0_7 = arith.constant 0 : index
    %c0_8 = arith.constant 0 : index
    %5 = vector.load %arg4[%c0_7, %c0_8] : memref<1x64xf32, #tpu.memory_space<vmem>>, vector<1x64xf32>
    %c0_9 = arith.constant 0 : index
    %c0_10 = arith.constant 0 : index
    %6 = vector.load %arg5[%c0_9, %c0_10] : memref<1x64xf32, #tpu.memory_space<vmem>>, vector<1x64xf32>
    %cst = arith.constant dense<0.000000e+00> : vector<4xf32>
    %7 = vector.multi_reduction <add>, %1, %cst [1] : vector<4x64xf32> to vector<4xf32>
    %8 = vector.shape_cast %7 : vector<4xf32> to vector<4x1xf32>
    %cst_11 = arith.constant 6.400000e+01 : f32
    %9 = vector.broadcast %cst_11 : f32 to vector<4x1xf32>
    %10 = arith.divf %8, %9 : vector<4x1xf32>
    %11 = vector.broadcast %10 : vector<4x1xf32> to vector<4x64xf32>
    %12 = arith.subf %1, %11 : vector<4x64xf32>
    %13 = arith.mulf %12, %12 : vector<4x64xf32>
    %cst_12 = arith.constant dense<0.000000e+00> : vector<4xf32>
    %14 = vector.multi_reduction <add>, %13, %cst_12 [1] : vector<4x64xf32> to vector<4xf32>
    %15 = vector.shape_cast %14 : vector<4xf32> to vector<4x1xf32>
    %cst_13 = arith.constant 6.400000e+01 : f32
    %16 = vector.broadcast %cst_13 : f32 to vector<4x1xf32>
    %17 = arith.divf %15, %16 : vector<4x1xf32>
    %18 = vector.broadcast %10 : vector<4x1xf32> to vector<4x64xf32>
    %19 = arith.subf %1, %18 : vector<4x64xf32>
    %cst_14 = arith.constant 9.99999974E-6 : f32
    %20 = vector.broadcast %cst_14 : f32 to vector<4x1xf32>
    %21 = arith.addf %17, %20 : vector<4x1xf32>
    %22 = math.rsqrt %21 : vector<4x1xf32>
    %23 = vector.broadcast %22 : vector<4x1xf32> to vector<4x64xf32>
    %24 = arith.mulf %19, %23 : vector<4x64xf32>
    %25 = vector.broadcast %5 : vector<1x64xf32> to vector<4x64xf32>
    %26 = arith.mulf %24, %25 : vector<4x64xf32>
    %27 = vector.broadcast %6 : vector<1x64xf32> to vector<4x64xf32>
    %28 = arith.addf %26, %27 : vector<4x64xf32>
    %c0_15 = arith.constant 0 : index
    %c0_16 = arith.constant 0 : index
    %29 = vector.load %arg6[%c0_15, %c0_16] : memref<64x32xf32, #tpu.memory_space<vmem>>, vector<64x32xf32>
    %cst_17 = arith.constant dense<0.000000e+00> : vector<4x32xf32>
    %30 = tpu.matmul %28, %29, %cst_17 {dimension_numbers = #tpu.dot_dimension_numbers<[1], [0], [0], [1], [0, 0, 1, 1], [], []>} : vector<4x64xf32>, vector<64x32xf32>, vector<4x32xf32> -> vector<4x32xf32>
    %cst_18 = arith.constant dense<0.000000e+00> : vector<4x64xf32>
    %31 = tpu.matmul %30, %3, %cst_18 {dimension_numbers = #tpu.dot_dimension_numbers<[1], [1], [0], [0], [0, 0, 1, 0], [], []>} : vector<4x32xf32>, vector<64x32xf32>, vector<4x64xf32> -> vector<4x64xf32>
    %cst_19 = arith.constant 0.176776692 : f32
    %32 = vector.broadcast %cst_19 : f32 to vector<4x64xf32>
    %33 = arith.mulf %31, %32 : vector<4x64xf32>
    %cst_20 = arith.constant dense<0xFF800000> : vector<4xf32>
    %34 = vector.multi_reduction <maximumf>, %33, %cst_20 [1] : vector<4x64xf32> to vector<4xf32>
    %35 = vector.shape_cast %34 : vector<4xf32> to vector<4x1xf32>
    %36 = vector.broadcast %35 : vector<4x1xf32> to vector<4x64xf32>
    %37 = arith.subf %33, %36 : vector<4x64xf32>
    %38 = math.exp %37 : vector<4x64xf32>
    %cst_21 = arith.constant dense<0.000000e+00> : vector<4xf32>
    %39 = vector.multi_reduction <add>, %38, %cst_21 [1] : vector<4x64xf32> to vector<4xf32>
    %40 = vector.shape_cast %39 : vector<4xf32> to vector<4x1xf32>
    %41 = vector.broadcast %40 : vector<4x1xf32> to vector<4x64xf32>
    %42 = arith.divf %38, %41 : vector<4x64xf32>
    %cst_22 = arith.constant dense<0.000000e+00> : vector<4x32xf32>
    %43 = tpu.matmul %42, %3, %cst_22 {dimension_numbers = #tpu.dot_dimension_numbers<[1], [0], [0], [1], [0, 0, 1, 1], [], []>} : vector<4x64xf32>, vector<64x32xf32>, vector<4x32xf32> -> vector<4x32xf32>
    %c0_23 = arith.constant 0 : index
    %c0_24 = arith.constant 0 : index
    %44 = vector.load %arg7[%c0_23, %c0_24] : memref<32x64xf32, #tpu.memory_space<vmem>>, vector<32x64xf32>
    %cst_25 = arith.constant dense<0.000000e+00> : vector<4x64xf32>
    %45 = tpu.matmul %43, %44, %cst_25 {dimension_numbers = #tpu.dot_dimension_numbers<[1], [0], [0], [1], [0, 0, 1, 1], [], []>} : vector<4x32xf32>, vector<32x64xf32>, vector<4x64xf32> -> vector<4x64xf32>
    %46 = arith.addf %45, %28 : vector<4x64xf32>
    %c0_26 = arith.constant 0 : index
    %c0_27 = arith.constant 0 : index
    %47 = vector.load %arg8[%c0_26, %c0_27] : memref<1x64xf32, #tpu.memory_space<vmem>>, vector<1x64xf32>
    %c0_28 = arith.constant 0 : index
    %c0_29 = arith.constant 0 : index
    %48 = vector.load %arg9[%c0_28, %c0_29] : memref<1x64xf32, #tpu.memory_space<vmem>>, vector<1x64xf32>
    %cst_30 = arith.constant dense<0.000000e+00> : vector<4xf32>
    %49 = vector.multi_reduction <add>, %46, %cst_30 [1] : vector<4x64xf32> to vector<4xf32>
    %50 = vector.shape_cast %49 : vector<4xf32> to vector<4x1xf32>
    %cst_31 = arith.constant 6.400000e+01 : f32
    %51 = vector.broadcast %cst_31 : f32 to vector<4x1xf32>
    %52 = arith.divf %50, %51 : vector<4x1xf32>
    %53 = vector.broadcast %52 : vector<4x1xf32> to vector<4x64xf32>
    %54 = arith.subf %46, %53 : vector<4x64xf32>
    %55 = arith.mulf %54, %54 : vector<4x64xf32>
    %cst_32 = arith.constant dense<0.000000e+00> : vector<4xf32>
    %56 = vector.multi_reduction <add>, %55, %cst_32 [1] : vector<4x64xf32> to vector<4xf32>
    %57 = vector.shape_cast %56 : vector<4xf32> to vector<4x1xf32>
    %cst_33 = arith.constant 6.400000e+01 : f32
    %58 = vector.broadcast %cst_33 : f32 to vector<4x1xf32>
    %59 = arith.divf %57, %58 : vector<4x1xf32>
    %60 = vector.broadcast %52 : vector<4x1xf32> to vector<4x64xf32>
    %61 = arith.subf %46, %60 : vector<4x64xf32>
    %cst_34 = arith.constant 9.99999974E-6 : f32
    %62 = vector.broadcast %cst_34 : f32 to vector<4x1xf32>
    %63 = arith.addf %59, %62 : vector<4x1xf32>
    %64 = math.rsqrt %63 : vector<4x1xf32>
    %65 = vector.broadcast %64 : vector<4x1xf32> to vector<4x64xf32>
    %66 = arith.mulf %61, %65 : vector<4x64xf32>
    %67 = vector.broadcast %47 : vector<1x64xf32> to vector<4x64xf32>
    %68 = arith.mulf %66, %67 : vector<4x64xf32>
    %69 = vector.broadcast %48 : vector<1x64xf32> to vector<4x64xf32>
    %70 = arith.addf %68, %69 : vector<4x64xf32>
    %c0_35 = arith.constant 0 : index
    %c0_36 = arith.constant 0 : index
    %71 = vector.load %arg10[%c0_35, %c0_36] : memref<64x64xf32, #tpu.memory_space<vmem>>, vector<64x64xf32>
    %cst_37 = arith.constant dense<0.000000e+00> : vector<4x64xf32>
    %72 = tpu.matmul %70, %71, %cst_37 {dimension_numbers = #tpu.dot_dimension_numbers<[1], [0], [0], [1], [0, 0, 1, 1], [], []>} : vector<4x64xf32>, vector<64x64xf32>, vector<4x64xf32> -> vector<4x64xf32>
    %c0_38 = arith.constant 0 : index
    %c0_39 = arith.constant 0 : index
    %73 = vector.load %arg11[%c0_38, %c0_39] : memref<64x64xf32, #tpu.memory_space<vmem>>, vector<64x64xf32>
    %cst_40 = arith.constant dense<0.000000e+00> : vector<4x64xf32>
    %74 = tpu.matmul %70, %73, %cst_40 {dimension_numbers = #tpu.dot_dimension_numbers<[1], [0], [0], [1], [0, 0, 1, 1], [], []>} : vector<4x64xf32>, vector<64x64xf32>, vector<4x64xf32> -> vector<4x64xf32>
    %c0_41 = arith.constant 0 : index
    %c0_42 = arith.constant 0 : index
    %75 = vector.load %arg12[%c0_41, %c0_42] : memref<64x64xf32, #tpu.memory_space<vmem>>, vector<64x64xf32>
    %cst_43 = arith.constant dense<0.000000e+00> : vector<4x64xf32>
    %76 = tpu.matmul %70, %75, %cst_43 {dimension_numbers = #tpu.dot_dimension_numbers<[1], [0], [0], [1], [0, 0, 1, 1], [], []>} : vector<4x64xf32>, vector<64x64xf32>, vector<4x64xf32> -> vector<4x64xf32>
    %c0_44 = arith.constant 0 : index
    %c0_45 = arith.constant 0 : index
    %77 = vector.load %arg13[%c0_44, %c0_45] : memref<64x64xf32, #tpu.memory_space<vmem>>, vector<64x64xf32>
    %cst_46 = arith.constant 0.000000e+00 : f32
    %78 = vector.broadcast %cst_46 : f32 to vector<4x64xf32>
    %79 = vector.extract_strided_slice %72 {offsets = [0, 0], sizes = [4, 32], strides = [1, 1]} : vector<4x64xf32> to vector<4x32xf32>
    %80 = vector.extract_strided_slice %74 {offsets = [0, 0], sizes = [4, 32], strides = [1, 1]} : vector<4x64xf32> to vector<4x32xf32>
    %81 = vector.extract_strided_slice %76 {offsets = [0, 0], sizes = [4, 32], strides = [1, 1]} : vector<4x64xf32> to vector<4x32xf32>
    %cst_47 = arith.constant dense<0.000000e+00> : vector<4x4xf32>
    %82 = tpu.matmul %79, %80, %cst_47 {dimension_numbers = #tpu.dot_dimension_numbers<[1], [1], [0], [0], [0, 0, 1, 0], [], []>} : vector<4x32xf32>, vector<4x32xf32>, vector<4x4xf32> -> vector<4x4xf32>
    %cst_48 = arith.constant 0.176776692 : f32
    %83 = vector.broadcast %cst_48 : f32 to vector<4x4xf32>
    %84 = arith.mulf %82, %83 : vector<4x4xf32>
    %cst_49 = arith.constant dense<0xFF800000> : vector<4xf32>
    %85 = vector.multi_reduction <maximumf>, %84, %cst_49 [1] : vector<4x4xf32> to vector<4xf32>
    %86 = vector.shape_cast %85 : vector<4xf32> to vector<4x1xf32>
    %87 = vector.broadcast %86 : vector<4x1xf32> to vector<4x4xf32>
    %88 = arith.subf %84, %87 : vector<4x4xf32>
    %89 = math.exp %88 : vector<4x4xf32>
    %cst_50 = arith.constant dense<0.000000e+00> : vector<4xf32>
    %90 = vector.multi_reduction <add>, %89, %cst_50 [1] : vector<4x4xf32> to vector<4xf32>
    %91 = vector.shape_cast %90 : vector<4xf32> to vector<4x1xf32>
    %92 = vector.broadcast %91 : vector<4x1xf32> to vector<4x4xf32>
    %93 = arith.divf %89, %92 : vector<4x4xf32>
    %cst_51 = arith.constant dense<0.000000e+00> : vector<4x32xf32>
    %94 = tpu.matmul %93, %81, %cst_51 {dimension_numbers = #tpu.dot_dimension_numbers<[1], [0], [0], [1], [0, 0, 1, 1], [], []>} : vector<4x4xf32>, vector<4x32xf32>, vector<4x32xf32> -> vector<4x32xf32>
    %95 = vector.extract_strided_slice %77 {offsets = [0, 0], sizes = [32, 64], strides = [1, 1]} : vector<64x64xf32> to vector<32x64xf32>
    %cst_52 = arith.constant dense<0.000000e+00> : vector<4x64xf32>
    %96 = tpu.matmul %94, %95, %cst_52 {dimension_numbers = #tpu.dot_dimension_numbers<[1], [0], [0], [1], [0, 0, 1, 1], [], []>} : vector<4x32xf32>, vector<32x64xf32>, vector<4x64xf32> -> vector<4x64xf32>
    %97 = arith.addf %78, %96 : vector<4x64xf32>
    %98 = vector.extract_strided_slice %72 {offsets = [0, 32], sizes = [4, 32], strides = [1, 1]} : vector<4x64xf32> to vector<4x32xf32>
    %99 = vector.extract_strided_slice %74 {offsets = [0, 32], sizes = [4, 32], strides = [1, 1]} : vector<4x64xf32> to vector<4x32xf32>
    %100 = vector.extract_strided_slice %76 {offsets = [0, 32], sizes = [4, 32], strides = [1, 1]} : vector<4x64xf32> to vector<4x32xf32>
    %cst_53 = arith.constant dense<0.000000e+00> : vector<4x4xf32>
    %101 = tpu.matmul %98, %99, %cst_53 {dimension_numbers = #tpu.dot_dimension_numbers<[1], [1], [0], [0], [0, 0, 1, 0], [], []>} : vector<4x32xf32>, vector<4x32xf32>, vector<4x4xf32> -> vector<4x4xf32>
    %cst_54 = arith.constant 0.176776692 : f32
    %102 = vector.broadcast %cst_54 : f32 to vector<4x4xf32>
    %103 = arith.mulf %101, %102 : vector<4x4xf32>
    %cst_55 = arith.constant dense<0xFF800000> : vector<4xf32>
    %104 = vector.multi_reduction <maximumf>, %103, %cst_55 [1] : vector<4x4xf32> to vector<4xf32>
    %105 = vector.shape_cast %104 : vector<4xf32> to vector<4x1xf32>
    %106 = vector.broadcast %105 : vector<4x1xf32> to vector<4x4xf32>
    %107 = arith.subf %103, %106 : vector<4x4xf32>
    %108 = math.exp %107 : vector<4x4xf32>
    %cst_56 = arith.constant dense<0.000000e+00> : vector<4xf32>
    %109 = vector.multi_reduction <add>, %108, %cst_56 [1] : vector<4x4xf32> to vector<4xf32>
    %110 = vector.shape_cast %109 : vector<4xf32> to vector<4x1xf32>
    %111 = vector.broadcast %110 : vector<4x1xf32> to vector<4x4xf32>
    %112 = arith.divf %108, %111 : vector<4x4xf32>
    %cst_57 = arith.constant dense<0.000000e+00> : vector<4x32xf32>
    %113 = tpu.matmul %112, %100, %cst_57 {dimension_numbers = #tpu.dot_dimension_numbers<[1], [0], [0], [1], [0, 0, 1, 1], [], []>} : vector<4x4xf32>, vector<4x32xf32>, vector<4x32xf32> -> vector<4x32xf32>
    %114 = vector.extract_strided_slice %77 {offsets = [32, 0], sizes = [32, 64], strides = [1, 1]} : vector<64x64xf32> to vector<32x64xf32>
    %cst_58 = arith.constant dense<0.000000e+00> : vector<4x64xf32>
    %115 = tpu.matmul %113, %114, %cst_58 {dimension_numbers = #tpu.dot_dimension_numbers<[1], [0], [0], [1], [0, 0, 1, 1], [], []>} : vector<4x32xf32>, vector<32x64xf32>, vector<4x64xf32> -> vector<4x64xf32>
    %116 = arith.addf %97, %115 : vector<4x64xf32>
    %117 = arith.addf %46, %116 : vector<4x64xf32>
    %c0_59 = arith.constant 0 : index
    %c0_60 = arith.constant 0 : index
    %118 = vector.load %arg14[%c0_59, %c0_60] : memref<1x64xf32, #tpu.memory_space<vmem>>, vector<1x64xf32>
    %119 = vector.broadcast %118 : vector<1x64xf32> to vector<4x64xf32>
    %120 = arith.addf %117, %119 : vector<4x64xf32>
    %c0_61 = arith.constant 0 : index
    %c0_62 = arith.constant 0 : index
    %121 = vector.load %arg15[%c0_61, %c0_62] : memref<1x64xf32, #tpu.memory_space<vmem>>, vector<1x64xf32>
    %c0_63 = arith.constant 0 : index
    %c0_64 = arith.constant 0 : index
    %122 = vector.load %arg16[%c0_63, %c0_64] : memref<1x64xf32, #tpu.memory_space<vmem>>, vector<1x64xf32>
    %cst_65 = arith.constant dense<0.000000e+00> : vector<4xf32>
    %123 = vector.multi_reduction <add>, %120, %cst_65 [1] : vector<4x64xf32> to vector<4xf32>
    %124 = vector.shape_cast %123 : vector<4xf32> to vector<4x1xf32>
    %cst_66 = arith.constant 6.400000e+01 : f32
    %125 = vector.broadcast %cst_66 : f32 to vector<4x1xf32>
    %126 = arith.divf %124, %125 : vector<4x1xf32>
    %127 = vector.broadcast %126 : vector<4x1xf32> to vector<4x64xf32>
    %128 = arith.subf %120, %127 : vector<4x64xf32>
    %129 = arith.mulf %128, %128 : vector<4x64xf32>
    %cst_67 = arith.constant dense<0.000000e+00> : vector<4xf32>
    %130 = vector.multi_reduction <add>, %129, %cst_67 [1] : vector<4x64xf32> to vector<4xf32>
    %131 = vector.shape_cast %130 : vector<4xf32> to vector<4x1xf32>
    %cst_68 = arith.constant 6.400000e+01 : f32
    %132 = vector.broadcast %cst_68 : f32 to vector<4x1xf32>
    %133 = arith.divf %131, %132 : vector<4x1xf32>
    %134 = vector.broadcast %126 : vector<4x1xf32> to vector<4x64xf32>
    %135 = arith.subf %120, %134 : vector<4x64xf32>
    %cst_69 = arith.constant 9.99999974E-6 : f32
    %136 = vector.broadcast %cst_69 : f32 to vector<4x1xf32>
    %137 = arith.addf %133, %136 : vector<4x1xf32>
    %138 = math.rsqrt %137 : vector<4x1xf32>
    %139 = vector.broadcast %138 : vector<4x1xf32> to vector<4x64xf32>
    %140 = arith.mulf %135, %139 : vector<4x64xf32>
    %141 = vector.broadcast %121 : vector<1x64xf32> to vector<4x64xf32>
    %142 = arith.mulf %140, %141 : vector<4x64xf32>
    %143 = vector.broadcast %122 : vector<1x64xf32> to vector<4x64xf32>
    %144 = arith.addf %142, %143 : vector<4x64xf32>
    %c0_70 = arith.constant 0 : index
    %c0_71 = arith.constant 0 : index
    %145 = vector.load %arg17[%c0_70, %c0_71] : memref<64x128xf32, #tpu.memory_space<vmem>>, vector<64x128xf32>
    %cst_72 = arith.constant dense<0.000000e+00> : vector<4x128xf32>
    %146 = tpu.matmul %144, %145, %cst_72 {dimension_numbers = #tpu.dot_dimension_numbers<[1], [0], [0], [1], [0, 0, 1, 1], [], []>} : vector<4x64xf32>, vector<64x128xf32>, vector<4x128xf32> -> vector<4x128xf32>
    %cst_73 = arith.constant 5.000000e-01 : f32
    %147 = vector.broadcast %cst_73 : f32 to vector<4x128xf32>
    %148 = arith.mulf %147, %146 : vector<4x128xf32>
    %cst_74 = arith.constant 0.707106769 : f32
    %149 = vector.broadcast %cst_74 : f32 to vector<4x128xf32>
    %150 = arith.mulf %146, %149 : vector<4x128xf32>
    %151 = math.absf %150 : vector<4x128xf32>
    %cst_75 = arith.constant 0.327591091 : f32
    %152 = vector.broadcast %cst_75 : f32 to vector<4x128xf32>
    %153 = arith.mulf %152, %151 : vector<4x128xf32>
    %cst_76 = arith.constant 1.000000e+00 : f32
    %154 = vector.broadcast %cst_76 : f32 to vector<4x128xf32>
    %155 = arith.addf %154, %153 : vector<4x128xf32>
    %cst_77 = arith.constant 1.000000e+00 : f32
    %156 = vector.broadcast %cst_77 : f32 to vector<4x128xf32>
    %157 = arith.divf %156, %155 : vector<4x128xf32>
    %cst_78 = arith.constant 1.06140542 : f32
    %158 = vector.broadcast %cst_78 : f32 to vector<4x128xf32>
    %159 = arith.mulf %158, %157 : vector<4x128xf32>
    %cst_79 = arith.constant 1.45315206 : f32
    %160 = vector.broadcast %cst_79 : f32 to vector<4x128xf32>
    %161 = arith.subf %159, %160 : vector<4x128xf32>
    %162 = arith.mulf %161, %157 : vector<4x128xf32>
    %cst_80 = arith.constant 1.42141378 : f32
    %163 = vector.broadcast %cst_80 : f32 to vector<4x128xf32>
    %164 = arith.addf %162, %163 : vector<4x128xf32>
    %165 = arith.mulf %164, %157 : vector<4x128xf32>
    %cst_81 = arith.constant 0.284496725 : f32
    %166 = vector.broadcast %cst_81 : f32 to vector<4x128xf32>
    %167 = arith.subf %165, %166 : vector<4x128xf32>
    %168 = arith.mulf %167, %157 : vector<4x128xf32>
    %cst_82 = arith.constant 0.254829586 : f32
    %169 = vector.broadcast %cst_82 : f32 to vector<4x128xf32>
    %170 = arith.addf %168, %169 : vector<4x128xf32>
    %171 = arith.mulf %170, %157 : vector<4x128xf32>
    %cst_83 = arith.constant 0.000000e+00 : f32
    %172 = vector.broadcast %cst_83 : f32 to vector<4x128xf32>
    %173 = arith.subf %172, %151 : vector<4x128xf32>
    %174 = arith.mulf %173, %151 : vector<4x128xf32>
    %175 = math.exp %174 : vector<4x128xf32>
    %176 = arith.mulf %171, %175 : vector<4x128xf32>
    %cst_84 = arith.constant 1.000000e+00 : f32
    %177 = vector.broadcast %cst_84 : f32 to vector<4x128xf32>
    %178 = arith.subf %177, %176 : vector<4x128xf32>
    %cst_85 = arith.constant 0.000000e+00 : f32
    %179 = vector.broadcast %cst_85 : f32 to vector<4x128xf32>
    %180 = arith.cmpf oge, %150, %179 : vector<4x128xf32>
    %cst_86 = arith.constant 0.000000e+00 : f32
    %181 = vector.broadcast %cst_86 : f32 to vector<4x128xf32>
    %182 = arith.subf %181, %178 : vector<4x128xf32>
    %183 = arith.select %180, %178, %182 : vector<4x128xi1>, vector<4x128xf32>
    %cst_87 = arith.constant 1.000000e+00 : f32
    %184 = vector.broadcast %cst_87 : f32 to vector<4x128xf32>
    %185 = arith.addf %184, %183 : vector<4x128xf32>
    %186 = arith.mulf %148, %185 : vector<4x128xf32>
    %c0_88 = arith.constant 0 : index
    %c0_89 = arith.constant 0 : index
    %187 = vector.load %arg18[%c0_88, %c0_89] : memref<128x64xf32, #tpu.memory_space<vmem>>, vector<128x64xf32>
    %cst_90 = arith.constant dense<0.000000e+00> : vector<4x64xf32>
    %188 = tpu.matmul %186, %187, %cst_90 {dimension_numbers = #tpu.dot_dimension_numbers<[1], [0], [0], [1], [0, 0, 1, 1], [], []>} : vector<4x128xf32>, vector<128x64xf32>, vector<4x64xf32> -> vector<4x64xf32>
    %189 = arith.addf %120, %188 : vector<4x64xf32>
    %c0_91 = arith.constant 0 : index
    %c0_92 = arith.constant 0 : index
    %c0_93 = arith.constant 0 : index
    %190 = vector.load %arg49[%c0_91, %c0_92, %c0_93] : memref<1x4x64xf32, #tpu.memory_space<vmem>>, vector<1x4x64xf32>
    %191 = vector.shape_cast %190 : vector<1x4x64xf32> to vector<4x64xf32>
    %192 = vector.shape_cast %189 : vector<4x64xf32> to vector<1x4x64xf32>
    tpu.vector_store %arg49[%c0_91, %c0_92, %c0_93], %192 {strides = array<i32>} : memref<1x4x64xf32, #tpu.memory_space<vmem>>, vector<1x4x64xf32>,
    %193 = vector.extract_strided_slice %189 {offsets = [0, 0], sizes = [1, 64], strides = [1, 1]} : vector<4x64xf32> to vector<1x64xf32>
    %cst_94 = arith.constant dense<0.000000e+00> : vector<32xf32>
    %194 = vector.multi_reduction <add>, %3, %cst_94 [0] : vector<64x32xf32> to vector<32xf32>
    %195 = vector.shape_cast %194 : vector<32xf32> to vector<1x32xf32>
    %cst_95 = arith.constant 6.400000e+01 : f32
    %196 = vector.broadcast %cst_95 : f32 to vector<1x32xf32>
    %197 = arith.divf %195, %196 : vector<1x32xf32>
    %c0_96 = arith.constant 0 : index
    %c0_97 = arith.constant 0 : index
    %198 = vector.load %arg19[%c0_96, %c0_97] : memref<64x64xf32, #tpu.memory_space<vmem>>, vector<64x64xf32>
    %cst_98 = arith.constant dense<0.000000e+00> : vector<1x64xf32>
    %199 = tpu.matmul %193, %198, %cst_98 {dimension_numbers = #tpu.dot_dimension_numbers<[1], [0], [0], [1], [0, 0, 1, 1], [], []>} : vector<1x64xf32>, vector<64x64xf32>, vector<1x64xf32> -> vector<1x64xf32>
    %c0_99 = arith.constant 0 : index
    %c0_100 = arith.constant 0 : index
    %200 = vector.load %arg20[%c0_99, %c0_100] : memref<32x64xf32, #tpu.memory_space<vmem>>, vector<32x64xf32>
    %cst_101 = arith.constant dense<0.000000e+00> : vector<1x64xf32>
    %201 = tpu.matmul %197, %200, %cst_101 {dimension_numbers = #tpu.dot_dimension_numbers<[1], [0], [0], [1], [0, 0, 1, 1], [], []>} : vector<1x32xf32>, vector<32x64xf32>, vector<1x64xf32> -> vector<1x64xf32>
    %202 = arith.addf %199, %201 : vector<1x64xf32>
    %c0_102 = arith.constant 0 : index
    %c0_103 = arith.constant 0 : index
    %203 = vector.load %arg21[%c0_102, %c0_103] : memref<1x64xf32, #tpu.memory_space<vmem>>, vector<1x64xf32>
    %204 = arith.addf %202, %203 : vector<1x64xf32>
    %cst_104 = arith.constant 0.000000e+00 : f32
    %205 = vector.broadcast %cst_104 : f32 to vector<1x64xf32>
    %206 = arith.maximumf %204, %205 : vector<1x64xf32>
    %c0_105 = arith.constant 0 : index
    %c0_106 = arith.constant 0 : index
    %207 = vector.load %arg22[%c0_105, %c0_106] : memref<64x4xf32, #tpu.memory_space<vmem>>, vector<64x4xf32>
    %cst_107 = arith.constant dense<0.000000e+00> : vector<1x4xf32>
    %208 = tpu.matmul %206, %207, %cst_107 {dimension_numbers = #tpu.dot_dimension_numbers<[1], [0], [0], [1], [0, 0, 1, 1], [], []>} : vector<1x64xf32>, vector<64x4xf32>, vector<1x4xf32> -> vector<1x4xf32>
    %cst_108 = arith.constant 0.000000e+00 : f32
    %209 = vector.broadcast %cst_108 : f32 to vector<1x4xf32>
    %210 = arith.subf %209, %208 : vector<1x4xf32>
    %211 = math.exp %210 : vector<1x4xf32>
    %cst_109 = arith.constant 1.000000e+00 : f32
    %212 = vector.broadcast %cst_109 : f32 to vector<1x4xf32>
    %213 = arith.addf %212, %211 : vector<1x4xf32>
    %cst_110 = arith.constant 1.000000e+00 : f32
    %214 = vector.broadcast %cst_110 : f32 to vector<1x4xf32>
    %215 = arith.divf %214, %213 : vector<1x4xf32>
    %c0_111 = arith.constant 0 : index
    %c0_112 = arith.constant 0 : index
    %216 = vector.load %arg32[%c0_111, %c0_112] : memref<32x64xf32, #tpu.memory_space<vmem>>, vector<32x64xf32>
    %217 = vector.extract_strided_slice %215 {offsets = [0, 0], sizes = [1, 1], strides = [1, 1]} : vector<1x4xf32> to vector<1x1xf32>
    %c0_113 = arith.constant 0 : index
    %c0_114 = arith.constant 0 : index
    %c0_115 = arith.constant 0 : index
    %218 = vector.load %arg31[%c0_113, %c0_114, %c0_115] : memref<4x32x64xf32, #tpu.memory_space<vmem>>, vector<1x32x64xf32>
    %219 = vector.shape_cast %218 : vector<1x32x64xf32> to vector<32x64xf32>
    %220 = vector.broadcast %217 : vector<1x1xf32> to vector<32x64xf32>
    %221 = arith.mulf %220, %219 : vector<32x64xf32>
    %222 = arith.addf %216, %221 : vector<32x64xf32>
    %223 = vector.extract_strided_slice %215 {offsets = [0, 1], sizes = [1, 1], strides = [1, 1]} : vector<1x4xf32> to vector<1x1xf32>
    %c1 = arith.constant 1 : index
    %c0_116 = arith.constant 0 : index
    %c0_117 = arith.constant 0 : index
    %224 = vector.load %arg31[%c1, %c0_116, %c0_117] : memref<4x32x64xf32, #tpu.memory_space<vmem>>, vector<1x32x64xf32>
    %225 = vector.shape_cast %224 : vector<1x32x64xf32> to vector<32x64xf32>
    %226 = vector.broadcast %223 : vector<1x1xf32> to vector<32x64xf32>
    %227 = arith.mulf %226, %225 : vector<32x64xf32>
    %228 = arith.addf %222, %227 : vector<32x64xf32>
    %229 = vector.extract_strided_slice %215 {offsets = [0, 2], sizes = [1, 1], strides = [1, 1]} : vector<1x4xf32> to vector<1x1xf32>
    %c2 = arith.constant 2 : index
    %c0_118 = arith.constant 0 : index
    %c0_119 = arith.constant 0 : index
    %230 = vector.load %arg31[%c2, %c0_118, %c0_119] : memref<4x32x64xf32, #tpu.memory_space<vmem>>, vector<1x32x64xf32>
    %231 = vector.shape_cast %230 : vector<1x32x64xf32> to vector<32x64xf32>
    %232 = vector.broadcast %229 : vector<1x1xf32> to vector<32x64xf32>
    %233 = arith.mulf %232, %231 : vector<32x64xf32>
    %234 = arith.addf %228, %233 : vector<32x64xf32>
    %235 = vector.extract_strided_slice %215 {offsets = [0, 3], sizes = [1, 1], strides = [1, 1]} : vector<1x4xf32> to vector<1x1xf32>
    %c3 = arith.constant 3 : index
    %c0_120 = arith.constant 0 : index
    %c0_121 = arith.constant 0 : index
    %236 = vector.load %arg31[%c3, %c0_120, %c0_121] : memref<4x32x64xf32, #tpu.memory_space<vmem>>, vector<1x32x64xf32>
    %237 = vector.shape_cast %236 : vector<1x32x64xf32> to vector<32x64xf32>
    %238 = vector.broadcast %235 : vector<1x1xf32> to vector<32x64xf32>
    %239 = arith.mulf %238, %237 : vector<32x64xf32>
    %240 = arith.addf %234, %239 : vector<32x64xf32>
    %cst_122 = arith.constant dense<0.000000e+00> : vector<64x64xf32>
    %241 = tpu.matmul %3, %240, %cst_122 {dimension_numbers = #tpu.dot_dimension_numbers<[1], [0], [0], [1], [0, 0, 1, 1], [], []>} : vector<64x32xf32>, vector<32x64xf32>, vector<64x64xf32> -> vector<64x64xf32>
    %c0_123 = arith.constant 0 : index
    %c0_124 = arith.constant 0 : index
    %242 = vector.load %arg33[%c0_123, %c0_124] : memref<1x64xf32, #tpu.memory_space<vmem>>, vector<1x64xf32>
    %243 = vector.broadcast %242 : vector<1x64xf32> to vector<64x64xf32>
    %244 = arith.addf %241, %243 : vector<64x64xf32>
    %cst_125 = arith.constant 5.000000e-01 : f32
    %245 = vector.broadcast %cst_125 : f32 to vector<64x64xf32>
    %246 = arith.mulf %245, %244 : vector<64x64xf32>
    %cst_126 = arith.constant 0.707106769 : f32
    %247 = vector.broadcast %cst_126 : f32 to vector<64x64xf32>
    %248 = arith.mulf %244, %247 : vector<64x64xf32>
    %249 = math.absf %248 : vector<64x64xf32>
    %cst_127 = arith.constant 0.327591091 : f32
    %250 = vector.broadcast %cst_127 : f32 to vector<64x64xf32>
    %251 = arith.mulf %250, %249 : vector<64x64xf32>
    %cst_128 = arith.constant 1.000000e+00 : f32
    %252 = vector.broadcast %cst_128 : f32 to vector<64x64xf32>
    %253 = arith.addf %252, %251 : vector<64x64xf32>
    %cst_129 = arith.constant 1.000000e+00 : f32
    %254 = vector.broadcast %cst_129 : f32 to vector<64x64xf32>
    %255 = arith.divf %254, %253 : vector<64x64xf32>
    %cst_130 = arith.constant 1.06140542 : f32
    %256 = vector.broadcast %cst_130 : f32 to vector<64x64xf32>
    %257 = arith.mulf %256, %255 : vector<64x64xf32>
    %cst_131 = arith.constant 1.45315206 : f32
    %258 = vector.broadcast %cst_131 : f32 to vector<64x64xf32>
    %259 = arith.subf %257, %258 : vector<64x64xf32>
    %260 = arith.mulf %259, %255 : vector<64x64xf32>
    %cst_132 = arith.constant 1.42141378 : f32
    %261 = vector.broadcast %cst_132 : f32 to vector<64x64xf32>
    %262 = arith.addf %260, %261 : vector<64x64xf32>
    %263 = arith.mulf %262, %255 : vector<64x64xf32>
    %cst_133 = arith.constant 0.284496725 : f32
    %264 = vector.broadcast %cst_133 : f32 to vector<64x64xf32>
    %265 = arith.subf %263, %264 : vector<64x64xf32>
    %266 = arith.mulf %265, %255 : vector<64x64xf32>
    %cst_134 = arith.constant 0.254829586 : f32
    %267 = vector.broadcast %cst_134 : f32 to vector<64x64xf32>
    %268 = arith.addf %266, %267 : vector<64x64xf32>
    %269 = arith.mulf %268, %255 : vector<64x64xf32>
    %cst_135 = arith.constant 0.000000e+00 : f32
    %270 = vector.broadcast %cst_135 : f32 to vector<64x64xf32>
    %271 = arith.subf %270, %249 : vector<64x64xf32>
    %272 = arith.mulf %271, %249 : vector<64x64xf32>
    %273 = math.exp %272 : vector<64x64xf32>
    %274 = arith.mulf %269, %273 : vector<64x64xf32>
    %cst_136 = arith.constant 1.000000e+00 : f32
    %275 = vector.broadcast %cst_136 : f32 to vector<64x64xf32>
    %276 = arith.subf %275, %274 : vector<64x64xf32>
    %cst_137 = arith.constant 0.000000e+00 : f32
    %277 = vector.broadcast %cst_137 : f32 to vector<64x64xf32>
    %278 = arith.cmpf oge, %248, %277 : vector<64x64xf32>
    %cst_138 = arith.constant 0.000000e+00 : f32
    %279 = vector.broadcast %cst_138 : f32 to vector<64x64xf32>
    %280 = arith.subf %279, %276 : vector<64x64xf32>
    %281 = arith.select %278, %276, %280 : vector<64x64xi1>, vector<64x64xf32>
    %cst_139 = arith.constant 1.000000e+00 : f32
    %282 = vector.broadcast %cst_139 : f32 to vector<64x64xf32>
    %283 = arith.addf %282, %281 : vector<64x64xf32>
    %284 = arith.mulf %246, %283 : vector<64x64xf32>
    %cst_140 = arith.constant dense<0.000000e+00> : vector<64xf32>
    %285 = vector.multi_reduction <add>, %284, %cst_140 [0] : vector<64x64xf32> to vector<64xf32>
    %286 = vector.shape_cast %285 : vector<64xf32> to vector<1x64xf32>
    %cst_141 = arith.constant 6.400000e+01 : f32
    %287 = vector.broadcast %cst_141 : f32 to vector<1x64xf32>
    %288 = arith.divf %286, %287 : vector<1x64xf32>
    %c0_142 = arith.constant 0 : index
    %c0_143 = arith.constant 0 : index
    %289 = vector.load %arg23[%c0_142, %c0_143] : memref<64x64xf32, #tpu.memory_space<vmem>>, vector<64x64xf32>
    %cst_144 = arith.constant dense<0.000000e+00> : vector<1x64xf32>
    %290 = tpu.matmul %193, %289, %cst_144 {dimension_numbers = #tpu.dot_dimension_numbers<[1], [0], [0], [1], [0, 0, 1, 1], [], []>} : vector<1x64xf32>, vector<64x64xf32>, vector<1x64xf32> -> vector<1x64xf32>
    %c0_145 = arith.constant 0 : index
    %c0_146 = arith.constant 0 : index
    %291 = vector.load %arg24[%c0_145, %c0_146] : memref<64x64xf32, #tpu.memory_space<vmem>>, vector<64x64xf32>
    %cst_147 = arith.constant dense<0.000000e+00> : vector<1x64xf32>
    %292 = tpu.matmul %288, %291, %cst_147 {dimension_numbers = #tpu.dot_dimension_numbers<[1], [0], [0], [1], [0, 0, 1, 1], [], []>} : vector<1x64xf32>, vector<64x64xf32>, vector<1x64xf32> -> vector<1x64xf32>
    %293 = arith.addf %290, %292 : vector<1x64xf32>
    %c0_148 = arith.constant 0 : index
    %c0_149 = arith.constant 0 : index
    %294 = vector.load %arg25[%c0_148, %c0_149] : memref<1x64xf32, #tpu.memory_space<vmem>>, vector<1x64xf32>
    %295 = arith.addf %293, %294 : vector<1x64xf32>
    %cst_150 = arith.constant 0.000000e+00 : f32
    %296 = vector.broadcast %cst_150 : f32 to vector<1x64xf32>
    %297 = arith.maximumf %295, %296 : vector<1x64xf32>
    %c0_151 = arith.constant 0 : index
    %c0_152 = arith.constant 0 : index
    %298 = vector.load %arg26[%c0_151, %c0_152] : memref<64x16xf32, #tpu.memory_space<vmem>>, vector<64x16xf32>
    %cst_153 = arith.constant dense<0.000000e+00> : vector<1x16xf32>
    %299 = tpu.matmul %297, %298, %cst_153 {dimension_numbers = #tpu.dot_dimension_numbers<[1], [0], [0], [1], [0, 0, 1, 1], [], []>} : vector<1x64xf32>, vector<64x16xf32>, vector<1x16xf32> -> vector<1x16xf32>
    %cst_154 = arith.constant 0.000000e+00 : f32
    %300 = vector.broadcast %cst_154 : f32 to vector<1x16xf32>
    %301 = arith.subf %300, %299 : vector<1x16xf32>
    %302 = math.exp %301 : vector<1x16xf32>
    %cst_155 = arith.constant 1.000000e+00 : f32
    %303 = vector.broadcast %cst_155 : f32 to vector<1x16xf32>
    %304 = arith.addf %303, %302 : vector<1x16xf32>
    %cst_156 = arith.constant 1.000000e+00 : f32
    %305 = vector.broadcast %cst_156 : f32 to vector<1x16xf32>
    %306 = arith.divf %305, %304 : vector<1x16xf32>
    %c0_157 = arith.constant 0 : index
    %c0_158 = arith.constant 0 : index
    %307 = vector.load %arg35[%c0_157, %c0_158] : memref<9x64xf32, #tpu.memory_space<vmem>>, vector<9x64xf32>
    %308 = vector.extract_strided_slice %306 {offsets = [0, 0], sizes = [1, 1], strides = [1, 1]} : vector<1x16xf32> to vector<1x1xf32>
    %c0_159 = arith.constant 0 : index
    %c0_160 = arith.constant 0 : index
    %c0_161 = arith.constant 0 : index
    %309 = vector.load %arg34[%c0_159, %c0_160, %c0_161] : memref<16x9x64xf32, #tpu.memory_space<vmem>>, vector<1x9x64xf32>
    %310 = vector.shape_cast %309 : vector<1x9x64xf32> to vector<9x64xf32>
    %311 = vector.broadcast %308 : vector<1x1xf32> to vector<9x64xf32>
    %312 = arith.mulf %311, %310 : vector<9x64xf32>
    %313 = arith.addf %307, %312 : vector<9x64xf32>
    %314 = vector.extract_strided_slice %306 {offsets = [0, 1], sizes = [1, 1], strides = [1, 1]} : vector<1x16xf32> to vector<1x1xf32>
    %c1_162 = arith.constant 1 : index
    %c0_163 = arith.constant 0 : index
    %c0_164 = arith.constant 0 : index
    %315 = vector.load %arg34[%c1_162, %c0_163, %c0_164] : memref<16x9x64xf32, #tpu.memory_space<vmem>>, vector<1x9x64xf32>
    %316 = vector.shape_cast %315 : vector<1x9x64xf32> to vector<9x64xf32>
    %317 = vector.broadcast %314 : vector<1x1xf32> to vector<9x64xf32>
    %318 = arith.mulf %317, %316 : vector<9x64xf32>
    %319 = arith.addf %313, %318 : vector<9x64xf32>
    %320 = vector.extract_strided_slice %306 {offsets = [0, 2], sizes = [1, 1], strides = [1, 1]} : vector<1x16xf32> to vector<1x1xf32>
    %c2_165 = arith.constant 2 : index
    %c0_166 = arith.constant 0 : index
    %c0_167 = arith.constant 0 : index
    %321 = vector.load %arg34[%c2_165, %c0_166, %c0_167] : memref<16x9x64xf32, #tpu.memory_space<vmem>>, vector<1x9x64xf32>
    %322 = vector.shape_cast %321 : vector<1x9x64xf32> to vector<9x64xf32>
    %323 = vector.broadcast %320 : vector<1x1xf32> to vector<9x64xf32>
    %324 = arith.mulf %323, %322 : vector<9x64xf32>
    %325 = arith.addf %319, %324 : vector<9x64xf32>
    %326 = vector.extract_strided_slice %306 {offsets = [0, 3], sizes = [1, 1], strides = [1, 1]} : vector<1x16xf32> to vector<1x1xf32>
    %c3_168 = arith.constant 3 : index
    %c0_169 = arith.constant 0 : index
    %c0_170 = arith.constant 0 : index
    %327 = vector.load %arg34[%c3_168, %c0_169, %c0_170] : memref<16x9x64xf32, #tpu.memory_space<vmem>>, vector<1x9x64xf32>
    %328 = vector.shape_cast %327 : vector<1x9x64xf32> to vector<9x64xf32>
    %329 = vector.broadcast %326 : vector<1x1xf32> to vector<9x64xf32>
    %330 = arith.mulf %329, %328 : vector<9x64xf32>
    %331 = arith.addf %325, %330 : vector<9x64xf32>
    %332 = vector.extract_strided_slice %306 {offsets = [0, 4], sizes = [1, 1], strides = [1, 1]} : vector<1x16xf32> to vector<1x1xf32>
    %c4 = arith.constant 4 : index
    %c0_171 = arith.constant 0 : index
    %c0_172 = arith.constant 0 : index
    %333 = vector.load %arg34[%c4, %c0_171, %c0_172] : memref<16x9x64xf32, #tpu.memory_space<vmem>>, vector<1x9x64xf32>
    %334 = vector.shape_cast %333 : vector<1x9x64xf32> to vector<9x64xf32>
    %335 = vector.broadcast %332 : vector<1x1xf32> to vector<9x64xf32>
    %336 = arith.mulf %335, %334 : vector<9x64xf32>
    %337 = arith.addf %331, %336 : vector<9x64xf32>
    %338 = vector.extract_strided_slice %306 {offsets = [0, 5], sizes = [1, 1], strides = [1, 1]} : vector<1x16xf32> to vector<1x1xf32>
    %c5 = arith.constant 5 : index
    %c0_173 = arith.constant 0 : index
    %c0_174 = arith.constant 0 : index
    %339 = vector.load %arg34[%c5, %c0_173, %c0_174] : memref<16x9x64xf32, #tpu.memory_space<vmem>>, vector<1x9x64xf32>
    %340 = vector.shape_cast %339 : vector<1x9x64xf32> to vector<9x64xf32>
    %341 = vector.broadcast %338 : vector<1x1xf32> to vector<9x64xf32>
    %342 = arith.mulf %341, %340 : vector<9x64xf32>
    %343 = arith.addf %337, %342 : vector<9x64xf32>
    %344 = vector.extract_strided_slice %306 {offsets = [0, 6], sizes = [1, 1], strides = [1, 1]} : vector<1x16xf32> to vector<1x1xf32>
    %c6 = arith.constant 6 : index
    %c0_175 = arith.constant 0 : index
    %c0_176 = arith.constant 0 : index
    %345 = vector.load %arg34[%c6, %c0_175, %c0_176] : memref<16x9x64xf32, #tpu.memory_space<vmem>>, vector<1x9x64xf32>
    %346 = vector.shape_cast %345 : vector<1x9x64xf32> to vector<9x64xf32>
    %347 = vector.broadcast %344 : vector<1x1xf32> to vector<9x64xf32>
    %348 = arith.mulf %347, %346 : vector<9x64xf32>
    %349 = arith.addf %343, %348 : vector<9x64xf32>
    %350 = vector.extract_strided_slice %306 {offsets = [0, 7], sizes = [1, 1], strides = [1, 1]} : vector<1x16xf32> to vector<1x1xf32>
    %c7 = arith.constant 7 : index
    %c0_177 = arith.constant 0 : index
    %c0_178 = arith.constant 0 : index
    %351 = vector.load %arg34[%c7, %c0_177, %c0_178] : memref<16x9x64xf32, #tpu.memory_space<vmem>>, vector<1x9x64xf32>
    %352 = vector.shape_cast %351 : vector<1x9x64xf32> to vector<9x64xf32>
    %353 = vector.broadcast %350 : vector<1x1xf32> to vector<9x64xf32>
    %354 = arith.mulf %353, %352 : vector<9x64xf32>
    %355 = arith.addf %349, %354 : vector<9x64xf32>
    %356 = vector.extract_strided_slice %306 {offsets = [0, 8], sizes = [1, 1], strides = [1, 1]} : vector<1x16xf32> to vector<1x1xf32>
    %c8 = arith.constant 8 : index
    %c0_179 = arith.constant 0 : index
    %c0_180 = arith.constant 0 : index
    %357 = vector.load %arg34[%c8, %c0_179, %c0_180] : memref<16x9x64xf32, #tpu.memory_space<vmem>>, vector<1x9x64xf32>
    %358 = vector.shape_cast %357 : vector<1x9x64xf32> to vector<9x64xf32>
    %359 = vector.broadcast %356 : vector<1x1xf32> to vector<9x64xf32>
    %360 = arith.mulf %359, %358 : vector<9x64xf32>
    %361 = arith.addf %355, %360 : vector<9x64xf32>
    %362 = vector.extract_strided_slice %306 {offsets = [0, 9], sizes = [1, 1], strides = [1, 1]} : vector<1x16xf32> to vector<1x1xf32>
    %c9 = arith.constant 9 : index
    %c0_181 = arith.constant 0 : index
    %c0_182 = arith.constant 0 : index
    %363 = vector.load %arg34[%c9, %c0_181, %c0_182] : memref<16x9x64xf32, #tpu.memory_space<vmem>>, vector<1x9x64xf32>
    %364 = vector.shape_cast %363 : vector<1x9x64xf32> to vector<9x64xf32>
    %365 = vector.broadcast %362 : vector<1x1xf32> to vector<9x64xf32>
    %366 = arith.mulf %365, %364 : vector<9x64xf32>
    %367 = arith.addf %361, %366 : vector<9x64xf32>
    %368 = vector.extract_strided_slice %306 {offsets = [0, 10], sizes = [1, 1], strides = [1, 1]} : vector<1x16xf32> to vector<1x1xf32>
    %c10 = arith.constant 10 : index
    %c0_183 = arith.constant 0 : index
    %c0_184 = arith.constant 0 : index
    %369 = vector.load %arg34[%c10, %c0_183, %c0_184] : memref<16x9x64xf32, #tpu.memory_space<vmem>>, vector<1x9x64xf32>
    %370 = vector.shape_cast %369 : vector<1x9x64xf32> to vector<9x64xf32>
    %371 = vector.broadcast %368 : vector<1x1xf32> to vector<9x64xf32>
    %372 = arith.mulf %371, %370 : vector<9x64xf32>
    %373 = arith.addf %367, %372 : vector<9x64xf32>
    %374 = vector.extract_strided_slice %306 {offsets = [0, 11], sizes = [1, 1], strides = [1, 1]} : vector<1x16xf32> to vector<1x1xf32>
    %c11 = arith.constant 11 : index
    %c0_185 = arith.constant 0 : index
    %c0_186 = arith.constant 0 : index
    %375 = vector.load %arg34[%c11, %c0_185, %c0_186] : memref<16x9x64xf32, #tpu.memory_space<vmem>>, vector<1x9x64xf32>
    %376 = vector.shape_cast %375 : vector<1x9x64xf32> to vector<9x64xf32>
    %377 = vector.broadcast %374 : vector<1x1xf32> to vector<9x64xf32>
    %378 = arith.mulf %377, %376 : vector<9x64xf32>
    %379 = arith.addf %373, %378 : vector<9x64xf32>
    %380 = vector.extract_strided_slice %306 {offsets = [0, 12], sizes = [1, 1], strides = [1, 1]} : vector<1x16xf32> to vector<1x1xf32>
    %c12 = arith.constant 12 : index
    %c0_187 = arith.constant 0 : index
    %c0_188 = arith.constant 0 : index
    %381 = vector.load %arg34[%c12, %c0_187, %c0_188] : memref<16x9x64xf32, #tpu.memory_space<vmem>>, vector<1x9x64xf32>
    %382 = vector.shape_cast %381 : vector<1x9x64xf32> to vector<9x64xf32>
    %383 = vector.broadcast %380 : vector<1x1xf32> to vector<9x64xf32>
    %384 = arith.mulf %383, %382 : vector<9x64xf32>
    %385 = arith.addf %379, %384 : vector<9x64xf32>
    %386 = vector.extract_strided_slice %306 {offsets = [0, 13], sizes = [1, 1], strides = [1, 1]} : vector<1x16xf32> to vector<1x1xf32>
    %c13 = arith.constant 13 : index
    %c0_189 = arith.constant 0 : index
    %c0_190 = arith.constant 0 : index
    %387 = vector.load %arg34[%c13, %c0_189, %c0_190] : memref<16x9x64xf32, #tpu.memory_space<vmem>>, vector<1x9x64xf32>
    %388 = vector.shape_cast %387 : vector<1x9x64xf32> to vector<9x64xf32>
    %389 = vector.broadcast %386 : vector<1x1xf32> to vector<9x64xf32>
    %390 = arith.mulf %389, %388 : vector<9x64xf32>
    %391 = arith.addf %385, %390 : vector<9x64xf32>
    %392 = vector.extract_strided_slice %306 {offsets = [0, 14], sizes = [1, 1], strides = [1, 1]} : vector<1x16xf32> to vector<1x1xf32>
    %c14 = arith.constant 14 : index
    %c0_191 = arith.constant 0 : index
    %c0_192 = arith.constant 0 : index
    %393 = vector.load %arg34[%c14, %c0_191, %c0_192] : memref<16x9x64xf32, #tpu.memory_space<vmem>>, vector<1x9x64xf32>
    %394 = vector.shape_cast %393 : vector<1x9x64xf32> to vector<9x64xf32>
    %395 = vector.broadcast %392 : vector<1x1xf32> to vector<9x64xf32>
    %396 = arith.mulf %395, %394 : vector<9x64xf32>
    %397 = arith.addf %391, %396 : vector<9x64xf32>
    %398 = vector.extract_strided_slice %306 {offsets = [0, 15], sizes = [1, 1], strides = [1, 1]} : vector<1x16xf32> to vector<1x1xf32>
    %c15 = arith.constant 15 : index
    %c0_193 = arith.constant 0 : index
    %c0_194 = arith.constant 0 : index
    %399 = vector.load %arg34[%c15, %c0_193, %c0_194] : memref<16x9x64xf32, #tpu.memory_space<vmem>>, vector<1x9x64xf32>
    %400 = vector.shape_cast %399 : vector<1x9x64xf32> to vector<9x64xf32>
    %401 = vector.broadcast %398 : vector<1x1xf32> to vector<9x64xf32>
    %402 = arith.mulf %401, %400 : vector<9x64xf32>
    %403 = arith.addf %397, %402 : vector<9x64xf32>
    %cst_195 = arith.constant 0.000000e+00 : f32
    %404 = vector.broadcast %cst_195 : f32 to vector<96x64xf32>
    %c0_196 = arith.constant 0 : index
    %c0_197 = arith.constant 0 : index
    %405 = vector.load %arg51[%c0_196, %c0_197] : memref<96x64xf32, #tpu.memory_space<vmem>>, vector<96x64xf32>
    tpu.vector_store %arg51[%c0_196, %c0_197], %404 {strides = array<i32>} : memref<96x64xf32, #tpu.memory_space<vmem>>, vector<96x64xf32>,
    %c16 = arith.constant 16 : index
    %c0_198 = arith.constant 0 : index
    %406 = vector.load %arg51[%c16, %c0_198] : memref<96x64xf32, #tpu.memory_space<vmem>>, vector<64x64xf32>
    tpu.vector_store %arg51[%c16, %c0_198], %284 {strides = array<i32>} : memref<96x64xf32, #tpu.memory_space<vmem>>, vector<64x64xf32>,
    %c0_199 = arith.constant 0 : index
    %c0_200 = arith.constant 0 : index
    %407 = vector.load %arg51[%c0_199, %c0_200] : memref<96x64xf32, #tpu.memory_space<vmem>>, vector<96x64xf32>
    %408 = vector.extract_strided_slice %4 {offsets = [0, 0], sizes = [64, 1], strides = [1, 1]} : vector<64x2xf32> to vector<64x1xf32>
    %409 = vector.extract_strided_slice %4 {offsets = [0, 1], sizes = [64, 1], strides = [1, 1]} : vector<64x2xf32> to vector<64x1xf32>
    %cst_201 = arith.constant 0.000000e+00 : f32
    %410 = vector.broadcast %cst_201 : f32 to vector<64x64xf32>
    %411 = vector.extract_strided_slice %407 {offsets = [7, 0], sizes = [64, 64], strides = [1, 1]} : vector<96x64xf32> to vector<64x64xf32>
    %412 = vector.broadcast %408 : vector<64x1xf32> to vector<64x64xf32>
    %413 = arith.mulf %411, %412 : vector<64x64xf32>
    %414 = vector.extract_strided_slice %403 {offsets = [0, 0], sizes = [1, 64], strides = [1, 1]} : vector<9x64xf32> to vector<1x64xf32>
    %415 = vector.broadcast %414 : vector<1x64xf32> to vector<64x64xf32>
    %416 = arith.mulf %413, %415 : vector<64x64xf32>
    %417 = arith.addf %410, %416 : vector<64x64xf32>
    %418 = vector.extract_strided_slice %407 {offsets = [8, 0], sizes = [64, 64], strides = [1, 1]} : vector<96x64xf32> to vector<64x64xf32>
    %419 = vector.extract_strided_slice %403 {offsets = [1, 0], sizes = [1, 64], strides = [1, 1]} : vector<9x64xf32> to vector<1x64xf32>
    %420 = vector.broadcast %419 : vector<1x64xf32> to vector<64x64xf32>
    %421 = arith.mulf %418, %420 : vector<64x64xf32>
    %422 = arith.addf %417, %421 : vector<64x64xf32>
    %423 = vector.extract_strided_slice %407 {offsets = [9, 0], sizes = [64, 64], strides = [1, 1]} : vector<96x64xf32> to vector<64x64xf32>
    %424 = vector.broadcast %409 : vector<64x1xf32> to vector<64x64xf32>
    %425 = arith.mulf %423, %424 : vector<64x64xf32>
    %426 = vector.extract_strided_slice %403 {offsets = [2, 0], sizes = [1, 64], strides = [1, 1]} : vector<9x64xf32> to vector<1x64xf32>
    %427 = vector.broadcast %426 : vector<1x64xf32> to vector<64x64xf32>
    %428 = arith.mulf %425, %427 : vector<64x64xf32>
    %429 = arith.addf %422, %428 : vector<64x64xf32>
    %430 = vector.extract_strided_slice %407 {offsets = [15, 0], sizes = [64, 64], strides = [1, 1]} : vector<96x64xf32> to vector<64x64xf32>
    %431 = vector.broadcast %408 : vector<64x1xf32> to vector<64x64xf32>
    %432 = arith.mulf %430, %431 : vector<64x64xf32>
    %433 = vector.extract_strided_slice %403 {offsets = [3, 0], sizes = [1, 64], strides = [1, 1]} : vector<9x64xf32> to vector<1x64xf32>
    %434 = vector.broadcast %433 : vector<1x64xf32> to vector<64x64xf32>
    %435 = arith.mulf %432, %434 : vector<64x64xf32>
    %436 = arith.addf %429, %435 : vector<64x64xf32>
    %437 = vector.extract_strided_slice %407 {offsets = [16, 0], sizes = [64, 64], strides = [1, 1]} : vector<96x64xf32> to vector<64x64xf32>
    %438 = vector.extract_strided_slice %403 {offsets = [4, 0], sizes = [1, 64], strides = [1, 1]} : vector<9x64xf32> to vector<1x64xf32>
    %439 = vector.broadcast %438 : vector<1x64xf32> to vector<64x64xf32>
    %440 = arith.mulf %437, %439 : vector<64x64xf32>
    %441 = arith.addf %436, %440 : vector<64x64xf32>
    %442 = vector.extract_strided_slice %407 {offsets = [17, 0], sizes = [64, 64], strides = [1, 1]} : vector<96x64xf32> to vector<64x64xf32>
    %443 = vector.broadcast %409 : vector<64x1xf32> to vector<64x64xf32>
    %444 = arith.mulf %442, %443 : vector<64x64xf32>
    %445 = vector.extract_strided_slice %403 {offsets = [5, 0], sizes = [1, 64], strides = [1, 1]} : vector<9x64xf32> to vector<1x64xf32>
    %446 = vector.broadcast %445 : vector<1x64xf32> to vector<64x64xf32>
    %447 = arith.mulf %444, %446 : vector<64x64xf32>
    %448 = arith.addf %441, %447 : vector<64x64xf32>
    %449 = vector.extract_strided_slice %407 {offsets = [23, 0], sizes = [64, 64], strides = [1, 1]} : vector<96x64xf32> to vector<64x64xf32>
    %450 = vector.broadcast %408 : vector<64x1xf32> to vector<64x64xf32>
    %451 = arith.mulf %449, %450 : vector<64x64xf32>
    %452 = vector.extract_strided_slice %403 {offsets = [6, 0], sizes = [1, 64], strides = [1, 1]} : vector<9x64xf32> to vector<1x64xf32>
    %453 = vector.broadcast %452 : vector<1x64xf32> to vector<64x64xf32>
    %454 = arith.mulf %451, %453 : vector<64x64xf32>
    %455 = arith.addf %448, %454 : vector<64x64xf32>
    %456 = vector.extract_strided_slice %407 {offsets = [24, 0], sizes = [64, 64], strides = [1, 1]} : vector<96x64xf32> to vector<64x64xf32>
    %457 = vector.extract_strided_slice %403 {offsets = [7, 0], sizes = [1, 64], strides = [1, 1]} : vector<9x64xf32> to vector<1x64xf32>
    %458 = vector.broadcast %457 : vector<1x64xf32> to vector<64x64xf32>
    %459 = arith.mulf %456, %458 : vector<64x64xf32>
    %460 = arith.addf %455, %459 : vector<64x64xf32>
    %461 = vector.extract_strided_slice %407 {offsets = [25, 0], sizes = [64, 64], strides = [1, 1]} : vector<96x64xf32> to vector<64x64xf32>
    %462 = vector.broadcast %409 : vector<64x1xf32> to vector<64x64xf32>
    %463 = arith.mulf %461, %462 : vector<64x64xf32>
    %464 = vector.extract_strided_slice %403 {offsets = [8, 0], sizes = [1, 64], strides = [1, 1]} : vector<9x64xf32> to vector<1x64xf32>
    %465 = vector.broadcast %464 : vector<1x64xf32> to vector<64x64xf32>
    %466 = arith.mulf %463, %465 : vector<64x64xf32>
    %467 = arith.addf %460, %466 : vector<64x64xf32>
    %c0_202 = arith.constant 0 : index
    %c0_203 = arith.constant 0 : index
    %468 = vector.load %arg36[%c0_202, %c0_203] : memref<1x64xf32, #tpu.memory_space<vmem>>, vector<1x64xf32>
    %469 = vector.broadcast %468 : vector<1x64xf32> to vector<64x64xf32>
    %470 = arith.addf %467, %469 : vector<64x64xf32>
    %cst_204 = arith.constant 5.000000e-01 : f32
    %471 = vector.broadcast %cst_204 : f32 to vector<64x64xf32>
    %472 = arith.mulf %471, %470 : vector<64x64xf32>
    %cst_205 = arith.constant 0.707106769 : f32
    %473 = vector.broadcast %cst_205 : f32 to vector<64x64xf32>
    %474 = arith.mulf %470, %473 : vector<64x64xf32>
    %475 = math.absf %474 : vector<64x64xf32>
    %cst_206 = arith.constant 0.327591091 : f32
    %476 = vector.broadcast %cst_206 : f32 to vector<64x64xf32>
    %477 = arith.mulf %476, %475 : vector<64x64xf32>
    %cst_207 = arith.constant 1.000000e+00 : f32
    %478 = vector.broadcast %cst_207 : f32 to vector<64x64xf32>
    %479 = arith.addf %478, %477 : vector<64x64xf32>
    %cst_208 = arith.constant 1.000000e+00 : f32
    %480 = vector.broadcast %cst_208 : f32 to vector<64x64xf32>
    %481 = arith.divf %480, %479 : vector<64x64xf32>
    %cst_209 = arith.constant 1.06140542 : f32
    %482 = vector.broadcast %cst_209 : f32 to vector<64x64xf32>
    %483 = arith.mulf %482, %481 : vector<64x64xf32>
    %cst_210 = arith.constant 1.45315206 : f32
    %484 = vector.broadcast %cst_210 : f32 to vector<64x64xf32>
    %485 = arith.subf %483, %484 : vector<64x64xf32>
    %486 = arith.mulf %485, %481 : vector<64x64xf32>
    %cst_211 = arith.constant 1.42141378 : f32
    %487 = vector.broadcast %cst_211 : f32 to vector<64x64xf32>
    %488 = arith.addf %486, %487 : vector<64x64xf32>
    %489 = arith.mulf %488, %481 : vector<64x64xf32>
    %cst_212 = arith.constant 0.284496725 : f32
    %490 = vector.broadcast %cst_212 : f32 to vector<64x64xf32>
    %491 = arith.subf %489, %490 : vector<64x64xf32>
    %492 = arith.mulf %491, %481 : vector<64x64xf32>
    %cst_213 = arith.constant 0.254829586 : f32
    %493 = vector.broadcast %cst_213 : f32 to vector<64x64xf32>
    %494 = arith.addf %492, %493 : vector<64x64xf32>
    %495 = arith.mulf %494, %481 : vector<64x64xf32>
    %cst_214 = arith.constant 0.000000e+00 : f32
    %496 = vector.broadcast %cst_214 : f32 to vector<64x64xf32>
    %497 = arith.subf %496, %475 : vector<64x64xf32>
    %498 = arith.mulf %497, %475 : vector<64x64xf32>
    %499 = math.exp %498 : vector<64x64xf32>
    %500 = arith.mulf %495, %499 : vector<64x64xf32>
    %cst_215 = arith.constant 1.000000e+00 : f32
    %501 = vector.broadcast %cst_215 : f32 to vector<64x64xf32>
    %502 = arith.subf %501, %500 : vector<64x64xf32>
    %cst_216 = arith.constant 0.000000e+00 : f32
    %503 = vector.broadcast %cst_216 : f32 to vector<64x64xf32>
    %504 = arith.cmpf oge, %474, %503 : vector<64x64xf32>
    %cst_217 = arith.constant 0.000000e+00 : f32
    %505 = vector.broadcast %cst_217 : f32 to vector<64x64xf32>
    %506 = arith.subf %505, %502 : vector<64x64xf32>
    %507 = arith.select %504, %502, %506 : vector<64x64xi1>, vector<64x64xf32>
    %cst_218 = arith.constant 1.000000e+00 : f32
    %508 = vector.broadcast %cst_218 : f32 to vector<64x64xf32>
    %509 = arith.addf %508, %507 : vector<64x64xf32>
    %510 = arith.mulf %472, %509 : vector<64x64xf32>
    %cst_219 = arith.constant dense<0.000000e+00> : vector<64xf32>
    %511 = vector.multi_reduction <add>, %510, %cst_219 [0] : vector<64x64xf32> to vector<64xf32>
    %512 = vector.shape_cast %511 : vector<64xf32> to vector<1x64xf32>
    %cst_220 = arith.constant 6.400000e+01 : f32
    %513 = vector.broadcast %cst_220 : f32 to vector<1x64xf32>
    %514 = arith.divf %512, %513 : vector<1x64xf32>
    %c0_221 = arith.constant 0 : index
    %c0_222 = arith.constant 0 : index
    %515 = vector.load %arg27[%c0_221, %c0_222] : memref<64x64xf32, #tpu.memory_space<vmem>>, vector<64x64xf32>
    %cst_223 = arith.constant dense<0.000000e+00> : vector<1x64xf32>
    %516 = tpu.matmul %193, %515, %cst_223 {dimension_numbers = #tpu.dot_dimension_numbers<[1], [0], [0], [1], [0, 0, 1, 1], [], []>} : vector<1x64xf32>, vector<64x64xf32>, vector<1x64xf32> -> vector<1x64xf32>
    %c0_224 = arith.constant 0 : index
    %c0_225 = arith.constant 0 : index
    %517 = vector.load %arg28[%c0_224, %c0_225] : memref<64x64xf32, #tpu.memory_space<vmem>>, vector<64x64xf32>
    %cst_226 = arith.constant dense<0.000000e+00> : vector<1x64xf32>
    %518 = tpu.matmul %514, %517, %cst_226 {dimension_numbers = #tpu.dot_dimension_numbers<[1], [0], [0], [1], [0, 0, 1, 1], [], []>} : vector<1x64xf32>, vector<64x64xf32>, vector<1x64xf32> -> vector<1x64xf32>
    %519 = arith.addf %516, %518 : vector<1x64xf32>
    %c0_227 = arith.constant 0 : index
    %c0_228 = arith.constant 0 : index
    %520 = vector.load %arg29[%c0_227, %c0_228] : memref<1x64xf32, #tpu.memory_space<vmem>>, vector<1x64xf32>
    %521 = arith.addf %519, %520 : vector<1x64xf32>
    %cst_229 = arith.constant 0.000000e+00 : f32
    %522 = vector.broadcast %cst_229 : f32 to vector<1x64xf32>
    %523 = arith.maximumf %521, %522 : vector<1x64xf32>
    %c0_230 = arith.constant 0 : index
    %c0_231 = arith.constant 0 : index
    %524 = vector.load %arg30[%c0_230, %c0_231] : memref<64x4xf32, #tpu.memory_space<vmem>>, vector<64x4xf32>
    %cst_232 = arith.constant dense<0.000000e+00> : vector<1x4xf32>
    %525 = tpu.matmul %523, %524, %cst_232 {dimension_numbers = #tpu.dot_dimension_numbers<[1], [0], [0], [1], [0, 0, 1, 1], [], []>} : vector<1x64xf32>, vector<64x4xf32>, vector<1x4xf32> -> vector<1x4xf32>
    %cst_233 = arith.constant 0.000000e+00 : f32
    %526 = vector.broadcast %cst_233 : f32 to vector<1x4xf32>
    %527 = arith.subf %526, %525 : vector<1x4xf32>
    %528 = math.exp %527 : vector<1x4xf32>
    %cst_234 = arith.constant 1.000000e+00 : f32
    %529 = vector.broadcast %cst_234 : f32 to vector<1x4xf32>
    %530 = arith.addf %529, %528 : vector<1x4xf32>
    %cst_235 = arith.constant 1.000000e+00 : f32
    %531 = vector.broadcast %cst_235 : f32 to vector<1x4xf32>
    %532 = arith.divf %531, %530 : vector<1x4xf32>
    %c0_236 = arith.constant 0 : index
    %c0_237 = arith.constant 0 : index
    %533 = vector.load %arg38[%c0_236, %c0_237] : memref<64x32xf32, #tpu.memory_space<vmem>>, vector<64x32xf32>
    %534 = vector.extract_strided_slice %532 {offsets = [0, 0], sizes = [1, 1], strides = [1, 1]} : vector<1x4xf32> to vector<1x1xf32>
    %c0_238 = arith.constant 0 : index
    %c0_239 = arith.constant 0 : index
    %c0_240 = arith.constant 0 : index
    %535 = vector.load %arg37[%c0_238, %c0_239, %c0_240] : memref<4x64x32xf32, #tpu.memory_space<vmem>>, vector<1x64x32xf32>
    %536 = vector.shape_cast %535 : vector<1x64x32xf32> to vector<64x32xf32>
    %537 = vector.broadcast %534 : vector<1x1xf32> to vector<64x32xf32>
    %538 = arith.mulf %537, %536 : vector<64x32xf32>
    %539 = arith.addf %533, %538 : vector<64x32xf32>
    %540 = vector.extract_strided_slice %532 {offsets = [0, 1], sizes = [1, 1], strides = [1, 1]} : vector<1x4xf32> to vector<1x1xf32>
    %c1_241 = arith.constant 1 : index
    %c0_242 = arith.constant 0 : index
    %c0_243 = arith.constant 0 : index
    %541 = vector.load %arg37[%c1_241, %c0_242, %c0_243] : memref<4x64x32xf32, #tpu.memory_space<vmem>>, vector<1x64x32xf32>
    %542 = vector.shape_cast %541 : vector<1x64x32xf32> to vector<64x32xf32>
    %543 = vector.broadcast %540 : vector<1x1xf32> to vector<64x32xf32>
    %544 = arith.mulf %543, %542 : vector<64x32xf32>
    %545 = arith.addf %539, %544 : vector<64x32xf32>
    %546 = vector.extract_strided_slice %532 {offsets = [0, 2], sizes = [1, 1], strides = [1, 1]} : vector<1x4xf32> to vector<1x1xf32>
    %c2_244 = arith.constant 2 : index
    %c0_245 = arith.constant 0 : index
    %c0_246 = arith.constant 0 : index
    %547 = vector.load %arg37[%c2_244, %c0_245, %c0_246] : memref<4x64x32xf32, #tpu.memory_space<vmem>>, vector<1x64x32xf32>
    %548 = vector.shape_cast %547 : vector<1x64x32xf32> to vector<64x32xf32>
    %549 = vector.broadcast %546 : vector<1x1xf32> to vector<64x32xf32>
    %550 = arith.mulf %549, %548 : vector<64x32xf32>
    %551 = arith.addf %545, %550 : vector<64x32xf32>
    %552 = vector.extract_strided_slice %532 {offsets = [0, 3], sizes = [1, 1], strides = [1, 1]} : vector<1x4xf32> to vector<1x1xf32>
    %c3_247 = arith.constant 3 : index
    %c0_248 = arith.constant 0 : index
    %c0_249 = arith.constant 0 : index
    %553 = vector.load %arg37[%c3_247, %c0_248, %c0_249] : memref<4x64x32xf32, #tpu.memory_space<vmem>>, vector<1x64x32xf32>
    %554 = vector.shape_cast %553 : vector<1x64x32xf32> to vector<64x32xf32>
    %555 = vector.broadcast %552 : vector<1x1xf32> to vector<64x32xf32>
    %556 = arith.mulf %555, %554 : vector<64x32xf32>
    %557 = arith.addf %551, %556 : vector<64x32xf32>
    %cst_250 = arith.constant dense<0.000000e+00> : vector<64x32xf32>
    %558 = tpu.matmul %510, %557, %cst_250 {dimension_numbers = #tpu.dot_dimension_numbers<[1], [0], [0], [1], [0, 0, 1, 1], [], []>} : vector<64x64xf32>, vector<64x32xf32>, vector<64x32xf32> -> vector<64x32xf32>
    %c0_251 = arith.constant 0 : index
    %c0_252 = arith.constant 0 : index
    %559 = vector.load %arg39[%c0_251, %c0_252] : memref<1x32xf32, #tpu.memory_space<vmem>>, vector<1x32xf32>
    %560 = vector.broadcast %559 : vector<1x32xf32> to vector<64x32xf32>
    %561 = arith.addf %558, %560 : vector<64x32xf32>
    %cst_253 = arith.constant dense<0.000000e+00> : vector<64xf32>
    %562 = vector.multi_reduction <add>, %561, %cst_253 [1] : vector<64x32xf32> to vector<64xf32>
    %563 = vector.shape_cast %562 : vector<64xf32> to vector<64x1xf32>
    %cst_254 = arith.constant 3.200000e+01 : f32
    %564 = vector.broadcast %cst_254 : f32 to vector<64x1xf32>
    %565 = arith.divf %563, %564 : vector<64x1xf32>
    %cst_255 = arith.constant dense<0.000000e+00> : vector<1xf32>
    %566 = vector.multi_reduction <add>, %565, %cst_255 [0] : vector<64x1xf32> to vector<1xf32>
    %567 = vector.shape_cast %566 : vector<1xf32> to vector<1x1xf32>
    %cst_256 = arith.constant 6.400000e+01 : f32
    %568 = vector.broadcast %cst_256 : f32 to vector<1x1xf32>
    %569 = arith.divf %567, %568 : vector<1x1xf32>
    %570 = vector.broadcast %569 : vector<1x1xf32> to vector<64x32xf32>
    %571 = arith.subf %561, %570 : vector<64x32xf32>
    %572 = arith.mulf %571, %571 : vector<64x32xf32>
    %cst_257 = arith.constant dense<0.000000e+00> : vector<64xf32>
    %573 = vector.multi_reduction <add>, %572, %cst_257 [1] : vector<64x32xf32> to vector<64xf32>
    %574 = vector.shape_cast %573 : vector<64xf32> to vector<64x1xf32>
    %cst_258 = arith.constant 3.200000e+01 : f32
    %575 = vector.broadcast %cst_258 : f32 to vector<64x1xf32>
    %576 = arith.divf %574, %575 : vector<64x1xf32>
    %cst_259 = arith.constant dense<0.000000e+00> : vector<1xf32>
    %577 = vector.multi_reduction <add>, %576, %cst_259 [0] : vector<64x1xf32> to vector<1xf32>
    %578 = vector.shape_cast %577 : vector<1xf32> to vector<1x1xf32>
    %cst_260 = arith.constant 6.400000e+01 : f32
    %579 = vector.broadcast %cst_260 : f32 to vector<1x1xf32>
    %580 = arith.divf %578, %579 : vector<1x1xf32>
    %581 = vector.broadcast %569 : vector<1x1xf32> to vector<64x32xf32>
    %582 = arith.subf %561, %581 : vector<64x32xf32>
    %cst_261 = arith.constant 9.99999974E-6 : f32
    %583 = vector.broadcast %cst_261 : f32 to vector<1x1xf32>
    %584 = arith.addf %580, %583 : vector<1x1xf32>
    %585 = math.rsqrt %584 : vector<1x1xf32>
    %586 = vector.broadcast %585 : vector<1x1xf32> to vector<64x32xf32>
    %587 = arith.mulf %582, %586 : vector<64x32xf32>
    %c0_262 = arith.constant 0 : index
    %c0_263 = arith.constant 0 : index
    %588 = vector.load %arg40[%c0_262, %c0_263] : memref<1x32xf32, #tpu.memory_space<vmem>>, vector<1x32xf32>
    %589 = vector.broadcast %588 : vector<1x32xf32> to vector<64x32xf32>
    %590 = arith.mulf %587, %589 : vector<64x32xf32>
    %c0_264 = arith.constant 0 : index
    %c0_265 = arith.constant 0 : index
    %591 = vector.load %arg41[%c0_264, %c0_265] : memref<1x32xf32, #tpu.memory_space<vmem>>, vector<1x32xf32>
    %592 = vector.broadcast %591 : vector<1x32xf32> to vector<64x32xf32>
    %593 = arith.addf %590, %592 : vector<64x32xf32>
    %c0_266 = arith.constant 0 : index
    %c0_267 = arith.constant 0 : index
    %594 = vector.load %arg42[%c0_266, %c0_267] : memref<32x96xf32, #tpu.memory_space<vmem>>, vector<32x96xf32>
    %cst_268 = arith.constant dense<0.000000e+00> : vector<64x96xf32>
    %595 = tpu.matmul %593, %594, %cst_268 {dimension_numbers = #tpu.dot_dimension_numbers<[1], [0], [0], [1], [0, 0, 1, 1], [], []>} : vector<64x32xf32>, vector<32x96xf32>, vector<64x96xf32> -> vector<64x96xf32>
    %c0_269 = arith.constant 0 : index
    %c0_270 = arith.constant 0 : index
    %596 = vector.load %arg43[%c0_269, %c0_270] : memref<1x96xf32, #tpu.memory_space<vmem>>, vector<1x96xf32>
    %597 = vector.broadcast %596 : vector<1x96xf32> to vector<64x96xf32>
    %598 = arith.addf %595, %597 : vector<64x96xf32>
    %cst_271 = arith.constant 5.000000e-01 : f32
    %599 = vector.broadcast %cst_271 : f32 to vector<64x96xf32>
    %600 = arith.mulf %599, %598 : vector<64x96xf32>
    %cst_272 = arith.constant 0.707106769 : f32
    %601 = vector.broadcast %cst_272 : f32 to vector<64x96xf32>
    %602 = arith.mulf %598, %601 : vector<64x96xf32>
    %603 = math.absf %602 : vector<64x96xf32>
    %cst_273 = arith.constant 0.327591091 : f32
    %604 = vector.broadcast %cst_273 : f32 to vector<64x96xf32>
    %605 = arith.mulf %604, %603 : vector<64x96xf32>
    %cst_274 = arith.constant 1.000000e+00 : f32
    %606 = vector.broadcast %cst_274 : f32 to vector<64x96xf32>
    %607 = arith.addf %606, %605 : vector<64x96xf32>
    %cst_275 = arith.constant 1.000000e+00 : f32
    %608 = vector.broadcast %cst_275 : f32 to vector<64x96xf32>
    %609 = arith.divf %608, %607 : vector<64x96xf32>
    %cst_276 = arith.constant 1.06140542 : f32
    %610 = vector.broadcast %cst_276 : f32 to vector<64x96xf32>
    %611 = arith.mulf %610, %609 : vector<64x96xf32>
    %cst_277 = arith.constant 1.45315206 : f32
    %612 = vector.broadcast %cst_277 : f32 to vector<64x96xf32>
    %613 = arith.subf %611, %612 : vector<64x96xf32>
    %614 = arith.mulf %613, %609 : vector<64x96xf32>
    %cst_278 = arith.constant 1.42141378 : f32
    %615 = vector.broadcast %cst_278 : f32 to vector<64x96xf32>
    %616 = arith.addf %614, %615 : vector<64x96xf32>
    %617 = arith.mulf %616, %609 : vector<64x96xf32>
    %cst_279 = arith.constant 0.284496725 : f32
    %618 = vector.broadcast %cst_279 : f32 to vector<64x96xf32>
    %619 = arith.subf %617, %618 : vector<64x96xf32>
    %620 = arith.mulf %619, %609 : vector<64x96xf32>
    %cst_280 = arith.constant 0.254829586 : f32
    %621 = vector.broadcast %cst_280 : f32 to vector<64x96xf32>
    %622 = arith.addf %620, %621 : vector<64x96xf32>
    %623 = arith.mulf %622, %609 : vector<64x96xf32>
    %cst_281 = arith.constant 0.000000e+00 : f32
    %624 = vector.broadcast %cst_281 : f32 to vector<64x96xf32>
    %625 = arith.subf %624, %603 : vector<64x96xf32>
    %626 = arith.mulf %625, %603 : vector<64x96xf32>
    %627 = math.exp %626 : vector<64x96xf32>
    %628 = arith.mulf %623, %627 : vector<64x96xf32>
    %cst_282 = arith.constant 1.000000e+00 : f32
    %629 = vector.broadcast %cst_282 : f32 to vector<64x96xf32>
    %630 = arith.subf %629, %628 : vector<64x96xf32>
    %cst_283 = arith.constant 0.000000e+00 : f32
    %631 = vector.broadcast %cst_283 : f32 to vector<64x96xf32>
    %632 = arith.cmpf oge, %602, %631 : vector<64x96xf32>
    %cst_284 = arith.constant 0.000000e+00 : f32
    %633 = vector.broadcast %cst_284 : f32 to vector<64x96xf32>
    %634 = arith.subf %633, %630 : vector<64x96xf32>
    %635 = arith.select %632, %630, %634 : vector<64x96xi1>, vector<64x96xf32>
    %cst_285 = arith.constant 1.000000e+00 : f32
    %636 = vector.broadcast %cst_285 : f32 to vector<64x96xf32>
    %637 = arith.addf %636, %635 : vector<64x96xf32>
    %638 = arith.mulf %600, %637 : vector<64x96xf32>
    %c0_286 = arith.constant 0 : index
    %c0_287 = arith.constant 0 : index
    %639 = vector.load %arg44[%c0_286, %c0_287] : memref<9x96xf32, #tpu.memory_space<vmem>>, vector<9x96xf32>
    %cst_288 = arith.constant 0.000000e+00 : f32
    %640 = vector.broadcast %cst_288 : f32 to vector<96x96xf32>
    %c0_289 = arith.constant 0 : index
    %c0_290 = arith.constant 0 : index
    %641 = vector.load %arg52[%c0_289, %c0_290] : memref<96x96xf32, #tpu.memory_space<vmem>>, vector<96x96xf32>
    tpu.vector_store %arg52[%c0_289, %c0_290], %640 {strides = array<i32>} : memref<96x96xf32, #tpu.memory_space<vmem>>, vector<96x96xf32>,
    %c16_291 = arith.constant 16 : index
    %c0_292 = arith.constant 0 : index
    %642 = vector.load %arg52[%c16_291, %c0_292] : memref<96x96xf32, #tpu.memory_space<vmem>>, vector<64x96xf32>
    tpu.vector_store %arg52[%c16_291, %c0_292], %638 {strides = array<i32>} : memref<96x96xf32, #tpu.memory_space<vmem>>, vector<64x96xf32>,
    %c0_293 = arith.constant 0 : index
    %c0_294 = arith.constant 0 : index
    %643 = vector.load %arg52[%c0_293, %c0_294] : memref<96x96xf32, #tpu.memory_space<vmem>>, vector<96x96xf32>
    %644 = vector.extract_strided_slice %4 {offsets = [0, 0], sizes = [64, 1], strides = [1, 1]} : vector<64x2xf32> to vector<64x1xf32>
    %645 = vector.extract_strided_slice %4 {offsets = [0, 1], sizes = [64, 1], strides = [1, 1]} : vector<64x2xf32> to vector<64x1xf32>
    %cst_295 = arith.constant 0.000000e+00 : f32
    %646 = vector.broadcast %cst_295 : f32 to vector<64x96xf32>
    %647 = vector.extract_strided_slice %643 {offsets = [7, 0], sizes = [64, 96], strides = [1, 1]} : vector<96x96xf32> to vector<64x96xf32>
    %648 = vector.broadcast %644 : vector<64x1xf32> to vector<64x96xf32>
    %649 = arith.mulf %647, %648 : vector<64x96xf32>
    %650 = vector.extract_strided_slice %639 {offsets = [0, 0], sizes = [1, 96], strides = [1, 1]} : vector<9x96xf32> to vector<1x96xf32>
    %651 = vector.broadcast %650 : vector<1x96xf32> to vector<64x96xf32>
    %652 = arith.mulf %649, %651 : vector<64x96xf32>
    %653 = arith.addf %646, %652 : vector<64x96xf32>
    %654 = vector.extract_strided_slice %643 {offsets = [8, 0], sizes = [64, 96], strides = [1, 1]} : vector<96x96xf32> to vector<64x96xf32>
    %655 = vector.extract_strided_slice %639 {offsets = [1, 0], sizes = [1, 96], strides = [1, 1]} : vector<9x96xf32> to vector<1x96xf32>
    %656 = vector.broadcast %655 : vector<1x96xf32> to vector<64x96xf32>
    %657 = arith.mulf %654, %656 : vector<64x96xf32>
    %658 = arith.addf %653, %657 : vector<64x96xf32>
    %659 = vector.extract_strided_slice %643 {offsets = [9, 0], sizes = [64, 96], strides = [1, 1]} : vector<96x96xf32> to vector<64x96xf32>
    %660 = vector.broadcast %645 : vector<64x1xf32> to vector<64x96xf32>
    %661 = arith.mulf %659, %660 : vector<64x96xf32>
    %662 = vector.extract_strided_slice %639 {offsets = [2, 0], sizes = [1, 96], strides = [1, 1]} : vector<9x96xf32> to vector<1x96xf32>
    %663 = vector.broadcast %662 : vector<1x96xf32> to vector<64x96xf32>
    %664 = arith.mulf %661, %663 : vector<64x96xf32>
    %665 = arith.addf %658, %664 : vector<64x96xf32>
    %666 = vector.extract_strided_slice %643 {offsets = [15, 0], sizes = [64, 96], strides = [1, 1]} : vector<96x96xf32> to vector<64x96xf32>
    %667 = vector.broadcast %644 : vector<64x1xf32> to vector<64x96xf32>
    %668 = arith.mulf %666, %667 : vector<64x96xf32>
    %669 = vector.extract_strided_slice %639 {offsets = [3, 0], sizes = [1, 96], strides = [1, 1]} : vector<9x96xf32> to vector<1x96xf32>
    %670 = vector.broadcast %669 : vector<1x96xf32> to vector<64x96xf32>
    %671 = arith.mulf %668, %670 : vector<64x96xf32>
    %672 = arith.addf %665, %671 : vector<64x96xf32>
    %673 = vector.extract_strided_slice %643 {offsets = [16, 0], sizes = [64, 96], strides = [1, 1]} : vector<96x96xf32> to vector<64x96xf32>
    %674 = vector.extract_strided_slice %639 {offsets = [4, 0], sizes = [1, 96], strides = [1, 1]} : vector<9x96xf32> to vector<1x96xf32>
    %675 = vector.broadcast %674 : vector<1x96xf32> to vector<64x96xf32>
    %676 = arith.mulf %673, %675 : vector<64x96xf32>
    %677 = arith.addf %672, %676 : vector<64x96xf32>
    %678 = vector.extract_strided_slice %643 {offsets = [17, 0], sizes = [64, 96], strides = [1, 1]} : vector<96x96xf32> to vector<64x96xf32>
    %679 = vector.broadcast %645 : vector<64x1xf32> to vector<64x96xf32>
    %680 = arith.mulf %678, %679 : vector<64x96xf32>
    %681 = vector.extract_strided_slice %639 {offsets = [5, 0], sizes = [1, 96], strides = [1, 1]} : vector<9x96xf32> to vector<1x96xf32>
    %682 = vector.broadcast %681 : vector<1x96xf32> to vector<64x96xf32>
    %683 = arith.mulf %680, %682 : vector<64x96xf32>
    %684 = arith.addf %677, %683 : vector<64x96xf32>
    %685 = vector.extract_strided_slice %643 {offsets = [23, 0], sizes = [64, 96], strides = [1, 1]} : vector<96x96xf32> to vector<64x96xf32>
    %686 = vector.broadcast %644 : vector<64x1xf32> to vector<64x96xf32>
    %687 = arith.mulf %685, %686 : vector<64x96xf32>
    %688 = vector.extract_strided_slice %639 {offsets = [6, 0], sizes = [1, 96], strides = [1, 1]} : vector<9x96xf32> to vector<1x96xf32>
    %689 = vector.broadcast %688 : vector<1x96xf32> to vector<64x96xf32>
    %690 = arith.mulf %687, %689 : vector<64x96xf32>
    %691 = arith.addf %684, %690 : vector<64x96xf32>
    %692 = vector.extract_strided_slice %643 {offsets = [24, 0], sizes = [64, 96], strides = [1, 1]} : vector<96x96xf32> to vector<64x96xf32>
    %693 = vector.extract_strided_slice %639 {offsets = [7, 0], sizes = [1, 96], strides = [1, 1]} : vector<9x96xf32> to vector<1x96xf32>
    %694 = vector.broadcast %693 : vector<1x96xf32> to vector<64x96xf32>
    %695 = arith.mulf %692, %694 : vector<64x96xf32>
    %696 = arith.addf %691, %695 : vector<64x96xf32>
    %697 = vector.extract_strided_slice %643 {offsets = [25, 0], sizes = [64, 96], strides = [1, 1]} : vector<96x96xf32> to vector<64x96xf32>
    %698 = vector.broadcast %645 : vector<64x1xf32> to vector<64x96xf32>
    %699 = arith.mulf %697, %698 : vector<64x96xf32>
    %700 = vector.extract_strided_slice %639 {offsets = [8, 0], sizes = [1, 96], strides = [1, 1]} : vector<9x96xf32> to vector<1x96xf32>
    %701 = vector.broadcast %700 : vector<1x96xf32> to vector<64x96xf32>
    %702 = arith.mulf %699, %701 : vector<64x96xf32>
    %703 = arith.addf %696, %702 : vector<64x96xf32>
    %704 = arith.addf %703, %638 : vector<64x96xf32>
    %705 = arith.mulf %704, %704 : vector<64x96xf32>
    %cst_296 = arith.constant dense<0.000000e+00> : vector<96xf32>
    %706 = vector.multi_reduction <add>, %705, %cst_296 [0] : vector<64x96xf32> to vector<96xf32>
    %707 = vector.shape_cast %706 : vector<96xf32> to vector<1x96xf32>
    %708 = math.sqrt %707 : vector<1x96xf32>
    %cst_297 = arith.constant 9.99999997E-7 : f32
    %709 = vector.broadcast %cst_297 : f32 to vector<1x96xf32>
    %710 = arith.addf %708, %709 : vector<1x96xf32>
    %711 = arith.divf %708, %710 : vector<1x96xf32>
    %c0_298 = arith.constant 0 : index
    %c0_299 = arith.constant 0 : index
    %712 = vector.load %arg45[%c0_298, %c0_299] : memref<1x96xf32, #tpu.memory_space<vmem>>, vector<1x96xf32>
    %713 = vector.broadcast %711 : vector<1x96xf32> to vector<64x96xf32>
    %714 = arith.mulf %704, %713 : vector<64x96xf32>
    %715 = vector.broadcast %712 : vector<1x96xf32> to vector<64x96xf32>
    %716 = arith.mulf %715, %714 : vector<64x96xf32>
    %c0_300 = arith.constant 0 : index
    %c0_301 = arith.constant 0 : index
    %717 = vector.load %arg46[%c0_300, %c0_301] : memref<1x96xf32, #tpu.memory_space<vmem>>, vector<1x96xf32>
    %718 = vector.broadcast %717 : vector<1x96xf32> to vector<64x96xf32>
    %719 = arith.addf %716, %718 : vector<64x96xf32>
    %720 = arith.addf %719, %704 : vector<64x96xf32>
    %cst_302 = arith.constant 5.000000e-01 : f32
    %721 = vector.broadcast %cst_302 : f32 to vector<64x96xf32>
    %722 = arith.mulf %721, %720 : vector<64x96xf32>
    %cst_303 = arith.constant 0.707106769 : f32
    %723 = vector.broadcast %cst_303 : f32 to vector<64x96xf32>
    %724 = arith.mulf %720, %723 : vector<64x96xf32>
    %725 = math.absf %724 : vector<64x96xf32>
    %cst_304 = arith.constant 0.327591091 : f32
    %726 = vector.broadcast %cst_304 : f32 to vector<64x96xf32>
    %727 = arith.mulf %726, %725 : vector<64x96xf32>
    %cst_305 = arith.constant 1.000000e+00 : f32
    %728 = vector.broadcast %cst_305 : f32 to vector<64x96xf32>
    %729 = arith.addf %728, %727 : vector<64x96xf32>
    %cst_306 = arith.constant 1.000000e+00 : f32
    %730 = vector.broadcast %cst_306 : f32 to vector<64x96xf32>
    %731 = arith.divf %730, %729 : vector<64x96xf32>
    %cst_307 = arith.constant 1.06140542 : f32
    %732 = vector.broadcast %cst_307 : f32 to vector<64x96xf32>
    %733 = arith.mulf %732, %731 : vector<64x96xf32>
    %cst_308 = arith.constant 1.45315206 : f32
    %734 = vector.broadcast %cst_308 : f32 to vector<64x96xf32>
    %735 = arith.subf %733, %734 : vector<64x96xf32>
    %736 = arith.mulf %735, %731 : vector<64x96xf32>
    %cst_309 = arith.constant 1.42141378 : f32
    %737 = vector.broadcast %cst_309 : f32 to vector<64x96xf32>
    %738 = arith.addf %736, %737 : vector<64x96xf32>
    %739 = arith.mulf %738, %731 : vector<64x96xf32>
    %cst_310 = arith.constant 0.284496725 : f32
    %740 = vector.broadcast %cst_310 : f32 to vector<64x96xf32>
    %741 = arith.subf %739, %740 : vector<64x96xf32>
    %742 = arith.mulf %741, %731 : vector<64x96xf32>
    %cst_311 = arith.constant 0.254829586 : f32
    %743 = vector.broadcast %cst_311 : f32 to vector<64x96xf32>
    %744 = arith.addf %742, %743 : vector<64x96xf32>
    %745 = arith.mulf %744, %731 : vector<64x96xf32>
    %cst_312 = arith.constant 0.000000e+00 : f32
    %746 = vector.broadcast %cst_312 : f32 to vector<64x96xf32>
    %747 = arith.subf %746, %725 : vector<64x96xf32>
    %748 = arith.mulf %747, %725 : vector<64x96xf32>
    %749 = math.exp %748 : vector<64x96xf32>
    %750 = arith.mulf %745, %749 : vector<64x96xf32>
    %cst_313 = arith.constant 1.000000e+00 : f32
    %751 = vector.broadcast %cst_313 : f32 to vector<64x96xf32>
    %752 = arith.subf %751, %750 : vector<64x96xf32>
    %cst_314 = arith.constant 0.000000e+00 : f32
    %753 = vector.broadcast %cst_314 : f32 to vector<64x96xf32>
    %754 = arith.cmpf oge, %724, %753 : vector<64x96xf32>
    %cst_315 = arith.constant 0.000000e+00 : f32
    %755 = vector.broadcast %cst_315 : f32 to vector<64x96xf32>
    %756 = arith.subf %755, %752 : vector<64x96xf32>
    %757 = arith.select %754, %752, %756 : vector<64x96xi1>, vector<64x96xf32>
    %cst_316 = arith.constant 1.000000e+00 : f32
    %758 = vector.broadcast %cst_316 : f32 to vector<64x96xf32>
    %759 = arith.addf %758, %757 : vector<64x96xf32>
    %760 = arith.mulf %722, %759 : vector<64x96xf32>
    %c0_317 = arith.constant 0 : index
    %c0_318 = arith.constant 0 : index
    %761 = vector.load %arg47[%c0_317, %c0_318] : memref<96x32xf32, #tpu.memory_space<vmem>>, vector<96x32xf32>
    %cst_319 = arith.constant dense<0.000000e+00> : vector<64x32xf32>
    %762 = tpu.matmul %760, %761, %cst_319 {dimension_numbers = #tpu.dot_dimension_numbers<[1], [0], [0], [1], [0, 0, 1, 1], [], []>} : vector<64x96xf32>, vector<96x32xf32>, vector<64x32xf32> -> vector<64x32xf32>
    %c0_320 = arith.constant 0 : index
    %c0_321 = arith.constant 0 : index
    %763 = vector.load %arg48[%c0_320, %c0_321] : memref<1x32xf32, #tpu.memory_space<vmem>>, vector<1x32xf32>
    %764 = vector.broadcast %763 : vector<1x32xf32> to vector<64x32xf32>
    %765 = arith.addf %762, %764 : vector<64x32xf32>
    %766 = arith.addf %765, %561 : vector<64x32xf32>
    %c0_322 = arith.constant 0 : index
    %c0_323 = arith.constant 0 : index
    %c0_324 = arith.constant 0 : index
    %767 = vector.load %arg50[%c0_322, %c0_323, %c0_324] : memref<1x64x32xf32, #tpu.memory_space<vmem>>, vector<1x64x32xf32>
    %768 = vector.shape_cast %767 : vector<1x64x32xf32> to vector<64x32xf32>
    %769 = vector.shape_cast %766 : vector<64x32xf32> to vector<1x64x32xf32>
    tpu.vector_store %arg50[%c0_322, %c0_323, %c0_324], %769 {strides = array<i32>} : memref<1x64x32xf32, #tpu.memory_space<vmem>>, vector<1x64x32xf32>,
    return
  }
  func.func @transform_0(%arg0: i32) -> (i32, i32, i32) {
    %c0_i32 = arith.constant 0 : i32
    %c0_i32_0 = arith.constant 0 : i32
    %c0_i32_1 = arith.constant 0 : i32
    return %arg0, %c0_i32, %c0_i32_0 : i32, i32, i32
  }
  func.func @transform_1(%arg0: i32) -> (i32, i32, i32) {
    %c0_i32 = arith.constant 0 : i32
    %c0_i32_0 = arith.constant 0 : i32
    %c0_i32_1 = arith.constant 0 : i32
    return %arg0, %c0_i32, %c0_i32_0 : i32, i32, i32
  }
  func.func @transform_2(%arg0: i32) -> (i32, i32) {
    %c0_i32 = arith.constant 0 : i32
    %c0_i32_0 = arith.constant 0 : i32
    %c0_i32_1 = arith.constant 0 : i32
    return %c0_i32, %c0_i32_0 : i32, i32
  }
  func.func @transform_3(%arg0: i32) -> (i32, i32) {
    %c0_i32 = arith.constant 0 : i32
    %c0_i32_0 = arith.constant 0 : i32
    %c0_i32_1 = arith.constant 0 : i32
    return %c0_i32, %c0_i32_0 : i32, i32
  }
  func.func @transform_4(%arg0: i32) -> (i32, i32) {
    %c0_i32 = arith.constant 0 : i32
    %c0_i32_0 = arith.constant 0 : i32
    %c0_i32_1 = arith.constant 0 : i32
    return %c0_i32, %c0_i32_0 : i32, i32
  }
  func.func @transform_5(%arg0: i32) -> (i32, i32) {
    %c0_i32 = arith.constant 0 : i32
    %c0_i32_0 = arith.constant 0 : i32
    %c0_i32_1 = arith.constant 0 : i32
    return %c0_i32, %c0_i32_0 : i32, i32
  }
  func.func @transform_6(%arg0: i32) -> (i32, i32) {
    %c0_i32 = arith.constant 0 : i32
    %c0_i32_0 = arith.constant 0 : i32
    %c0_i32_1 = arith.constant 0 : i32
    return %c0_i32, %c0_i32_0 : i32, i32
  }
  func.func @transform_7(%arg0: i32) -> (i32, i32) {
    %c0_i32 = arith.constant 0 : i32
    %c0_i32_0 = arith.constant 0 : i32
    %c0_i32_1 = arith.constant 0 : i32
    return %c0_i32, %c0_i32_0 : i32, i32
  }
  func.func @transform_8(%arg0: i32) -> (i32, i32) {
    %c0_i32 = arith.constant 0 : i32
    %c0_i32_0 = arith.constant 0 : i32
    %c0_i32_1 = arith.constant 0 : i32
    return %c0_i32, %c0_i32_0 : i32, i32
  }
  func.func @transform_9(%arg0: i32) -> (i32, i32) {
    %c0_i32 = arith.constant 0 : i32
    %c0_i32_0 = arith.constant 0 : i32
    %c0_i32_1 = arith.constant 0 : i32
    return %c0_i32, %c0_i32_0 : i32, i32
  }
  func.func @transform_10(%arg0: i32) -> (i32, i32) {
    %c0_i32 = arith.constant 0 : i32
    %c0_i32_0 = arith.constant 0 : i32
    %c0_i32_1 = arith.constant 0 : i32
    return %c0_i32, %c0_i32_0 : i32, i32
  }
  func.func @transform_11(%arg0: i32) -> (i32, i32) {
    %c0_i32 = arith.constant 0 : i32
    %c0_i32_0 = arith.constant 0 : i32
    %c0_i32_1 = arith.constant 0 : i32
    return %c0_i32, %c0_i32_0 : i32, i32
  }
  func.func @transform_12(%arg0: i32) -> (i32, i32) {
    %c0_i32 = arith.constant 0 : i32
    %c0_i32_0 = arith.constant 0 : i32
    %c0_i32_1 = arith.constant 0 : i32
    return %c0_i32, %c0_i32_0 : i32, i32
  }
  func.func @transform_13(%arg0: i32) -> (i32, i32) {
    %c0_i32 = arith.constant 0 : i32
    %c0_i32_0 = arith.constant 0 : i32
    %c0_i32_1 = arith.constant 0 : i32
    return %c0_i32, %c0_i32_0 : i32, i32
  }
  func.func @transform_14(%arg0: i32) -> (i32, i32) {
    %c0_i32 = arith.constant 0 : i32
    %c0_i32_0 = arith.constant 0 : i32
    %c0_i32_1 = arith.constant 0 : i32
    return %c0_i32, %c0_i32_0 : i32, i32
  }
  func.func @transform_15(%arg0: i32) -> (i32, i32) {
    %c0_i32 = arith.constant 0 : i32
    %c0_i32_0 = arith.constant 0 : i32
    %c0_i32_1 = arith.constant 0 : i32
    return %c0_i32, %c0_i32_0 : i32, i32
  }
  func.func @transform_16(%arg0: i32) -> (i32, i32) {
    %c0_i32 = arith.constant 0 : i32
    %c0_i32_0 = arith.constant 0 : i32
    %c0_i32_1 = arith.constant 0 : i32
    return %c0_i32, %c0_i32_0 : i32, i32
  }
  func.func @transform_17(%arg0: i32) -> (i32, i32) {
    %c0_i32 = arith.constant 0 : i32
    %c0_i32_0 = arith.constant 0 : i32
    %c0_i32_1 = arith.constant 0 : i32
    return %c0_i32, %c0_i32_0 : i32, i32
  }
  func.func @transform_18(%arg0: i32) -> (i32, i32) {
    %c0_i32 = arith.constant 0 : i32
    %c0_i32_0 = arith.constant 0 : i32
    %c0_i32_1 = arith.constant 0 : i32
    return %c0_i32, %c0_i32_0 : i32, i32
  }
  func.func @transform_19(%arg0: i32) -> (i32, i32) {
    %c0_i32 = arith.constant 0 : i32
    %c0_i32_0 = arith.constant 0 : i32
    %c0_i32_1 = arith.constant 0 : i32
    return %c0_i32, %c0_i32_0 : i32, i32
  }
  func.func @transform_20(%arg0: i32) -> (i32, i32) {
    %c0_i32 = arith.constant 0 : i32
    %c0_i32_0 = arith.constant 0 : i32
    %c0_i32_1 = arith.constant 0 : i32
    return %c0_i32, %c0_i32_0 : i32, i32
  }
  func.func @transform_21(%arg0: i32) -> (i32, i32) {
    %c0_i32 = arith.constant 0 : i32
    %c0_i32_0 = arith.constant 0 : i32
    %c0_i32_1 = arith.constant 0 : i32
    return %c0_i32, %c0_i32_0 : i32, i32
  }
  func.func @transform_22(%arg0: i32) -> (i32, i32) {
    %c0_i32 = arith.constant 0 : i32
    %c0_i32_0 = arith.constant 0 : i32
    %c0_i32_1 = arith.constant 0 : i32
    return %c0_i32, %c0_i32_0 : i32, i32
  }
  func.func @transform_23(%arg0: i32) -> (i32, i32) {
    %c0_i32 = arith.constant 0 : i32
    %c0_i32_0 = arith.constant 0 : i32
    %c0_i32_1 = arith.constant 0 : i32
    return %c0_i32, %c0_i32_0 : i32, i32
  }
  func.func @transform_24(%arg0: i32) -> (i32, i32) {
    %c0_i32 = arith.constant 0 : i32
    %c0_i32_0 = arith.constant 0 : i32
    %c0_i32_1 = arith.constant 0 : i32
    return %c0_i32, %c0_i32_0 : i32, i32
  }
  func.func @transform_25(%arg0: i32) -> (i32, i32) {
    %c0_i32 = arith.constant 0 : i32
    %c0_i32_0 = arith.constant 0 : i32
    %c0_i32_1 = arith.constant 0 : i32
    return %c0_i32, %c0_i32_0 : i32, i32
  }
  func.func @transform_26(%arg0: i32) -> (i32, i32) {
    %c0_i32 = arith.constant 0 : i32
    %c0_i32_0 = arith.constant 0 : i32
    %c0_i32_1 = arith.constant 0 : i32
    return %c0_i32, %c0_i32_0 : i32, i32
  }
  func.func @transform_27(%arg0: i32) -> (i32, i32) {
    %c0_i32 = arith.constant 0 : i32
    %c0_i32_0 = arith.constant 0 : i32
    %c0_i32_1 = arith.constant 0 : i32
    return %c0_i32, %c0_i32_0 : i32, i32
  }
  func.func @transform_28(%arg0: i32) -> (i32, i32) {
    %c0_i32 = arith.constant 0 : i32
    %c0_i32_0 = arith.constant 0 : i32
    %c0_i32_1 = arith.constant 0 : i32
    return %c0_i32, %c0_i32_0 : i32, i32
  }
  func.func @transform_29(%arg0: i32) -> (i32, i32) {
    %c0_i32 = arith.constant 0 : i32
    %c0_i32_0 = arith.constant 0 : i32
    %c0_i32_1 = arith.constant 0 : i32
    return %c0_i32, %c0_i32_0 : i32, i32
  }
  func.func @transform_30(%arg0: i32) -> (i32, i32, i32) {
    %c0_i32 = arith.constant 0 : i32
    %c0_i32_0 = arith.constant 0 : i32
    %c0_i32_1 = arith.constant 0 : i32
    %c0_i32_2 = arith.constant 0 : i32
    return %c0_i32, %c0_i32_0, %c0_i32_1 : i32, i32, i32
  }
  func.func @transform_31(%arg0: i32) -> (i32, i32) {
    %c0_i32 = arith.constant 0 : i32
    %c0_i32_0 = arith.constant 0 : i32
    %c0_i32_1 = arith.constant 0 : i32
    return %c0_i32, %c0_i32_0 : i32, i32
  }
  func.func @transform_32(%arg0: i32) -> (i32, i32) {
    %c0_i32 = arith.constant 0 : i32
    %c0_i32_0 = arith.constant 0 : i32
    %c0_i32_1 = arith.constant 0 : i32
    return %c0_i32, %c0_i32_0 : i32, i32
  }
  func.func @transform_33(%arg0: i32) -> (i32, i32, i32) {
    %c0_i32 = arith.constant 0 : i32
    %c0_i32_0 = arith.constant 0 : i32
    %c0_i32_1 = arith.constant 0 : i32
    %c0_i32_2 = arith.constant 0 : i32
    return %c0_i32, %c0_i32_0, %c0_i32_1 : i32, i32, i32
  }
  func.func @transform_34(%arg0: i32) -> (i32, i32) {
    %c0_i32 = arith.constant 0 : i32
    %c0_i32_0 = arith.constant 0 : i32
    %c0_i32_1 = arith.constant 0 : i32
    return %c0_i32, %c0_i32_0 : i32, i32
  }
  func.func @transform_35(%arg0: i32) -> (i32, i32) {
    %c0_i32 = arith.constant 0 : i32
    %c0_i32_0 = arith.constant 0 : i32
    %c0_i32_1 = arith.constant 0 : i32
    return %c0_i32, %c0_i32_0 : i32, i32
  }
  func.func @transform_36(%arg0: i32) -> (i32, i32, i32) {
    %c0_i32 = arith.constant 0 : i32
    %c0_i32_0 = arith.constant 0 : i32
    %c0_i32_1 = arith.constant 0 : i32
    %c0_i32_2 = arith.constant 0 : i32
    return %c0_i32, %c0_i32_0, %c0_i32_1 : i32, i32, i32
  }
  func.func @transform_37(%arg0: i32) -> (i32, i32) {
    %c0_i32 = arith.constant 0 : i32
    %c0_i32_0 = arith.constant 0 : i32
    %c0_i32_1 = arith.constant 0 : i32
    return %c0_i32, %c0_i32_0 : i32, i32
  }
  func.func @transform_38(%arg0: i32) -> (i32, i32) {
    %c0_i32 = arith.constant 0 : i32
    %c0_i32_0 = arith.constant 0 : i32
    %c0_i32_1 = arith.constant 0 : i32
    return %c0_i32, %c0_i32_0 : i32, i32
  }
  func.func @transform_39(%arg0: i32) -> (i32, i32) {
    %c0_i32 = arith.constant 0 : i32
    %c0_i32_0 = arith.constant 0 : i32
    %c0_i32_1 = arith.constant 0 : i32
    return %c0_i32, %c0_i32_0 : i32, i32
  }
  func.func @transform_40(%arg0: i32) -> (i32, i32) {
    %c0_i32 = arith.constant 0 : i32
    %c0_i32_0 = arith.constant 0 : i32
    %c0_i32_1 = arith.constant 0 : i32
    return %c0_i32, %c0_i32_0 : i32, i32
  }
  func.func @transform_41(%arg0: i32) -> (i32, i32) {
    %c0_i32 = arith.constant 0 : i32
    %c0_i32_0 = arith.constant 0 : i32
    %c0_i32_1 = arith.constant 0 : i32
    return %c0_i32, %c0_i32_0 : i32, i32
  }
  func.func @transform_42(%arg0: i32) -> (i32, i32) {
    %c0_i32 = arith.constant 0 : i32
    %c0_i32_0 = arith.constant 0 : i32
    %c0_i32_1 = arith.constant 0 : i32
    return %c0_i32, %c0_i32_0 : i32, i32
  }
  func.func @transform_43(%arg0: i32) -> (i32, i32) {
    %c0_i32 = arith.constant 0 : i32
    %c0_i32_0 = arith.constant 0 : i32
    %c0_i32_1 = arith.constant 0 : i32
    return %c0_i32, %c0_i32_0 : i32, i32
  }
  func.func @transform_44(%arg0: i32) -> (i32, i32) {
    %c0_i32 = arith.constant 0 : i32
    %c0_i32_0 = arith.constant 0 : i32
    %c0_i32_1 = arith.constant 0 : i32
    return %c0_i32, %c0_i32_0 : i32, i32
  }
  func.func @transform_45(%arg0: i32) -> (i32, i32) {
    %c0_i32 = arith.constant 0 : i32
    %c0_i32_0 = arith.constant 0 : i32
    %c0_i32_1 = arith.constant 0 : i32
    return %c0_i32, %c0_i32_0 : i32, i32
  }
  func.func @transform_46(%arg0: i32) -> (i32, i32) {
    %c0_i32 = arith.constant 0 : i32
    %c0_i32_0 = arith.constant 0 : i32
    %c0_i32_1 = arith.constant 0 : i32
    return %c0_i32, %c0_i32_0 : i32, i32
  }
  func.func @transform_47(%arg0: i32) -> (i32, i32) {
    %c0_i32 = arith.constant 0 : i32
    %c0_i32_0 = arith.constant 0 : i32
    %c0_i32_1 = arith.constant 0 : i32
    return %c0_i32, %c0_i32_0 : i32, i32
  }
  func.func @transform_48(%arg0: i32) -> (i32, i32, i32) {
    %c0_i32 = arith.constant 0 : i32
    %c0_i32_0 = arith.constant 0 : i32
    %c0_i32_1 = arith.constant 0 : i32
    return %arg0, %c0_i32, %c0_i32_0 : i32, i32, i32
  }
  func.func @transform_49(%arg0: i32) -> (i32, i32, i32) {
    %c0_i32 = arith.constant 0 : i32
    %c0_i32_0 = arith.constant 0 : i32
    %c0_i32_1 = arith.constant 0 : i32
    return %arg0, %c0_i32, %c0_i32_0 : i32, i32, i32
  }
}

</mosaic_0001>

<llo_original>
// kernel: dmf_block_forward.1
$region0: #{dmf_block_forward.1}
  #allocation0 [shape = 'u32[]', space=smem, size = 0x4, offset = 0x4, fixed_abs, tag = 'smem constant byte address 0x4 - core index']
  #allocation1 [shape = 'u32[72,128]{1,0:T(1,128)}', space=vmem, size = 0x9000, scoped, tag = 'internal scratch']
  #allocation2 [shape = 'f32[96,64]{1,0:T(8,128)}', space=vmem, size = 0xc000, scoped, tag = 'scratch operand']
  #allocation3 [shape = 'f32[96,96]{1,0:T(8,128)}', space=vmem, size = 0xc000, scoped, tag = 'scratch operand']
  %s0 = inlined_call_operand.smem [shape: u32[50], index: -1, kind: input, shape index: {}]
  %s1 = sld [smem:[%s0]]
  %s2 = scalar_lea.smem %s0, 1
  %s3 = sld [smem:[%s2]]
  %s4 = scalar_lea.smem %s0, 2
  %s5 = sld [smem:[%s4]]
  %s6 = scalar_lea.smem %s0, 3
  %s7 = sld [smem:[%s6]]
  %s8 = scalar_lea.smem %s0, 4
  %s9 = sld [smem:[%s8]]
  %s10 = scalar_lea.smem %s0, 5
  %s11 = sld [smem:[%s10]]
  %s12 = scalar_lea.smem %s0, 6
  %s13 = sld [smem:[%s12]]
  %s14 = scalar_lea.smem %s0, 7
  %s15 = sld [smem:[%s14]]
  %s16 = scalar_lea.smem %s0, 8
  %s17 = sld [smem:[%s16]]
  %s18 = scalar_lea.smem %s0, 9
  %s19 = sld [smem:[%s18]]
  %s20 = scalar_lea.smem %s0, 10
  %s21 = sld [smem:[%s20]]
  %s22 = scalar_lea.smem %s0, 11
  %s23 = sld [smem:[%s22]]
  %s24 = scalar_lea.smem %s0, 12
  %s25 = sld [smem:[%s24]]
  %s26 = scalar_lea.smem %s0, 13
  %s27 = sld [smem:[%s26]]
  %s28 = scalar_lea.smem %s0, 14
  %s29 = sld [smem:[%s28]]
  %s30 = scalar_lea.smem %s0, 15
  %s31 = sld [smem:[%s30]]
  %s32 = scalar_lea.smem %s0, 16
  %s33 = sld [smem:[%s32]]
  %s34 = scalar_lea.smem %s0, 17
  %s35 = sld [smem:[%s34]]
  %s36 = scalar_lea.smem %s0, 18
  %s37 = sld [smem:[%s36]]
  %s38 = scalar_lea.smem %s0, 19
  %s39 = sld [smem:[%s38]]
  %s40 = scalar_lea.smem %s0, 20
  %s41 = sld [smem:[%s40]]
  %s42 = scalar_lea.smem %s0, 21
  %s43 = sld [smem:[%s42]]
  %s44 = scalar_lea.smem %s0, 22
  %s45 = sld [smem:[%s44]]
  %s46 = scalar_lea.smem %s0, 23
  %s47 = sld [smem:[%s46]]
  %s48 = scalar_lea.smem %s0, 24
  %s49 = sld [smem:[%s48]]
  %s50 = scalar_lea.smem %s0, 25
  %s51 = sld [smem:[%s50]]
  %s52 = scalar_lea.smem %s0, 26
  %s53 = sld [smem:[%s52]]
  %s54 = scalar_lea.smem %s0, 27
  %s55 = sld [smem:[%s54]]
  %s56 = scalar_lea.smem %s0, 28
  %s57 = sld [smem:[%s56]]
  %s58 = scalar_lea.smem %s0, 29
  %s59 = sld [smem:[%s58]]
  %s60 = scalar_lea.smem %s0, 30
  %s61 = sld [smem:[%s60]]
  %s62 = scalar_lea.smem %s0, 31
  %s63 = sld [smem:[%s62]]
  %s64 = scalar_lea.smem %s0, 32
  %s65 = sld [smem:[%s64]]
  %s66 = scalar_lea.smem %s0, 33
  %s67 = sld [smem:[%s66]]
  %s68 = scalar_lea.smem %s0, 34
  %s69 = sld [smem:[%s68]]
  %s70 = scalar_lea.smem %s0, 35
  %s71 = sld [smem:[%s70]]
  %s72 = scalar_lea.smem %s0, 36
  %s73 = sld [smem:[%s72]]
  %s74 = scalar_lea.smem %s0, 37
  %s75 = sld [smem:[%s74]]
  %s76 = scalar_lea.smem %s0, 38
  %s77 = sld [smem:[%s76]]
  %s78 = scalar_lea.smem %s0, 39
  %s79 = sld [smem:[%s78]]
  %s80 = scalar_lea.smem %s0, 40
  %s81 = sld [smem:[%s80]]
  %s82 = scalar_lea.smem %s0, 41
  %s83 = sld [smem:[%s82]]
  %s84 = scalar_lea.smem %s0, 42
  %s85 = sld [smem:[%s84]]
  %s86 = scalar_lea.smem %s0, 43
  %s87 = sld [smem:[%s86]]
  %s88 = scalar_lea.smem %s0, 44
  %s89 = sld [smem:[%s88]]
  %s90 = scalar_lea.smem %s0, 45
  %s91 = sld [smem:[%s90]]
  %s92 = scalar_lea.smem %s0, 46
  %s93 = sld [smem:[%s92]]
  %s94 = scalar_lea.smem %s0, 47
  %s95 = sld [smem:[%s94]]
  %s96 = scalar_lea.smem %s0, 48
  %s97 = sld [smem:[%s96]]
  %s98 = scalar_lea.smem %s0, 49
  %s99 = sld [smem:[%s98]]
  %100 = xla_tuple %s97, %s99
  %s101 = sld [smem:[#allocation0]]
  $region289: #{dmf_block_forward.1} parent=0
    _
  %s103 = ssub.s32 1, %s101
  %s104 = scalar_select 0, %s103, %s101
  $region1: #{dmf_block_forward.1} parent=0
    #allocation4 [shape = 'u8[512]{0}', space=vmem, size = 0x400, scoped, tag = 'input window, operand 20, single buffered']
    #allocation5 [shape = 's32[2]{0}', space=sflag, size = 0x8, scoped, tag = 'scoped memory for dmf_block_forward.1']
    #allocation6 [shape = 's32[2]{0}', space=sflag, size = 0x8, scoped, tag = 'scoped memory for dmf_block_forward.1']
    #allocation7 [shape = 'u8[512]{0}', space=vmem, size = 0x400, scoped, tag = 'input window, operand 28, single buffered']
    #allocation8 [shape = 's32[1]{0}', space=sflag, size = 0x4, scoped, tag = 'scoped memory for dmf_block_forward.1']
    #allocation9 [shape = 'u8[512]{0}', space=vmem, size = 0x400, scoped, tag = 'input window, operand 32, single buffered']
    #allocation10 [shape = 'u8[8192]{0}', space=vmem, size = 0x2000, scoped, tag = 'input window, operand 34, single buffered']
    #allocation11 [shape = 's32[1]{0}', space=sflag, size = 0x4, scoped, tag = 'scoped memory for dmf_block_forward.1']
    #allocation12 [shape = 'u8[512]{0}', space=vmem, size = 0x400, scoped, tag = 'input window, operand 35, single buffered']
    #allocation13 [shape = 'u8[512]{0}', space=vmem, size = 0x400, scoped, tag = 'input window, operand 38, single buffered']
    #allocation14 [shape = 's32[1]{0}', space=sflag, size = 0x4, scoped, tag = 'scoped memory for dmf_block_forward.1']
    #allocation15 [shape = 'u8[512]{0}', space=vmem, size = 0x400, scoped, tag = 'input window, operand 39, single buffered']
    #allocation16 [shape = 'u8[512]{0}', space=vmem, size = 0x400, scoped, tag = 'input window, operand 40, single buffered']
    #allocation17 [shape = 's32[1]{0}', space=sflag, size = 0x4, scoped, tag = 'scoped memory for dmf_block_forward.1']
    #allocation18 [shape = 'u8[16384]{0}', space=vmem, size = 0x4000, scoped, tag = 'input window, operand 41, single buffered']
    #allocation19 [shape = 'u8[512]{0}', space=vmem, size = 0x400, scoped, tag = 'input window, operand 42, single buffered']
    #allocation20 [shape = 's32[1]{0}', space=sflag, size = 0x4, scoped, tag = 'scoped memory for dmf_block_forward.1']
    #allocation21 [shape = 'u8[8192]{0}', space=vmem, size = 0x2000, scoped, tag = 'input window, operand 43, single buffered']
    #allocation22 [shape = 'u8[512]{0}', space=vmem, size = 0x400, scoped, tag = 'input window, operand 44, single buffered']
    #allocation23 [shape = 's32[1]{0}', space=sflag, size = 0x4, scoped, tag = 'scoped memory for dmf_block_forward.1']
    #allocation24 [shape = 'u8[512]{0}', space=vmem, size = 0x400, scoped, tag = 'input window, operand 45, single buffered']
    #allocation25 [shape = 'u8[512]{0}', space=vmem, size = 0x400, scoped, tag = 'input window, operand 47, single buffered']
    #allocation26 [shape = 's32[1]{0}', space=sflag, size = 0x4, scoped, tag = 'scoped memory for dmf_block_forward.1']
    #allocation27 [shape = 'u8[4096]{0}', space=vmem, size = 0x1000, scoped, tag = 'output window, operand 0']
    #allocation28 [shape = 'u8[65536]{0}', space=vmem, size = 0x10000, scoped, tag = 'output window, operand 1']
    #allocation29 [shape = 's32[2]{0}', space=sflag, size = 0x8, scoped, tag = 'scoped memory for dmf_block_forward.1']
    %105 = vsyncpa [#allocation5], 0
    %106 = vsyncpa [#allocation8], 0
    %107 = vsyncpa [#allocation11], 0
    %108 = vsyncpa [#allocation14], 0
    %109 = vsyncpa [#allocation17], 0
    %110 = vsyncpa [#allocation20], 0
    %111 = vsyncpa [#allocation23], 0
    %112 = vsyncpa [#allocation26], 0
    %113 = vsyncpa [#allocation6], 0
    %s114 = scalar_lea.sflag [#allocation6], 1
    %115 = vsyncpa %s114, 0
    %116 = vsyncpa [#allocation29], 0
    %s117 = scalar_lea.sflag [#allocation29], 1
    %118 = vsyncpa %s117, 0
    loop: start=0, step=1, limit=4
    $region2: #{dmf_block_forward.1} parent=1 // loop_pre_header
      _
    $region3: #{dmf_block_forward.1} parent=1 // loop_header
      %s120 = sphi 0, %s124
      %p121 = scmp.ge.s32.totalorder %s120, 4
      %s130 = sphi 0, %s132
      %s133 = sphi 0, %s130
      %s134 = sphi 0, %s133
      %s150 = sphi 0, %s134
      %s156 = sphi 0, %s158
      %s159 = sphi 0, %s156
      %s160 = sphi 0, %s159
      %s176 = sphi 0, %s160
      %s180 = sphi 0, %s180
      %s182 = sphi 0, %s180
      %s183 = sphi 0, %s182
      %s197 = sphi 0, %s183
      %s201 = sphi 0, %s201
      %s203 = sphi 0, %s201
      %s204 = sphi 0, %s203
      %s218 = sphi 0, %s204
      %s222 = sphi 0, %s222
      %s224 = sphi 0, %s222
      %s225 = sphi 0, %s224
      %s239 = sphi 0, %s225
      %s243 = sphi 0, %s243
      %s245 = sphi 0, %s243
      %s246 = sphi 0, %s245
      %s260 = sphi 0, %s246
      %s264 = sphi 0, %s264
      %s266 = sphi 0, %s264
      %s267 = sphi 0, %s266
      %s281 = sphi 0, %s267
      %s285 = sphi 0, %s285
      %s287 = sphi 0, %s285
      %s288 = sphi 0, %s287
      %s302 = sphi 0, %s288
      %s306 = sphi 0, %s306
      %s308 = sphi 0, %s306
      %s309 = sphi 0, %s308
      %s323 = sphi 0, %s309
      %s327 = sphi 0, %s327
      %s329 = sphi 0, %s327
      %s330 = sphi 0, %s329
      %s344 = sphi 0, %s330
      %s348 = sphi 0, %s348
      %s350 = sphi 0, %s348
      %s351 = sphi 0, %s350
      %s365 = sphi 0, %s351
      %s369 = sphi 0, %s369
      %s371 = sphi 0, %s369
      %s372 = sphi 0, %s371
      %s386 = sphi 0, %s372
      %s390 = sphi 0, %s390
      %s392 = sphi 0, %s390
      %s393 = sphi 0, %s392
      %s407 = sphi 0, %s393
      %s411 = sphi 0, %s411
      %s413 = sphi 0, %s411
      %s414 = sphi 0, %s413
      %s428 = sphi 0, %s414
      %s432 = sphi 0, %s432
      %s434 = sphi 0, %s432
      %s435 = sphi 0, %s434
      %s449 = sphi 0, %s435
      %s453 = sphi 0, %s453
      %s455 = sphi 0, %s453
      %s456 = sphi 0, %s455
      %s470 = sphi 0, %s456
      %s474 = sphi 0, %s474
      %s476 = sphi 0, %s474
      %s477 = sphi 0, %s476
      %s491 = sphi 0, %s477
      %s495 = sphi 0, %s495
      %s497 = sphi 0, %s495
      %s498 = sphi 0, %s497
      %s512 = sphi 0, %s498
      %s516 = sphi 0, %s516
      %s518 = sphi 0, %s516
      %s519 = sphi 0, %s518
      %s533 = sphi 0, %s519
      %s537 = sphi 0, %s537
      %s539 = sphi 0, %s537
      %s540 = sphi 0, %s539
      %s554 = sphi 0, %s540
      %s558 = sphi 0, %s558
      %s560 = sphi 0, %s558
      %s561 = sphi 0, %s560
      %s575 = sphi 0, %s561
      %s579 = sphi 0, %s579
      %s581 = sphi 0, %s579
      %s582 = sphi 0, %s581
      %s596 = sphi 0, %s582
      %s600 = sphi 0, %s600
      %s602 = sphi 0, %s600
      %s603 = sphi 0, %s602
      %s617 = sphi 0, %s603
      %s621 = sphi 0, %s621
      %s623 = sphi 0, %s621
      %s624 = sphi 0, %s623
      %s638 = sphi 0, %s624
      %s642 = sphi 0, %s642
      %s644 = sphi 0, %s642
      %s645 = sphi 0, %s644
      %s659 = sphi 0, %s645
      %s663 = sphi 0, %s663
      %s665 = sphi 0, %s663
      %s666 = sphi 0, %s665
      %s680 = sphi 0, %s666
      %s684 = sphi 0, %s684
      %s686 = sphi 0, %s684
      %s687 = sphi 0, %s686
      %s701 = sphi 0, %s687
      %s705 = sphi 0, %s705
      %s707 = sphi 0, %s705
      %s708 = sphi 0, %s707
      %s722 = sphi 0, %s708
      %s726 = sphi 0, %s726
      %s728 = sphi 0, %s726
      %s729 = sphi 0, %s728
      %s743 = sphi 0, %s729
      %s747 = sphi 0, %s747
      %s749 = sphi 0, %s747
      %s750 = sphi 0, %s749
      %s764 = sphi 0, %s750
      %s768 = sphi 0, %s768
      %s770 = sphi 0, %s768
      %s771 = sphi 0, %s770
      %s785 = sphi 0, %s771
      %s789 = sphi 0, %s789
      %s791 = sphi 0, %s789
      %s792 = sphi 0, %s791
      %s806 = sphi 0, %s792
      %s810 = sphi 0, %s810
      %s812 = sphi 0, %s810
      %s813 = sphi 0, %s812
      %s827 = sphi 0, %s813
      %s831 = sphi 0, %s831
      %s833 = sphi 0, %s831
      %s834 = sphi 0, %s833
      %s848 = sphi 0, %s834
      %s852 = sphi 0, %s852
      %s854 = sphi 0, %s852
      %s855 = sphi 0, %s854
      %s869 = sphi 0, %s855
      %s873 = sphi 0, %s873
      %s875 = sphi 0, %s873
      %s876 = sphi 0, %s875
      %s890 = sphi 0, %s876
      %s894 = sphi 0, %s894
      %s896 = sphi 0, %s894
      %s897 = sphi 0, %s896
      %s911 = sphi 0, %s897
      %s915 = sphi 0, %s915
      %s917 = sphi 0, %s915
      %s918 = sphi 0, %s917
      %s932 = sphi 0, %s918
      %s936 = sphi 0, %s936
      %s938 = sphi 0, %s936
      %s939 = sphi 0, %s938
      %s953 = sphi 0, %s939
      %s957 = sphi 0, %s957
      %s959 = sphi 0, %s957
      %s960 = sphi 0, %s959
      %s974 = sphi 0, %s960
      %s978 = sphi 0, %s978
      %s980 = sphi 0, %s978
      %s981 = sphi 0, %s980
      %s995 = sphi 0, %s981
      %s999 = sphi 0, %s999
      %s1001 = sphi 0, %s999
      %s1002 = sphi 0, %s1001
      %s1016 = sphi 0, %s1002
      %s1020 = sphi 0, %s1020
      %s1022 = sphi 0, %s1020
      %s1023 = sphi 0, %s1022
      %s1037 = sphi 0, %s1023
      %s1041 = sphi 0, %s1041
      %s1043 = sphi 0, %s1041
      %s1044 = sphi 0, %s1043
      %s1058 = sphi 0, %s1044
      %s1062 = sphi 0, %s1062
      %s1064 = sphi 0, %s1062
      %s1065 = sphi 0, %s1064
      %s1079 = sphi 0, %s1065
      %s1083 = sphi 0, %s1083
      %s1085 = sphi 0, %s1083
      %s1086 = sphi 0, %s1085
      %s1100 = sphi 0, %s1086
      %s1104 = sphi 0, %s1104
      %s1106 = sphi 0, %s1104
      %s1107 = sphi 0, %s1106
      %s1121 = sphi 0, %s1107
      %s1125 = sphi 0, %s1125
      %s1127 = sphi 0, %s1125
      %s1128 = sphi 0, %s1127
      %s1142 = sphi 0, %s1128
      %s1148 = sphi 0, %s1150
      %s1151 = sphi 0, %s1148
      %s1152 = sphi 0, %s1151
      %s1168 = sphi 0, %s1152
      %s1174 = sphi 0, %s1176
      %s1177 = sphi 0, %s1174
      %s1178 = sphi 0, %s1177
      %s1194 = sphi 0, %s1178
    $region4: #{dmf_block_forward.1} parent=1 // loop_header_branch
      %123 = sbr.rel (%p121) target = $region8
    $region5: #{dmf_block_forward.1} parent=1 // loop_body
      %s125 = ssub.s32 %s120, 1
      %s126 = ssub.s32 %s120, 2
      %s127 = sadd.s32 %s120, 1
      %s128 = ssub.s32 %s120, %s127
      %p129 = scmp.eq.s32.totalorder %s128, 0
      %s131 = sadd.s32 %s130, 1
      %s132 = scalar_select %p129, %s130, %s131
      %p135 = pneg %p129
      %p136 = scmp.eq.s32.totalorder %s120, 1
      %p137 = por %p135, %p136
      %p138 = scmp.ne.s32.totalorder %s130, %s133
      %p139 = scmp.eq.s32.totalorder %s120, 0
      %p140 = por %p138, %p139
      %p141 = scmp.ne.s32.totalorder %s130, %s133
      %p142 = scmp.eq.s32.totalorder %s125, 1
      %p143 = por %p141, %p142
      %p144 = scmp.ne.s32.totalorder %s133, %s134
      %p145 = scmp.eq.s32.totalorder %s125, 0
      %p146 = por %p144, %p145
      %p147 = scmp.ne.s32.totalorder %s133, %s134
      %p148 = scmp.eq.s32.totalorder %s126, 1
      %p149 = por %p147, %p148
      %p151 = scmp.ne.s32.totalorder %s134, %s150
      %p152 = scmp.eq.s32.totalorder %s126, 0
      %p153 = por %p151, %p152
      %s154 = ssub.s32 %s120, %s127
      %p155 = scmp.eq.s32.totalorder %s154, 0
      %s157 = sadd.s32 %s156, 1
      %s158 = scalar_select %p155, %s156, %s157
      %p161 = pneg %p155
      %p162 = scmp.eq.s32.totalorder %s120, 1
      %p163 = por %p161, %p162
      %p164 = scmp.ne.s32.totalorder %s156, %s159
      %p165 = scmp.eq.s32.totalorder %s120, 0
      %p166 = por %p164, %p165
      %p167 = scmp.ne.s32.totalorder %s156, %s159
      %p168 = scmp.eq.s32.totalorder %s125, 1
      %p169 = por %p167, %p168
      %p170 = scmp.ne.s32.totalorder %s159, %s160
      %p171 = scmp.eq.s32.totalorder %s125, 0
      %p172 = por %p170, %p171
      %p173 = scmp.ne.s32.totalorder %s159, %s160
      %p174 = scmp.eq.s32.totalorder %s126, 1
      %p175 = por %p173, %p174
      %p177 = scmp.ne.s32.totalorder %s160, %s176
      %p178 = scmp.eq.s32.totalorder %s126, 0
      %p179 = por %p177, %p178
      %s181 = sadd.s32 %s180, 1
      %p184 = scmp.eq.s32.totalorder %s120, 1
      %p185 = scmp.ne.s32.totalorder %s180, %s182
      %p186 = scmp.eq.s32.totalorder %s120, 0
      %p187 = por %p185, %p186
      %p188 = scmp.ne.s32.totalorder %s180, %s182
      %p189 = scmp.eq.s32.totalorder %s125, 1
      %p190 = por %p188, %p189
      %p191 = scmp.ne.s32.totalorder %s182, %s183
      %p192 = scmp.eq.s32.totalorder %s125, 0
      %p193 = por %p191, %p192
      %p194 = scmp.ne.s32.totalorder %s182, %s183
      %p195 = scmp.eq.s32.totalorder %s126, 1
      %p196 = por %p194, %p195
      %p198 = scmp.ne.s32.totalorder %s183, %s197
      %p199 = scmp.eq.s32.totalorder %s126, 0
      %p200 = por %p198, %p199
      %s202 = sadd.s32 %s201, 1
      %p205 = scmp.eq.s32.totalorder %s120, 1
      %p206 = scmp.ne.s32.totalorder %s201, %s203
      %p207 = scmp.eq.s32.totalorder %s120, 0
      %p208 = por %p206, %p207
      %p209 = scmp.ne.s32.totalorder %s201, %s203
      %p210 = scmp.eq.s32.totalorder %s125, 1
      %p211 = por %p209, %p210
      %p212 = scmp.ne.s32.totalorder %s203, %s204
      %p213 = scmp.eq.s32.totalorder %s125, 0
      %p214 = por %p212, %p213
      %p215 = scmp.ne.s32.totalorder %s203, %s204
      %p216 = scmp.eq.s32.totalorder %s126, 1
      %p217 = por %p215, %p216
      %p219 = scmp.ne.s32.totalorder %s204, %s218
      %p220 = scmp.eq.s32.totalorder %s126, 0
      %p221 = por %p219, %p220
      %s223 = sadd.s32 %s222, 1
      %p226 = scmp.eq.s32.totalorder %s120, 1
      %p227 = scmp.ne.s32.totalorder %s222, %s224
      %p228 = scmp.eq.s32.totalorder %s120, 0
      %p229 = por %p227, %p228
      %p230 = scmp.ne.s32.totalorder %s222, %s224
      %p231 = scmp.eq.s32.totalorder %s125, 1
      %p232 = por %p230, %p231
      %p233 = scmp.ne.s32.totalorder %s224, %s225
      %p234 = scmp.eq.s32.totalorder %s125, 0
      %p235 = por %p233, %p234
      %p236 = scmp.ne.s32.totalorder %s224, %s225
      %p237 = scmp.eq.s32.totalorder %s126, 1
      %p238 = por %p236, %p237
      %p240 = scmp.ne.s32.totalorder %s225, %s239
      %p241 = scmp.eq.s32.totalorder %s126, 0
      %p242 = por %p240, %p241
      %s244 = sadd.s32 %s243, 1
      %p247 = scmp.eq.s32.totalorder %s120, 1
      %p248 = scmp.ne.s32.totalorder %s243, %s245
      %p249 = scmp.eq.s32.totalorder %s120, 0
      %p250 = por %p248, %p249
      %p251 = scmp.ne.s32.totalorder %s243, %s245
      %p252 = scmp.eq.s32.totalorder %s125, 1
      %p253 = por %p251, %p252
      %p254 = scmp.ne.s32.totalorder %s245, %s246
      %p255 = scmp.eq.s32.totalorder %s125, 0
      %p256 = por %p254, %p255
      %p257 = scmp.ne.s32.totalorder %s245, %s246
      %p258 = scmp.eq.s32.totalorder %s126, 1
      %p259 = por %p257, %p258
      %p261 = scmp.ne.s32.totalorder %s246, %s260
      %p262 = scmp.eq.s32.totalorder %s126, 0
      %p263 = por %p261, %p262
      %s265 = sadd.s32 %s264, 1
      %p268 = scmp.eq.s32.totalorder %s120, 1
      %p269 = scmp.ne.s32.totalorder %s264, %s266
      %p270 = scmp.eq.s32.totalorder %s120, 0
      %p271 = por %p269, %p270
      %p272 = scmp.ne.s32.totalorder %s264, %s266
      %p273 = scmp.eq.s32.totalorder %s125, 1
      %p274 = por %p272, %p273
      %p275 = scmp.ne.s32.totalorder %s266, %s267
      %p276 = scmp.eq.s32.totalorder %s125, 0
      %p277 = por %p275, %p276
      %p278 = scmp.ne.s32.totalorder %s266, %s267
      %p279 = scmp.eq.s32.totalorder %s126, 1
      %p280 = por %p278, %p279
      %p282 = scmp.ne.s32.totalorder %s267, %s281
      %p283 = scmp.eq.s32.totalorder %s126, 0
      %p284 = por %p282, %p283
      %s286 = sadd.s32 %s285, 1
      %p289 = scmp.eq.s32.totalorder %s120, 1
      %p290 = scmp.ne.s32.totalorder %s285, %s287
      %p291 = scmp.eq.s32.totalorder %s120, 0
      %p292 = por %p290, %p291
      %p293 = scmp.ne.s32.totalorder %s285, %s287
      %p294 = scmp.eq.s32.totalorder %s125, 1
      %p295 = por %p293, %p294
      %p296 = scmp.ne.s32.totalorder %s287, %s288
      %p297 = scmp.eq.s32.totalorder %s125, 0
      %p298 = por %p296, %p297
      %p299 = scmp.ne.s32.totalorder %s287, %s288
      %p300 = scmp.eq.s32.totalorder %s126, 1
      %p301 = por %p299, %p300
      %p303 = scmp.ne.s32.totalorder %s288, %s302
      %p304 = scmp.eq.s32.totalorder %s126, 0
      %p305 = por %p303, %p304
      %s307 = sadd.s32 %s306, 1
      %p310 = scmp.eq.s32.totalorder %s120, 1
      %p311 = scmp.ne.s32.totalorder %s306, %s308
      %p312 = scmp.eq.s32.totalorder %s120, 0
      %p313 = por %p311, %p312
      %p314 = scmp.ne.s32.totalorder %s306, %s308
      %p315 = scmp.eq.s32.totalorder %s125, 1
      %p316 = por %p314, %p315
      %p317 = scmp.ne.s32.totalorder %s308, %s309
      %p318 = scmp.eq.s32.totalorder %s125, 0
      %p319 = por %p317, %p318
      %p320 = scmp.ne.s32.totalorder %s308, %s309
      %p321 = scmp.eq.s32.totalorder %s126, 1
      %p322 = por %p320, %p321
      %p324 = scmp.ne.s32.totalorder %s309, %s323
      %p325 = scmp.eq.s32.totalorder %s126, 0
      %p326 = por %p324, %p325
      %s328 = sadd.s32 %s327, 1
      %p331 = scmp.eq.s32.totalorder %s120, 1
      %p332 = scmp.ne.s32.totalorder %s327, %s329
      %p333 = scmp.eq.s32.totalorder %s120, 0
      %p334 = por %p332, %p333
      %p335 = scmp.ne.s32.totalorder %s327, %s329
      %p336 = scmp.eq.s32.totalorder %s125, 1
      %p337 = por %p335, %p336
      %p338 = scmp.ne.s32.totalorder %s329, %s330
      %p339 = scmp.eq.s32.totalorder %s125, 0
      %p340 = por %p338, %p339
      %p341 = scmp.ne.s32.totalorder %s329, %s330
      %p342 = scmp.eq.s32.totalorder %s126, 1
      %p343 = por %p341, %p342
      %p345 = scmp.ne.s32.totalorder %s330, %s344
      %p346 = scmp.eq.s32.totalorder %s126, 0
      %p347 = por %p345, %p346
      %s349 = sadd.s32 %s348, 1
      %p352 = scmp.eq.s32.totalorder %s120, 1
      %p353 = scmp.ne.s32.totalorder %s348, %s350
      %p354 = scmp.eq.s32.totalorder %s120, 0
      %p355 = por %p353, %p354
      %p356 = scmp.ne.s32.totalorder %s348, %s350
      %p357 = scmp.eq.s32.totalorder %s125, 1
      %p358 = por %p356, %p357
      %p359 = scmp.ne.s32.totalorder %s350, %s351
      %p360 = scmp.eq.s32.totalorder %s125, 0
      %p361 = por %p359, %p360
      %p362 = scmp.ne.s32.totalorder %s350, %s351
      %p363 = scmp.eq.s32.totalorder %s126, 1
      %p364 = por %p362, %p363
      %p366 = scmp.ne.s32.totalorder %s351, %s365
      %p367 = scmp.eq.s32.totalorder %s126, 0
      %p368 = por %p366, %p367
      %s370 = sadd.s32 %s369, 1
      %p373 = scmp.eq.s32.totalorder %s120, 1
      %p374 = scmp.ne.s32.totalorder %s369, %s371
      %p375 = scmp.eq.s32.totalorder %s120, 0
      %p376 = por %p374, %p375
      %p377 = scmp.ne.s32.totalorder %s369, %s371
      %p378 = scmp.eq.s32.totalorder %s125, 1
      %p379 = por %p377, %p378
      %p380 = scmp.ne.s32.totalorder %s371, %s372
      %p381 = scmp.eq.s32.totalorder %s125, 0
      %p382 = por %p380, %p381
      %p383 = scmp.ne.s32.totalorder %s371, %s372
      %p384 = scmp.eq.s32.totalorder %s126, 1
      %p385 = por %p383, %p384
      %p387 = scmp.ne.s32.totalorder %s372, %s386
      %p388 = scmp.eq.s32.totalorder %s126, 0
      %p389 = por %p387, %p388
      %s391 = sadd.s32 %s390, 1
      %p394 = scmp.eq.s32.totalorder %s120, 1
      %p395 = scmp.ne.s32.totalorder %s390, %s392
      %p396 = scmp.eq.s32.totalorder %s120, 0
      %p397 = por %p395, %p396
      %p398 = scmp.ne.s32.totalorder %s390, %s392
      %p399 = scmp.eq.s32.totalorder %s125, 1
      %p400 = por %p398, %p399
      %p401 = scmp.ne.s32.totalorder %s392, %s393
      %p402 = scmp.eq.s32.totalorder %s125, 0
      %p403 = por %p401, %p402
      %p404 = scmp.ne.s32.totalorder %s392, %s393
      %p405 = scmp.eq.s32.totalorder %s126, 1
      %p406 = por %p404, %p405
      %p408 = scmp.ne.s32.totalorder %s393, %s407
      %p409 = scmp.eq.s32.totalorder %s126, 0
      %p410 = por %p408, %p409
      %s412 = sadd.s32 %s411, 1
      %p415 = scmp.eq.s32.totalorder %s120, 1
      %p416 = scmp.ne.s32.totalorder %s411, %s413
      %p417 = scmp.eq.s32.totalorder %s120, 0
      %p418 = por %p416, %p417
      %p419 = scmp.ne.s32.totalorder %s411, %s413
      %p420 = scmp.eq.s32.totalorder %s125, 1
      %p421 = por %p419, %p420
      %p422 = scmp.ne.s32.totalorder %s413, %s414
      %p423 = scmp.eq.s32.totalorder %s125, 0
      %p424 = por %p422, %p423
      %p425 = scmp.ne.s32.totalorder %s413, %s414
      %p426 = scmp.eq.s32.totalorder %s126, 1
      %p427 = por %p425, %p426
      %p429 = scmp.ne.s32.totalorder %s414, %s428
      %p430 = scmp.eq.s32.totalorder %s126, 0
      %p431 = por %p429, %p430
      %s433 = sadd.s32 %s432, 1
      %p436 = scmp.eq.s32.totalorder %s120, 1
      %p437 = scmp.ne.s32.totalorder %s432, %s434
      %p438 = scmp.eq.s32.totalorder %s120, 0
      %p439 = por %p437, %p438
      %p440 = scmp.ne.s32.totalorder %s432, %s434
      %p441 = scmp.eq.s32.totalorder %s125, 1
      %p442 = por %p440, %p441
      %p443 = scmp.ne.s32.totalorder %s434, %s435
      %p444 = scmp.eq.s32.totalorder %s125, 0
      %p445 = por %p443, %p444
      %p446 = scmp.ne.s32.totalorder %s434, %s435
      %p447 = scmp.eq.s32.totalorder %s126, 1
      %p448 = por %p446, %p447
      %p450 = scmp.ne.s32.totalorder %s435, %s449
      %p451 = scmp.eq.s32.totalorder %s126, 0
      %p452 = por %p450, %p451
      %s454 = sadd.s32 %s453, 1
      %p457 = scmp.eq.s32.totalorder %s120, 1
      %p458 = scmp.ne.s32.totalorder %s453, %s455
      %p459 = scmp.eq.s32.totalorder %s120, 0
      %p460 = por %p458, %p459
      %p461 = scmp.ne.s32.totalorder %s453, %s455
      %p462 = scmp.eq.s32.totalorder %s125, 1
      %p463 = por %p461, %p462
      %p464 = scmp.ne.s32.totalorder %s455, %s456
      %p465 = scmp.eq.s32.totalorder %s125, 0
      %p466 = por %p464, %p465
      %p467 = scmp.ne.s32.totalorder %s455, %s456
      %p468 = scmp.eq.s32.totalorder %s126, 1
      %p469 = por %p467, %p468
      %p471 = scmp.ne.s32.totalorder %s456, %s470
      %p472 = scmp.eq.s32.totalorder %s126, 0
      %p473 = por %p471, %p472
      %s475 = sadd.s32 %s474, 1
      %p478 = scmp.eq.s32.totalorder %s120, 1
      %p479 = scmp.ne.s32.totalorder %s474, %s476
      %p480 = scmp.eq.s32.totalorder %s120, 0
      %p481 = por %p479, %p480
      %p482 = scmp.ne.s32.totalorder %s474, %s476
      %p483 = scmp.eq.s32.totalorder %s125, 1
      %p484 = por %p482, %p483
      %p485 = scmp.ne.s32.totalorder %s476, %s477
      %p486 = scmp.eq.s32.totalorder %s125, 0
      %p487 = por %p485, %p486
      %p488 = scmp.ne.s32.totalorder %s476, %s477
      %p489 = scmp.eq.s32.totalorder %s126, 1
      %p490 = por %p488, %p489
      %p492 = scmp.ne.s32.totalorder %s477, %s491
      %p493 = scmp.eq.s32.totalorder %s126, 0
      %p494 = por %p492, %p493
      %s496 = sadd.s32 %s495, 1
      %p499 = scmp.eq.s32.totalorder %s120, 1
      %p500 = scmp.ne.s32.totalorder %s495, %s497
      %p501 = scmp.eq.s32.totalorder %s120, 0
      %p502 = por %p500, %p501
      %p503 = scmp.ne.s32.totalorder %s495, %s497
      %p504 = scmp.eq.s32.totalorder %s125, 1
      %p505 = por %p503, %p504
      %p506 = scmp.ne.s32.totalorder %s497, %s498
      %p507 = scmp.eq.s32.totalorder %s125, 0
      %p508 = por %p506, %p507
      %p509 = scmp.ne.s32.totalorder %s497, %s498
      %p510 = scmp.eq.s32.totalorder %s126, 1
      %p511 = por %p509, %p510
      %p513 = scmp.ne.s32.totalorder %s498, %s512
      %p514 = scmp.eq.s32.totalorder %s126, 0
      %p515 = por %p513, %p514
      %s517 = sadd.s32 %s516, 1
      %p520 = scmp.eq.s32.totalorder %s120, 1
      %p521 = scmp.ne.s32.totalorder %s516, %s518
      %p522 = scmp.eq.s32.totalorder %s120, 0
      %p523 = por %p521, %p522
      %p524 = scmp.ne.s32.totalorder %s516, %s518
      %p525 = scmp.eq.s32.totalorder %s125, 1
      %p526 = por %p524, %p525
      %p527 = scmp.ne.s32.totalorder %s518, %s519
      %p528 = scmp.eq.s32.totalorder %s125, 0
      %p529 = por %p527, %p528
      %p530 = scmp.ne.s32.totalorder %s518, %s519
      %p531 = scmp.eq.s32.totalorder %s126, 1
      %p532 = por %p530, %p531
      %p534 = scmp.ne.s32.totalorder %s519, %s533
      %p535 = scmp.eq.s32.totalorder %s126, 0
      %p536 = por %p534, %p535
      %s538 = sadd.s32 %s537, 1
      %p541 = scmp.eq.s32.totalorder %s120, 1
      %p542 = scmp.ne.s32.totalorder %s537, %s539
      %p543 = scmp.eq.s32.totalorder %s120, 0
      %p544 = por %p542, %p543
      %p545 = scmp.ne.s32.totalorder %s537, %s539
      %p546 = scmp.eq.s32.totalorder %s125, 1
      %p547 = por %p545, %p546
      %p548 = scmp.ne.s32.totalorder %s539, %s540
      %p549 = scmp.eq.s32.totalorder %s125, 0
      %p550 = por %p548, %p549
      %p551 = scmp.ne.s32.totalorder %s539, %s540
      %p552 = scmp.eq.s32.totalorder %s126, 1
      %p553 = por %p551, %p552
      %p555 = scmp.ne.s32.totalorder %s540, %s554
      %p556 = scmp.eq.s32.totalorder %s126, 0
      %p557 = por %p555, %p556
      %s559 = sadd.s32 %s558, 1
      %p562 = scmp.eq.s32.totalorder %s120, 1
      %p563 = scmp.ne.s32.totalorder %s558, %s560
      %p564 = scmp.eq.s32.totalorder %s120, 0
      %p565 = por %p563, %p564
      %p566 = scmp.ne.s32.totalorder %s558, %s560
      %p567 = scmp.eq.s32.totalorder %s125, 1
      %p568 = por %p566, %p567
      %p569 = scmp.ne.s32.totalorder %s560, %s561
      %p570 = scmp.eq.s32.totalorder %s125, 0
      %p571 = por %p569, %p570
      %p572 = scmp.ne.s32.totalorder %s560, %s561
      %p573 = scmp.eq.s32.totalorder %s126, 1
      %p574 = por %p572, %p573
      %p576 = scmp.ne.s32.totalorder %s561, %s575
      %p577 = scmp.eq.s32.totalorder %s126, 0
      %p578 = por %p576, %p577
      %s580 = sadd.s32 %s579, 1
      %p583 = scmp.eq.s32.totalorder %s120, 1
      %p584 = scmp.ne.s32.totalorder %s579, %s581
      %p585 = scmp.eq.s32.totalorder %s120, 0
      %p586 = por %p584, %p585
      %p587 = scmp.ne.s32.totalorder %s579, %s581
      %p588 = scmp.eq.s32.totalorder %s125, 1
      %p589 = por %p587, %p588
      %p590 = scmp.ne.s32.totalorder %s581, %s582
      %p591 = scmp.eq.s32.totalorder %s125, 0
      %p592 = por %p590, %p591
      %p593 = scmp.ne.s32.totalorder %s581, %s582
      %p594 = scmp.eq.s32.totalorder %s126, 1
      %p595 = por %p593, %p594
      %p597 = scmp.ne.s32.totalorder %s582, %s596
      %p598 = scmp.eq.s32.totalorder %s126, 0
      %p599 = por %p597, %p598
      %s601 = sadd.s32 %s600, 1
      %p604 = scmp.eq.s32.totalorder %s120, 1
      %p605 = scmp.ne.s32.totalorder %s600, %s602
      %p606 = scmp.eq.s32.totalorder %s120, 0
      %p607 = por %p605, %p606
      %p608 = scmp.ne.s32.totalorder %s600, %s602
      %p609 = scmp.eq.s32.totalorder %s125, 1
      %p610 = por %p608, %p609
      %p611 = scmp.ne.s32.totalorder %s602, %s603
      %p612 = scmp.eq.s32.totalorder %s125, 0
      %p613 = por %p611, %p612
      %p614 = scmp.ne.s32.totalorder %s602, %s603
      %p615 = scmp.eq.s32.totalorder %s126, 1
      %p616 = por %p614, %p615
      %p618 = scmp.ne.s32.totalorder %s603, %s617
      %p619 = scmp.eq.s32.totalorder %s126, 0
      %p620 = por %p618, %p619
      %s622 = sadd.s32 %s621, 1
      %p625 = scmp.eq.s32.totalorder %s120, 1
      %p626 = scmp.ne.s32.totalorder %s621, %s623
      %p627 = scmp.eq.s32.totalorder %s120, 0
      %p628 = por %p626, %p627
      %p629 = scmp.ne.s32.totalorder %s621, %s623
      %p630 = scmp.eq.s32.totalorder %s125, 1
      %p631 = por %p629, %p630
      %p632 = scmp.ne.s32.totalorder %s623, %s624
      %p633 = scmp.eq.s32.totalorder %s125, 0
      %p634 = por %p632, %p633
      %p635 = scmp.ne.s32.totalorder %s623, %s624
      %p636 = scmp.eq.s32.totalorder %s126, 1
      %p637 = por %p635, %p636
      %p639 = scmp.ne.s32.totalorder %s624, %s638
      %p640 = scmp.eq.s32.totalorder %s126, 0
      %p641 = por %p639, %p640
      %s643 = sadd.s32 %s642, 1
      %p646 = scmp.eq.s32.totalorder %s120, 1
      %p647 = scmp.ne.s32.totalorder %s642, %s644
      %p648 = scmp.eq.s32.totalorder %s120, 0
      %p649 = por %p647, %p648
      %p650 = scmp.ne.s32.totalorder %s642, %s644
      %p651 = scmp.eq.s32.totalorder %s125, 1
      %p652 = por %p650, %p651
      %p653 = scmp.ne.s32.totalorder %s644, %s645
      %p654 = scmp.eq.s32.totalorder %s125, 0
      %p655 = por %p653, %p654
      %p656 = scmp.ne.s32.totalorder %s644, %s645
      %p657 = scmp.eq.s32.totalorder %s126, 1
      %p658 = por %p656, %p657
      %p660 = scmp.ne.s32.totalorder %s645, %s659
      %p661 = scmp.eq.s32.totalorder %s126, 0
      %p662 = por %p660, %p661
      %s664 = sadd.s32 %s663, 1
      %p667 = scmp.eq.s32.totalorder %s120, 1
      %p668 = scmp.ne.s32.totalorder %s663, %s665
      %p669 = scmp.eq.s32.totalorder %s120, 0
      %p670 = por %p668, %p669
      %p671 = scmp.ne.s32.totalorder %s663, %s665
      %p672 = scmp.eq.s32.totalorder %s125, 1
      %p673 = por %p671, %p672
      %p674 = scmp.ne.s32.totalorder %s665, %s666
      %p675 = scmp.eq.s32.totalorder %s125, 0
      %p676 = por %p674, %p675
      %p677 = scmp.ne.s32.totalorder %s665, %s666
      %p678 = scmp.eq.s32.totalorder %s126, 1
      %p679 = por %p677, %p678
      %p681 = scmp.ne.s32.totalorder %s666, %s680
      %p682 = scmp.eq.s32.totalorder %s126, 0
      %p683 = por %p681, %p682
      %s685 = sadd.s32 %s684, 1
      %p688 = scmp.eq.s32.totalorder %s120, 1
      %p689 = scmp.ne.s32.totalorder %s684, %s686
      %p690 = scmp.eq.s32.totalorder %s120, 0
      %p691 = por %p689, %p690
      %p692 = scmp.ne.s32.totalorder %s684, %s686
      %p693 = scmp.eq.s32.totalorder %s125, 1
      %p694 = por %p692, %p693
      %p695 = scmp.ne.s32.totalorder %s686, %s687
      %p696 = scmp.eq.s32.totalorder %s125, 0
      %p697 = por %p695, %p696
      %p698 = scmp.ne.s32.totalorder %s686, %s687
      %p699 = scmp.eq.s32.totalorder %s126, 1
      %p700 = por %p698, %p699
      %p702 = scmp.ne.s32.totalorder %s687, %s701
      %p703 = scmp.eq.s32.totalorder %s126, 0
      %p704 = por %p702, %p703
      %s706 = sadd.s32 %s705, 1
      %p709 = scmp.eq.s32.totalorder %s120, 1
      %p710 = scmp.ne.s32.totalorder %s705, %s707
      %p711 = scmp.eq.s32.totalorder %s120, 0
      %p712 = por %p710, %p711
      %p713 = scmp.ne.s32.totalorder %s705, %s707
      %p714 = scmp.eq.s32.totalorder %s125, 1
      %p715 = por %p713, %p714
      %p716 = scmp.ne.s32.totalorder %s707, %s708
      %p717 = scmp.eq.s32.totalorder %s125, 0
      %p718 = por %p716, %p717
      %p719 = scmp.ne.s32.totalorder %s707, %s708
      %p720 = scmp.eq.s32.totalorder %s126, 1
      %p721 = por %p719, %p720
      %p723 = scmp.ne.s32.totalorder %s708, %s722
      %p724 = scmp.eq.s32.totalorder %s126, 0
      %p725 = por %p723, %p724
      %s727 = sadd.s32 %s726, 1
      %p730 = scmp.eq.s32.totalorder %s120, 1
      %p731 = scmp.ne.s32.totalorder %s726, %s728
      %p732 = scmp.eq.s32.totalorder %s120, 0
      %p733 = por %p731, %p732
      %p734 = scmp.ne.s32.totalorder %s726, %s728
      %p735 = scmp.eq.s32.totalorder %s125, 1
      %p736 = por %p734, %p735
      %p737 = scmp.ne.s32.totalorder %s728, %s729
      %p738 = scmp.eq.s32.totalorder %s125, 0
      %p739 = por %p737, %p738
      %p740 = scmp.ne.s32.totalorder %s728, %s729
      %p741 = scmp.eq.s32.totalorder %s126, 1
      %p742 = por %p740, %p741
      %p744 = scmp.ne.s32.totalorder %s729, %s743
      %p745 = scmp.eq.s32.totalorder %s126, 0
      %p746 = por %p744, %p745
      %s748 = sadd.s32 %s747, 1
      %p751 = scmp.eq.s32.totalorder %s120, 1
      %p752 = scmp.ne.s32.totalorder %s747, %s749
      %p753 = scmp.eq.s32.totalorder %s120, 0
      %p754 = por %p752, %p753
      %p755 = scmp.ne.s32.totalorder %s747, %s749
      %p756 = scmp.eq.s32.totalorder %s125, 1
      %p757 = por %p755, %p756
      %p758 = scmp.ne.s32.totalorder %s749, %s750
      %p759 = scmp.eq.s32.totalorder %s125, 0
      %p760 = por %p758, %p759
      %p761 = scmp.ne.s32.totalorder %s749, %s750
      %p762 = scmp.eq.s32.totalorder %s126, 1
      %p763 = por %p761, %p762
      %p765 = scmp.ne.s32.totalorder %s750, %s764
      %p766 = scmp.eq.s32.totalorder %s126, 0
      %p767 = por %p765, %p766
      %s769 = sadd.s32 %s768, 1
      %p772 = scmp.eq.s32.totalorder %s120, 1
      %p773 = scmp.ne.s32.totalorder %s768, %s770
      %p774 = scmp.eq.s32.totalorder %s120, 0
      %p775 = por %p773, %p774
      %p776 = scmp.ne.s32.totalorder %s768, %s770
      %p777 = scmp.eq.s32.totalorder %s125, 1
      %p778 = por %p776, %p777
      %p779 = scmp.ne.s32.totalorder %s770, %s771
      %p780 = scmp.eq.s32.totalorder %s125, 0
      %p781 = por %p779, %p780
      %p782 = scmp.ne.s32.totalorder %s770, %s771
      %p783 = scmp.eq.s32.totalorder %s126, 1
      %p784 = por %p782, %p783
      %p786 = scmp.ne.s32.totalorder %s771, %s785
      %p787 = scmp.eq.s32.totalorder %s126, 0
      %p788 = por %p786, %p787
      %s790 = sadd.s32 %s789, 1
      %p793 = scmp.eq.s32.totalorder %s120, 1
      %p794 = scmp.ne.s32.totalorder %s789, %s791
      %p795 = scmp.eq.s32.totalorder %s120, 0
      %p796 = por %p794, %p795
      %p797 = scmp.ne.s32.totalorder %s789, %s791
      %p798 = scmp.eq.s32.totalorder %s125, 1
      %p799 = por %p797, %p798
      %p800 = scmp.ne.s32.totalorder %s791, %s792
      %p801 = scmp.eq.s32.totalorder %s125, 0
      %p802 = por %p800, %p801
      %p803 = scmp.ne.s32.totalorder %s791, %s792
      %p804 = scmp.eq.s32.totalorder %s126, 1
      %p805 = por %p803, %p804
      %p807 = scmp.ne.s32.totalorder %s792, %s806
      %p808 = scmp.eq.s32.totalorder %s126, 0
      %p809 = por %p807, %p808
      %s811 = sadd.s32 %s810, 1
      %p814 = scmp.eq.s32.totalorder %s120, 1
      %p815 = scmp.ne.s32.totalorder %s810, %s812
      %p816 = scmp.eq.s32.totalorder %s120, 0
      %p817 = por %p815, %p816
      %p818 = scmp.ne.s32.totalorder %s810, %s812
      %p819 = scmp.eq.s32.totalorder %s125, 1
      %p820 = por %p818, %p819
      %p821 = scmp.ne.s32.totalorder %s812, %s813
      %p822 = scmp.eq.s32.totalorder %s125, 0
      %p823 = por %p821, %p822
      %p824 = scmp.ne.s32.totalorder %s812, %s813
      %p825 = scmp.eq.s32.totalorder %s126, 1
      %p826 = por %p824, %p825
      %p828 = scmp.ne.s32.totalorder %s813, %s827
      %p829 = scmp.eq.s32.totalorder %s126, 0
      %p830 = por %p828, %p829
      %s832 = sadd.s32 %s831, 1
      %p835 = scmp.eq.s32.totalorder %s120, 1
      %p836 = scmp.ne.s32.totalorder %s831, %s833
      %p837 = scmp.eq.s32.totalorder %s120, 0
      %p838 = por %p836, %p837
      %p839 = scmp.ne.s32.totalorder %s831, %s833
      %p840 = scmp.eq.s32.totalorder %s125, 1
      %p841 = por %p839, %p840
      %p842 = scmp.ne.s32.totalorder %s833, %s834
      %p843 = scmp.eq.s32.totalorder %s125, 0
      %p844 = por %p842, %p843
      %p845 = scmp.ne.s32.totalorder %s833, %s834
      %p846 = scmp.eq.s32.totalorder %s126, 1
      %p847 = por %p845, %p846
      %p849 = scmp.ne.s32.totalorder %s834, %s848
      %p850 = scmp.eq.s32.totalorder %s126, 0
      %p851 = por %p849, %p850
      %s853 = sadd.s32 %s852, 1
      %p856 = scmp.eq.s32.totalorder %s120, 1
      %p857 = scmp.ne.s32.totalorder %s852, %s854
      %p858 = scmp.eq.s32.totalorder %s120, 0
      %p859 = por %p857, %p858
      %p860 = scmp.ne.s32.totalorder %s852, %s854
      %p861 = scmp.eq.s32.totalorder %s125, 1
      %p862 = por %p860, %p861
      %p863 = scmp.ne.s32.totalorder %s854, %s855
      %p864 = scmp.eq.s32.totalorder %s125, 0
      %p865 = por %p863, %p864
      %p866 = scmp.ne.s32.totalorder %s854, %s855
      %p867 = scmp.eq.s32.totalorder %s126, 1
      %p868 = por %p866, %p867
      %p870 = scmp.ne.s32.totalorder %s855, %s869
      %p871 = scmp.eq.s32.totalorder %s126, 0
      %p872 = por %p870, %p871
      %s874 = sadd.s32 %s873, 1
      %p877 = scmp.eq.s32.totalorder %s120, 1
      %p878 = scmp.ne.s32.totalorder %s873, %s875
      %p879 = scmp.eq.s32.totalorder %s120, 0
      %p880 = por %p878, %p879
      %p881 = scmp.ne.s32.totalorder %s873, %s875
      %p882 = scmp.eq.s32.totalorder %s125, 1
      %p883 = por %p881, %p882
      %p884 = scmp.ne.s32.totalorder %s875, %s876
      %p885 = scmp.eq.s32.totalorder %s125, 0
      %p886 = por %p884, %p885
      %p887 = scmp.ne.s32.totalorder %s875, %s876
      %p888 = scmp.eq.s32.totalorder %s126, 1
      %p889 = por %p887, %p888
      %p891 = scmp.ne.s32.totalorder %s876, %s890
      %p892 = scmp.eq.s32.totalorder %s126, 0
      %p893 = por %p891, %p892
      %s895 = sadd.s32 %s894, 1
      %p898 = scmp.eq.s32.totalorder %s120, 1
      %p899 = scmp.ne.s32.totalorder %s894, %s896
      %p900 = scmp.eq.s32.totalorder %s120, 0
      %p901 = por %p899, %p900
      %p902 = scmp.ne.s32.totalorder %s894, %s896
      %p903 = scmp.eq.s32.totalorder %s125, 1
      %p904 = por %p902, %p903
      %p905 = scmp.ne.s32.totalorder %s896, %s897
      %p906 = scmp.eq.s32.totalorder %s125, 0
      %p907 = por %p905, %p906
      %p908 = scmp.ne.s32.totalorder %s896, %s897
      %p909 = scmp.eq.s32.totalorder %s126, 1
      %p910 = por %p908, %p909
      %p912 = scmp.ne.s32.totalorder %s897, %s911
      %p913 = scmp.eq.s32.totalorder %s126, 0
      %p914 = por %p912, %p913
      %s916 = sadd.s32 %s915, 1
      %p919 = scmp.eq.s32.totalorder %s120, 1
      %p920 = scmp.ne.s32.totalorder %s915, %s917
      %p921 = scmp.eq.s32.totalorder %s120, 0
      %p922 = por %p920, %p921
      %p923 = scmp.ne.s32.totalorder %s915, %s917
      %p924 = scmp.eq.s32.totalorder %s125, 1
      %p925 = por %p923, %p924
      %p926 = scmp.ne.s32.totalorder %s917, %s918
      %p927 = scmp.eq.s32.totalorder %s125, 0
      %p928 = por %p926, %p927
      %p929 = scmp.ne.s32.totalorder %s917, %s918
      %p930 = scmp.eq.s32.totalorder %s126, 1
      %p931 = por %p929, %p930
      %p933 = scmp.ne.s32.totalorder %s918, %s932
      %p934 = scmp.eq.s32.totalorder %s126, 0
      %p935 = por %p933, %p934
      %s937 = sadd.s32 %s936, 1
      %p940 = scmp.eq.s32.totalorder %s120, 1
      %p941 = scmp.ne.s32.totalorder %s936, %s938
      %p942 = scmp.eq.s32.totalorder %s120, 0
      %p943 = por %p941, %p942
      %p944 = scmp.ne.s32.totalorder %s936, %s938
      %p945 = scmp.eq.s32.totalorder %s125, 1
      %p946 = por %p944, %p945
      %p947 = scmp.ne.s32.totalorder %s938, %s939
      %p948 = scmp.eq.s32.totalorder %s125, 0
      %p949 = por %p947, %p948
      %p950 = scmp.ne.s32.totalorder %s938, %s939
      %p951 = scmp.eq.s32.totalorder %s126, 1
      %p952 = por %p950, %p951
      %p954 = scmp.ne.s32.totalorder %s939, %s953
      %p955 = scmp.eq.s32.totalorder %s126, 0
      %p956 = por %p954, %p955
      %s958 = sadd.s32 %s957, 1
      %p961 = scmp.eq.s32.totalorder %s120, 1
      %p962 = scmp.ne.s32.totalorder %s957, %s959
      %p963 = scmp.eq.s32.totalorder %s120, 0
      %p964 = por %p962, %p963
      %p965 = scmp.ne.s32.totalorder %s957, %s959
      %p966 = scmp.eq.s32.totalorder %s125, 1
      %p967 = por %p965, %p966
      %p968 = scmp.ne.s32.totalorder %s959, %s960
      %p969 = scmp.eq.s32.totalorder %s125, 0
      %p970 = por %p968, %p969
      %p971 = scmp.ne.s32.totalorder %s959, %s960
      %p972 = scmp.eq.s32.totalorder %s126, 1
      %p973 = por %p971, %p972
      %p975 = scmp.ne.s32.totalorder %s960, %s974
      %p976 = scmp.eq.s32.totalorder %s126, 0
      %p977 = por %p975, %p976
      %s979 = sadd.s32 %s978, 1
      %p982 = scmp.eq.s32.totalorder %s120, 1
      %p983 = scmp.ne.s32.totalorder %s978, %s980
      %p984 = scmp.eq.s32.totalorder %s120, 0
      %p985 = por %p983, %p984
      %p986 = scmp.ne.s32.totalorder %s978, %s980
      %p987 = scmp.eq.s32.totalorder %s125, 1
      %p988 = por %p986, %p987
      %p989 = scmp.ne.s32.totalorder %s980, %s981
      %p990 = scmp.eq.s32.totalorder %s125, 0
      %p991 = por %p989, %p990
      %p992 = scmp.ne.s32.totalorder %s980, %s981
      %p993 = scmp.eq.s32.totalorder %s126, 1
      %p994 = por %p992, %p993
      %p996 = scmp.ne.s32.totalorder %s981, %s995
      %p997 = scmp.eq.s32.totalorder %s126, 0
      %p998 = por %p996, %p997
      %s1000 = sadd.s32 %s999, 1
      %p1003 = scmp.eq.s32.totalorder %s120, 1
      %p1004 = scmp.ne.s32.totalorder %s999, %s1001
      %p1005 = scmp.eq.s32.totalorder %s120, 0
      %p1006 = por %p1004, %p1005
      %p1007 = scmp.ne.s32.totalorder %s999, %s1001
      %p1008 = scmp.eq.s32.totalorder %s125, 1
      %p1009 = por %p1007, %p1008
      %p1010 = scmp.ne.s32.totalorder %s1001, %s1002
      %p1011 = scmp.eq.s32.totalorder %s125, 0
      %p1012 = por %p1010, %p1011
      %p1013 = scmp.ne.s32.totalorder %s1001, %s1002
      %p1014 = scmp.eq.s32.totalorder %s126, 1
      %p1015 = por %p1013, %p1014
      %p1017 = scmp.ne.s32.totalorder %s1002, %s1016
      %p1018 = scmp.eq.s32.totalorder %s126, 0
      %p1019 = por %p1017, %p1018
      %s1021 = sadd.s32 %s1020, 1
      %p1024 = scmp.eq.s32.totalorder %s120, 1
      %p1025 = scmp.ne.s32.totalorder %s1020, %s1022
      %p1026 = scmp.eq.s32.totalorder %s120, 0
      %p1027 = por %p1025, %p1026
      %p1028 = scmp.ne.s32.totalorder %s1020, %s1022
      %p1029 = scmp.eq.s32.totalorder %s125, 1
      %p1030 = por %p1028, %p1029
      %p1031 = scmp.ne.s32.totalorder %s1022, %s1023
      %p1032 = scmp.eq.s32.totalorder %s125, 0
      %p1033 = por %p1031, %p1032
      %p1034 = scmp.ne.s32.totalorder %s1022, %s1023
      %p1035 = scmp.eq.s32.totalorder %s126, 1
      %p1036 = por %p1034, %p1035
      %p1038 = scmp.ne.s32.totalorder %s1023, %s1037
      %p1039 = scmp.eq.s32.totalorder %s126, 0
      %p1040 = por %p1038, %p1039
      %s1042 = sadd.s32 %s1041, 1
      %p1045 = scmp.eq.s32.totalorder %s120, 1
      %p1046 = scmp.ne.s32.totalorder %s1041, %s1043
      %p1047 = scmp.eq.s32.totalorder %s120, 0
      %p1048 = por %p1046, %p1047
      %p1049 = scmp.ne.s32.totalorder %s1041, %s1043
      %p1050 = scmp.eq.s32.totalorder %s125, 1
      %p1051 = por %p1049, %p1050
      %p1052 = scmp.ne.s32.totalorder %s1043, %s1044
      %p1053 = scmp.eq.s32.totalorder %s125, 0
      %p1054 = por %p1052, %p1053
      %p1055 = scmp.ne.s32.totalorder %s1043, %s1044
      %p1056 = scmp.eq.s32.totalorder %s126, 1
      %p1057 = por %p1055, %p1056
      %p1059 = scmp.ne.s32.totalorder %s1044, %s1058
      %p1060 = scmp.eq.s32.totalorder %s126, 0
      %p1061 = por %p1059, %p1060
      %s1063 = sadd.s32 %s1062, 1
      %p1066 = scmp.eq.s32.totalorder %s120, 1
      %p1067 = scmp.ne.s32.totalorder %s1062, %s1064
      %p1068 = scmp.eq.s32.totalorder %s120, 0
      %p1069 = por %p1067, %p1068
      %p1070 = scmp.ne.s32.totalorder %s1062, %s1064
      %p1071 = scmp.eq.s32.totalorder %s125, 1
      %p1072 = por %p1070, %p1071
      %p1073 = scmp.ne.s32.totalorder %s1064, %s1065
      %p1074 = scmp.eq.s32.totalorder %s125, 0
      %p1075 = por %p1073, %p1074
      %p1076 = scmp.ne.s32.totalorder %s1064, %s1065
      %p1077 = scmp.eq.s32.totalorder %s126, 1
      %p1078 = por %p1076, %p1077
      %p1080 = scmp.ne.s32.totalorder %s1065, %s1079
      %p1081 = scmp.eq.s32.totalorder %s126, 0
      %p1082 = por %p1080, %p1081
      %s1084 = sadd.s32 %s1083, 1
      %p1087 = scmp.eq.s32.totalorder %s120, 1
      %p1088 = scmp.ne.s32.totalorder %s1083, %s1085
      %p1089 = scmp.eq.s32.totalorder %s120, 0
      %p1090 = por %p1088, %p1089
      %p1091 = scmp.ne.s32.totalorder %s1083, %s1085
      %p1092 = scmp.eq.s32.totalorder %s125, 1
      %p1093 = por %p1091, %p1092
      %p1094 = scmp.ne.s32.totalorder %s1085, %s1086
      %p1095 = scmp.eq.s32.totalorder %s125, 0
      %p1096 = por %p1094, %p1095
      %p1097 = scmp.ne.s32.totalorder %s1085, %s1086
      %p1098 = scmp.eq.s32.totalorder %s126, 1
      %p1099 = por %p1097, %p1098
      %p1101 = scmp.ne.s32.totalorder %s1086, %s1100
      %p1102 = scmp.eq.s32.totalorder %s126, 0
      %p1103 = por %p1101, %p1102
      %s1105 = sadd.s32 %s1104, 1
      %p1108 = scmp.eq.s32.totalorder %s120, 1
      %p1109 = scmp.ne.s32.totalorder %s1104, %s1106
      %p1110 = scmp.eq.s32.totalorder %s120, 0
      %p1111 = por %p1109, %p1110
      %p1112 = scmp.ne.s32.totalorder %s1104, %s1106
      %p1113 = scmp.eq.s32.totalorder %s125, 1
      %p1114 = por %p1112, %p1113
      %p1115 = scmp.ne.s32.totalorder %s1106, %s1107
      %p1116 = scmp.eq.s32.totalorder %s125, 0
      %p1117 = por %p1115, %p1116
      %p1118 = scmp.ne.s32.totalorder %s1106, %s1107
      %p1119 = scmp.eq.s32.totalorder %s126, 1
      %p1120 = por %p1118, %p1119
      %p1122 = scmp.ne.s32.totalorder %s1107, %s1121
      %p1123 = scmp.eq.s32.totalorder %s126, 0
      %p1124 = por %p1122, %p1123
      %s1126 = sadd.s32 %s1125, 1
      %p1129 = scmp.eq.s32.totalorder %s120, 1
      %p1130 = scmp.ne.s32.totalorder %s1125, %s1127
      %p1131 = scmp.eq.s32.totalorder %s120, 0
      %p1132 = por %p1130, %p1131
      %p1133 = scmp.ne.s32.totalorder %s1125, %s1127
      %p1134 = scmp.eq.s32.totalorder %s125, 1
      %p1135 = por %p1133, %p1134
      %p1136 = scmp.ne.s32.totalorder %s1127, %s1128
      %p1137 = scmp.eq.s32.totalorder %s125, 0
      %p1138 = por %p1136, %p1137
      %p1139 = scmp.ne.s32.totalorder %s1127, %s1128
      %p1140 = scmp.eq.s32.totalorder %s126, 1
      %p1141 = por %p1139, %p1140
      %p1143 = scmp.ne.s32.totalorder %s1128, %s1142
      %p1144 = scmp.eq.s32.totalorder %s126, 0
      %p1145 = por %p1143, %p1144
      %s1146 = ssub.s32 %s120, %s127
      %p1147 = scmp.eq.s32.totalorder %s1146, 0
      %s1149 = sadd.s32 %s1148, 1
      %s1150 = scalar_select %p1147, %s1148, %s1149
      %p1153 = pneg %p1147
      %p1154 = scmp.eq.s32.totalorder %s120, 1
      %p1155 = por %p1153, %p1154
      %p1156 = scmp.ne.s32.totalorder %s1148, %s1151
      %p1157 = scmp.eq.s32.totalorder %s120, 0
      %p1158 = por %p1156, %p1157
      %p1159 = scmp.ne.s32.totalorder %s1148, %s1151
      %p1160 = scmp.eq.s32.totalorder %s125, 1
      %p1161 = por %p1159, %p1160
      %p1162 = scmp.ne.s32.totalorder %s1151, %s1152
      %p1163 = scmp.eq.s32.totalorder %s125, 0
      %p1164 = por %p1162, %p1163
      %p1165 = scmp.ne.s32.totalorder %s1151, %s1152
      %p1166 = scmp.eq.s32.totalorder %s126, 1
      %p1167 = por %p1165, %p1166
      %p1169 = scmp.ne.s32.totalorder %s1152, %s1168
      %p1170 = scmp.eq.s32.totalorder %s126, 0
      %p1171 = por %p1169, %p1170
      %s1172 = ssub.s32 %s120, %s127
      %p1173 = scmp.eq.s32.totalorder %s1172, 0
      %s1175 = sadd.s32 %s1174, 1
      %s1176 = scalar_select %p1173, %s1174, %s1175
      %p1179 = pneg %p1173
      %p1180 = scmp.eq.s32.totalorder %s120, 1
      %p1181 = por %p1179, %p1180
      %p1182 = scmp.ne.s32.totalorder %s1174, %s1177
      %p1183 = scmp.eq.s32.totalorder %s120, 0
      %p1184 = por %p1182, %p1183
      %p1185 = scmp.ne.s32.totalorder %s1174, %s1177
      %p1186 = scmp.eq.s32.totalorder %s125, 1
      %p1187 = por %p1185, %p1186
      %p1188 = scmp.ne.s32.totalorder %s1177, %s1178
      %p1189 = scmp.eq.s32.totalorder %s125, 0
      %p1190 = por %p1188, %p1189
      %p1191 = scmp.ne.s32.totalorder %s1177, %s1178
      %p1192 = scmp.eq.s32.totalorder %s126, 1
      %p1193 = por %p1191, %p1192
      %p1195 = scmp.ne.s32.totalorder %s1178, %s1194
      %p1196 = scmp.eq.s32.totalorder %s126, 0
      %p1197 = por %p1195, %p1196
      %p1198 = scmp.le.s32.totalorder 1, %s120
      %p1199 = scmp.lt.s32.totalorder %s120, 3
      %p1200 = pnand %p1198, %p1199
      %p1201 = pneg %p1200
      // Predicated region
      $region9: #{dmf_block_forward.1} parent=5 // pred_check
        _
      $region10: #{dmf_block_forward.1} parent=5 // pred_check_branch
        %1203 = sbr.rel (%p1200) target = $region12
      $region11: #{dmf_block_forward.1} parent=5 // pred_region
        %s1204 = ssub.s32 %s120, 1
        // Predicated region
        $region13: #{dmf_block_forward.1} parent=11 // pred_check
          %p1205 = pneg %p193
        $region14: #{dmf_block_forward.1} parent=11 // pred_check_branch
          %1207 = sbr.rel (%p1205) target = $region16
        $region15: #{dmf_block_forward.1} parent=11 // pred_region
          _
        $region16: #{dmf_block_forward.1} parent=11 // pred_fallthru
          _
        // Predicated region
        $region17: #{dmf_block_forward.1} parent=11 // pred_check
          %p1208 = pneg %p214
        $region18: #{dmf_block_forward.1} parent=11 // pred_check_branch
          %1210 = sbr.rel (%p1208) target = $region20
        $region19: #{dmf_block_forward.1} parent=11 // pred_region
          _
        $region20: #{dmf_block_forward.1} parent=11 // pred_fallthru
          _
        // Predicated region
        $region21: #{dmf_block_forward.1} parent=11 // pred_check
          %p1211 = pneg %p235
        $region22: #{dmf_block_forward.1} parent=11 // pred_check_branch
          %1213 = sbr.rel (%p1211) target = $region24
        $region23: #{dmf_block_forward.1} parent=11 // pred_region
          _
        $region24: #{dmf_block_forward.1} parent=11 // pred_fallthru
          _
        // Predicated region
        $region25: #{dmf_block_forward.1} parent=11 // pred_check
          %p1214 = pneg %p256
        $region26: #{dmf_block_forward.1} parent=11 // pred_check_branch
          %1216 = sbr.rel (%p1214) target = $region28
        $region27: #{dmf_block_forward.1} parent=11 // pred_region
          _
        $region28: #{dmf_block_forward.1} parent=11 // pred_fallthru
          _
        // Predicated region
        $region29: #{dmf_block_forward.1} parent=11 // pred_check
          %p1217 = pneg %p277
        $region30: #{dmf_block_forward.1} parent=11 // pred_check_branch
          %1219 = sbr.rel (%p1217) target = $region32
        $region31: #{dmf_block_forward.1} parent=11 // pred_region
          _
        $region32: #{dmf_block_forward.1} parent=11 // pred_fallthru
          _
        // Predicated region
        $region33: #{dmf_block_forward.1} parent=11 // pred_check
          %p1220 = pneg %p298
        $region34: #{dmf_block_forward.1} parent=11 // pred_check_branch
          %1222 = sbr.rel (%p1220) target = $region36
        $region35: #{dmf_block_forward.1} parent=11 // pred_region
          _
        $region36: #{dmf_block_forward.1} parent=11 // pred_fallthru
          _
        // Predicated region
        $region37: #{dmf_block_forward.1} parent=11 // pred_check
          %p1223 = pneg %p319
        $region38: #{dmf_block_forward.1} parent=11 // pred_check_branch
          %1225 = sbr.rel (%p1223) target = $region40
        $region39: #{dmf_block_forward.1} parent=11 // pred_region
          _
        $region40: #{dmf_block_forward.1} parent=11 // pred_fallthru
          _
        // Predicated region
        $region41: #{dmf_block_forward.1} parent=11 // pred_check
          %p1226 = pneg %p340
        $region42: #{dmf_block_forward.1} parent=11 // pred_check_branch
          %1228 = sbr.rel (%p1226) target = $region44
        $region43: #{dmf_block_forward.1} parent=11 // pred_region
          _
        $region44: #{dmf_block_forward.1} parent=11 // pred_fallthru
          _
        // Predicated region
        $region45: #{dmf_block_forward.1} parent=11 // pred_check
          %p1229 = pneg %p361
        $region46: #{dmf_block_forward.1} parent=11 // pred_check_branch
          %1231 = sbr.rel (%p1229) target = $region48
        $region47: #{dmf_block_forward.1} parent=11 // pred_region
          _
        $region48: #{dmf_block_forward.1} parent=11 // pred_fallthru
          _
        // Predicated region
        $region49: #{dmf_block_forward.1} parent=11 // pred_check
          %p1232 = pneg %p382
        $region50: #{dmf_block_forward.1} parent=11 // pred_check_branch
          %1234 = sbr.rel (%p1232) target = $region52
        $region51: #{dmf_block_forward.1} parent=11 // pred_region
          _
        $region52: #{dmf_block_forward.1} parent=11 // pred_fallthru
          _
        // Predicated region
        $region53: #{dmf_block_forward.1} parent=11 // pred_check
          %p1235 = pneg %p403
        $region54: #{dmf_block_forward.1} parent=11 // pred_check_branch
          %1237 = sbr.rel (%p1235) target = $region56
        $region55: #{dmf_block_forward.1} parent=11 // pred_region
          _
        $region56: #{dmf_block_forward.1} parent=11 // pred_fallthru
          _
        // Predicated region
        $region57: #{dmf_block_forward.1} parent=11 // pred_check
          %p1238 = pneg %p424
        $region58: #{dmf_block_forward.1} parent=11 // pred_check_branch
          %1240 = sbr.rel (%p1238) target = $region60
        $region59: #{dmf_block_forward.1} parent=11 // pred_region
          _
        $region60: #{dmf_block_forward.1} parent=11 // pred_fallthru
          _
        // Predicated region
        $region61: #{dmf_block_forward.1} parent=11 // pred_check
          %p1241 = pneg %p445
        $region62: #{dmf_block_forward.1} parent=11 // pred_check_branch
          %1243 = sbr.rel (%p1241) target = $region64
        $region63: #{dmf_block_forward.1} parent=11 // pred_region
          _
        $region64: #{dmf_block_forward.1} parent=11 // pred_fallthru
          _
        // Predicated region
        $region65: #{dmf_block_forward.1} parent=11 // pred_check
          %p1244 = pneg %p466
        $region66: #{dmf_block_forward.1} parent=11 // pred_check_branch
          %1246 = sbr.rel (%p1244) target = $region68
        $region67: #{dmf_block_forward.1} parent=11 // pred_region
          _
        $region68: #{dmf_block_forward.1} parent=11 // pred_fallthru
          _
        // Predicated region
        $region69: #{dmf_block_forward.1} parent=11 // pred_check
          %p1247 = pneg %p487
        $region70: #{dmf_block_forward.1} parent=11 // pred_check_branch
          %1249 = sbr.rel (%p1247) target = $region72
        $region71: #{dmf_block_forward.1} parent=11 // pred_region
          _
        $region72: #{dmf_block_forward.1} parent=11 // pred_fallthru
          _
        // Predicated region
        $region73: #{dmf_block_forward.1} parent=11 // pred_check
          %p1250 = pneg %p508
        $region74: #{dmf_block_forward.1} parent=11 // pred_check_branch
          %1252 = sbr.rel (%p1250) target = $region76
        $region75: #{dmf_block_forward.1} parent=11 // pred_region
          _
        $region76: #{dmf_block_forward.1} parent=11 // pred_fallthru
          _
        // Predicated region
        $region77: #{dmf_block_forward.1} parent=11 // pred_check
          %p1253 = pneg %p529
        $region78: #{dmf_block_forward.1} parent=11 // pred_check_branch
          %1255 = sbr.rel (%p1253) target = $region80
        $region79: #{dmf_block_forward.1} parent=11 // pred_region
          _
        $region80: #{dmf_block_forward.1} parent=11 // pred_fallthru
          _
        // Predicated region
        $region81: #{dmf_block_forward.1} parent=11 // pred_check
          %p1256 = pneg %p550
        $region82: #{dmf_block_forward.1} parent=11 // pred_check_branch
          %1258 = sbr.rel (%p1256) target = $region84
        $region83: #{dmf_block_forward.1} parent=11 // pred_region
          _
        $region84: #{dmf_block_forward.1} parent=11 // pred_fallthru
          _
        // Predicated region
        $region85: #{dmf_block_forward.1} parent=11 // pred_check
          %p1259 = pneg %p571
        $region86: #{dmf_block_forward.1} parent=11 // pred_check_branch
          %1261 = sbr.rel (%p1259) target = $region88
        $region87: #{dmf_block_forward.1} parent=11 // pred_region
          %1263 = vsyncadd [#allocation5], 0
          %s1265 = sshll.u32 %s41, 4
          %s1266 = int_to_ptr.hbm [resolvable:$true] %s1265
          %s1267 = sshll.u32 [#allocation4], 4
          %s1268 = int_to_ptr.vmem [resolvable:$true] %s1267
          %1270 = dma.hbm_to_vmem [thread:$0]  %s1266, 16, %s1268, [#allocation5]
        $region88: #{dmf_block_forward.1} parent=11 // pred_fallthru
          _
        // Predicated region
        $region89: #{dmf_block_forward.1} parent=11 // pred_check
          %p1271 = pneg %p592
        $region90: #{dmf_block_forward.1} parent=11 // pred_check_branch
          %1273 = sbr.rel (%p1271) target = $region92
        $region91: #{dmf_block_forward.1} parent=11 // pred_region
          _
        $region92: #{dmf_block_forward.1} parent=11 // pred_fallthru
          _
        // Predicated region
        $region93: #{dmf_block_forward.1} parent=11 // pred_check
          %p1274 = pneg %p613
        $region94: #{dmf_block_forward.1} parent=11 // pred_check_branch
          %1276 = sbr.rel (%p1274) target = $region96
        $region95: #{dmf_block_forward.1} parent=11 // pred_region
          _
        $region96: #{dmf_block_forward.1} parent=11 // pred_fallthru
          _
        // Predicated region
        $region97: #{dmf_block_forward.1} parent=11 // pred_check
          %p1277 = pneg %p634
        $region98: #{dmf_block_forward.1} parent=11 // pred_check_branch
          %1279 = sbr.rel (%p1277) target = $region100
        $region99: #{dmf_block_forward.1} parent=11 // pred_region
          _
        $region100: #{dmf_block_forward.1} parent=11 // pred_fallthru
          _
        // Predicated region
        $region101: #{dmf_block_forward.1} parent=11 // pred_check
          %p1280 = pneg %p655
        $region102: #{dmf_block_forward.1} parent=11 // pred_check_branch
          %1282 = sbr.rel (%p1280) target = $region104
        $region103: #{dmf_block_forward.1} parent=11 // pred_region
          _
        $region104: #{dmf_block_forward.1} parent=11 // pred_fallthru
          _
        // Predicated region
        $region105: #{dmf_block_forward.1} parent=11 // pred_check
          %p1283 = pneg %p676
        $region106: #{dmf_block_forward.1} parent=11 // pred_check_branch
          %1285 = sbr.rel (%p1283) target = $region108
        $region107: #{dmf_block_forward.1} parent=11 // pred_region
          _
        $region108: #{dmf_block_forward.1} parent=11 // pred_fallthru
          _
        // Predicated region
        $region109: #{dmf_block_forward.1} parent=11 // pred_check
          %p1286 = pneg %p697
        $region110: #{dmf_block_forward.1} parent=11 // pred_check_branch
          %1288 = sbr.rel (%p1286) target = $region112
        $region111: #{dmf_block_forward.1} parent=11 // pred_region
          _
        $region112: #{dmf_block_forward.1} parent=11 // pred_fallthru
          _
        // Predicated region
        $region113: #{dmf_block_forward.1} parent=11 // pred_check
          %p1289 = pneg %p718
        $region114: #{dmf_block_forward.1} parent=11 // pred_check_branch
          %1291 = sbr.rel (%p1289) target = $region116
        $region115: #{dmf_block_forward.1} parent=11 // pred_region
          _
        $region116: #{dmf_block_forward.1} parent=11 // pred_fallthru
          _
        // Predicated region
        $region117: #{dmf_block_forward.1} parent=11 // pred_check
          %p1292 = pneg %p739
        $region118: #{dmf_block_forward.1} parent=11 // pred_check_branch
          %1294 = sbr.rel (%p1292) target = $region120
        $region119: #{dmf_block_forward.1} parent=11 // pred_region
          %1296 = vsyncadd [#allocation8], 0
          %s1298 = sshll.u32 %s57, 4
          %s1299 = int_to_ptr.hbm [resolvable:$true] %s1298
          %s1300 = sshll.u32 [#allocation7], 4
          %s1301 = int_to_ptr.vmem [resolvable:$true] %s1300
          %1303 = dma.hbm_to_vmem [thread:$0]  %s1299, 16, %s1301, [#allocation8]
        $region120: #{dmf_block_forward.1} parent=11 // pred_fallthru
          _
        // Predicated region
        $region121: #{dmf_block_forward.1} parent=11 // pred_check
          %p1304 = pneg %p760
        $region122: #{dmf_block_forward.1} parent=11 // pred_check_branch
          %1306 = sbr.rel (%p1304) target = $region124
        $region123: #{dmf_block_forward.1} parent=11 // pred_region
          _
        $region124: #{dmf_block_forward.1} parent=11 // pred_fallthru
          _
        // Predicated region
        $region125: #{dmf_block_forward.1} parent=11 // pred_check
          %p1307 = pneg %p781
        $region126: #{dmf_block_forward.1} parent=11 // pred_check_branch
          %1309 = sbr.rel (%p1307) target = $region128
        $region127: #{dmf_block_forward.1} parent=11 // pred_region
          _
        $region128: #{dmf_block_forward.1} parent=11 // pred_fallthru
          _
        // Predicated region
        $region129: #{dmf_block_forward.1} parent=11 // pred_check
          %p1310 = pneg %p802
        $region130: #{dmf_block_forward.1} parent=11 // pred_check_branch
          %1312 = sbr.rel (%p1310) target = $region132
        $region131: #{dmf_block_forward.1} parent=11 // pred_region
          _
        $region132: #{dmf_block_forward.1} parent=11 // pred_fallthru
          _
        // Predicated region
        $region133: #{dmf_block_forward.1} parent=11 // pred_check
          %p1313 = pneg %p823
        $region134: #{dmf_block_forward.1} parent=11 // pred_check_branch
          %1315 = sbr.rel (%p1313) target = $region136
        $region135: #{dmf_block_forward.1} parent=11 // pred_region
          %1317 = vsyncadd [#allocation8], 0
          %s1319 = sshll.u32 %s65, 4
          %s1320 = int_to_ptr.hbm [resolvable:$true] %s1319
          %s1321 = sshll.u32 [#allocation9], 4
          %s1322 = int_to_ptr.vmem [resolvable:$true] %s1321
          %1324 = dma.hbm_to_vmem [thread:$0]  %s1320, 16, %s1322, [#allocation8]
        $region136: #{dmf_block_forward.1} parent=11 // pred_fallthru
          _
        // Predicated region
        $region137: #{dmf_block_forward.1} parent=11 // pred_check
          %p1325 = pneg %p844
        $region138: #{dmf_block_forward.1} parent=11 // pred_check_branch
          %1327 = sbr.rel (%p1325) target = $region140
        $region139: #{dmf_block_forward.1} parent=11 // pred_region
          _
        $region140: #{dmf_block_forward.1} parent=11 // pred_fallthru
          _
        // Predicated region
        $region141: #{dmf_block_forward.1} parent=11 // pred_check
          %p1328 = pneg %p865
        $region142: #{dmf_block_forward.1} parent=11 // pred_check_branch
          %1330 = sbr.rel (%p1328) target = $region144
        $region143: #{dmf_block_forward.1} parent=11 // pred_region
          %1332 = vsyncadd [#allocation11], 0
          %s1333 = sshll.u32 %s69, 4
          %s1334 = int_to_ptr.hbm [resolvable:$true] %s1333
          %s1335 = sshll.u32 [#allocation10], 4
          %s1336 = int_to_ptr.vmem [resolvable:$true] %s1335
          %1341 = dma.hbm_to_vmem [thread:$0]  %s1334, 256, %s1336, [#allocation11], 128, 128, 8
        $region144: #{dmf_block_forward.1} parent=11 // pred_fallthru
          _
        // Predicated region
        $region145: #{dmf_block_forward.1} parent=11 // pred_check
          %p1342 = pneg %p886
        $region146: #{dmf_block_forward.1} parent=11 // pred_check_branch
          %1344 = sbr.rel (%p1342) target = $region148
        $region147: #{dmf_block_forward.1} parent=11 // pred_region
          %1346 = vsyncadd [#allocation11], 0
          %s1348 = sshll.u32 %s71, 4
          %s1349 = int_to_ptr.hbm [resolvable:$true] %s1348
          %s1350 = sshll.u32 [#allocation12], 4
          %s1351 = int_to_ptr.vmem [resolvable:$true] %s1350
          %1353 = dma.hbm_to_vmem [thread:$0]  %s1349, 16, %s1351, [#allocation11]
        $region148: #{dmf_block_forward.1} parent=11 // pred_fallthru
          _
        // Predicated region
        $region149: #{dmf_block_forward.1} parent=11 // pred_check
          %p1354 = pneg %p907
        $region150: #{dmf_block_forward.1} parent=11 // pred_check_branch
          %1356 = sbr.rel (%p1354) target = $region152
        $region151: #{dmf_block_forward.1} parent=11 // pred_region
          _
        $region152: #{dmf_block_forward.1} parent=11 // pred_fallthru
          _
        // Predicated region
        $region153: #{dmf_block_forward.1} parent=11 // pred_check
          %p1357 = pneg %p928
        $region154: #{dmf_block_forward.1} parent=11 // pred_check_branch
          %1359 = sbr.rel (%p1357) target = $region156
        $region155: #{dmf_block_forward.1} parent=11 // pred_region
          _
        $region156: #{dmf_block_forward.1} parent=11 // pred_fallthru
          _
        // Predicated region
        $region157: #{dmf_block_forward.1} parent=11 // pred_check
          %p1360 = pneg %p949
        $region158: #{dmf_block_forward.1} parent=11 // pred_check_branch
          %1362 = sbr.rel (%p1360) target = $region160
        $region159: #{dmf_block_forward.1} parent=11 // pred_region
          %1364 = vsyncadd [#allocation14], 0
          %s1366 = sshll.u32 %s77, 4
          %s1367 = int_to_ptr.hbm [resolvable:$true] %s1366
          %s1368 = sshll.u32 [#allocation13], 4
          %s1369 = int_to_ptr.vmem [resolvable:$true] %s1368
          %1371 = dma.hbm_to_vmem [thread:$0]  %s1367, 16, %s1369, [#allocation14]
        $region160: #{dmf_block_forward.1} parent=11 // pred_fallthru
          _
        // Predicated region
        $region161: #{dmf_block_forward.1} parent=11 // pred_check
          %p1372 = pneg %p970
        $region162: #{dmf_block_forward.1} parent=11 // pred_check_branch
          %1374 = sbr.rel (%p1372) target = $region164
        $region163: #{dmf_block_forward.1} parent=11 // pred_region
          %1376 = vsyncadd [#allocation14], 0
          %s1378 = sshll.u32 %s79, 4
          %s1379 = int_to_ptr.hbm [resolvable:$true] %s1378
          %s1380 = sshll.u32 [#allocation15], 4
          %s1381 = int_to_ptr.vmem [resolvable:$true] %s1380
          %1383 = dma.hbm_to_vmem [thread:$0]  %s1379, 16, %s1381, [#allocation14]
        $region164: #{dmf_block_forward.1} parent=11 // pred_fallthru
          _
        // Predicated region
        $region165: #{dmf_block_forward.1} parent=11 // pred_check
          %p1384 = pneg %p991
        $region166: #{dmf_block_forward.1} parent=11 // pred_check_branch
          %1386 = sbr.rel (%p1384) target = $region168
        $region167: #{dmf_block_forward.1} parent=11 // pred_region
          %1388 = vsyncadd [#allocation17], 0
          %s1390 = sshll.u32 %s81, 4
          %s1391 = int_to_ptr.hbm [resolvable:$true] %s1390
          %s1392 = sshll.u32 [#allocation16], 4
          %s1393 = int_to_ptr.vmem [resolvable:$true] %s1392
          %1395 = dma.hbm_to_vmem [thread:$0]  %s1391, 16, %s1393, [#allocation17]
        $region168: #{dmf_block_forward.1} parent=11 // pred_fallthru
          _
        // Predicated region
        $region169: #{dmf_block_forward.1} parent=11 // pred_check
          %p1396 = pneg %p1012
        $region170: #{dmf_block_forward.1} parent=11 // pred_check_branch
          %1398 = sbr.rel (%p1396) target = $region172
        $region171: #{dmf_block_forward.1} parent=11 // pred_region
          %1400 = vsyncadd [#allocation17], 0
          %s1401 = sshll.u32 %s83, 4
          %s1402 = int_to_ptr.hbm [resolvable:$true] %s1401
          %s1403 = sshll.u32 [#allocation18], 4
          %s1404 = int_to_ptr.vmem [resolvable:$true] %s1403
          %1409 = dma.hbm_to_vmem [thread:$0]  %s1402, 512, %s1404, [#allocation17], 128, 128, 8
        $region172: #{dmf_block_forward.1} parent=11 // pred_fallthru
          _
        // Predicated region
        $region173: #{dmf_block_forward.1} parent=11 // pred_check
          %p1410 = pneg %p1033
        $region174: #{dmf_block_forward.1} parent=11 // pred_check_branch
          %1412 = sbr.rel (%p1410) target = $region176
        $region175: #{dmf_block_forward.1} parent=11 // pred_region
          %1414 = vsyncadd [#allocation20], 0
          %s1416 = sshll.u32 %s85, 4
          %s1417 = int_to_ptr.hbm [resolvable:$true] %s1416
          %s1418 = sshll.u32 [#allocation19], 4
          %s1419 = int_to_ptr.vmem [resolvable:$true] %s1418
          %1421 = dma.hbm_to_vmem [thread:$0]  %s1417, 16, %s1419, [#allocation20]
        $region176: #{dmf_block_forward.1} parent=11 // pred_fallthru
          _
        // Predicated region
        $region177: #{dmf_block_forward.1} parent=11 // pred_check
          %p1422 = pneg %p1054
        $region178: #{dmf_block_forward.1} parent=11 // pred_check_branch
          %1424 = sbr.rel (%p1422) target = $region180
        $region179: #{dmf_block_forward.1} parent=11 // pred_region
          %1426 = vsyncadd [#allocation20], 0
          %s1427 = sshll.u32 %s87, 4
          %s1428 = int_to_ptr.hbm [resolvable:$true] %s1427
          %s1429 = sshll.u32 [#allocation21], 4
          %s1430 = int_to_ptr.vmem [resolvable:$true] %s1429
          %1435 = dma.hbm_to_vmem [thread:$0]  %s1428, 256, %s1430, [#allocation20], 128, 128, 8
        $region180: #{dmf_block_forward.1} parent=11 // pred_fallthru
          _
        // Predicated region
        $region181: #{dmf_block_forward.1} parent=11 // pred_check
          %p1436 = pneg %p1075
        $region182: #{dmf_block_forward.1} parent=11 // pred_check_branch
          %1438 = sbr.rel (%p1436) target = $region184
        $region183: #{dmf_block_forward.1} parent=11 // pred_region
          %1440 = vsyncadd [#allocation23], 0
          %s1442 = sshll.u32 %s89, 4
          %s1443 = int_to_ptr.hbm [resolvable:$true] %s1442
          %s1444 = sshll.u32 [#allocation22], 4
          %s1445 = int_to_ptr.vmem [resolvable:$true] %s1444
          %1447 = dma.hbm_to_vmem [thread:$0]  %s1443, 16, %s1445, [#allocation23]
        $region184: #{dmf_block_forward.1} parent=11 // pred_fallthru
          _
        // Predicated region
        $region185: #{dmf_block_forward.1} parent=11 // pred_check
          %p1448 = pneg %p1096
        $region186: #{dmf_block_forward.1} parent=11 // pred_check_branch
          %1450 = sbr.rel (%p1448) target = $region188
        $region187: #{dmf_block_forward.1} parent=11 // pred_region
          %1452 = vsyncadd [#allocation23], 0
          %s1454 = sshll.u32 %s91, 4
          %s1455 = int_to_ptr.hbm [resolvable:$true] %s1454
          %s1456 = sshll.u32 [#allocation24], 4
          %s1457 = int_to_ptr.vmem [resolvable:$true] %s1456
          %1459 = dma.hbm_to_vmem [thread:$0]  %s1455, 16, %s1457, [#allocation23]
        $region188: #{dmf_block_forward.1} parent=11 // pred_fallthru
          _
        // Predicated region
        $region189: #{dmf_block_forward.1} parent=11 // pred_check
          %p1460 = pneg %p1117
        $region190: #{dmf_block_forward.1} parent=11 // pred_check_branch
          %1462 = sbr.rel (%p1460) target = $region192
        $region191: #{dmf_block_forward.1} parent=11 // pred_region
          _
        $region192: #{dmf_block_forward.1} parent=11 // pred_fallthru
          _
        // Predicated region
        $region193: #{dmf_block_forward.1} parent=11 // pred_check
          %p1463 = pneg %p1138
        $region194: #{dmf_block_forward.1} parent=11 // pred_check_branch
          %1465 = sbr.rel (%p1463) target = $region196
        $region195: #{dmf_block_forward.1} parent=11 // pred_region
          %1467 = vsyncadd [#allocation26], 0
          %s1469 = sshll.u32 %s95, 4
          %s1470 = int_to_ptr.hbm [resolvable:$true] %s1469
          %s1471 = sshll.u32 [#allocation25], 4
          %s1472 = int_to_ptr.vmem [resolvable:$true] %s1471
          %1474 = dma.hbm_to_vmem [thread:$0]  %s1470, 16, %s1472, [#allocation26]
        $region196: #{dmf_block_forward.1} parent=11 // pred_fallthru
          _
      $region12: #{dmf_block_forward.1} parent=5 // pred_fallthru
        _
      %p1475 = scmp.lt.s32.totalorder %s120, 2
      // Predicated region
      $region197: #{dmf_block_forward.1} parent=5 // pred_check
        %p1476 = pneg %p1475
      $region198: #{dmf_block_forward.1} parent=5 // pred_check_branch
        %1478 = sbr.rel (%p1476) target = $region200
      $region199: #{dmf_block_forward.1} parent=5 // pred_region
        // Predicated region
        $region201: #{dmf_block_forward.1} parent=199 // pred_check
          %p1479 = pneg %p140
        $region202: #{dmf_block_forward.1} parent=199 // pred_check_branch
          %1481 = sbr.rel (%p1479) target = $region204
        $region203: #{dmf_block_forward.1} parent=199 // pred_region
          %p1482 = scmp.lt.s32.totalorder %s120, 1
          %s1483 = scalar_select %p1482, %s120, 1
          %s1484 = smul.addr %s1483, 4
          %s1485 = scalar_lea.vmem %s1, %s1484
        $region204: #{dmf_block_forward.1} parent=199 // pred_fallthru
          _
        // Predicated region
        $region205: #{dmf_block_forward.1} parent=199 // pred_check
          %p1486 = pneg %p166
        $region206: #{dmf_block_forward.1} parent=199 // pred_check_branch
          %1488 = sbr.rel (%p1486) target = $region208
        $region207: #{dmf_block_forward.1} parent=199 // pred_region
          %p1489 = scmp.lt.s32.totalorder %s120, 1
          %s1490 = scalar_select %p1489, %s120, 1
          %s1491 = smul.addr %s1490, 8
          %s1492 = smul.addr %s1491, 8
          %s1493 = scalar_lea.vmem %s3, %s1492
        $region208: #{dmf_block_forward.1} parent=199 // pred_fallthru
          _
      $region200: #{dmf_block_forward.1} parent=5 // pred_fallthru
        _
      %p1494 = scmp.le.s32.totalorder 1, %s120
      %p1495 = scmp.lt.s32.totalorder %s120, 3
      %p1496 = pnand %p1494, %p1495
      %p1497 = pneg %p1496
      // Predicated region
      $region209: #{dmf_block_forward.1} parent=5 // pred_check
        _
      $region210: #{dmf_block_forward.1} parent=5 // pred_check_branch
        %1499 = sbr.rel (%p1496) target = $region212
      $region211: #{dmf_block_forward.1} parent=5 // pred_region
        %s1500 = ssub.s32 %s120, 1
        // Predicated region
        $region213: #{dmf_block_forward.1} parent=211 // pred_check
          %p1501 = pneg %p571
        $region214: #{dmf_block_forward.1} parent=211 // pred_check_branch
          %1503 = sbr.rel (%p1501) target = $region216
        $region215: #{dmf_block_forward.1} parent=211 // pred_region
          %1505 = dma.done [#allocation5], 16
        $region216: #{dmf_block_forward.1} parent=211 // pred_fallthru
          _
        // Predicated region
        $region217: #{dmf_block_forward.1} parent=211 // pred_check
          %p1506 = pneg %p739
        $region218: #{dmf_block_forward.1} parent=211 // pred_check_branch
          %1508 = sbr.rel (%p1506) target = $region220
        $region219: #{dmf_block_forward.1} parent=211 // pred_region
          %1510 = dma.done [#allocation8], 16
        $region220: #{dmf_block_forward.1} parent=211 // pred_fallthru
          _
        // Predicated region
        $region221: #{dmf_block_forward.1} parent=211 // pred_check
          %p1511 = pneg %p823
        $region222: #{dmf_block_forward.1} parent=211 // pred_check_branch
          %1513 = sbr.rel (%p1511) target = $region224
        $region223: #{dmf_block_forward.1} parent=211 // pred_region
          %1515 = dma.done [#allocation8], 16
        $region224: #{dmf_block_forward.1} parent=211 // pred_fallthru
          _
        // Predicated region
        $region225: #{dmf_block_forward.1} parent=211 // pred_check
          %p1516 = pneg %p865
        $region226: #{dmf_block_forward.1} parent=211 // pred_check_branch
          %1518 = sbr.rel (%p1516) target = $region228
        $region227: #{dmf_block_forward.1} parent=211 // pred_region
          %1520 = dma.done [#allocation11], 256
        $region228: #{dmf_block_forward.1} parent=211 // pred_fallthru
          _
        // Predicated region
        $region229: #{dmf_block_forward.1} parent=211 // pred_check
          %p1521 = pneg %p886
        $region230: #{dmf_block_forward.1} parent=211 // pred_check_branch
          %1523 = sbr.rel (%p1521) target = $region232
        $region231: #{dmf_block_forward.1} parent=211 // pred_region
          %1525 = dma.done [#allocation11], 16
        $region232: #{dmf_block_forward.1} parent=211 // pred_fallthru
          _
        // Predicated region
        $region233: #{dmf_block_forward.1} parent=211 // pred_check
          %p1526 = pneg %p949
        $region234: #{dmf_block_forward.1} parent=211 // pred_check_branch
          %1528 = sbr.rel (%p1526) target = $region236
        $region235: #{dmf_block_forward.1} parent=211 // pred_region
          %1530 = dma.done [#allocation14], 16
        $region236: #{dmf_block_forward.1} parent=211 // pred_fallthru
          _
        // Predicated region
        $region237: #{dmf_block_forward.1} parent=211 // pred_check
          %p1531 = pneg %p970
        $region238: #{dmf_block_forward.1} parent=211 // pred_check_branch
          %1533 = sbr.rel (%p1531) target = $region240
        $region239: #{dmf_block_forward.1} parent=211 // pred_region
          %1535 = dma.done [#allocation14], 16
        $region240: #{dmf_block_forward.1} parent=211 // pred_fallthru
          _
        // Predicated region
        $region241: #{dmf_block_forward.1} parent=211 // pred_check
          %p1536 = pneg %p991
        $region242: #{dmf_block_forward.1} parent=211 // pred_check_branch
          %1538 = sbr.rel (%p1536) target = $region244
        $region243: #{dmf_block_forward.1} parent=211 // pred_region
          %1540 = dma.done [#allocation17], 16
        $region244: #{dmf_block_forward.1} parent=211 // pred_fallthru
          _
        // Predicated region
        $region245: #{dmf_block_forward.1} parent=211 // pred_check
          %p1541 = pneg %p1012
        $region246: #{dmf_block_forward.1} parent=211 // pred_check_branch
          %1543 = sbr.rel (%p1541) target = $region248
        $region247: #{dmf_block_forward.1} parent=211 // pred_region
          %1545 = dma.done [#allocation17], 512
        $region248: #{dmf_block_forward.1} parent=211 // pred_fallthru
          _
        // Predicated region
        $region249: #{dmf_block_forward.1} parent=211 // pred_check
          %p1546 = pneg %p1033
        $region250: #{dmf_block_forward.1} parent=211 // pred_check_branch
          %1548 = sbr.rel (%p1546) target = $region252
        $region251: #{dmf_block_forward.1} parent=211 // pred_region
          %1550 = dma.done [#allocation20], 16
        $region252: #{dmf_block_forward.1} parent=211 // pred_fallthru
          _
        // Predicated region
        $region253: #{dmf_block_forward.1} parent=211 // pred_check
          %p1551 = pneg %p1054
        $region254: #{dmf_block_forward.1} parent=211 // pred_check_branch
          %1553 = sbr.rel (%p1551) target = $region256
        $region255: #{dmf_block_forward.1} parent=211 // pred_region
          %1555 = dma.done [#allocation20], 256
        $region256: #{dmf_block_forward.1} parent=211 // pred_fallthru
          _
        // Predicated region
        $region257: #{dmf_block_forward.1} parent=211 // pred_check
          %p1556 = pneg %p1075
        $region258: #{dmf_block_forward.1} parent=211 // pred_check_branch
          %1558 = sbr.rel (%p1556) target = $region260
        $region259: #{dmf_block_forward.1} parent=211 // pred_region
          %1560 = dma.done [#allocation23], 16
        $region260: #{dmf_block_forward.1} parent=211 // pred_fallthru
          _
        // Predicated region
        $region261: #{dmf_block_forward.1} parent=211 // pred_check
          %p1561 = pneg %p1096
        $region262: #{dmf_block_forward.1} parent=211 // pred_check_branch
          %1563 = sbr.rel (%p1561) target = $region264
        $region263: #{dmf_block_forward.1} parent=211 // pred_region
          %1565 = dma.done [#allocation23], 16
        $region264: #{dmf_block_forward.1} parent=211 // pred_fallthru
          _
        // Predicated region
        $region265: #{dmf_block_forward.1} parent=211 // pred_check
          %p1566 = pneg %p1138
        $region266: #{dmf_block_forward.1} parent=211 // pred_check_branch
          %1568 = sbr.rel (%p1566) target = $region268
        $region267: #{dmf_block_forward.1} parent=211 // pred_region
          %1570 = dma.done [#allocation26], 16
        $region268: #{dmf_block_forward.1} parent=211 // pred_fallthru
          _
        %p1571 = scmp.lt.s32.totalorder %s125, 1
        %s1572 = scalar_select %p1571, %s125, 1
        %s1573 = smul.addr %s1572, 4
        %s1574 = scalar_lea.vmem %s1, %s1573
        %p1575 = pneg %p146
        %p1576 = pneg %p143
        %p1577 = scmp.lt.s32.totalorder %s125, 1
        %s1578 = scalar_select %p1577, %s125, 1
        %s1579 = smul.addr %s1578, 8
        %s1580 = smul.addr %s1579, 8
        %s1581 = scalar_lea.vmem %s3, %s1580
        %p1582 = pneg %p172
        %p1583 = pneg %p169
        %p1584 = pneg %p193
        %p1585 = pneg %p190
        %p1586 = pneg %p214
        %p1587 = pneg %p211
        %p1588 = pneg %p235
        %p1589 = pneg %p232
        %p1590 = pneg %p256
        %p1591 = pneg %p253
        %p1592 = pneg %p277
        %p1593 = pneg %p274
        %p1594 = pneg %p298
        %p1595 = pneg %p295
        %p1596 = pneg %p319
        %p1597 = pneg %p316
        %p1598 = pneg %p340
        %p1599 = pneg %p337
        %p1600 = pneg %p361
        %p1601 = pneg %p358
        %p1602 = pneg %p382
        %p1603 = pneg %p379
        %p1604 = pneg %p403
        %p1605 = pneg %p400
        %p1606 = pneg %p424
        %p1607 = pneg %p421
        %p1608 = pneg %p445
        %p1609 = pneg %p442
        %p1610 = pneg %p466
        %p1611 = pneg %p463
        %p1612 = pneg %p487
        %p1613 = pneg %p484
        %p1614 = pneg %p508
        %p1615 = pneg %p505
        %p1616 = pneg %p529
        %p1617 = pneg %p526
        %p1618 = pneg %p550
        %p1619 = pneg %p547
        %p1620 = pneg %p571
        %p1621 = pneg %p568
        %p1622 = pneg %p592
        %p1623 = pneg %p589
        %p1624 = pneg %p613
        %p1625 = pneg %p610
        %p1626 = pneg %p634
        %p1627 = pneg %p631
        %p1628 = pneg %p655
        %p1629 = pneg %p652
        %p1630 = pneg %p676
        %p1631 = pneg %p673
        %p1632 = pneg %p697
        %p1633 = pneg %p694
        %p1634 = pneg %p718
        %p1635 = pneg %p715
        %p1636 = pneg %p739
        %p1637 = pneg %p736
        %p1638 = pneg %p760
        %p1639 = pneg %p757
        %p1640 = pneg %p781
        %p1641 = pneg %p778
        %p1642 = pneg %p802
        %p1643 = pneg %p799
        %p1644 = pneg %p823
        %p1645 = pneg %p820
        %p1646 = pneg %p844
        %p1647 = pneg %p841
        %p1648 = pneg %p865
        %p1649 = pneg %p862
        %p1650 = pneg %p886
        %p1651 = pneg %p883
        %p1652 = pneg %p907
        %p1653 = pneg %p904
        %p1654 = pneg %p928
        %p1655 = pneg %p925
        %p1656 = pneg %p949
        %p1657 = pneg %p946
        %p1658 = pneg %p970
        %p1659 = pneg %p967
        %p1660 = pneg %p991
        %p1661 = pneg %p988
        %p1662 = pneg %p1012
        %p1663 = pneg %p1009
        %p1664 = pneg %p1033
        %p1665 = pneg %p1030
        %p1666 = pneg %p1054
        %p1667 = pneg %p1051
        %p1668 = pneg %p1075
        %p1669 = pneg %p1072
        %p1670 = pneg %p1096
        %p1671 = pneg %p1093
        %p1672 = pneg %p1117
        %p1673 = pneg %p1114
        %p1674 = pneg %p1138
        %p1675 = pneg %p1135
        %p1676 = pneg %p1164
        %p1677 = pneg %p1161
        %s1678 = sand.u32 %s1151, 1
        %s1679 = scalar_lea.sflag [#allocation6], %s1678
        %s1680 = sand.u32 %s1151, 1
        %s1681 = smul.addr %s1680, 4
        %s1682 = scalar_lea.vmem [#allocation27], %s1681
        %p1683 = pneg %p1190
        %p1684 = pneg %p1187
        %s1685 = sand.u32 %s1177, 1
        %s1686 = scalar_lea.sflag [#allocation29], %s1685
        %s1687 = sand.u32 %s1177, 1
        %s1688 = smul.addr %s1687, 64
        %s1689 = scalar_lea.vmem [#allocation28], %s1688
        %p1690 = scmp.lt.s32.totalorder %s125, 1
        %s1691 = scalar_select %p1690, %s125, 1
        %s1692 = smul.addr %s1691, 4
        %s1693 = scalar_lea.vmem %s1, %s1692
        %p1694 = scmp.lt.s32.totalorder %s125, 1
        %s1695 = scalar_select %p1694, %s125, 1
        %s1696 = smul.addr %s1695, 8
        %s1697 = smul.addr %s1696, 8
        %s1698 = scalar_lea.vmem %s3, %s1697
        %v1699 = vld [vmem:[%s1693] sm:$0xf]
        %v1700 = vld [vmem:[%s1698] sm:$0xff]
        %v1701 = vld [vmem:[%s1698 + $0x8] sm:$0xff]
        %v1702 = vld [vmem:[%s1698 + $0x10] sm:$0xff]
        %v1703 = vld [vmem:[%s1698 + $0x18] sm:$0xff]
        %v1704 = vld [vmem:[%s1698 + $0x20] sm:$0xff]
        %v1705 = vld [vmem:[%s1698 + $0x28] sm:$0xff]
        %v1706 = vld [vmem:[%s1698 + $0x30] sm:$0xff]
        %v1707 = vld [vmem:[%s1698 + $0x38] sm:$0xff]
        %v1708 = vld [vmem:[%s5] sm:$0xff]
        %v1709 = vld [vmem:[%s5 + $0x8] sm:$0xff]
        %v1710 = vld [vmem:[%s5 + $0x10] sm:$0xff]
        %v1711 = vld [vmem:[%s5 + $0x18] sm:$0xff]
        %v1712 = vld [vmem:[%s5 + $0x20] sm:$0xff]
        %v1713 = vld [vmem:[%s5 + $0x28] sm:$0xff]
        %v1714 = vld [vmem:[%s5 + $0x30] sm:$0xff]
        %v1715 = vld [vmem:[%s5 + $0x38] sm:$0xff]
        %v1716 = vld [vmem:[%s7] sm:$0x1]
        %v1717 = vld [vmem:[%s9] sm:$0x1]
        %vm1718 = vcmask 519168
        %v1719 = vsel %vm1718, %v1699, 0.0
        %1720 = vadd.xlane.f32.xlu0 %v1719
        %v1721 = vpop.xlane.xlu0 %1720
        %v1722 = vrcp.pop 64.0
        %v1723 = vmul.f32 64.0, %v1722
        %v1724 = vsub.f32 1.0, %v1723
        %v1725 = vmul.f32 %v1722, %v1724
        %v1726 = vadd.f32 %v1722, %v1725
        %vm1727 = vweird.f32 %v1722
        %v1728 = vsel %vm1727, %v1722, %v1726
        %v1729 = vmul.f32 %v1721, %v1728
        %v1730 = vsub.f32 %v1699, %v1729
        %v1731 = vmul.f32 %v1730, %v1730
        %v1732 = vsel %vm1718, %v1731, 0.0
        %1733 = vadd.xlane.f32.xlu0 %v1732
        %v1734 = vpop.xlane.xlu0 %1733
        %v1735 = vmul.f32 %v1734, %v1728
        %v1736 = vadd.f32 %v1735, 1e-05
        %v1737 = vrsqrt.pop %v1736
        %v1738 = vmul.f32 %v1737, %v1736
        %v1739 = vmul.f32 %v1738, %v1737
        %v1740 = vmul.f32 0.5, %v1739
        %v1741 = vsub.f32 1.5, %v1740
        %v1742 = vmul.f32 %v1737, %v1741
        %vm1743 = vweird.f32 %v1736
        %vm1744 = vweird.f32 %v1737
        %vm1745 = vmor %vm1743, %vm1744
        %v1746 = vsel %vm1745, %v1737, %v1742
        %v1747 = vmul.f32 %v1730, %v1746
        %v1749 = vperm.slane %v1716, 0
        %v1751 = vmul.f32 %v1747, %v1749
        %v1753 = vperm.slane %v1717, 0
        %v1755 = vadd.f32 %v1751, %v1753
        %v1756 = vld [vmem:[%s11] sm:$0xff]
        %v1757 = vld [vmem:[%s11 + $0x8] sm:$0xff]
        %v1758 = vld [vmem:[%s11 + $0x10] sm:$0xff]
        %v1759 = vld [vmem:[%s11 + $0x18] sm:$0xff]
        %v1760 = vld [vmem:[%s11 + $0x20] sm:$0xff]
        %v1761 = vld [vmem:[%s11 + $0x28] sm:$0xff]
        %v1762 = vld [vmem:[%s11 + $0x30] sm:$0xff]
        %v1763 = vld [vmem:[%s11 + $0x38] sm:$0xff]
        %vm1764 = vcmask 523264
        %v1766 = vsel %vm1764, %v1755, 0
        %1768 = vmatpush.msra.mxu0 0.0
        %1769 = vmatpush.msra.mxu0 0.0
        %1770 = vmatpush.msra.mxu0 0.0
        %1771 = vmatpush.msra.mxu0 0.0
        %1772 = vmatpush.msra.mxu0 0.0
        %1773 = vmatpush.msra.mxu0 0.0
        %1774 = vmatpush.msra.mxu0 0.0
        %1775 = vmatpush.msra.mxu0 0.0
        %1776 = vmatpush.msra.mxu0 %v1763
        %1777 = vmatpush.msra.mxu0 %v1762
        %1778 = vmatpush.msra.mxu0 %v1761
        %1779 = vmatpush.msra.mxu0 %v1760
        %1780 = vmatpush.msra.mxu0 %v1759
        %1781 = vmatpush.msra.mxu0 %v1758
        %1782 = vmatpush.msra.mxu0 %v1757
        %1783 = vmatpush.msra.mxu0 %v1756
        %1784 = vmatmul.f32.gmra.mxu0 %v1766
        %v1785 = vpop.f32.mrf.mxu0
        %v1786 = vadd.f32 0.0, %v1785
        %1787 = vdwg.mxu0
        %vm1788 = vcmask 261120
        %v1790 = vsel %vm1788, %v1786, 0
        %v1793 = vsel %vm1788, %v1700, 0
        %v1796 = vsel %vm1788, %v1701, 0
        %v1799 = vsel %vm1788, %v1702, 0
        %v1802 = vsel %vm1788, %v1703, 0
        %v1805 = vsel %vm1788, %v1704, 0
        %v1808 = vsel %vm1788, %v1705, 0
        %v1811 = vsel %vm1788, %v1706, 0
        %v1814 = vsel %vm1788, %v1707, 0
        %1816 = vmatpush.xpose.msra.mxu0 0.0
        %1817 = vmatpush.xpose.msra.mxu0 0.0
        %1818 = vmatpush.xpose.msra.mxu0 0.0
        %1819 = vmatpush.xpose.msra.mxu0 0.0
        %1820 = vmatpush.xpose.msra.mxu0 0.0
        %1821 = vmatpush.xpose.msra.mxu0 0.0
        %1822 = vmatpush.xpose.msra.mxu0 0.0
        %1823 = vmatpush.xpose.msra.mxu0 0.0
        %1824 = vmatpush.xpose.msra.mxu0 %v1814
        %1825 = vmatpush.xpose.msra.mxu0 %v1811
        %1826 = vmatpush.xpose.msra.mxu0 %v1808
        %1827 = vmatpush.xpose.msra.mxu0 %v1805
        %1828 = vmatpush.xpose.msra.mxu0 %v1802
        %1829 = vmatpush.xpose.msra.mxu0 %v1799
        %1830 = vmatpush.xpose.msra.mxu0 %v1796
        %1831 = vmatpush.xpose.msra.mxu0 %v1793
        %1832 = vmatmul.f32.gmra.mxu0 %v1790
        %v1833 = vpop.f32.mrf.mxu0
        %v1834 = vadd.f32 0.0, %v1833
        %1835 = vdwg.mxu0
        %v1836 = vmul.f32 %v1834, 0.17677669
        %v1837 = vsel %vm1718, %v1836, -inf
        %1838 = vmax.xlane.f32.xlu0 %v1837
        %v1839 = vpop.xlane.xlu0 %1838
        %v1840 = vsub.f32 %v1836, %v1839
        %v1841 = vmul.f32 %v1840, 1.442695
        %v1842 = vpow.pop %v1841
        %v1843 = vsel %vm1718, %v1842, 0.0
        %1844 = vadd.xlane.f32.xlu0 %v1843
        %v1845 = vpop.xlane.xlu0 %1844
        %v1846 = vrcp.pop %v1845
        %v1847 = vmul.f32 %v1845, %v1846
        %v1848 = vsub.f32 1.0, %v1847
        %v1849 = vmul.f32 %v1846, %v1848
        %v1850 = vadd.f32 %v1846, %v1849
        %vm1851 = vweird.f32 %v1845
        %vm1852 = vweird.f32 %v1846
        %vm1853 = vmor %vm1851, %vm1852
        %v1854 = vsel %vm1853, %v1846, %v1850
        %v1855 = vand.u32 2147483647, %v1845
        %vm1856 = vcmp.eq.f32.partialorder %v1855, 8.507059e+37
        %v1857 = vand.u32 %v1845, 2147483648
        %v1858 = vor.u32 1.1754944e-38, %v1857
        %v1859 = vsel %vm1856, %v1858, %v1854
        %v1860 = vmul.f32 %v1842, %v1859
        %v1862 = vsel %vm1764, %v1860, 0
        %1864 = vmatpush.msra.mxu0 0.0
        %1865 = vmatpush.msra.mxu0 0.0
        %1866 = vmatpush.msra.mxu0 0.0
        %1867 = vmatpush.msra.mxu0 0.0
        %1868 = vmatpush.msra.mxu0 0.0
        %1869 = vmatpush.msra.mxu0 0.0
        %1870 = vmatpush.msra.mxu0 0.0
        %1871 = vmatpush.msra.mxu0 0.0
        %1872 = vmatpush.msra.mxu0 %v1707
        %1873 = vmatpush.msra.mxu0 %v1706
        %1874 = vmatpush.msra.mxu0 %v1705
        %1875 = vmatpush.msra.mxu0 %v1704
        %1876 = vmatpush.msra.mxu0 %v1703
        %1877 = vmatpush.msra.mxu0 %v1702
        %1878 = vmatpush.msra.mxu0 %v1701
        %1879 = vmatpush.msra.mxu0 %v1700
        %1880 = vmatmul.f32.gmra.mxu0 %v1862
        %v1881 = vpop.f32.mrf.mxu0
        %v1882 = vadd.f32 0.0, %v1881
        %1883 = vdwg.mxu0
        %v1884 = vld [vmem:[%s13] sm:$0xff]
        %v1885 = vld [vmem:[%s13 + $0x8] sm:$0xff]
        %v1886 = vld [vmem:[%s13 + $0x10] sm:$0xff]
        %v1887 = vld [vmem:[%s13 + $0x18] sm:$0xff]
        %v1889 = vsel %vm1788, %v1882, 0
        %1891 = vmatpush.msra.mxu0 0.0
        %1892 = vmatpush.msra.mxu0 0.0
        %1893 = vmatpush.msra.mxu0 0.0
        %1894 = vmatpush.msra.mxu0 0.0
        %1895 = vmatpush.msra.mxu0 0.0
        %1896 = vmatpush.msra.mxu0 0.0
        %1897 = vmatpush.msra.mxu0 0.0
        %1898 = vmatpush.msra.mxu0 0.0
        %1899 = vmatpush.msra.mxu0 0.0
        %1900 = vmatpush.msra.mxu0 0.0
        %1901 = vmatpush.msra.mxu0 0.0
        %1902 = vmatpush.msra.mxu0 0.0
        %1903 = vmatpush.msra.mxu0 %v1887
        %1904 = vmatpush.msra.mxu0 %v1886
        %1905 = vmatpush.msra.mxu0 %v1885
        %1906 = vmatpush.msra.mxu0 %v1884
        %1907 = vmatmul.f32.gmra.mxu0 %v1889
        %v1908 = vpop.f32.mrf.mxu0
        %v1909 = vadd.f32 %v1755, %v1908
        %1910 = vdwg.mxu0
        %v1911 = vld [vmem:[%s15] sm:$0x1]
        %v1912 = vld [vmem:[%s17] sm:$0x1]
        %v1913 = vsel %vm1718, %v1909, 0.0
        %1914 = vadd.xlane.f32.xlu0 %v1913
        %v1915 = vpop.xlane.xlu0 %1914
        %v1916 = vmul.f32 %v1915, %v1728
        %v1917 = vsub.f32 %v1909, %v1916
        %v1918 = vmul.f32 %v1917, %v1917
        %v1919 = vsel %vm1718, %v1918, 0.0
        %1920 = vadd.xlane.f32.xlu0 %v1919
        %v1921 = vpop.xlane.xlu0 %1920
        %v1922 = vmul.f32 %v1921, %v1728
        %v1923 = vadd.f32 %v1922, 1e-05
        %v1924 = vrsqrt.pop %v1923
        %v1925 = vmul.f32 %v1924, %v1923
        %v1926 = vmul.f32 %v1925, %v1924
        %v1927 = vmul.f32 0.5, %v1926
        %v1928 = vsub.f32 1.5, %v1927
        %v1929 = vmul.f32 %v1924, %v1928
        %vm1930 = vweird.f32 %v1923
        %vm1931 = vweird.f32 %v1924
        %vm1932 = vmor %vm1930, %vm1931
        %v1933 = vsel %vm1932, %v1924, %v1929
        %v1934 = vmul.f32 %v1917, %v1933
        %v1936 = vperm.slane %v1911, 0
        %v1938 = vmul.f32 %v1934, %v1936
        %v1940 = vperm.slane %v1912, 0
        %v1942 = vadd.f32 %v1938, %v1940
        %v1943 = vld [vmem:[%s19] sm:$0xff]
        %v1944 = vld [vmem:[%s19 + $0x8] sm:$0xff]
        %v1945 = vld [vmem:[%s19 + $0x10] sm:$0xff]
        %v1946 = vld [vmem:[%s19 + $0x18] sm:$0xff]
        %v1947 = vld [vmem:[%s19 + $0x20] sm:$0xff]
        %v1948 = vld [vmem:[%s19 + $0x28] sm:$0xff]
        %v1949 = vld [vmem:[%s19 + $0x30] sm:$0xff]
        %v1950 = vld [vmem:[%s19 + $0x38] sm:$0xff]
        %v1952 = vsel %vm1764, %v1942, 0
        %1954 = vmatpush.msra.mxu0 0.0
        %1955 = vmatpush.msra.mxu0 0.0
        %1956 = vmatpush.msra.mxu0 0.0
        %1957 = vmatpush.msra.mxu0 0.0
        %1958 = vmatpush.msra.mxu0 0.0
        %1959 = vmatpush.msra.mxu0 0.0
        %1960 = vmatpush.msra.mxu0 0.0
        %1961 = vmatpush.msra.mxu0 0.0
        %1962 = vmatpush.msra.mxu0 %v1950
        %1963 = vmatpush.msra.mxu0 %v1949
        %1964 = vmatpush.msra.mxu0 %v1948
        %1965 = vmatpush.msra.mxu0 %v1947
        %1966 = vmatpush.msra.mxu0 %v1946
        %1967 = vmatpush.msra.mxu0 %v1945
        %1968 = vmatpush.msra.mxu0 %v1944
        %1969 = vmatpush.msra.mxu0 %v1943
        %1970 = vmatmul.f32.gmra.mxu0 %v1952
        %v1971 = vpop.f32.mrf.mxu0
        %v1972 = vadd.f32 0.0, %v1971
        %1973 = vdwg.mxu0
        %v1974 = vld [vmem:[%s21] sm:$0xff]
        %v1975 = vld [vmem:[%s21 + $0x8] sm:$0xff]
        %v1976 = vld [vmem:[%s21 + $0x10] sm:$0xff]
        %v1977 = vld [vmem:[%s21 + $0x18] sm:$0xff]
        %v1978 = vld [vmem:[%s21 + $0x20] sm:$0xff]
        %v1979 = vld [vmem:[%s21 + $0x28] sm:$0xff]
        %v1980 = vld [vmem:[%s21 + $0x30] sm:$0xff]
        %v1981 = vld [vmem:[%s21 + $0x38] sm:$0xff]
        %1982 = vmatpush.msra.mxu0 0.0
        %1983 = vmatpush.msra.mxu0 0.0
        %1984 = vmatpush.msra.mxu0 0.0
        %1985 = vmatpush.msra.mxu0 0.0
        %1986 = vmatpush.msra.mxu0 0.0
        %1987 = vmatpush.msra.mxu0 0.0
        %1988 = vmatpush.msra.mxu0 0.0
        %1989 = vmatpush.msra.mxu0 0.0
        %1990 = vmatpush.msra.mxu0 %v1981
        %1991 = vmatpush.msra.mxu0 %v1980
        %1992 = vmatpush.msra.mxu0 %v1979
        %1993 = vmatpush.msra.mxu0 %v1978
        %1994 = vmatpush.msra.mxu0 %v1977
        %1995 = vmatpush.msra.mxu0 %v1976
        %1996 = vmatpush.msra.mxu0 %v1975
        %1997 = vmatpush.msra.mxu0 %v1974
        %1998 = vmatmul.f32.gmra.mxu0 %v1952
        %v1999 = vpop.f32.mrf.mxu0
        %v2000 = vadd.f32 0.0, %v1999
        %2001 = vdwg.mxu0
        %v2002 = vld [vmem:[%s23] sm:$0xff]
        %v2003 = vld [vmem:[%s23 + $0x8] sm:$0xff]
        %v2004 = vld [vmem:[%s23 + $0x10] sm:$0xff]
        %v2005 = vld [vmem:[%s23 + $0x18] sm:$0xff]
        %v2006 = vld [vmem:[%s23 + $0x20] sm:$0xff]
        %v2007 = vld [vmem:[%s23 + $0x28] sm:$0xff]
        %v2008 = vld [vmem:[%s23 + $0x30] sm:$0xff]
        %v2009 = vld [vmem:[%s23 + $0x38] sm:$0xff]
        %2010 = vmatpush.msra.mxu0 0.0
        %2011 = vmatpush.msra.mxu0 0.0
        %2012 = vmatpush.msra.mxu0 0.0
        %2013 = vmatpush.msra.mxu0 0.0
        %2014 = vmatpush.msra.mxu0 0.0
        %2015 = vmatpush.msra.mxu0 0.0
        %2016 = vmatpush.msra.mxu0 0.0
        %2017 = vmatpush.msra.mxu0 0.0
        %2018 = vmatpush.msra.mxu0 %v2009
        %2019 = vmatpush.msra.mxu0 %v2008
        %2020 = vmatpush.msra.mxu0 %v2007
        %2021 = vmatpush.msra.mxu0 %v2006
        %2022 = vmatpush.msra.mxu0 %v2005
        %2023 = vmatpush.msra.mxu0 %v2004
        %2024 = vmatpush.msra.mxu0 %v2003
        %2025 = vmatpush.msra.mxu0 %v2002
        %2026 = vmatmul.f32.gmra.mxu0 %v1952
        %v2027 = vpop.f32.mrf.mxu0
        %v2028 = vadd.f32 0.0, %v2027
        %2029 = vdwg.mxu0
        %v2030 = vld [vmem:[%s25] sm:$0xff]
        %v2031 = vld [vmem:[%s25 + $0x8] sm:$0xff]
        %v2032 = vld [vmem:[%s25 + $0x10] sm:$0xff]
        %v2033 = vld [vmem:[%s25 + $0x18] sm:$0xff]
        %v2034 = vld [vmem:[%s25 + $0x20] sm:$0xff]
        %v2035 = vld [vmem:[%s25 + $0x28] sm:$0xff]
        %v2036 = vld [vmem:[%s25 + $0x30] sm:$0xff]
        %v2037 = vld [vmem:[%s25 + $0x38] sm:$0xff]
        %v2039 = vsel %vm1788, %v1972, 0
        %v2042 = vsel %vm1788, %v2000, 0
        %2044 = vmatpush.xpose.msra.mxu0 0.0
        %2045 = vmatpush.xpose.msra.mxu0 0.0
        %2046 = vmatpush.xpose.msra.mxu0 0.0
        %2047 = vmatpush.xpose.msra.mxu0 0.0
        %2048 = vmatpush.xpose.msra.mxu0 0.0
        %2049 = vmatpush.xpose.msra.mxu0 0.0
        %2050 = vmatpush.xpose.msra.mxu0 0.0
        %2051 = vmatpush.xpose.msra.mxu0 0.0
        %2052 = vmatpush.xpose.msra.mxu0 0.0
        %2053 = vmatpush.xpose.msra.mxu0 0.0
        %2054 = vmatpush.xpose.msra.mxu0 0.0
        %2055 = vmatpush.xpose.msra.mxu0 0.0
        %2056 = vmatpush.xpose.msra.mxu0 0.0
        %2057 = vmatpush.xpose.msra.mxu0 0.0
        %2058 = vmatpush.xpose.msra.mxu0 0.0
        %2059 = vmatpush.xpose.msra.mxu0 %v2042
        %2060 = vmatmul.f32.gmra.mxu0 %v2039
        %v2061 = vpop.f32.mrf.mxu0
        %v2062 = vadd.f32 0.0, %v2061
        %2063 = vdwg.mxu0
        %v2064 = vmul.f32 %v2062, 0.17677669
        %vm2065 = vcmask 27648
        %v2066 = vsel %vm2065, %v2064, -inf
        %2067 = vmax.xlane.f32.xlu0 %v2066
        %v2068 = vpop.xlane.xlu0 %2067
        %v2069 = vsub.f32 %v2064, %v2068
        %v2070 = vmul.f32 %v2069, 1.442695
        %v2071 = vpow.pop %v2070
        %v2072 = vsel %vm2065, %v2071, 0.0
        %2073 = vadd.xlane.f32.xlu0 %v2072
        %v2074 = vpop.xlane.xlu0 %2073
        %v2075 = vrcp.pop %v2074
        %v2076 = vmul.f32 %v2074, %v2075
        %v2077 = vsub.f32 1.0, %v2076
        %v2078 = vmul.f32 %v2075, %v2077
        %v2079 = vadd.f32 %v2075, %v2078
        %vm2080 = vweird.f32 %v2074
        %vm2081 = vweird.f32 %v2075
        %vm2082 = vmor %vm2080, %vm2081
        %v2083 = vsel %vm2082, %v2075, %v2079
        %v2084 = vand.u32 2147483647, %v2074
        %vm2085 = vcmp.eq.f32.partialorder %v2084, 8.507059e+37
        %v2086 = vand.u32 %v2074, 2147483648
        %v2087 = vor.u32 1.1754944e-38, %v2086
        %v2088 = vsel %vm2085, %v2087, %v2083
        %v2089 = vmul.f32 %v2071, %v2088
        %vm2090 = vcmask 31744
        %v2092 = vsel %vm2090, %v2089, 0
        %vm2094 = vcmask 1043456
        %v2096 = vsel %vm2094, %v2028, 0
        %2098 = vmatpush.msra.mxu0 0.0
        %2099 = vmatpush.msra.mxu0 0.0
        %2100 = vmatpush.msra.mxu0 0.0
        %2101 = vmatpush.msra.mxu0 0.0
        %2102 = vmatpush.msra.mxu0 0.0
        %2103 = vmatpush.msra.mxu0 0.0
        %2104 = vmatpush.msra.mxu0 0.0
        %2105 = vmatpush.msra.mxu0 0.0
        %2106 = vmatpush.msra.mxu0 0.0
        %2107 = vmatpush.msra.mxu0 0.0
        %2108 = vmatpush.msra.mxu0 0.0
        %2109 = vmatpush.msra.mxu0 0.0
        %2110 = vmatpush.msra.mxu0 0.0
        %2111 = vmatpush.msra.mxu0 0.0
        %2112 = vmatpush.msra.mxu0 0.0
        %2113 = vmatpush.msra.mxu0 %v2096
        %2114 = vmatmul.f32.gmra.mxu0 %v2092
        %v2115 = vpop.f32.mrf.mxu0
        %v2116 = vadd.f32 0.0, %v2115
        %2117 = vdwg.mxu0
        %2118 = vrot.lane.b32.xlu0 %v1972, 96
        %v2119 = vpop.permute.xlu0 %2118
        %2120 = vrot.lane.b32.xlu0 %v2000, 96
        %v2121 = vpop.permute.xlu0 %2120
        %v2122 = vsel %vm1788, %v2119, 0
        %v2124 = vsel %vm1788, %v2121, 0
        %2126 = vmatpush.xpose.msra.mxu0 0.0
        %2127 = vmatpush.xpose.msra.mxu0 0.0
        %2128 = vmatpush.xpose.msra.mxu0 0.0
        %2129 = vmatpush.xpose.msra.mxu0 0.0
        %2130 = vmatpush.xpose.msra.mxu0 0.0
        %2131 = vmatpush.xpose.msra.mxu0 0.0
        %2132 = vmatpush.xpose.msra.mxu0 0.0
        %2133 = vmatpush.xpose.msra.mxu0 0.0
        %2134 = vmatpush.xpose.msra.mxu0 0.0
        %2135 = vmatpush.xpose.msra.mxu0 0.0
        %2136 = vmatpush.xpose.msra.mxu0 0.0
        %2137 = vmatpush.xpose.msra.mxu0 0.0
        %2138 = vmatpush.xpose.msra.mxu0 0.0
        %2139 = vmatpush.xpose.msra.mxu0 0.0
        %2140 = vmatpush.xpose.msra.mxu0 0.0
        %2141 = vmatpush.xpose.msra.mxu0 %v2124
        %2142 = vmatmul.f32.gmra.mxu0 %v2122
        %v2143 = vpop.f32.mrf.mxu0
        %v2144 = vadd.f32 0.0, %v2143
        %2145 = vdwg.mxu0
        %v2146 = vmul.f32 %v2144, 0.17677669
        %v2147 = vsel %vm2065, %v2146, -inf
        %2148 = vmax.xlane.f32.xlu0 %v2147
        %v2149 = vpop.xlane.xlu0 %2148
        %v2150 = vsub.f32 %v2146, %v2149
        %v2151 = vmul.f32 %v2150, 1.442695
        %v2152 = vpow.pop %v2151
        %v2153 = vsel %vm2065, %v2152, 0.0
        %2154 = vadd.xlane.f32.xlu0 %v2153
        %v2155 = vpop.xlane.xlu0 %2154
        %v2156 = vrcp.pop %v2155
        %v2157 = vmul.f32 %v2155, %v2156
        %v2158 = vsub.f32 1.0, %v2157
        %v2159 = vmul.f32 %v2156, %v2158
        %v2160 = vadd.f32 %v2156, %v2159
        %vm2161 = vweird.f32 %v2155
        %vm2162 = vweird.f32 %v2156
        %vm2163 = vmor %vm2161, %vm2162
        %v2164 = vsel %vm2163, %v2156, %v2160
        %v2165 = vand.u32 2147483647, %v2155
        %vm2166 = vcmp.eq.f32.partialorder %v2165, 8.507059e+37
        %v2167 = vand.u32 %v2155, 2147483648
        %v2168 = vor.u32 1.1754944e-38, %v2167
        %v2169 = vsel %vm2166, %v2168, %v2164
        %v2170 = vmul.f32 %v2152, %v2169
        %2171 = vrot.lane.b32.xlu0 %v2028, 96
        %v2172 = vpop.permute.xlu0 %2171
        %v2174 = vsel %vm2090, %v2170, 0
        %v2176 = vsel %vm2094, %v2172, 0
        %2178 = vmatpush.msra.mxu0 0.0
        %2179 = vmatpush.msra.mxu0 0.0
        %2180 = vmatpush.msra.mxu0 0.0
        %2181 = vmatpush.msra.mxu0 0.0
        %2182 = vmatpush.msra.mxu0 0.0
        %2183 = vmatpush.msra.mxu0 0.0
        %2184 = vmatpush.msra.mxu0 0.0
        %2185 = vmatpush.msra.mxu0 0.0
        %2186 = vmatpush.msra.mxu0 0.0
        %2187 = vmatpush.msra.mxu0 0.0
        %2188 = vmatpush.msra.mxu0 0.0
        %2189 = vmatpush.msra.mxu0 0.0
        %2190 = vmatpush.msra.mxu0 0.0
        %2191 = vmatpush.msra.mxu0 0.0
        %2192 = vmatpush.msra.mxu0 0.0
        %2193 = vmatpush.msra.mxu0 %v2176
        %2194 = vmatmul.f32.gmra.mxu0 %v2174
        %v2195 = vpop.f32.mrf.mxu0
        %v2196 = vadd.f32 0.0, %v2195
        %2197 = vdwg.mxu0
        %v2199 = vsel %vm1788, %v2196, 0
        %2201 = vmatpush.msra.mxu0 0.0
        %2202 = vmatpush.msra.mxu0 0.0
        %2203 = vmatpush.msra.mxu0 0.0
        %2204 = vmatpush.msra.mxu0 0.0
        %2205 = vmatpush.msra.mxu0 0.0
        %2206 = vmatpush.msra.mxu0 0.0
        %2207 = vmatpush.msra.mxu0 0.0
        %2208 = vmatpush.msra.mxu0 0.0
        %2209 = vmatpush.msra.mxu0 0.0
        %2210 = vmatpush.msra.mxu0 0.0
        %2211 = vmatpush.msra.mxu0 0.0
        %2212 = vmatpush.msra.mxu0 0.0
        %2213 = vmatpush.msra.mxu0 %v2037
        %2214 = vmatpush.msra.mxu0 %v2036
        %2215 = vmatpush.msra.mxu0 %v2035
        %2216 = vmatpush.msra.mxu0 %v2034
        %2217 = vmatmul.f32.gmra.mxu0 %v2199
        %v2218 = vpop.f32.mrf.mxu0
        %v2219 = vadd.f32 0.0, %v2218
        %2220 = vdwg.mxu0
        %v2222 = vsel %vm1788, %v2116, 0
        %2224 = vmatpush.msra.mxu0 0.0
        %2225 = vmatpush.msra.mxu0 0.0
        %2226 = vmatpush.msra.mxu0 0.0
        %2227 = vmatpush.msra.mxu0 0.0
        %2228 = vmatpush.msra.mxu0 0.0
        %2229 = vmatpush.msra.mxu0 0.0
        %2230 = vmatpush.msra.mxu0 0.0
        %2231 = vmatpush.msra.mxu0 0.0
        %2232 = vmatpush.msra.mxu0 0.0
        %2233 = vmatpush.msra.mxu0 0.0
        %2234 = vmatpush.msra.mxu0 0.0
        %2235 = vmatpush.msra.mxu0 0.0
        %2236 = vmatpush.msra.mxu0 %v2033
        %2237 = vmatpush.msra.mxu0 %v2032
        %2238 = vmatpush.msra.mxu0 %v2031
        %2239 = vmatpush.msra.mxu0 %v2030
        %2240 = vmatmul.f32.gmra.mxu0 %v2222
        %v2241 = vpop.f32.mrf.mxu0
        %v2242 = vadd.f32 %v2219, %v2241
        %2243 = vdwg.mxu0
        %v2244 = vadd.f32 %v1909, %v2242
        %v2245 = vld [vmem:[%s27] sm:$0x1]
        %v2247 = vperm.slane %v2245, 0
        %v2249 = vadd.f32 %v2244, %v2247
        %v2250 = vld [vmem:[%s29] sm:$0x1]
        %v2251 = vld [vmem:[%s31] sm:$0x1]
        %v2252 = vsel %vm1718, %v2249, 0.0
        %2253 = vadd.xlane.f32.xlu0 %v2252
        %v2254 = vpop.xlane.xlu0 %2253
        %v2255 = vmul.f32 %v2254, %v1728
        %v2256 = vsub.f32 %v2249, %v2255
        %v2257 = vmul.f32 %v2256, %v2256
        %v2258 = vsel %vm1718, %v2257, 0.0
        %2259 = vadd.xlane.f32.xlu0 %v2258
        %v2260 = vpop.xlane.xlu0 %2259
        %v2261 = vmul.f32 %v2260, %v1728
        %v2262 = vadd.f32 %v2261, 1e-05
        %v2263 = vrsqrt.pop %v2262
        %v2264 = vmul.f32 %v2263, %v2262
        %v2265 = vmul.f32 %v2264, %v2263
        %v2266 = vmul.f32 0.5, %v2265
        %v2267 = vsub.f32 1.5, %v2266
        %v2268 = vmul.f32 %v2263, %v2267
        %vm2269 = vweird.f32 %v2262
        %vm2270 = vweird.f32 %v2263
        %vm2271 = vmor %vm2269, %vm2270
        %v2272 = vsel %vm2271, %v2263, %v2268
        %v2273 = vmul.f32 %v2256, %v2272
        %v2275 = vperm.slane %v2250, 0
        %v2277 = vmul.f32 %v2273, %v2275
        %v2279 = vperm.slane %v2251, 0
        %v2281 = vadd.f32 %v2277, %v2279
        %v2282 = vld [vmem:[%s33] sm:$0xff]
        %v2283 = vld [vmem:[%s33 + $0x8] sm:$0xff]
        %v2284 = vld [vmem:[%s33 + $0x10] sm:$0xff]
        %v2285 = vld [vmem:[%s33 + $0x18] sm:$0xff]
        %v2286 = vld [vmem:[%s33 + $0x20] sm:$0xff]
        %v2287 = vld [vmem:[%s33 + $0x28] sm:$0xff]
        %v2288 = vld [vmem:[%s33 + $0x30] sm:$0xff]
        %v2289 = vld [vmem:[%s33 + $0x38] sm:$0xff]
        %v2291 = vsel %vm1764, %v2281, 0
        %2293 = vmatpush.msra.mxu0 0.0
        %2294 = vmatpush.msra.mxu0 0.0
        %2295 = vmatpush.msra.mxu0 0.0
        %2296 = vmatpush.msra.mxu0 0.0
        %2297 = vmatpush.msra.mxu0 0.0
        %2298 = vmatpush.msra.mxu0 0.0
        %2299 = vmatpush.msra.mxu0 0.0
        %2300 = vmatpush.msra.mxu0 0.0
        %2301 = vmatpush.msra.mxu0 %v2289
        %2302 = vmatpush.msra.mxu0 %v2288
        %2303 = vmatpush.msra.mxu0 %v2287
        %2304 = vmatpush.msra.mxu0 %v2286
        %2305 = vmatpush.msra.mxu0 %v2285
        %2306 = vmatpush.msra.mxu0 %v2284
        %2307 = vmatpush.msra.mxu0 %v2283
        %2308 = vmatpush.msra.mxu0 %v2282
        %2309 = vmatmul.f32.gmra.mxu0 %v2291
        %v2310 = vpop.f32.mrf.mxu0
        %v2311 = vadd.f32 0.0, %v2310
        %2312 = vdwg.mxu0
        %v2313 = vmul.f32 %v2311, 0.5
        %v2314 = vmul.f32 %v2311, 0.70710677
        %v2315 = vand.u32 2147483647, %v2314
        %v2316 = vmul.f32 %v2315, 0.3275911
        %v2317 = vadd.f32 %v2316, 1.0
        %v2318 = vrcp.pop %v2317
        %v2319 = vmul.f32 %v2317, %v2318
        %v2320 = vsub.f32 1.0, %v2319
        %v2321 = vmul.f32 %v2318, %v2320
        %v2322 = vadd.f32 %v2318, %v2321
        %vm2323 = vweird.f32 %v2317
        %vm2324 = vweird.f32 %v2318
        %vm2325 = vmor %vm2323, %vm2324
        %v2326 = vsel %vm2325, %v2318, %v2322
        %v2327 = vand.u32 2147483647, %v2317
        %vm2328 = vcmp.eq.f32.partialorder %v2327, 8.507059e+37
        %v2329 = vand.u32 %v2317, 2147483648
        %v2330 = vor.u32 1.1754944e-38, %v2329
        %v2331 = vsel %vm2328, %v2330, %v2326
        %v2332 = vmul.f32 1.0, %v2331
        %v2333 = vmul.f32 %v2332, 1.0614054
        %v2334 = vsub.f32 %v2333, 1.4531521
        %v2335 = vmul.f32 %v2334, %v2332
        %v2336 = vadd.f32 %v2335, 1.4214138
        %v2337 = vmul.f32 %v2336, %v2332
        %v2338 = vsub.f32 %v2337, 0.28449672
        %v2339 = vmul.f32 %v2338, %v2332
        %v2340 = vadd.f32 %v2339, 0.2548296
        %v2341 = vmul.f32 %v2340, %v2332
        %v2342 = vsub.f32 0.0, %v2315
        %v2343 = vmul.f32 %v2342, %v2315
        %v2344 = vmul.f32 %v2343, 1.442695
        %v2345 = vpow.pop %v2344
        %v2346 = vmul.f32 %v2341, %v2345
        %v2347 = vsub.f32 1.0, %v2346
        %vm2348 = vcmp.ge.f32.partialorder %v2314, 0.0
        %v2349 = vsub.f32 0.0, %v2347
        %v2350 = vsel %vm2348, %v2347, %v2349
        %v2351 = vadd.f32 %v2350, 1.0
        %v2352 = vmul.f32 %v2313, %v2351
        %v2353 = vld [vmem:[%s35] sm:$0xff]
        %v2354 = vld [vmem:[%s35 + $0x8] sm:$0xff]
        %v2355 = vld [vmem:[%s35 + $0x10] sm:$0xff]
        %v2356 = vld [vmem:[%s35 + $0x18] sm:$0xff]
        %v2357 = vld [vmem:[%s35 + $0x20] sm:$0xff]
        %v2358 = vld [vmem:[%s35 + $0x28] sm:$0xff]
        %v2359 = vld [vmem:[%s35 + $0x30] sm:$0xff]
        %v2360 = vld [vmem:[%s35 + $0x38] sm:$0xff]
        %v2361 = vld [vmem:[%s35 + $0x40] sm:$0xff]
        %v2362 = vld [vmem:[%s35 + $0x48] sm:$0xff]
        %v2363 = vld [vmem:[%s35 + $0x50] sm:$0xff]
        %v2364 = vld [vmem:[%s35 + $0x58] sm:$0xff]
        %v2365 = vld [vmem:[%s35 + $0x60] sm:$0xff]
        %v2366 = vld [vmem:[%s35 + $0x68] sm:$0xff]
        %v2367 = vld [vmem:[%s35 + $0x70] sm:$0xff]
        %v2368 = vld [vmem:[%s35 + $0x78] sm:$0xff]
        %2369 = vmatpush.msra.mxu0 %v2368
        %2370 = vmatpush.msra.mxu0 %v2367
        %2371 = vmatpush.msra.mxu0 %v2366
        %2372 = vmatpush.msra.mxu0 %v2365
        %2373 = vmatpush.msra.mxu0 %v2364
        %2374 = vmatpush.msra.mxu0 %v2363
        %2375 = vmatpush.msra.mxu0 %v2362
        %2376 = vmatpush.msra.mxu0 %v2361
        %2377 = vmatpush.msra.mxu0 %v2360
        %2378 = vmatpush.msra.mxu0 %v2359
        %2379 = vmatpush.msra.mxu0 %v2358
        %2380 = vmatpush.msra.mxu0 %v2357
        %2381 = vmatpush.msra.mxu0 %v2356
        %2382 = vmatpush.msra.mxu0 %v2355
        %2383 = vmatpush.msra.mxu0 %v2354
        %2384 = vmatpush.msra.mxu0 %v2353
        %2385 = vmatmul.f32.gmra.mxu0 %v2352
        %v2386 = vpop.f32.mrf.mxu0
        %v2387 = vadd.f32 0.0, %v2386
        %2388 = vdwg.mxu0
        %v2389 = vadd.f32 %v2249, %v2387
        %2390 = vst.msk [vmem:[%s1682] sm:$0xf] %vm1718, %v2389
        %v2391 = vsel %vm1788, %v1700, 0.0
        %v2392 = vsel %vm1788, %v1701, 0.0
        %v2393 = vadd.f32 %v2391, %v2392
        %v2394 = vsel %vm1788, %v1702, 0.0
        %v2395 = vadd.f32 %v2393, %v2394
        %v2396 = vsel %vm1788, %v1703, 0.0
        %v2397 = vadd.f32 %v2395, %v2396
        %v2398 = vsel %vm1788, %v1704, 0.0
        %v2399 = vadd.f32 %v2397, %v2398
        %v2400 = vsel %vm1788, %v1705, 0.0
        %v2401 = vadd.f32 %v2399, %v2400
        %v2402 = vsel %vm1788, %v1706, 0.0
        %v2403 = vadd.f32 %v2401, %v2402
        %v2404 = vsel %vm1788, %v1707, 0.0
        %v2405 = vadd.f32 %v2403, %v2404
        %v2406 = vrot.slane %v2405, 4
        %v2407 = vadd.f32 %v2405, %v2406
        %v2408 = vrot.slane %v2407, 2
        %v2409 = vadd.f32 %v2407, %v2408
        %v2410 = vrot.slane %v2409, 1
        %v2411 = vadd.f32 %v2409, %v2410
        %v2412 = vmul.f32 %v2411, %v1728
        %v2413 = vld [vmem:[%s37] sm:$0xff]
        %v2414 = vld [vmem:[%s37 + $0x8] sm:$0xff]
        %v2415 = vld [vmem:[%s37 + $0x10] sm:$0xff]
        %v2416 = vld [vmem:[%s37 + $0x18] sm:$0xff]
        %v2417 = vld [vmem:[%s37 + $0x20] sm:$0xff]
        %v2418 = vld [vmem:[%s37 + $0x28] sm:$0xff]
        %v2419 = vld [vmem:[%s37 + $0x30] sm:$0xff]
        %v2420 = vld [vmem:[%s37 + $0x38] sm:$0xff]
        %v2421 = vld [vmem:[%s39] sm:$0xff]
        %v2422 = vld [vmem:[%s39 + $0x8] sm:$0xff]
        %v2423 = vld [vmem:[%s39 + $0x10] sm:$0xff]
        %v2424 = vld [vmem:[%s39 + $0x18] sm:$0xff]
        %v2426 = vsel %vm1788, %v2412, 0
        %2428 = vmatpush.msra.mxu0 0.0
        %2429 = vmatpush.msra.mxu0 0.0
        %2430 = vmatpush.msra.mxu0 0.0
        %2431 = vmatpush.msra.mxu0 0.0
        %2432 = vmatpush.msra.mxu0 0.0
        %2433 = vmatpush.msra.mxu0 0.0
        %2434 = vmatpush.msra.mxu0 0.0
        %2435 = vmatpush.msra.mxu0 0.0
        %2436 = vmatpush.msra.mxu0 0.0
        %2437 = vmatpush.msra.mxu0 0.0
        %2438 = vmatpush.msra.mxu0 0.0
        %2439 = vmatpush.msra.mxu0 0.0
        %2440 = vmatpush.msra.mxu0 %v2424
        %2441 = vmatpush.msra.mxu0 %v2423
        %2442 = vmatpush.msra.mxu0 %v2422
        %2443 = vmatpush.msra.mxu0 %v2421
        %2444 = vmatmul.f32.gmra.mxu0 %v2426
        %v2445 = vpop.f32.mrf.mxu0
        %v2446 = vadd.f32 0.0, %v2445
        %2447 = vdwg.mxu0
        %v2449 = vsel %vm1764, %v2389, 0
        %2451 = vmatpush.msra.mxu0 0.0
        %2452 = vmatpush.msra.mxu0 0.0
        %2453 = vmatpush.msra.mxu0 0.0
        %2454 = vmatpush.msra.mxu0 0.0
        %2455 = vmatpush.msra.mxu0 0.0
        %2456 = vmatpush.msra.mxu0 0.0
        %2457 = vmatpush.msra.mxu0 0.0
        %2458 = vmatpush.msra.mxu0 0.0
        %2459 = vmatpush.msra.mxu0 %v2420
        %2460 = vmatpush.msra.mxu0 %v2419
        %2461 = vmatpush.msra.mxu0 %v2418
        %2462 = vmatpush.msra.mxu0 %v2417
        %2463 = vmatpush.msra.mxu0 %v2416
        %2464 = vmatpush.msra.mxu0 %v2415
        %2465 = vmatpush.msra.mxu0 %v2414
        %2466 = vmatpush.msra.mxu0 %v2413
        %2467 = vmatmul.f32.gmra.mxu0 %v2449
        %v2468 = vpop.f32.mrf.mxu0
        %v2469 = vadd.f32 %v2446, %v2468
        %2470 = vdwg.mxu0
        %v2471 = vld [vmem:[#allocation4] sm:$0x1]
        %v2472 = vadd.f32 %v2469, %v2471
        %v2473 = vmax.f32 %v2472, 0.0
        %v2474 = vld [vmem:[%s43] sm:$0xff]
        %v2475 = vld [vmem:[%s43 + $0x8] sm:$0xff]
        %v2476 = vld [vmem:[%s43 + $0x10] sm:$0xff]
        %v2477 = vld [vmem:[%s43 + $0x18] sm:$0xff]
        %v2478 = vld [vmem:[%s43 + $0x20] sm:$0xff]
        %v2479 = vld [vmem:[%s43 + $0x28] sm:$0xff]
        %v2480 = vld [vmem:[%s43 + $0x30] sm:$0xff]
        %v2481 = vld [vmem:[%s43 + $0x38] sm:$0xff]
        %v2483 = vsel %vm1764, %v2473, 0
        %2485 = vmatpush.msra.mxu0 0.0
        %2486 = vmatpush.msra.mxu0 0.0
        %2487 = vmatpush.msra.mxu0 0.0
        %2488 = vmatpush.msra.mxu0 0.0
        %2489 = vmatpush.msra.mxu0 0.0
        %2490 = vmatpush.msra.mxu0 0.0
        %2491 = vmatpush.msra.mxu0 0.0
        %2492 = vmatpush.msra.mxu0 0.0
        %2493 = vmatpush.msra.mxu0 %v2481
        %2494 = vmatpush.msra.mxu0 %v2480
        %2495 = vmatpush.msra.mxu0 %v2479
        %2496 = vmatpush.msra.mxu0 %v2478
        %2497 = vmatpush.msra.mxu0 %v2477
        %2498 = vmatpush.msra.mxu0 %v2476
        %2499 = vmatpush.msra.mxu0 %v2475
        %2500 = vmatpush.msra.mxu0 %v2474
        %2501 = vmatmul.f32.gmra.mxu0 %v2483
        %v2502 = vpop.f32.mrf.mxu0
        %v2503 = vadd.f32 0.0, %v2502
        %2504 = vdwg.mxu0
        %v2505 = vsub.f32 0.0, %v2503
        %v2506 = vmul.f32 %v2505, 1.442695
        %v2507 = vpow.pop %v2506
        %v2508 = vadd.f32 %v2507, 1.0
        %v2509 = vrcp.pop %v2508
        %v2510 = vmul.f32 %v2508, %v2509
        %v2511 = vsub.f32 1.0, %v2510
        %v2512 = vmul.f32 %v2509, %v2511
        %v2513 = vadd.f32 %v2509, %v2512
        %vm2514 = vweird.f32 %v2508
        %vm2515 = vweird.f32 %v2509
        %vm2516 = vmor %vm2514, %vm2515
        %v2517 = vsel %vm2516, %v2509, %v2513
        %v2518 = vand.u32 2147483647, %v2508
        %vm2519 = vcmp.eq.f32.partialorder %v2518, 8.507059e+37
        %v2520 = vand.u32 %v2508, 2147483648
        %v2521 = vor.u32 1.1754944e-38, %v2520
        %v2522 = vsel %vm2519, %v2521, %v2517
        %v2523 = vmul.f32 1.0, %v2522
        %v2524 = vld [vmem:[%s63] sm:$0xff]
        %v2525 = vld [vmem:[%s63 + $0x8] sm:$0xff]
        %v2526 = vld [vmem:[%s63 + $0x10] sm:$0xff]
        %v2527 = vld [vmem:[%s63 + $0x18] sm:$0xff]
        %v2528 = vld [vmem:[%s61] sm:$0xff]
        %v2529 = vld [vmem:[%s61 + $0x8] sm:$0xff]
        %v2530 = vld [vmem:[%s61 + $0x10] sm:$0xff]
        %v2531 = vld [vmem:[%s61 + $0x18] sm:$0xff]
        %s2533 = vtos %v2523
        %v2534 = vstv %s2533
        %v2536 = vmul.f32 %v2534, %v2528
        %v2537 = vmul.f32 %v2534, %v2529
        %v2538 = vmul.f32 %v2534, %v2530
        %v2539 = vmul.f32 %v2534, %v2531
        %v2540 = vadd.f32 %v2524, %v2536
        %v2541 = vadd.f32 %v2525, %v2537
        %v2542 = vadd.f32 %v2526, %v2538
        %v2543 = vadd.f32 %v2527, %v2539
        %s2544 = scalar_lea.vmem %s61, 32
        %v2545 = vld [vmem:[%s2544] sm:$0xff]
        %v2546 = vld [vmem:[%s2544 + $0x8] sm:$0xff]
        %v2547 = vld [vmem:[%s2544 + $0x10] sm:$0xff]
        %v2548 = vld [vmem:[%s2544 + $0x18] sm:$0xff]
        %2549 = vrot.lane.b32.xlu0 %v2523, 127
        %v2550 = vpop.permute.xlu0 %2549
        %s2551 = vtos %v2550
        %v2552 = vstv %s2551
        %v2554 = vmul.f32 %v2552, %v2545
        %v2555 = vmul.f32 %v2552, %v2546
        %v2556 = vmul.f32 %v2552, %v2547
        %v2557 = vmul.f32 %v2552, %v2548
        %v2558 = vadd.f32 %v2540, %v2554
        %v2559 = vadd.f32 %v2541, %v2555
        %v2560 = vadd.f32 %v2542, %v2556
        %v2561 = vadd.f32 %v2543, %v2557
        %s2562 = scalar_lea.vmem %s61, 64
        %v2563 = vld [vmem:[%s2562] sm:$0xff]
        %v2564 = vld [vmem:[%s2562 + $0x8] sm:$0xff]
        %v2565 = vld [vmem:[%s2562 + $0x10] sm:$0xff]
        %v2566 = vld [vmem:[%s2562 + $0x18] sm:$0xff]
        %2567 = vrot.lane.b32.xlu0 %v2523, 126
        %v2568 = vpop.permute.xlu0 %2567
        %s2569 = vtos %v2568
        %v2570 = vstv %s2569
        %v2572 = vmul.f32 %v2570, %v2563
        %v2573 = vmul.f32 %v2570, %v2564
        %v2574 = vmul.f32 %v2570, %v2565
        %v2575 = vmul.f32 %v2570, %v2566
        %v2576 = vadd.f32 %v2558, %v2572
        %v2577 = vadd.f32 %v2559, %v2573
        %v2578 = vadd.f32 %v2560, %v2574
        %v2579 = vadd.f32 %v2561, %v2575
        %s2580 = scalar_lea.vmem %s61, 96
        %v2581 = vld [vmem:[%s2580] sm:$0xff]
        %v2582 = vld [vmem:[%s2580 + $0x8] sm:$0xff]
        %v2583 = vld [vmem:[%s2580 + $0x10] sm:$0xff]
        %v2584 = vld [vmem:[%s2580 + $0x18] sm:$0xff]
        %2585 = vrot.lane.b32.xlu0 %v2523, 125
        %v2586 = vpop.permute.xlu0 %2585
        %s2587 = vtos %v2586
        %v2588 = vstv %s2587
        %v2590 = vmul.f32 %v2588, %v2581
        %v2591 = vmul.f32 %v2588, %v2582
        %v2592 = vmul.f32 %v2588, %v2583
        %v2593 = vmul.f32 %v2588, %v2584
        %v2594 = vadd.f32 %v2576, %v2590
        %v2595 = vadd.f32 %v2577, %v2591
        %v2596 = vadd.f32 %v2578, %v2592
        %v2597 = vadd.f32 %v2579, %v2593
        %v2598 = vld [vmem:[#allocation9] sm:$0x1]
        %v2600 = vperm.slane %v2598, 0
        %2602 = vmatpush.msra.mxu0 0.0
        %2603 = vmatpush.msra.mxu0 0.0
        %2604 = vmatpush.msra.mxu0 0.0
        %2605 = vmatpush.msra.mxu0 0.0
        %2606 = vmatpush.msra.mxu0 0.0
        %2607 = vmatpush.msra.mxu0 0.0
        %2608 = vmatpush.msra.mxu0 0.0
        %2609 = vmatpush.msra.mxu0 0.0
        %2610 = vmatpush.msra.mxu0 0.0
        %2611 = vmatpush.msra.mxu0 0.0
        %2612 = vmatpush.msra.mxu0 0.0
        %2613 = vmatpush.msra.mxu0 0.0
        %2614 = vmatpush.msra.mxu0 %v2597
        %2615 = vmatpush.msra.mxu0 %v2596
        %2616 = vmatpush.msra.mxu0 %v2595
        %2617 = vmatpush.msra.mxu0 %v2594
        %2618 = vmatmul.f32.gmra.mxu0 %v1793
        %v2619 = vpop.f32.mrf.mxu0
        %v2620 = vadd.f32 %v2600, %v2619
        %2621 = vmatmul.f32.gmra.mxu0 %v1796
        %v2622 = vpop.f32.mrf.mxu0
        %v2623 = vadd.f32 %v2600, %v2622
        %2624 = vmatmul.f32.gmra.mxu0 %v1799
        %v2625 = vpop.f32.mrf.mxu0
        %v2626 = vadd.f32 %v2600, %v2625
        %2627 = vmatmul.f32.gmra.mxu0 %v1802
        %v2628 = vpop.f32.mrf.mxu0
        %v2629 = vadd.f32 %v2600, %v2628
        %2630 = vmatmul.f32.gmra.mxu0 %v1805
        %v2631 = vpop.f32.mrf.mxu0
        %v2632 = vadd.f32 %v2600, %v2631
        %2633 = vmatmul.f32.gmra.mxu0 %v1808
        %v2634 = vpop.f32.mrf.mxu0
        %v2635 = vadd.f32 %v2600, %v2634
        %2636 = vmatmul.f32.gmra.mxu0 %v1811
        %v2637 = vpop.f32.mrf.mxu0
        %v2638 = vadd.f32 %v2600, %v2637
        %2639 = vmatmul.f32.gmra.mxu0 %v1814
        %v2640 = vpop.f32.mrf.mxu0
        %v2641 = vadd.f32 %v2600, %v2640
        %2642 = vdwg.mxu0
        %v2643 = vmul.f32 %v2620, 0.5
        %v2644 = vmul.f32 %v2623, 0.5
        %v2645 = vmul.f32 %v2626, 0.5
        %v2646 = vmul.f32 %v2629, 0.5
        %v2647 = vmul.f32 %v2632, 0.5
        %v2648 = vmul.f32 %v2635, 0.5
        %v2649 = vmul.f32 %v2638, 0.5
        %v2650 = vmul.f32 %v2641, 0.5
        %v2651 = vmul.f32 %v2620, 0.70710677
        %v2652 = vmul.f32 %v2623, 0.70710677
        %v2653 = vmul.f32 %v2626, 0.70710677
        %v2654 = vmul.f32 %v2629, 0.70710677
        %v2655 = vmul.f32 %v2632, 0.70710677
        %v2656 = vmul.f32 %v2635, 0.70710677
        %v2657 = vmul.f32 %v2638, 0.70710677
        %v2658 = vmul.f32 %v2641, 0.70710677
        %v2659 = vand.u32 2147483647, %v2651
        %v2660 = vand.u32 2147483647, %v2652
        %v2661 = vand.u32 2147483647, %v2653
        %v2662 = vand.u32 2147483647, %v2654
        %v2663 = vand.u32 2147483647, %v2655
        %v2664 = vand.u32 2147483647, %v2656
        %v2665 = vand.u32 2147483647, %v2657
        %v2666 = vand.u32 2147483647, %v2658
        %v2667 = vmul.f32 %v2659, 0.3275911
        %v2668 = vmul.f32 %v2660, 0.3275911
        %v2669 = vmul.f32 %v2661, 0.3275911
        %v2670 = vmul.f32 %v2662, 0.3275911
        %v2671 = vmul.f32 %v2663, 0.3275911
        %v2672 = vmul.f32 %v2664, 0.3275911
        %v2673 = vmul.f32 %v2665, 0.3275911
        %v2674 = vmul.f32 %v2666, 0.3275911
        %v2675 = vadd.f32 %v2667, 1.0
        %v2676 = vadd.f32 %v2668, 1.0
        %v2677 = vadd.f32 %v2669, 1.0
        %v2678 = vadd.f32 %v2670, 1.0
        %v2679 = vadd.f32 %v2671, 1.0
        %v2680 = vadd.f32 %v2672, 1.0
        %v2681 = vadd.f32 %v2673, 1.0
        %v2682 = vadd.f32 %v2674, 1.0
        %v2683 = vrcp.pop %v2675
        %v2684 = vmul.f32 %v2675, %v2683
        %v2685 = vsub.f32 1.0, %v2684
        %v2686 = vmul.f32 %v2683, %v2685
        %v2687 = vadd.f32 %v2683, %v2686
        %vm2688 = vweird.f32 %v2675
        %vm2689 = vweird.f32 %v2683
        %vm2690 = vmor %vm2688, %vm2689
        %v2691 = vsel %vm2690, %v2683, %v2687
        %v2692 = vand.u32 2147483647, %v2675
        %vm2693 = vcmp.eq.f32.partialorder %v2692, 8.507059e+37
        %v2694 = vand.u32 %v2675, 2147483648
        %v2695 = vor.u32 1.1754944e-38, %v2694
        %v2696 = vsel %vm2693, %v2695, %v2691
        %v2697 = vmul.f32 1.0, %v2696
        %v2698 = vrcp.pop %v2676
        %v2699 = vmul.f32 %v2676, %v2698
        %v2700 = vsub.f32 1.0, %v2699
        %v2701 = vmul.f32 %v2698, %v2700
        %v2702 = vadd.f32 %v2698, %v2701
        %vm2703 = vweird.f32 %v2676
        %vm2704 = vweird.f32 %v2698
        %vm2705 = vmor %vm2703, %vm2704
        %v2706 = vsel %vm2705, %v2698, %v2702
        %v2707 = vand.u32 2147483647, %v2676
        %vm2708 = vcmp.eq.f32.partialorder %v2707, 8.507059e+37
        %v2709 = vand.u32 %v2676, 2147483648
        %v2710 = vor.u32 1.1754944e-38, %v2709
        %v2711 = vsel %vm2708, %v2710, %v2706
        %v2712 = vmul.f32 1.0, %v2711
        %v2713 = vrcp.pop %v2677
        %v2714 = vmul.f32 %v2677, %v2713
        %v2715 = vsub.f32 1.0, %v2714
        %v2716 = vmul.f32 %v2713, %v2715
        %v2717 = vadd.f32 %v2713, %v2716
        %vm2718 = vweird.f32 %v2677
        %vm2719 = vweird.f32 %v2713
        %vm2720 = vmor %vm2718, %vm2719
        %v2721 = vsel %vm2720, %v2713, %v2717
        %v2722 = vand.u32 2147483647, %v2677
        %vm2723 = vcmp.eq.f32.partialorder %v2722, 8.507059e+37
        %v2724 = vand.u32 %v2677, 2147483648
        %v2725 = vor.u32 1.1754944e-38, %v2724
        %v2726 = vsel %vm2723, %v2725, %v2721
        %v2727 = vmul.f32 1.0, %v2726
        %v2728 = vrcp.pop %v2678
        %v2729 = vmul.f32 %v2678, %v2728
        %v2730 = vsub.f32 1.0, %v2729
        %v2731 = vmul.f32 %v2728, %v2730
        %v2732 = vadd.f32 %v2728, %v2731
        %vm2733 = vweird.f32 %v2678
        %vm2734 = vweird.f32 %v2728
        %vm2735 = vmor %vm2733, %vm2734
        %v2736 = vsel %vm2735, %v2728, %v2732
        %v2737 = vand.u32 2147483647, %v2678
        %vm2738 = vcmp.eq.f32.partialorder %v2737, 8.507059e+37
        %v2739 = vand.u32 %v2678, 2147483648
        %v2740 = vor.u32 1.1754944e-38, %v2739
        %v2741 = vsel %vm2738, %v2740, %v2736
        %v2742 = vmul.f32 1.0, %v2741
        %v2743 = vrcp.pop %v2679
        %v2744 = vmul.f32 %v2679, %v2743
        %v2745 = vsub.f32 1.0, %v2744
        %v2746 = vmul.f32 %v2743, %v2745
        %v2747 = vadd.f32 %v2743, %v2746
        %vm2748 = vweird.f32 %v2679
        %vm2749 = vweird.f32 %v2743
        %vm2750 = vmor %vm2748, %vm2749
        %v2751 = vsel %vm2750, %v2743, %v2747
        %v2752 = vand.u32 2147483647, %v2679
        %vm2753 = vcmp.eq.f32.partialorder %v2752, 8.507059e+37
        %v2754 = vand.u32 %v2679, 2147483648
        %v2755 = vor.u32 1.1754944e-38, %v2754
        %v2756 = vsel %vm2753, %v2755, %v2751
        %v2757 = vmul.f32 1.0, %v2756
        %v2758 = vrcp.pop %v2680
        %v2759 = vmul.f32 %v2680, %v2758
        %v2760 = vsub.f32 1.0, %v2759
        %v2761 = vmul.f32 %v2758, %v2760
        %v2762 = vadd.f32 %v2758, %v2761
        %vm2763 = vweird.f32 %v2680
        %vm2764 = vweird.f32 %v2758
        %vm2765 = vmor %vm2763, %vm2764
        %v2766 = vsel %vm2765, %v2758, %v2762
        %v2767 = vand.u32 2147483647, %v2680
        %vm2768 = vcmp.eq.f32.partialorder %v2767, 8.507059e+37
        %v2769 = vand.u32 %v2680, 2147483648
        %v2770 = vor.u32 1.1754944e-38, %v2769
        %v2771 = vsel %vm2768, %v2770, %v2766
        %v2772 = vmul.f32 1.0, %v2771
        %v2773 = vrcp.pop %v2681
        %v2774 = vmul.f32 %v2681, %v2773
        %v2775 = vsub.f32 1.0, %v2774
        %v2776 = vmul.f32 %v2773, %v2775
        %v2777 = vadd.f32 %v2773, %v2776
        %vm2778 = vweird.f32 %v2681
        %vm2779 = vweird.f32 %v2773
        %vm2780 = vmor %vm2778, %vm2779
        %v2781 = vsel %vm2780, %v2773, %v2777
        %v2782 = vand.u32 2147483647, %v2681
        %vm2783 = vcmp.eq.f32.partialorder %v2782, 8.507059e+37
        %v2784 = vand.u32 %v2681, 2147483648
        %v2785 = vor.u32 1.1754944e-38, %v2784
        %v2786 = vsel %vm2783, %v2785, %v2781
        %v2787 = vmul.f32 1.0, %v2786
        %v2788 = vrcp.pop %v2682
        %v2789 = vmul.f32 %v2682, %v2788
        %v2790 = vsub.f32 1.0, %v2789
        %v2791 = vmul.f32 %v2788, %v2790
        %v2792 = vadd.f32 %v2788, %v2791
        %vm2793 = vweird.f32 %v2682
        %vm2794 = vweird.f32 %v2788
        %vm2795 = vmor %vm2793, %vm2794
        %v2796 = vsel %vm2795, %v2788, %v2792
        %v2797 = vand.u32 2147483647, %v2682
        %vm2798 = vcmp.eq.f32.partialorder %v2797, 8.507059e+37
        %v2799 = vand.u32 %v2682, 2147483648
        %v2800 = vor.u32 1.1754944e-38, %v2799
        %v2801 = vsel %vm2798, %v2800, %v2796
        %v2802 = vmul.f32 1.0, %v2801
        %v2803 = vmul.f32 %v2697, 1.0614054
        %v2804 = vmul.f32 %v2712, 1.0614054
        %v2805 = vmul.f32 %v2727, 1.0614054
        %v2806 = vmul.f32 %v2742, 1.0614054
        %v2807 = vmul.f32 %v2757, 1.0614054
        %v2808 = vmul.f32 %v2772, 1.0614054
        %v2809 = vmul.f32 %v2787, 1.0614054
        %v2810 = vmul.f32 %v2802, 1.0614054
        %v2811 = vsub.f32 %v2803, 1.4531521
        %v2812 = vsub.f32 %v2804, 1.4531521
        %v2813 = vsub.f32 %v2805, 1.4531521
        %v2814 = vsub.f32 %v2806, 1.4531521
        %v2815 = vsub.f32 %v2807, 1.4531521
        %v2816 = vsub.f32 %v2808, 1.4531521
        %v2817 = vsub.f32 %v2809, 1.4531521
        %v2818 = vsub.f32 %v2810, 1.4531521
        %v2819 = vmul.f32 %v2811, %v2697
        %v2820 = vmul.f32 %v2812, %v2712
        %v2821 = vmul.f32 %v2813, %v2727
        %v2822 = vmul.f32 %v2814, %v2742
        %v2823 = vmul.f32 %v2815, %v2757
        %v2824 = vmul.f32 %v2816, %v2772
        %v2825 = vmul.f32 %v2817, %v2787
        %v2826 = vmul.f32 %v2818, %v2802
        %v2827 = vadd.f32 %v2819, 1.4214138
        %v2828 = vadd.f32 %v2820, 1.4214138
        %v2829 = vadd.f32 %v2821, 1.4214138
        %v2830 = vadd.f32 %v2822, 1.4214138
        %v2831 = vadd.f32 %v2823, 1.4214138
        %v2832 = vadd.f32 %v2824, 1.4214138
        %v2833 = vadd.f32 %v2825, 1.4214138
        %v2834 = vadd.f32 %v2826, 1.4214138
        %v2835 = vmul.f32 %v2827, %v2697
        %v2836 = vmul.f32 %v2828, %v2712
        %v2837 = vmul.f32 %v2829, %v2727
        %v2838 = vmul.f32 %v2830, %v2742
        %v2839 = vmul.f32 %v2831, %v2757
        %v2840 = vmul.f32 %v2832, %v2772
        %v2841 = vmul.f32 %v2833, %v2787
        %v2842 = vmul.f32 %v2834, %v2802
        %v2843 = vsub.f32 %v2835, 0.28449672
        %v2844 = vsub.f32 %v2836, 0.28449672
        %v2845 = vsub.f32 %v2837, 0.28449672
        %v2846 = vsub.f32 %v2838, 0.28449672
        %v2847 = vsub.f32 %v2839, 0.28449672
        %v2848 = vsub.f32 %v2840, 0.28449672
        %v2849 = vsub.f32 %v2841, 0.28449672
        %v2850 = vsub.f32 %v2842, 0.28449672
        %v2851 = vmul.f32 %v2843, %v2697
        %v2852 = vmul.f32 %v2844, %v2712
        %v2853 = vmul.f32 %v2845, %v2727
        %v2854 = vmul.f32 %v2846, %v2742
        %v2855 = vmul.f32 %v2847, %v2757
        %v2856 = vmul.f32 %v2848, %v2772
        %v2857 = vmul.f32 %v2849, %v2787
        %v2858 = vmul.f32 %v2850, %v2802
        %v2859 = vadd.f32 %v2851, 0.2548296
        %v2860 = vadd.f32 %v2852, 0.2548296
        %v2861 = vadd.f32 %v2853, 0.2548296
        %v2862 = vadd.f32 %v2854, 0.2548296
        %v2863 = vadd.f32 %v2855, 0.2548296
        %v2864 = vadd.f32 %v2856, 0.2548296
        %v2865 = vadd.f32 %v2857, 0.2548296
        %v2866 = vadd.f32 %v2858, 0.2548296
        %v2867 = vmul.f32 %v2859, %v2697
        %v2868 = vmul.f32 %v2860, %v2712
        %v2869 = vmul.f32 %v2861, %v2727
        %v2870 = vmul.f32 %v2862, %v2742
        %v2871 = vmul.f32 %v2863, %v2757
        %v2872 = vmul.f32 %v2864, %v2772
        %v2873 = vmul.f32 %v2865, %v2787
        %v2874 = vmul.f32 %v2866, %v2802
        %v2875 = vsub.f32 0.0, %v2659
        %v2876 = vsub.f32 0.0, %v2660
        %v2877 = vsub.f32 0.0, %v2661
        %v2878 = vsub.f32 0.0, %v2662
        %v2879 = vsub.f32 0.0, %v2663
        %v2880 = vsub.f32 0.0, %v2664
        %v2881 = vsub.f32 0.0, %v2665
        %v2882 = vsub.f32 0.0, %v2666
        %v2883 = vmul.f32 %v2875, %v2659
        %v2884 = vmul.f32 %v2876, %v2660
        %v2885 = vmul.f32 %v2877, %v2661
        %v2886 = vmul.f32 %v2878, %v2662
        %v2887 = vmul.f32 %v2879, %v2663
        %v2888 = vmul.f32 %v2880, %v2664
        %v2889 = vmul.f32 %v2881, %v2665
        %v2890 = vmul.f32 %v2882, %v2666
        %v2891 = vmul.f32 %v2883, 1.442695
        %v2892 = vpow.pop %v2891
        %v2893 = vmul.f32 %v2884, 1.442695
        %v2894 = vpow.pop %v2893
        %v2895 = vmul.f32 %v2885, 1.442695
        %v2896 = vpow.pop %v2895
        %v2897 = vmul.f32 %v2886, 1.442695
        %v2898 = vpow.pop %v2897
        %v2899 = vmul.f32 %v2887, 1.442695
        %v2900 = vpow.pop %v2899
        %v2901 = vmul.f32 %v2888, 1.442695
        %v2902 = vpow.pop %v2901
        %v2903 = vmul.f32 %v2889, 1.442695
        %v2904 = vpow.pop %v2903
        %v2905 = vmul.f32 %v2890, 1.442695
        %v2906 = vpow.pop %v2905
        %v2907 = vmul.f32 %v2867, %v2892
        %v2908 = vmul.f32 %v2868, %v2894
        %v2909 = vmul.f32 %v2869, %v2896
        %v2910 = vmul.f32 %v2870, %v2898
        %v2911 = vmul.f32 %v2871, %v2900
        %v2912 = vmul.f32 %v2872, %v2902
        %v2913 = vmul.f32 %v2873, %v2904
        %v2914 = vmul.f32 %v2874, %v2906
        %v2915 = vsub.f32 1.0, %v2907
        %v2916 = vsub.f32 1.0, %v2908
        %v2917 = vsub.f32 1.0, %v2909
        %v2918 = vsub.f32 1.0, %v2910
        %v2919 = vsub.f32 1.0, %v2911
        %v2920 = vsub.f32 1.0, %v2912
        %v2921 = vsub.f32 1.0, %v2913
        %v2922 = vsub.f32 1.0, %v2914
        %vm2923 = vcmp.ge.f32.partialorder %v2651, 0.0
        %vm2924 = vcmp.ge.f32.partialorder %v2652, 0.0
        %vm2925 = vcmp.ge.f32.partialorder %v2653, 0.0
        %vm2926 = vcmp.ge.f32.partialorder %v2654, 0.0
        %vm2927 = vcmp.ge.f32.partialorder %v2655, 0.0
        %vm2928 = vcmp.ge.f32.partialorder %v2656, 0.0
        %vm2929 = vcmp.ge.f32.partialorder %v2657, 0.0
        %vm2930 = vcmp.ge.f32.partialorder %v2658, 0.0
        %v2931 = vsub.f32 0.0, %v2915
        %v2932 = vsub.f32 0.0, %v2916
        %v2933 = vsub.f32 0.0, %v2917
        %v2934 = vsub.f32 0.0, %v2918
        %v2935 = vsub.f32 0.0, %v2919
        %v2936 = vsub.f32 0.0, %v2920
        %v2937 = vsub.f32 0.0, %v2921
        %v2938 = vsub.f32 0.0, %v2922
        %v2939 = vsel %vm2923, %v2915, %v2931
        %v2940 = vsel %vm2924, %v2916, %v2932
        %v2941 = vsel %vm2925, %v2917, %v2933
        %v2942 = vsel %vm2926, %v2918, %v2934
        %v2943 = vsel %vm2927, %v2919, %v2935
        %v2944 = vsel %vm2928, %v2920, %v2936
        %v2945 = vsel %vm2929, %v2921, %v2937
        %v2946 = vsel %vm2930, %v2922, %v2938
        %v2947 = vadd.f32 %v2939, 1.0
        %v2948 = vadd.f32 %v2940, 1.0
        %v2949 = vadd.f32 %v2941, 1.0
        %v2950 = vadd.f32 %v2942, 1.0
        %v2951 = vadd.f32 %v2943, 1.0
        %v2952 = vadd.f32 %v2944, 1.0
        %v2953 = vadd.f32 %v2945, 1.0
        %v2954 = vadd.f32 %v2946, 1.0
        %v2955 = vmul.f32 %v2643, %v2947
        %v2956 = vmul.f32 %v2644, %v2948
        %v2957 = vmul.f32 %v2645, %v2949
        %v2958 = vmul.f32 %v2646, %v2950
        %v2959 = vmul.f32 %v2647, %v2951
        %v2960 = vmul.f32 %v2648, %v2952
        %v2961 = vmul.f32 %v2649, %v2953
        %v2962 = vmul.f32 %v2650, %v2954
        %v2963 = vsel %vm1764, %v2955, 0.0
        %v2964 = vsel %vm1764, %v2956, 0.0
        %v2965 = vadd.f32 %v2963, %v2964
        %v2966 = vsel %vm1764, %v2957, 0.0
        %v2967 = vadd.f32 %v2965, %v2966
        %v2968 = vsel %vm1764, %v2958, 0.0
        %v2969 = vadd.f32 %v2967, %v2968
        %v2970 = vsel %vm1764, %v2959, 0.0
        %v2971 = vadd.f32 %v2969, %v2970
        %v2972 = vsel %vm1764, %v2960, 0.0
        %v2973 = vadd.f32 %v2971, %v2972
        %v2974 = vsel %vm1764, %v2961, 0.0
        %v2975 = vadd.f32 %v2973, %v2974
        %v2976 = vsel %vm1764, %v2962, 0.0
        %v2977 = vadd.f32 %v2975, %v2976
        %v2978 = vrot.slane %v2977, 4
        %v2979 = vadd.f32 %v2977, %v2978
        %v2980 = vrot.slane %v2979, 2
        %v2981 = vadd.f32 %v2979, %v2980
        %v2982 = vrot.slane %v2981, 1
        %v2983 = vadd.f32 %v2981, %v2982
        %v2984 = vmul.f32 %v2983, %v1728
        %v2985 = vld [vmem:[%s45] sm:$0xff]
        %v2986 = vld [vmem:[%s45 + $0x8] sm:$0xff]
        %v2987 = vld [vmem:[%s45 + $0x10] sm:$0xff]
        %v2988 = vld [vmem:[%s45 + $0x18] sm:$0xff]
        %v2989 = vld [vmem:[%s45 + $0x20] sm:$0xff]
        %v2990 = vld [vmem:[%s45 + $0x28] sm:$0xff]
        %v2991 = vld [vmem:[%s45 + $0x30] sm:$0xff]
        %v2992 = vld [vmem:[%s45 + $0x38] sm:$0xff]
        %v2993 = vld [vmem:[%s47] sm:$0xff]
        %v2994 = vld [vmem:[%s47 + $0x8] sm:$0xff]
        %v2995 = vld [vmem:[%s47 + $0x10] sm:$0xff]
        %v2996 = vld [vmem:[%s47 + $0x18] sm:$0xff]
        %v2997 = vld [vmem:[%s47 + $0x20] sm:$0xff]
        %v2998 = vld [vmem:[%s47 + $0x28] sm:$0xff]
        %v2999 = vld [vmem:[%s47 + $0x30] sm:$0xff]
        %v3000 = vld [vmem:[%s47 + $0x38] sm:$0xff]
        %v3002 = vsel %vm1764, %v2984, 0
        %3004 = vmatpush.msra.mxu0 0.0
        %3005 = vmatpush.msra.mxu0 0.0
        %3006 = vmatpush.msra.mxu0 0.0
        %3007 = vmatpush.msra.mxu0 0.0
        %3008 = vmatpush.msra.mxu0 0.0
        %3009 = vmatpush.msra.mxu0 0.0
        %3010 = vmatpush.msra.mxu0 0.0
        %3011 = vmatpush.msra.mxu0 0.0
        %3012 = vmatpush.msra.mxu0 %v3000
        %3013 = vmatpush.msra.mxu0 %v2999
        %3014 = vmatpush.msra.mxu0 %v2998
        %3015 = vmatpush.msra.mxu0 %v2997
        %3016 = vmatpush.msra.mxu0 %v2996
        %3017 = vmatpush.msra.mxu0 %v2995
        %3018 = vmatpush.msra.mxu0 %v2994
        %3019 = vmatpush.msra.mxu0 %v2993
        %3020 = vmatmul.f32.gmra.mxu0 %v3002
        %v3021 = vpop.f32.mrf.mxu0
        %v3022 = vadd.f32 0.0, %v3021
        %3023 = vdwg.mxu0
        %3024 = vmatpush.msra.mxu0 0.0
        %3025 = vmatpush.msra.mxu0 0.0
        %3026 = vmatpush.msra.mxu0 0.0
        %3027 = vmatpush.msra.mxu0 0.0
        %3028 = vmatpush.msra.mxu0 0.0
        %3029 = vmatpush.msra.mxu0 0.0
        %3030 = vmatpush.msra.mxu0 0.0
        %3031 = vmatpush.msra.mxu0 0.0
        %3032 = vmatpush.msra.mxu0 %v2992
        %3033 = vmatpush.msra.mxu0 %v2991
        %3034 = vmatpush.msra.mxu0 %v2990
        %3035 = vmatpush.msra.mxu0 %v2989
        %3036 = vmatpush.msra.mxu0 %v2988
        %3037 = vmatpush.msra.mxu0 %v2987
        %3038 = vmatpush.msra.mxu0 %v2986
        %3039 = vmatpush.msra.mxu0 %v2985
        %3040 = vmatmul.f32.gmra.mxu0 %v2449
        %v3041 = vpop.f32.mrf.mxu0
        %v3042 = vadd.f32 %v3022, %v3041
        %3043 = vdwg.mxu0
        %v3044 = vld [vmem:[%s49] sm:$0x1]
        %v3045 = vadd.f32 %v3042, %v3044
        %v3046 = vmax.f32 %v3045, 0.0
        %v3047 = vld [vmem:[%s51] sm:$0xff]
        %v3048 = vld [vmem:[%s51 + $0x8] sm:$0xff]
        %v3049 = vld [vmem:[%s51 + $0x10] sm:$0xff]
        %v3050 = vld [vmem:[%s51 + $0x18] sm:$0xff]
        %v3051 = vld [vmem:[%s51 + $0x20] sm:$0xff]
        %v3052 = vld [vmem:[%s51 + $0x28] sm:$0xff]
        %v3053 = vld [vmem:[%s51 + $0x30] sm:$0xff]
        %v3054 = vld [vmem:[%s51 + $0x38] sm:$0xff]
        %v3056 = vsel %vm1764, %v3046, 0
        %3058 = vmatpush.msra.mxu0 0.0
        %3059 = vmatpush.msra.mxu0 0.0
        %3060 = vmatpush.msra.mxu0 0.0
        %3061 = vmatpush.msra.mxu0 0.0
        %3062 = vmatpush.msra.mxu0 0.0
        %3063 = vmatpush.msra.mxu0 0.0
        %3064 = vmatpush.msra.mxu0 0.0
        %3065 = vmatpush.msra.mxu0 0.0
        %3066 = vmatpush.msra.mxu0 %v3054
        %3067 = vmatpush.msra.mxu0 %v3053
        %3068 = vmatpush.msra.mxu0 %v3052
        %3069 = vmatpush.msra.mxu0 %v3051
        %3070 = vmatpush.msra.mxu0 %v3050
        %3071 = vmatpush.msra.mxu0 %v3049
        %3072 = vmatpush.msra.mxu0 %v3048
        %3073 = vmatpush.msra.mxu0 %v3047
        %3074 = vmatmul.f32.gmra.mxu0 %v3056
        %v3075 = vpop.f32.mrf.mxu0
        %v3076 = vadd.f32 0.0, %v3075
        %3077 = vdwg.mxu0
        %v3078 = vsub.f32 0.0, %v3076
        %v3079 = vmul.f32 %v3078, 1.442695
        %v3080 = vpow.pop %v3079
        %v3081 = vadd.f32 %v3080, 1.0
        %v3082 = vrcp.pop %v3081
        %v3083 = vmul.f32 %v3081, %v3082
        %v3084 = vsub.f32 1.0, %v3083
        %v3085 = vmul.f32 %v3082, %v3084
        %v3086 = vadd.f32 %v3082, %v3085
        %vm3087 = vweird.f32 %v3081
        %vm3088 = vweird.f32 %v3082
        %vm3089 = vmor %vm3087, %vm3088
        %v3090 = vsel %vm3089, %v3082, %v3086
        %v3091 = vand.u32 2147483647, %v3081
        %vm3092 = vcmp.eq.f32.partialorder %v3091, 8.507059e+37
        %v3093 = vand.u32 %v3081, 2147483648
        %v3094 = vor.u32 1.1754944e-38, %v3093
        %v3095 = vsel %vm3092, %v3094, %v3090
        %v3096 = vmul.f32 1.0, %v3095
        %v3097 = vld [vmem:[#allocation10] sm:$0xff]
        %v3098 = vld [vmem:[#allocation10 + $0x8] sm:$0x1]
        %v3099 = vld [vmem:[%s67] sm:$0xff]
        %v3100 = vld [vmem:[%s67 + $0x8] sm:$0x1]
        %s3102 = vtos %v3096
        %v3103 = vstv %s3102
        %v3105 = vmul.f32 %v3103, %v3099
        %v3106 = vmul.f32 %v3103, %v3100
        %v3107 = vadd.f32 %v3097, %v3105
        %v3108 = vadd.f32 %v3098, %v3106
        %s3109 = scalar_lea.vmem %s67, 16
        %v3110 = vld [vmem:[%s3109] sm:$0xff]
        %v3111 = vld [vmem:[%s3109 + $0x8] sm:$0x1]
        %3112 = vrot.lane.b32.xlu0 %v3096, 127
        %v3113 = vpop.permute.xlu0 %3112
        %s3114 = vtos %v3113
        %v3115 = vstv %s3114
        %v3117 = vmul.f32 %v3115, %v3110
        %v3118 = vmul.f32 %v3115, %v3111
        %v3119 = vadd.f32 %v3107, %v3117
        %v3120 = vadd.f32 %v3108, %v3118
        %s3121 = scalar_lea.vmem %s67, 32
        %v3122 = vld [vmem:[%s3121] sm:$0xff]
        %v3123 = vld [vmem:[%s3121 + $0x8] sm:$0x1]
        %3124 = vrot.lane.b32.xlu0 %v3096, 126
        %v3125 = vpop.permute.xlu0 %3124
        %s3126 = vtos %v3125
        %v3127 = vstv %s3126
        %v3129 = vmul.f32 %v3127, %v3122
        %v3130 = vmul.f32 %v3127, %v3123
        %v3131 = vadd.f32 %v3119, %v3129
        %v3132 = vadd.f32 %v3120, %v3130
        %s3133 = scalar_lea.vmem %s67, 48
        %v3134 = vld [vmem:[%s3133] sm:$0xff]
        %v3135 = vld [vmem:[%s3133 + $0x8] sm:$0x1]
        %3136 = vrot.lane.b32.xlu0 %v3096, 125
        %v3137 = vpop.permute.xlu0 %3136
        %s3138 = vtos %v3137
        %v3139 = vstv %s3138
        %v3141 = vmul.f32 %v3139, %v3134
        %v3142 = vmul.f32 %v3139, %v3135
        %v3143 = vadd.f32 %v3131, %v3141
        %v3144 = vadd.f32 %v3132, %v3142
        %s3145 = scalar_lea.vmem %s67, 64
        %v3146 = vld [vmem:[%s3145] sm:$0xff]
        %v3147 = vld [vmem:[%s3145 + $0x8] sm:$0x1]
        %3148 = vrot.lane.b32.xlu0 %v3096, 124
        %v3149 = vpop.permute.xlu0 %3148
        %s3150 = vtos %v3149
        %v3151 = vstv %s3150
        %v3153 = vmul.f32 %v3151, %v3146
        %v3154 = vmul.f32 %v3151, %v3147
        %v3155 = vadd.f32 %v3143, %v3153
        %v3156 = vadd.f32 %v3144, %v3154
        %s3157 = scalar_lea.vmem %s67, 80
        %v3158 = vld [vmem:[%s3157] sm:$0xff]
        %v3159 = vld [vmem:[%s3157 + $0x8] sm:$0x1]
        %3160 = vrot.lane.b32.xlu0 %v3096, 123
        %v3161 = vpop.permute.xlu0 %3160
        %s3162 = vtos %v3161
        %v3163 = vstv %s3162
        %v3165 = vmul.f32 %v3163, %v3158
        %v3166 = vmul.f32 %v3163, %v3159
        %v3167 = vadd.f32 %v3155, %v3165
        %v3168 = vadd.f32 %v3156, %v3166
        %s3169 = scalar_lea.vmem %s67, 96
        %v3170 = vld [vmem:[%s3169] sm:$0xff]
        %v3171 = vld [vmem:[%s3169 + $0x8] sm:$0x1]
        %3172 = vrot.lane.b32.xlu0 %v3096, 122
        %v3173 = vpop.permute.xlu0 %3172
        %s3174 = vtos %v3173
        %v3175 = vstv %s3174
        %v3177 = vmul.f32 %v3175, %v3170
        %v3178 = vmul.f32 %v3175, %v3171
        %v3179 = vadd.f32 %v3167, %v3177
        %v3180 = vadd.f32 %v3168, %v3178
        %s3181 = scalar_lea.vmem %s67, 112
        %v3182 = vld [vmem:[%s3181] sm:$0xff]
        %v3183 = vld [vmem:[%s3181 + $0x8] sm:$0x1]
        %3184 = vrot.lane.b32.xlu0 %v3096, 121
        %v3185 = vpop.permute.xlu0 %3184
        %s3186 = vtos %v3185
        %v3187 = vstv %s3186
        %v3189 = vmul.f32 %v3187, %v3182
        %v3190 = vmul.f32 %v3187, %v3183
        %v3191 = vadd.f32 %v3179, %v3189
        %v3192 = vadd.f32 %v3180, %v3190
        %s3193 = scalar_lea.vmem %s67, 128
        %v3194 = vld [vmem:[%s3193] sm:$0xff]
        %v3195 = vld [vmem:[%s3193 + $0x8] sm:$0x1]
        %3196 = vrot.lane.b32.xlu0 %v3096, 120
        %v3197 = vpop.permute.xlu0 %3196
        %s3198 = vtos %v3197
        %v3199 = vstv %s3198
        %v3201 = vmul.f32 %v3199, %v3194
        %v3202 = vmul.f32 %v3199, %v3195
        %v3203 = vadd.f32 %v3191, %v3201
        %v3204 = vadd.f32 %v3192, %v3202
        %s3205 = scalar_lea.vmem %s67, 144
        %v3206 = vld [vmem:[%s3205] sm:$0xff]
        %v3207 = vld [vmem:[%s3205 + $0x8] sm:$0x1]
        %3208 = vrot.lane.b32.xlu0 %v3096, 119
        %v3209 = vpop.permute.xlu0 %3208
        %s3210 = vtos %v3209
        %v3211 = vstv %s3210
        %v3213 = vmul.f32 %v3211, %v3206
        %v3214 = vmul.f32 %v3211, %v3207
        %v3215 = vadd.f32 %v3203, %v3213
        %v3216 = vadd.f32 %v3204, %v3214
        %s3217 = scalar_lea.vmem %s67, 160
        %v3218 = vld [vmem:[%s3217] sm:$0xff]
        %v3219 = vld [vmem:[%s3217 + $0x8] sm:$0x1]
        %3220 = vrot.lane.b32.xlu0 %v3096, 118
        %v3221 = vpop.permute.xlu0 %3220
        %s3222 = vtos %v3221
        %v3223 = vstv %s3222
        %v3225 = vmul.f32 %v3223, %v3218
        %v3226 = vmul.f32 %v3223, %v3219
        %v3227 = vadd.f32 %v3215, %v3225
        %v3228 = vadd.f32 %v3216, %v3226
        %s3229 = scalar_lea.vmem %s67, 176
        %v3230 = vld [vmem:[%s3229] sm:$0xff]
        %v3231 = vld [vmem:[%s3229 + $0x8] sm:$0x1]
        %3232 = vrot.lane.b32.xlu0 %v3096, 117
        %v3233 = vpop.permute.xlu0 %3232
        %s3234 = vtos %v3233
        %v3235 = vstv %s3234
        %v3237 = vmul.f32 %v3235, %v3230
        %v3238 = vmul.f32 %v3235, %v3231
        %v3239 = vadd.f32 %v3227, %v3237
        %v3240 = vadd.f32 %v3228, %v3238
        %s3241 = scalar_lea.vmem %s67, 192
        %v3242 = vld [vmem:[%s3241] sm:$0xff]
        %v3243 = vld [vmem:[%s3241 + $0x8] sm:$0x1]
        %3244 = vrot.lane.b32.xlu0 %v3096, 116
        %v3245 = vpop.permute.xlu0 %3244
        %s3246 = vtos %v3245
        %v3247 = vstv %s3246
        %v3249 = vmul.f32 %v3247, %v3242
        %v3250 = vmul.f32 %v3247, %v3243
        %v3251 = vadd.f32 %v3239, %v3249
        %v3252 = vadd.f32 %v3240, %v3250
        %s3253 = scalar_lea.vmem %s67, 208
        %v3254 = vld [vmem:[%s3253] sm:$0xff]
        %v3255 = vld [vmem:[%s3253 + $0x8] sm:$0x1]
        %3256 = vrot.lane.b32.xlu0 %v3096, 115
        %v3257 = vpop.permute.xlu0 %3256
        %s3258 = vtos %v3257
        %v3259 = vstv %s3258
        %v3261 = vmul.f32 %v3259, %v3254
        %v3262 = vmul.f32 %v3259, %v3255
        %v3263 = vadd.f32 %v3251, %v3261
        %v3264 = vadd.f32 %v3252, %v3262
        %s3265 = scalar_lea.vmem %s67, 224
        %v3266 = vld [vmem:[%s3265] sm:$0xff]
        %v3267 = vld [vmem:[%s3265 + $0x8] sm:$0x1]
        %3268 = vrot.lane.b32.xlu0 %v3096, 114
        %v3269 = vpop.permute.xlu0 %3268
        %s3270 = vtos %v3269
        %v3271 = vstv %s3270
        %v3273 = vmul.f32 %v3271, %v3266
        %v3274 = vmul.f32 %v3271, %v3267
        %v3275 = vadd.f32 %v3263, %v3273
        %v3276 = vadd.f32 %v3264, %v3274
        %s3277 = scalar_lea.vmem %s67, 240
        %v3278 = vld [vmem:[%s3277] sm:$0xff]
        %v3279 = vld [vmem:[%s3277 + $0x8] sm:$0x1]
        %3280 = vrot.lane.b32.xlu0 %v3096, 113
        %v3281 = vpop.permute.xlu0 %3280
        %s3282 = vtos %v3281
        %v3283 = vstv %s3282
        %v3285 = vmul.f32 %v3283, %v3278
        %v3286 = vmul.f32 %v3283, %v3279
        %v3287 = vadd.f32 %v3275, %v3285
        %v3288 = vadd.f32 %v3276, %v3286
        %3289 = vst.msk [vmem:[#allocation2] sm:$0xff] %vm1764, 0.0
        %3290 = vst.msk [vmem:[#allocation2 + $0x8] sm:$0xff] %vm1764, 0.0
        %3291 = vst.msk [vmem:[#allocation2 + $0x10] sm:$0xff] %vm1764, 0.0
        %3292 = vst.msk [vmem:[#allocation2 + $0x18] sm:$0xff] %vm1764, 0.0
        %3293 = vst.msk [vmem:[#allocation2 + $0x20] sm:$0xff] %vm1764, 0.0
        %3294 = vst.msk [vmem:[#allocation2 + $0x28] sm:$0xff] %vm1764, 0.0
        %3295 = vst.msk [vmem:[#allocation2 + $0x30] sm:$0xff] %vm1764, 0.0
        %3296 = vst.msk [vmem:[#allocation2 + $0x38] sm:$0xff] %vm1764, 0.0
        %3297 = vst.msk [vmem:[#allocation2 + $0x40] sm:$0xff] %vm1764, 0.0
        %3298 = vst.msk [vmem:[#allocation2 + $0x48] sm:$0xff] %vm1764, 0.0
        %3299 = vst.msk [vmem:[#allocation2 + $0x50] sm:$0xff] %vm1764, 0.0
        %3300 = vst.msk [vmem:[#allocation2 + $0x58] sm:$0xff] %vm1764, 0.0
        %3301 = vst.msk [vmem:[#allocation2 + $0x10] sm:$0xff] %vm1764, %v2955
        %3302 = vst.msk [vmem:[#allocation2 + $0x18] sm:$0xff] %vm1764, %v2956
        %3303 = vst.msk [vmem:[#allocation2 + $0x20] sm:$0xff] %vm1764, %v2957
        %3304 = vst.msk [vmem:[#allocation2 + $0x28] sm:$0xff] %vm1764, %v2958
        %3305 = vst.msk [vmem:[#allocation2 + $0x30] sm:$0xff] %vm1764, %v2959
        %3306 = vst.msk [vmem:[#allocation2 + $0x38] sm:$0xff] %vm1764, %v2960
        %3307 = vst.msk [vmem:[#allocation2 + $0x40] sm:$0xff] %vm1764, %v2961
        %3308 = vst.msk [vmem:[#allocation2 + $0x48] sm:$0xff] %vm1764, %v2962
        %v3309 = vld [vmem:[#allocation2] sm:$0xff]
        %v3310 = vld [vmem:[#allocation2 + $0x8] sm:$0xff]
        %v3311 = vld [vmem:[#allocation2 + $0x10] sm:$0xff]
        %v3312 = vld [vmem:[#allocation2 + $0x18] sm:$0xff]
        %v3313 = vld [vmem:[#allocation2 + $0x20] sm:$0xff]
        %v3314 = vld [vmem:[#allocation2 + $0x28] sm:$0xff]
        %v3315 = vld [vmem:[#allocation2 + $0x30] sm:$0xff]
        %v3316 = vld [vmem:[#allocation2 + $0x38] sm:$0xff]
        %v3317 = vld [vmem:[#allocation2 + $0x40] sm:$0xff]
        %v3318 = vld [vmem:[#allocation2 + $0x48] sm:$0xff]
        %v3319 = vld [vmem:[#allocation2 + $0x50] sm:$0xff]
        %v3320 = vld [vmem:[#allocation2 + $0x58] sm:$0xff]
        %3322 = vset.pattern.permute.xlu0 0
        %3323 = vperm.xlu0 %3322, %v1708
        %v3324 = vpop.permute.xlu0 %3323
        %3326 = vset.pattern.permute.xlu0 0
        %3327 = vperm.xlu0 %3326, %v1709
        %v3328 = vpop.permute.xlu0 %3327
        %3330 = vset.pattern.permute.xlu0 0
        %3331 = vperm.xlu0 %3330, %v1710
        %v3332 = vpop.permute.xlu0 %3331
        %3334 = vset.pattern.permute.xlu0 0
        %3335 = vperm.xlu0 %3334, %v1711
        %v3336 = vpop.permute.xlu0 %3335
        %3338 = vset.pattern.permute.xlu0 0
        %3339 = vperm.xlu0 %3338, %v1712
        %v3340 = vpop.permute.xlu0 %3339
        %3342 = vset.pattern.permute.xlu0 0
        %3343 = vperm.xlu0 %3342, %v1713
        %v3344 = vpop.permute.xlu0 %3343
        %3346 = vset.pattern.permute.xlu0 0
        %3347 = vperm.xlu0 %3346, %v1714
        %v3348 = vpop.permute.xlu0 %3347
        %3350 = vset.pattern.permute.xlu0 0
        %3351 = vperm.xlu0 %3350, %v1715
        %v3352 = vpop.permute.xlu0 %3351
        %vm3353 = vcmask 1046528
        %v3354 = vrot.slane %v3324, 1
        %v3355 = vrot.slane %v3328, 1
        %v3356 = vsel %vm3353, %v3354, %v3355
        %v3357 = vrot.slane %v3332, 1
        %v3358 = vsel %vm3353, %v3355, %v3357
        %v3359 = vrot.slane %v3336, 1
        %v3360 = vsel %vm3353, %v3357, %v3359
        %v3361 = vrot.slane %v3340, 1
        %v3362 = vsel %vm3353, %v3359, %v3361
        %v3363 = vrot.slane %v3344, 1
        %v3364 = vsel %vm3353, %v3361, %v3363
        %v3365 = vrot.slane %v3348, 1
        %v3366 = vsel %vm3353, %v3363, %v3365
        %v3367 = vrot.slane %v3352, 1
        %v3368 = vsel %vm3353, %v3365, %v3367
        %v3378 = vmul.f32 %v3309, %v3354
        %v3379 = vmul.f32 %v3310, %v3356
        %v3380 = vmul.f32 %v3311, %v3358
        %v3381 = vmul.f32 %v3312, %v3360
        %v3382 = vmul.f32 %v3313, %v3362
        %v3383 = vmul.f32 %v3314, %v3364
        %v3384 = vmul.f32 %v3315, %v3366
        %v3385 = vmul.f32 %v3316, %v3368
        %v3386 = vmul.f32 %v3317, %v3367
        %v3387 = vperm.slane %v3287, 0
        %v3388 = vmul.f32 %v3378, %v3387
        %v3389 = vmul.f32 %v3379, %v3387
        %v3390 = vmul.f32 %v3380, %v3387
        %v3391 = vmul.f32 %v3381, %v3387
        %v3392 = vmul.f32 %v3382, %v3387
        %v3393 = vmul.f32 %v3383, %v3387
        %v3394 = vmul.f32 %v3384, %v3387
        %v3395 = vmul.f32 %v3385, %v3387
        %v3396 = vmul.f32 %v3386, %v3387
        %v3397 = vadd.f32 %v3388, 0.0
        %v3398 = vadd.f32 %v3389, 0.0
        %v3399 = vadd.f32 %v3390, 0.0
        %v3400 = vadd.f32 %v3391, 0.0
        %v3401 = vadd.f32 %v3392, 0.0
        %v3402 = vadd.f32 %v3393, 0.0
        %v3403 = vadd.f32 %v3394, 0.0
        %v3404 = vadd.f32 %v3395, 0.0
        %v3405 = vadd.f32 %v3396, 0.0
        %v3406 = vperm.slane %v3287, 1
        %v3407 = vmul.f32 %v3310, %v3406
        %v3408 = vmul.f32 %v3311, %v3406
        %v3409 = vmul.f32 %v3312, %v3406
        %v3410 = vmul.f32 %v3313, %v3406
        %v3411 = vmul.f32 %v3314, %v3406
        %v3412 = vmul.f32 %v3315, %v3406
        %v3413 = vmul.f32 %v3316, %v3406
        %v3414 = vmul.f32 %v3317, %v3406
        %v3423 = vrot.slane %v3407, 1
        %v3424 = vrot.slane %v3408, 1
        %v3425 = vsel %vm3353, %v3423, %v3424
        %v3426 = vrot.slane %v3409, 1
        %v3427 = vsel %vm3353, %v3424, %v3426
        %v3428 = vrot.slane %v3410, 1
        %v3429 = vsel %vm3353, %v3426, %v3428
        %v3430 = vrot.slane %v3411, 1
        %v3431 = vsel %vm3353, %v3428, %v3430
        %v3432 = vrot.slane %v3412, 1
        %v3433 = vsel %vm3353, %v3430, %v3432
        %v3434 = vrot.slane %v3413, 1
        %v3435 = vsel %vm3353, %v3432, %v3434
        %v3436 = vrot.slane %v3414, 1
        %v3437 = vsel %vm3353, %v3434, %v3436
        %v3447 = vadd.f32 %v3397, %v3423
        %v3448 = vadd.f32 %v3398, %v3425
        %v3449 = vadd.f32 %v3399, %v3427
        %v3450 = vadd.f32 %v3400, %v3429
        %v3451 = vadd.f32 %v3401, %v3431
        %v3452 = vadd.f32 %v3402, %v3433
        %v3453 = vadd.f32 %v3403, %v3435
        %v3454 = vadd.f32 %v3404, %v3437
        %v3455 = vadd.f32 %v3405, %v3436
        %3456 = vset.pattern.permute.xlu0 1
        %3457 = vperm.xlu0 %3456, %v1708
        %v3458 = vpop.permute.xlu0 %3457
        %3459 = vset.pattern.permute.xlu0 1
        %3460 = vperm.xlu0 %3459, %v1709
        %v3461 = vpop.permute.xlu0 %3460
        %3462 = vset.pattern.permute.xlu0 1
        %3463 = vperm.xlu0 %3462, %v1710
        %v3464 = vpop.permute.xlu0 %3463
        %3465 = vset.pattern.permute.xlu0 1
        %3466 = vperm.xlu0 %3465, %v1711
        %v3467 = vpop.permute.xlu0 %3466
        %3468 = vset.pattern.permute.xlu0 1
        %3469 = vperm.xlu0 %3468, %v1712
        %v3470 = vpop.permute.xlu0 %3469
        %3471 = vset.pattern.permute.xlu0 1
        %3472 = vperm.xlu0 %3471, %v1713
        %v3473 = vpop.permute.xlu0 %3472
        %3474 = vset.pattern.permute.xlu0 1
        %3475 = vperm.xlu0 %3474, %v1714
        %v3476 = vpop.permute.xlu0 %3475
        %3477 = vset.pattern.permute.xlu0 1
        %3478 = vperm.xlu0 %3477, %v1715
        %v3479 = vpop.permute.xlu0 %3478
        %vm3480 = vcmask 1040384
        %v3481 = vrot.slane %v3458, 7
        %v3482 = vrot.slane %v3461, 7
        %v3483 = vsel %vm3480, %v3481, %v3482
        %v3484 = vrot.slane %v3464, 7
        %v3485 = vsel %vm3480, %v3482, %v3484
        %v3486 = vrot.slane %v3467, 7
        %v3487 = vsel %vm3480, %v3484, %v3486
        %v3488 = vrot.slane %v3470, 7
        %v3489 = vsel %vm3480, %v3486, %v3488
        %v3490 = vrot.slane %v3473, 7
        %v3491 = vsel %vm3480, %v3488, %v3490
        %v3492 = vrot.slane %v3476, 7
        %v3493 = vsel %vm3480, %v3490, %v3492
        %v3494 = vrot.slane %v3479, 7
        %v3495 = vsel %vm3480, %v3492, %v3494
        %v3505 = vmul.f32 %v3310, %v3481
        %v3506 = vmul.f32 %v3311, %v3483
        %v3507 = vmul.f32 %v3312, %v3485
        %v3508 = vmul.f32 %v3313, %v3487
        %v3509 = vmul.f32 %v3314, %v3489
        %v3510 = vmul.f32 %v3315, %v3491
        %v3511 = vmul.f32 %v3316, %v3493
        %v3512 = vmul.f32 %v3317, %v3495
        %v3513 = vmul.f32 %v3318, %v3494
        %v3514 = vperm.slane %v3287, 2
        %v3515 = vmul.f32 %v3505, %v3514
        %v3516 = vmul.f32 %v3506, %v3514
        %v3517 = vmul.f32 %v3507, %v3514
        %v3518 = vmul.f32 %v3508, %v3514
        %v3519 = vmul.f32 %v3509, %v3514
        %v3520 = vmul.f32 %v3510, %v3514
        %v3521 = vmul.f32 %v3511, %v3514
        %v3522 = vmul.f32 %v3512, %v3514
        %v3523 = vmul.f32 %v3513, %v3514
        %vm3533 = vcmask 1045504
        %v3534 = vrot.slane %v3515, 2
        %v3535 = vrot.slane %v3516, 2
        %v3536 = vsel %vm3533, %v3534, %v3535
        %v3537 = vrot.slane %v3517, 2
        %v3538 = vsel %vm3533, %v3535, %v3537
        %v3539 = vrot.slane %v3518, 2
        %v3540 = vsel %vm3533, %v3537, %v3539
        %v3541 = vrot.slane %v3519, 2
        %v3542 = vsel %vm3533, %v3539, %v3541
        %v3543 = vrot.slane %v3520, 2
        %v3544 = vsel %vm3533, %v3541, %v3543
        %v3545 = vrot.slane %v3521, 2
        %v3546 = vsel %vm3533, %v3543, %v3545
        %v3547 = vrot.slane %v3522, 2
        %v3548 = vsel %vm3533, %v3545, %v3547
        %v3549 = vrot.slane %v3523, 2
        %v3550 = vsel %vm3533, %v3547, %v3549
        %v3560 = vadd.f32 %v3447, %v3534
        %v3561 = vadd.f32 %v3448, %v3536
        %v3562 = vadd.f32 %v3449, %v3538
        %v3563 = vadd.f32 %v3450, %v3540
        %v3564 = vadd.f32 %v3451, %v3542
        %v3565 = vadd.f32 %v3452, %v3544
        %v3566 = vadd.f32 %v3453, %v3546
        %v3567 = vadd.f32 %v3454, %v3548
        %v3568 = vadd.f32 %v3455, %v3550
        %v3569 = vmul.f32 %v3310, %v3354
        %v3570 = vmul.f32 %v3311, %v3356
        %v3571 = vmul.f32 %v3312, %v3358
        %v3572 = vmul.f32 %v3313, %v3360
        %v3573 = vmul.f32 %v3314, %v3362
        %v3574 = vmul.f32 %v3315, %v3364
        %v3575 = vmul.f32 %v3316, %v3366
        %v3576 = vmul.f32 %v3317, %v3368
        %v3577 = vmul.f32 %v3318, %v3367
        %v3578 = vperm.slane %v3287, 3
        %v3579 = vmul.f32 %v3569, %v3578
        %v3580 = vmul.f32 %v3570, %v3578
        %v3581 = vmul.f32 %v3571, %v3578
        %v3582 = vmul.f32 %v3572, %v3578
        %v3583 = vmul.f32 %v3573, %v3578
        %v3584 = vmul.f32 %v3574, %v3578
        %v3585 = vmul.f32 %v3575, %v3578
        %v3586 = vmul.f32 %v3576, %v3578
        %v3587 = vmul.f32 %v3577, %v3578
        %v3588 = vadd.f32 %v3560, %v3579
        %v3589 = vadd.f32 %v3561, %v3580
        %v3590 = vadd.f32 %v3562, %v3581
        %v3591 = vadd.f32 %v3563, %v3582
        %v3592 = vadd.f32 %v3564, %v3583
        %v3593 = vadd.f32 %v3565, %v3584
        %v3594 = vadd.f32 %v3566, %v3585
        %v3595 = vadd.f32 %v3567, %v3586
        %v3596 = vadd.f32 %v3568, %v3587
        %v3597 = vperm.slane %v3287, 4
        %v3598 = vmul.f32 %v3311, %v3597
        %v3599 = vmul.f32 %v3312, %v3597
        %v3600 = vmul.f32 %v3313, %v3597
        %v3601 = vmul.f32 %v3314, %v3597
        %v3602 = vmul.f32 %v3315, %v3597
        %v3603 = vmul.f32 %v3316, %v3597
        %v3604 = vmul.f32 %v3317, %v3597
        %v3605 = vmul.f32 %v3318, %v3597
        %v3614 = vrot.slane %v3598, 1
        %v3615 = vrot.slane %v3599, 1
        %v3616 = vsel %vm3353, %v3614, %v3615
        %v3617 = vrot.slane %v3600, 1
        %v3618 = vsel %vm3353, %v3615, %v3617
        %v3619 = vrot.slane %v3601, 1
        %v3620 = vsel %vm3353, %v3617, %v3619
        %v3621 = vrot.slane %v3602, 1
        %v3622 = vsel %vm3353, %v3619, %v3621
        %v3623 = vrot.slane %v3603, 1
        %v3624 = vsel %vm3353, %v3621, %v3623
        %v3625 = vrot.slane %v3604, 1
        %v3626 = vsel %vm3353, %v3623, %v3625
        %v3627 = vrot.slane %v3605, 1
        %v3628 = vsel %vm3353, %v3625, %v3627
        %v3638 = vadd.f32 %v3588, %v3614
        %v3639 = vadd.f32 %v3589, %v3616
        %v3640 = vadd.f32 %v3590, %v3618
        %v3641 = vadd.f32 %v3591, %v3620
        %v3642 = vadd.f32 %v3592, %v3622
        %v3643 = vadd.f32 %v3593, %v3624
        %v3644 = vadd.f32 %v3594, %v3626
        %v3645 = vadd.f32 %v3595, %v3628
        %v3646 = vadd.f32 %v3596, %v3627
        %v3647 = vmul.f32 %v3311, %v3481
        %v3648 = vmul.f32 %v3312, %v3483
        %v3649 = vmul.f32 %v3313, %v3485
        %v3650 = vmul.f32 %v3314, %v3487
        %v3651 = vmul.f32 %v3315, %v3489
        %v3652 = vmul.f32 %v3316, %v3491
        %v3653 = vmul.f32 %v3317, %v3493
        %v3654 = vmul.f32 %v3318, %v3495
        %v3655 = vmul.f32 %v3319, %v3494
        %v3656 = vperm.slane %v3287, 5
        %v3657 = vmul.f32 %v3647, %v3656
        %v3658 = vmul.f32 %v3648, %v3656
        %v3659 = vmul.f32 %v3649, %v3656
        %v3660 = vmul.f32 %v3650, %v3656
        %v3661 = vmul.f32 %v3651, %v3656
        %v3662 = vmul.f32 %v3652, %v3656
        %v3663 = vmul.f32 %v3653, %v3656
        %v3664 = vmul.f32 %v3654, %v3656
        %v3665 = vmul.f32 %v3655, %v3656
        %v3675 = vrot.slane %v3657, 2
        %v3676 = vrot.slane %v3658, 2
        %v3677 = vsel %vm3533, %v3675, %v3676
        %v3678 = vrot.slane %v3659, 2
        %v3679 = vsel %vm3533, %v3676, %v3678
        %v3680 = vrot.slane %v3660, 2
        %v3681 = vsel %vm3533, %v3678, %v3680
        %v3682 = vrot.slane %v3661, 2
        %v3683 = vsel %vm3533, %v3680, %v3682
        %v3684 = vrot.slane %v3662, 2
        %v3685 = vsel %vm3533, %v3682, %v3684
        %v3686 = vrot.slane %v3663, 2
        %v3687 = vsel %vm3533, %v3684, %v3686
        %v3688 = vrot.slane %v3664, 2
        %v3689 = vsel %vm3533, %v3686, %v3688
        %v3690 = vrot.slane %v3665, 2
        %v3691 = vsel %vm3533, %v3688, %v3690
        %v3701 = vadd.f32 %v3638, %v3675
        %v3702 = vadd.f32 %v3639, %v3677
        %v3703 = vadd.f32 %v3640, %v3679
        %v3704 = vadd.f32 %v3641, %v3681
        %v3705 = vadd.f32 %v3642, %v3683
        %v3706 = vadd.f32 %v3643, %v3685
        %v3707 = vadd.f32 %v3644, %v3687
        %v3708 = vadd.f32 %v3645, %v3689
        %v3709 = vadd.f32 %v3646, %v3691
        %v3710 = vmul.f32 %v3311, %v3354
        %v3711 = vmul.f32 %v3312, %v3356
        %v3712 = vmul.f32 %v3313, %v3358
        %v3713 = vmul.f32 %v3314, %v3360
        %v3714 = vmul.f32 %v3315, %v3362
        %v3715 = vmul.f32 %v3316, %v3364
        %v3716 = vmul.f32 %v3317, %v3366
        %v3717 = vmul.f32 %v3318, %v3368
        %v3718 = vmul.f32 %v3319, %v3367
        %v3719 = vperm.slane %v3287, 6
        %v3720 = vmul.f32 %v3710, %v3719
        %v3721 = vmul.f32 %v3711, %v3719
        %v3722 = vmul.f32 %v3712, %v3719
        %v3723 = vmul.f32 %v3713, %v3719
        %v3724 = vmul.f32 %v3714, %v3719
        %v3725 = vmul.f32 %v3715, %v3719
        %v3726 = vmul.f32 %v3716, %v3719
        %v3727 = vmul.f32 %v3717, %v3719
        %v3728 = vmul.f32 %v3718, %v3719
        %v3729 = vadd.f32 %v3701, %v3720
        %v3730 = vadd.f32 %v3702, %v3721
        %v3731 = vadd.f32 %v3703, %v3722
        %v3732 = vadd.f32 %v3704, %v3723
        %v3733 = vadd.f32 %v3705, %v3724
        %v3734 = vadd.f32 %v3706, %v3725
        %v3735 = vadd.f32 %v3707, %v3726
        %v3736 = vadd.f32 %v3708, %v3727
        %v3737 = vadd.f32 %v3709, %v3728
        %v3738 = vperm.slane %v3287, 7
        %v3739 = vmul.f32 %v3312, %v3738
        %v3740 = vmul.f32 %v3313, %v3738
        %v3741 = vmul.f32 %v3314, %v3738
        %v3742 = vmul.f32 %v3315, %v3738
        %v3743 = vmul.f32 %v3316, %v3738
        %v3744 = vmul.f32 %v3317, %v3738
        %v3745 = vmul.f32 %v3318, %v3738
        %v3746 = vmul.f32 %v3319, %v3738
        %v3755 = vrot.slane %v3739, 1
        %v3756 = vrot.slane %v3740, 1
        %v3757 = vsel %vm3353, %v3755, %v3756
        %v3758 = vrot.slane %v3741, 1
        %v3759 = vsel %vm3353, %v3756, %v3758
        %v3760 = vrot.slane %v3742, 1
        %v3761 = vsel %vm3353, %v3758, %v3760
        %v3762 = vrot.slane %v3743, 1
        %v3763 = vsel %vm3353, %v3760, %v3762
        %v3764 = vrot.slane %v3744, 1
        %v3765 = vsel %vm3353, %v3762, %v3764
        %v3766 = vrot.slane %v3745, 1
        %v3767 = vsel %vm3353, %v3764, %v3766
        %v3768 = vrot.slane %v3746, 1
        %v3769 = vsel %vm3353, %v3766, %v3768
        %v3779 = vadd.f32 %v3729, %v3755
        %v3780 = vadd.f32 %v3730, %v3757
        %v3781 = vadd.f32 %v3731, %v3759
        %v3782 = vadd.f32 %v3732, %v3761
        %v3783 = vadd.f32 %v3733, %v3763
        %v3784 = vadd.f32 %v3734, %v3765
        %v3785 = vadd.f32 %v3735, %v3767
        %v3786 = vadd.f32 %v3736, %v3769
        %v3787 = vadd.f32 %v3737, %v3768
        %v3788 = vmul.f32 %v3312, %v3481
        %v3789 = vmul.f32 %v3313, %v3483
        %v3790 = vmul.f32 %v3314, %v3485
        %v3791 = vmul.f32 %v3315, %v3487
        %v3792 = vmul.f32 %v3316, %v3489
        %v3793 = vmul.f32 %v3317, %v3491
        %v3794 = vmul.f32 %v3318, %v3493
        %v3795 = vmul.f32 %v3319, %v3495
        %v3796 = vmul.f32 %v3320, %v3494
        %v3797 = vperm.slane %v3288, 0
        %v3798 = vmul.f32 %v3788, %v3797
        %v3799 = vmul.f32 %v3789, %v3797
        %v3800 = vmul.f32 %v3790, %v3797
        %v3801 = vmul.f32 %v3791, %v3797
        %v3802 = vmul.f32 %v3792, %v3797
        %v3803 = vmul.f32 %v3793, %v3797
        %v3804 = vmul.f32 %v3794, %v3797
        %v3805 = vmul.f32 %v3795, %v3797
        %v3806 = vmul.f32 %v3796, %v3797
        %v3816 = vrot.slane %v3798, 2
        %v3817 = vrot.slane %v3799, 2
        %v3818 = vsel %vm3533, %v3816, %v3817
        %v3819 = vrot.slane %v3800, 2
        %v3820 = vsel %vm3533, %v3817, %v3819
        %v3821 = vrot.slane %v3801, 2
        %v3822 = vsel %vm3533, %v3819, %v3821
        %v3823 = vrot.slane %v3802, 2
        %v3824 = vsel %vm3533, %v3821, %v3823
        %v3825 = vrot.slane %v3803, 2
        %v3826 = vsel %vm3533, %v3823, %v3825
        %v3827 = vrot.slane %v3804, 2
        %v3828 = vsel %vm3533, %v3825, %v3827
        %v3829 = vrot.slane %v3805, 2
        %v3830 = vsel %vm3533, %v3827, %v3829
        %v3831 = vrot.slane %v3806, 2
        %v3832 = vsel %vm3533, %v3829, %v3831
        %v3842 = vadd.f32 %v3779, %v3816
        %v3843 = vadd.f32 %v3780, %v3818
        %v3844 = vadd.f32 %v3781, %v3820
        %v3845 = vadd.f32 %v3782, %v3822
        %v3846 = vadd.f32 %v3783, %v3824
        %v3847 = vadd.f32 %v3784, %v3826
        %v3848 = vadd.f32 %v3785, %v3828
        %v3849 = vadd.f32 %v3786, %v3830
        %v3850 = vadd.f32 %v3787, %v3832
        %v3851 = vld [vmem:[#allocation12] sm:$0x1]
        %v3853 = vperm.slane %v3851, 0
        %v3855 = vadd.f32 %v3842, %v3853
        %v3856 = vadd.f32 %v3843, %v3853
        %v3857 = vadd.f32 %v3844, %v3853
        %v3858 = vadd.f32 %v3845, %v3853
        %v3859 = vadd.f32 %v3846, %v3853
        %v3860 = vadd.f32 %v3847, %v3853
        %v3861 = vadd.f32 %v3848, %v3853
        %v3862 = vadd.f32 %v3849, %v3853
        %v3863 = vadd.f32 %v3850, %v3853
        %v3864 = vmul.f32 %v3855, 0.5
        %v3865 = vmul.f32 %v3856, 0.5
        %v3866 = vmul.f32 %v3857, 0.5
        %v3867 = vmul.f32 %v3858, 0.5
        %v3868 = vmul.f32 %v3859, 0.5
        %v3869 = vmul.f32 %v3860, 0.5
        %v3870 = vmul.f32 %v3861, 0.5
        %v3871 = vmul.f32 %v3862, 0.5
        %v3872 = vmul.f32 %v3863, 0.5
        %v3873 = vmul.f32 %v3855, 0.70710677
        %v3874 = vmul.f32 %v3856, 0.70710677
        %v3875 = vmul.f32 %v3857, 0.70710677
        %v3876 = vmul.f32 %v3858, 0.70710677
        %v3877 = vmul.f32 %v3859, 0.70710677
        %v3878 = vmul.f32 %v3860, 0.70710677
        %v3879 = vmul.f32 %v3861, 0.70710677
        %v3880 = vmul.f32 %v3862, 0.70710677
        %v3881 = vmul.f32 %v3863, 0.70710677
        %v3882 = vand.u32 2147483647, %v3873
        %v3883 = vand.u32 2147483647, %v3874
        %v3884 = vand.u32 2147483647, %v3875
        %v3885 = vand.u32 2147483647, %v3876
        %v3886 = vand.u32 2147483647, %v3877
        %v3887 = vand.u32 2147483647, %v3878
        %v3888 = vand.u32 2147483647, %v3879
        %v3889 = vand.u32 2147483647, %v3880
        %v3890 = vand.u32 2147483647, %v3881
        %v3891 = vmul.f32 %v3882, 0.3275911
        %v3892 = vmul.f32 %v3883, 0.3275911
        %v3893 = vmul.f32 %v3884, 0.3275911
        %v3894 = vmul.f32 %v3885, 0.3275911
        %v3895 = vmul.f32 %v3886, 0.3275911
        %v3896 = vmul.f32 %v3887, 0.3275911
        %v3897 = vmul.f32 %v3888, 0.3275911
        %v3898 = vmul.f32 %v3889, 0.3275911
        %v3899 = vmul.f32 %v3890, 0.3275911
        %v3900 = vadd.f32 %v3891, 1.0
        %v3901 = vadd.f32 %v3892, 1.0
        %v3902 = vadd.f32 %v3893, 1.0
        %v3903 = vadd.f32 %v3894, 1.0
        %v3904 = vadd.f32 %v3895, 1.0
        %v3905 = vadd.f32 %v3896, 1.0
        %v3906 = vadd.f32 %v3897, 1.0
        %v3907 = vadd.f32 %v3898, 1.0
        %v3908 = vadd.f32 %v3899, 1.0
        %v3909 = vrcp.pop %v3900
        %v3910 = vmul.f32 %v3900, %v3909
        %v3911 = vsub.f32 1.0, %v3910
        %v3912 = vmul.f32 %v3909, %v3911
        %v3913 = vadd.f32 %v3909, %v3912
        %vm3914 = vweird.f32 %v3900
        %vm3915 = vweird.f32 %v3909
        %vm3916 = vmor %vm3914, %vm3915
        %v3917 = vsel %vm3916, %v3909, %v3913
        %v3918 = vand.u32 2147483647, %v3900
        %vm3919 = vcmp.eq.f32.partialorder %v3918, 8.507059e+37
        %v3920 = vand.u32 %v3900, 2147483648
        %v3921 = vor.u32 1.1754944e-38, %v3920
        %v3922 = vsel %vm3919, %v3921, %v3917
        %v3923 = vmul.f32 1.0, %v3922
        %v3924 = vrcp.pop %v3901
        %v3925 = vmul.f32 %v3901, %v3924
        %v3926 = vsub.f32 1.0, %v3925
        %v3927 = vmul.f32 %v3924, %v3926
        %v3928 = vadd.f32 %v3924, %v3927
        %vm3929 = vweird.f32 %v3901
        %vm3930 = vweird.f32 %v3924
        %vm3931 = vmor %vm3929, %vm3930
        %v3932 = vsel %vm3931, %v3924, %v3928
        %v3933 = vand.u32 2147483647, %v3901
        %vm3934 = vcmp.eq.f32.partialorder %v3933, 8.507059e+37
        %v3935 = vand.u32 %v3901, 2147483648
        %v3936 = vor.u32 1.1754944e-38, %v3935
        %v3937 = vsel %vm3934, %v3936, %v3932
        %v3938 = vmul.f32 1.0, %v3937
        %v3939 = vrcp.pop %v3902
        %v3940 = vmul.f32 %v3902, %v3939
        %v3941 = vsub.f32 1.0, %v3940
        %v3942 = vmul.f32 %v3939, %v3941
        %v3943 = vadd.f32 %v3939, %v3942
        %vm3944 = vweird.f32 %v3902
        %vm3945 = vweird.f32 %v3939
        %vm3946 = vmor %vm3944, %vm3945
        %v3947 = vsel %vm3946, %v3939, %v3943
        %v3948 = vand.u32 2147483647, %v3902
        %vm3949 = vcmp.eq.f32.partialorder %v3948, 8.507059e+37
        %v3950 = vand.u32 %v3902, 2147483648
        %v3951 = vor.u32 1.1754944e-38, %v3950
        %v3952 = vsel %vm3949, %v3951, %v3947
        %v3953 = vmul.f32 1.0, %v3952
        %v3954 = vrcp.pop %v3903
        %v3955 = vmul.f32 %v3903, %v3954
        %v3956 = vsub.f32 1.0, %v3955
        %v3957 = vmul.f32 %v3954, %v3956
        %v3958 = vadd.f32 %v3954, %v3957
        %vm3959 = vweird.f32 %v3903
        %vm3960 = vweird.f32 %v3954
        %vm3961 = vmor %vm3959, %vm3960
        %v3962 = vsel %vm3961, %v3954, %v3958
        %v3963 = vand.u32 2147483647, %v3903
        %vm3964 = vcmp.eq.f32.partialorder %v3963, 8.507059e+37
        %v3965 = vand.u32 %v3903, 2147483648
        %v3966 = vor.u32 1.1754944e-38, %v3965
        %v3967 = vsel %vm3964, %v3966, %v3962
        %v3968 = vmul.f32 1.0, %v3967
        %v3969 = vrcp.pop %v3904
        %v3970 = vmul.f32 %v3904, %v3969
        %v3971 = vsub.f32 1.0, %v3970
        %v3972 = vmul.f32 %v3969, %v3971
        %v3973 = vadd.f32 %v3969, %v3972
        %vm3974 = vweird.f32 %v3904
        %vm3975 = vweird.f32 %v3969
        %vm3976 = vmor %vm3974, %vm3975
        %v3977 = vsel %vm3976, %v3969, %v3973
        %v3978 = vand.u32 2147483647, %v3904
        %vm3979 = vcmp.eq.f32.partialorder %v3978, 8.507059e+37
        %v3980 = vand.u32 %v3904, 2147483648
        %v3981 = vor.u32 1.1754944e-38, %v3980
        %v3982 = vsel %vm3979, %v3981, %v3977
        %v3983 = vmul.f32 1.0, %v3982
        %v3984 = vrcp.pop %v3905
        %v3985 = vmul.f32 %v3905, %v3984
        %v3986 = vsub.f32 1.0, %v3985
        %v3987 = vmul.f32 %v3984, %v3986
        %v3988 = vadd.f32 %v3984, %v3987
        %vm3989 = vweird.f32 %v3905
        %vm3990 = vweird.f32 %v3984
        %vm3991 = vmor %vm3989, %vm3990
        %v3992 = vsel %vm3991, %v3984, %v3988
        %v3993 = vand.u32 2147483647, %v3905
        %vm3994 = vcmp.eq.f32.partialorder %v3993, 8.507059e+37
        %v3995 = vand.u32 %v3905, 2147483648
        %v3996 = vor.u32 1.1754944e-38, %v3995
        %v3997 = vsel %vm3994, %v3996, %v3992
        %v3998 = vmul.f32 1.0, %v3997
        %v3999 = vrcp.pop %v3906
        %v4000 = vmul.f32 %v3906, %v3999
        %v4001 = vsub.f32 1.0, %v4000
        %v4002 = vmul.f32 %v3999, %v4001
        %v4003 = vadd.f32 %v3999, %v4002
        %vm4004 = vweird.f32 %v3906
        %vm4005 = vweird.f32 %v3999
        %vm4006 = vmor %vm4004, %vm4005
        %v4007 = vsel %vm4006, %v3999, %v4003
        %v4008 = vand.u32 2147483647, %v3906
        %vm4009 = vcmp.eq.f32.partialorder %v4008, 8.507059e+37
        %v4010 = vand.u32 %v3906, 2147483648
        %v4011 = vor.u32 1.1754944e-38, %v4010
        %v4012 = vsel %vm4009, %v4011, %v4007
        %v4013 = vmul.f32 1.0, %v4012
        %v4014 = vrcp.pop %v3907
        %v4015 = vmul.f32 %v3907, %v4014
        %v4016 = vsub.f32 1.0, %v4015
        %v4017 = vmul.f32 %v4014, %v4016
        %v4018 = vadd.f32 %v4014, %v4017
        %vm4019 = vweird.f32 %v3907
        %vm4020 = vweird.f32 %v4014
        %vm4021 = vmor %vm4019, %vm4020
        %v4022 = vsel %vm4021, %v4014, %v4018
        %v4023 = vand.u32 2147483647, %v3907
        %vm4024 = vcmp.eq.f32.partialorder %v4023, 8.507059e+37
        %v4025 = vand.u32 %v3907, 2147483648
        %v4026 = vor.u32 1.1754944e-38, %v4025
        %v4027 = vsel %vm4024, %v4026, %v4022
        %v4028 = vmul.f32 1.0, %v4027
        %v4029 = vrcp.pop %v3908
        %v4030 = vmul.f32 %v3908, %v4029
        %v4031 = vsub.f32 1.0, %v4030
        %v4032 = vmul.f32 %v4029, %v4031
        %v4033 = vadd.f32 %v4029, %v4032
        %vm4034 = vweird.f32 %v3908
        %vm4035 = vweird.f32 %v4029
        %vm4036 = vmor %vm4034, %vm4035
        %v4037 = vsel %vm4036, %v4029, %v4033
        %v4038 = vand.u32 2147483647, %v3908
        %vm4039 = vcmp.eq.f32.partialorder %v4038, 8.507059e+37
        %v4040 = vand.u32 %v3908, 2147483648
        %v4041 = vor.u32 1.1754944e-38, %v4040
        %v4042 = vsel %vm4039, %v4041, %v4037
        %v4043 = vmul.f32 1.0, %v4042
        %v4044 = vmul.f32 %v3923, 1.0614054
        %v4045 = vmul.f32 %v3938, 1.0614054
        %v4046 = vmul.f32 %v3953, 1.0614054
        %v4047 = vmul.f32 %v3968, 1.0614054
        %v4048 = vmul.f32 %v3983, 1.0614054
        %v4049 = vmul.f32 %v3998, 1.0614054
        %v4050 = vmul.f32 %v4013, 1.0614054
        %v4051 = vmul.f32 %v4028, 1.0614054
        %v4052 = vmul.f32 %v4043, 1.0614054
        %v4053 = vsub.f32 %v4044, 1.4531521
        %v4054 = vsub.f32 %v4045, 1.4531521
        %v4055 = vsub.f32 %v4046, 1.4531521
        %v4056 = vsub.f32 %v4047, 1.4531521
        %v4057 = vsub.f32 %v4048, 1.4531521
        %v4058 = vsub.f32 %v4049, 1.4531521
        %v4059 = vsub.f32 %v4050, 1.4531521
        %v4060 = vsub.f32 %v4051, 1.4531521
        %v4061 = vsub.f32 %v4052, 1.4531521
        %v4062 = vmul.f32 %v4053, %v3923
        %v4063 = vmul.f32 %v4054, %v3938
        %v4064 = vmul.f32 %v4055, %v3953
        %v4065 = vmul.f32 %v4056, %v3968
        %v4066 = vmul.f32 %v4057, %v3983
        %v4067 = vmul.f32 %v4058, %v3998
        %v4068 = vmul.f32 %v4059, %v4013
        %v4069 = vmul.f32 %v4060, %v4028
        %v4070 = vmul.f32 %v4061, %v4043
        %v4071 = vadd.f32 %v4062, 1.4214138
        %v4072 = vadd.f32 %v4063, 1.4214138
        %v4073 = vadd.f32 %v4064, 1.4214138
        %v4074 = vadd.f32 %v4065, 1.4214138
        %v4075 = vadd.f32 %v4066, 1.4214138
        %v4076 = vadd.f32 %v4067, 1.4214138
        %v4077 = vadd.f32 %v4068, 1.4214138
        %v4078 = vadd.f32 %v4069, 1.4214138
        %v4079 = vadd.f32 %v4070, 1.4214138
        %v4080 = vmul.f32 %v4071, %v3923
        %v4081 = vmul.f32 %v4072, %v3938
        %v4082 = vmul.f32 %v4073, %v3953
        %v4083 = vmul.f32 %v4074, %v3968
        %v4084 = vmul.f32 %v4075, %v3983
        %v4085 = vmul.f32 %v4076, %v3998
        %v4086 = vmul.f32 %v4077, %v4013
        %v4087 = vmul.f32 %v4078, %v4028
        %v4088 = vmul.f32 %v4079, %v4043
        %v4089 = vsub.f32 %v4080, 0.28449672
        %v4090 = vsub.f32 %v4081, 0.28449672
        %v4091 = vsub.f32 %v4082, 0.28449672
        %v4092 = vsub.f32 %v4083, 0.28449672
        %v4093 = vsub.f32 %v4084, 0.28449672
        %v4094 = vsub.f32 %v4085, 0.28449672
        %v4095 = vsub.f32 %v4086, 0.28449672
        %v4096 = vsub.f32 %v4087, 0.28449672
        %v4097 = vsub.f32 %v4088, 0.28449672
        %v4098 = vmul.f32 %v4089, %v3923
        %v4099 = vmul.f32 %v4090, %v3938
        %v4100 = vmul.f32 %v4091, %v3953
        %v4101 = vmul.f32 %v4092, %v3968
        %v4102 = vmul.f32 %v4093, %v3983
        %v4103 = vmul.f32 %v4094, %v3998
        %v4104 = vmul.f32 %v4095, %v4013
        %v4105 = vmul.f32 %v4096, %v4028
        %v4106 = vmul.f32 %v4097, %v4043
        %v4107 = vadd.f32 %v4098, 0.2548296
        %v4108 = vadd.f32 %v4099, 0.2548296
        %v4109 = vadd.f32 %v4100, 0.2548296
        %v4110 = vadd.f32 %v4101, 0.2548296
        %v4111 = vadd.f32 %v4102, 0.2548296
        %v4112 = vadd.f32 %v4103, 0.2548296
        %v4113 = vadd.f32 %v4104, 0.2548296
        %v4114 = vadd.f32 %v4105, 0.2548296
        %v4115 = vadd.f32 %v4106, 0.2548296
        %v4116 = vmul.f32 %v4107, %v3923
        %v4117 = vmul.f32 %v4108, %v3938
        %v4118 = vmul.f32 %v4109, %v3953
        %v4119 = vmul.f32 %v4110, %v3968
        %v4120 = vmul.f32 %v4111, %v3983
        %v4121 = vmul.f32 %v4112, %v3998
        %v4122 = vmul.f32 %v4113, %v4013
        %v4123 = vmul.f32 %v4114, %v4028
        %v4124 = vmul.f32 %v4115, %v4043
        %v4125 = vsub.f32 0.0, %v3882
        %v4126 = vsub.f32 0.0, %v3883
        %v4127 = vsub.f32 0.0, %v3884
        %v4128 = vsub.f32 0.0, %v3885
        %v4129 = vsub.f32 0.0, %v3886
        %v4130 = vsub.f32 0.0, %v3887
        %v4131 = vsub.f32 0.0, %v3888
        %v4132 = vsub.f32 0.0, %v3889
        %v4133 = vsub.f32 0.0, %v3890
        %v4134 = vmul.f32 %v4125, %v3882
        %v4135 = vmul.f32 %v4126, %v3883
        %v4136 = vmul.f32 %v4127, %v3884
        %v4137 = vmul.f32 %v4128, %v3885
        %v4138 = vmul.f32 %v4129, %v3886
        %v4139 = vmul.f32 %v4130, %v3887
        %v4140 = vmul.f32 %v4131, %v3888
        %v4141 = vmul.f32 %v4132, %v3889
        %v4142 = vmul.f32 %v4133, %v3890
        %v4143 = vmul.f32 %v4134, 1.442695
        %v4144 = vpow.pop %v4143
        %v4145 = vmul.f32 %v4135, 1.442695
        %v4146 = vpow.pop %v4145
        %v4147 = vmul.f32 %v4136, 1.442695
        %v4148 = vpow.pop %v4147
        %v4149 = vmul.f32 %v4137, 1.442695
        %v4150 = vpow.pop %v4149
        %v4151 = vmul.f32 %v4138, 1.442695
        %v4152 = vpow.pop %v4151
        %v4153 = vmul.f32 %v4139, 1.442695
        %v4154 = vpow.pop %v4153
        %v4155 = vmul.f32 %v4140, 1.442695
        %v4156 = vpow.pop %v4155
        %v4157 = vmul.f32 %v4141, 1.442695
        %v4158 = vpow.pop %v4157
        %v4159 = vmul.f32 %v4142, 1.442695
        %v4160 = vpow.pop %v4159
        %v4161 = vmul.f32 %v4116, %v4144
        %v4162 = vmul.f32 %v4117, %v4146
        %v4163 = vmul.f32 %v4118, %v4148
        %v4164 = vmul.f32 %v4119, %v4150
        %v4165 = vmul.f32 %v4120, %v4152
        %v4166 = vmul.f32 %v4121, %v4154
        %v4167 = vmul.f32 %v4122, %v4156
        %v4168 = vmul.f32 %v4123, %v4158
        %v4169 = vmul.f32 %v4124, %v4160
        %v4170 = vsub.f32 1.0, %v4161
        %v4171 = vsub.f32 1.0, %v4162
        %v4172 = vsub.f32 1.0, %v4163
        %v4173 = vsub.f32 1.0, %v4164
        %v4174 = vsub.f32 1.0, %v4165
        %v4175 = vsub.f32 1.0, %v4166
        %v4176 = vsub.f32 1.0, %v4167
        %v4177 = vsub.f32 1.0, %v4168
        %v4178 = vsub.f32 1.0, %v4169
        %vm4179 = vcmp.ge.f32.partialorder %v3873, 0.0
        %vm4180 = vcmp.ge.f32.partialorder %v3874, 0.0
        %vm4181 = vcmp.ge.f32.partialorder %v3875, 0.0
        %vm4182 = vcmp.ge.f32.partialorder %v3876, 0.0
        %vm4183 = vcmp.ge.f32.partialorder %v3877, 0.0
        %vm4184 = vcmp.ge.f32.partialorder %v3878, 0.0
        %vm4185 = vcmp.ge.f32.partialorder %v3879, 0.0
        %vm4186 = vcmp.ge.f32.partialorder %v3880, 0.0
        %vm4187 = vcmp.ge.f32.partialorder %v3881, 0.0
        %v4188 = vsub.f32 0.0, %v4170
        %v4189 = vsub.f32 0.0, %v4171
        %v4190 = vsub.f32 0.0, %v4172
        %v4191 = vsub.f32 0.0, %v4173
        %v4192 = vsub.f32 0.0, %v4174
        %v4193 = vsub.f32 0.0, %v4175
        %v4194 = vsub.f32 0.0, %v4176
        %v4195 = vsub.f32 0.0, %v4177
        %v4196 = vsub.f32 0.0, %v4178
        %v4197 = vsel %vm4179, %v4170, %v4188
        %v4198 = vsel %vm4180, %v4171, %v4189
        %v4199 = vsel %vm4181, %v4172, %v4190
        %v4200 = vsel %vm4182, %v4173, %v4191
        %v4201 = vsel %vm4183, %v4174, %v4192
        %v4202 = vsel %vm4184, %v4175, %v4193
        %v4203 = vsel %vm4185, %v4176, %v4194
        %v4204 = vsel %vm4186, %v4177, %v4195
        %v4205 = vsel %vm4187, %v4178, %v4196
        %v4206 = vadd.f32 %v4197, 1.0
        %v4207 = vadd.f32 %v4198, 1.0
        %v4208 = vadd.f32 %v4199, 1.0
        %v4209 = vadd.f32 %v4200, 1.0
        %v4210 = vadd.f32 %v4201, 1.0
        %v4211 = vadd.f32 %v4202, 1.0
        %v4212 = vadd.f32 %v4203, 1.0
        %v4213 = vadd.f32 %v4204, 1.0
        %v4214 = vadd.f32 %v4205, 1.0
        %v4215 = vmul.f32 %v3864, %v4206
        %v4216 = vmul.f32 %v3865, %v4207
        %v4217 = vmul.f32 %v3866, %v4208
        %v4218 = vmul.f32 %v3867, %v4209
        %v4219 = vmul.f32 %v3868, %v4210
        %v4220 = vmul.f32 %v3869, %v4211
        %v4221 = vmul.f32 %v3870, %v4212
        %v4222 = vmul.f32 %v3871, %v4213
        %v4223 = vmul.f32 %v3872, %v4214
        %v4233 = vrot.slane %v4215, 7
        %v4234 = vrot.slane %v4216, 7
        %v4235 = vsel %vm3480, %v4233, %v4234
        %v4236 = vrot.slane %v4217, 7
        %v4237 = vsel %vm3480, %v4234, %v4236
        %v4238 = vrot.slane %v4218, 7
        %v4239 = vsel %vm3480, %v4236, %v4238
        %v4240 = vrot.slane %v4219, 7
        %v4241 = vsel %vm3480, %v4238, %v4240
        %v4242 = vrot.slane %v4220, 7
        %v4243 = vsel %vm3480, %v4240, %v4242
        %v4244 = vrot.slane %v4221, 7
        %v4245 = vsel %vm3480, %v4242, %v4244
        %v4246 = vrot.slane %v4222, 7
        %v4247 = vsel %vm3480, %v4244, %v4246
        %v4248 = vrot.slane %v4223, 7
        %v4249 = vsel %vm3480, %v4246, %v4248
        %v4258 = vsel %vm1764, %v4235, 0.0
        %v4259 = vsel %vm1764, %v4237, 0.0
        %v4260 = vadd.f32 %v4258, %v4259
        %v4261 = vsel %vm1764, %v4239, 0.0
        %v4262 = vadd.f32 %v4260, %v4261
        %v4263 = vsel %vm1764, %v4241, 0.0
        %v4264 = vadd.f32 %v4262, %v4263
        %v4265 = vsel %vm1764, %v4243, 0.0
        %v4266 = vadd.f32 %v4264, %v4265
        %v4267 = vsel %vm1764, %v4245, 0.0
        %v4268 = vadd.f32 %v4266, %v4267
        %v4269 = vsel %vm1764, %v4247, 0.0
        %v4270 = vadd.f32 %v4268, %v4269
        %v4271 = vsel %vm1764, %v4249, 0.0
        %v4272 = vadd.f32 %v4270, %v4271
        %v4273 = vrot.slane %v4272, 4
        %v4274 = vadd.f32 %v4272, %v4273
        %v4275 = vrot.slane %v4274, 2
        %v4276 = vadd.f32 %v4274, %v4275
        %v4277 = vrot.slane %v4276, 1
        %v4278 = vadd.f32 %v4276, %v4277
        %v4279 = vmul.f32 %v4278, %v1728
        %v4280 = vld [vmem:[%s53] sm:$0xff]
        %v4281 = vld [vmem:[%s53 + $0x8] sm:$0xff]
        %v4282 = vld [vmem:[%s53 + $0x10] sm:$0xff]
        %v4283 = vld [vmem:[%s53 + $0x18] sm:$0xff]
        %v4284 = vld [vmem:[%s53 + $0x20] sm:$0xff]
        %v4285 = vld [vmem:[%s53 + $0x28] sm:$0xff]
        %v4286 = vld [vmem:[%s53 + $0x30] sm:$0xff]
        %v4287 = vld [vmem:[%s53 + $0x38] sm:$0xff]
        %v4288 = vld [vmem:[%s55] sm:$0xff]
        %v4289 = vld [vmem:[%s55 + $0x8] sm:$0xff]
        %v4290 = vld [vmem:[%s55 + $0x10] sm:$0xff]
        %v4291 = vld [vmem:[%s55 + $0x18] sm:$0xff]
        %v4292 = vld [vmem:[%s55 + $0x20] sm:$0xff]
        %v4293 = vld [vmem:[%s55 + $0x28] sm:$0xff]
        %v4294 = vld [vmem:[%s55 + $0x30] sm:$0xff]
        %v4295 = vld [vmem:[%s55 + $0x38] sm:$0xff]
        %v4297 = vsel %vm1764, %v4279, 0
        %4299 = vmatpush.msra.mxu0 0.0
        %4300 = vmatpush.msra.mxu0 0.0
        %4301 = vmatpush.msra.mxu0 0.0
        %4302 = vmatpush.msra.mxu0 0.0
        %4303 = vmatpush.msra.mxu0 0.0
        %4304 = vmatpush.msra.mxu0 0.0
        %4305 = vmatpush.msra.mxu0 0.0
        %4306 = vmatpush.msra.mxu0 0.0
        %4307 = vmatpush.msra.mxu0 %v4295
        %4308 = vmatpush.msra.mxu0 %v4294
        %4309 = vmatpush.msra.mxu0 %v4293
        %4310 = vmatpush.msra.mxu0 %v4292
        %4311 = vmatpush.msra.mxu0 %v4291
        %4312 = vmatpush.msra.mxu0 %v4290
        %4313 = vmatpush.msra.mxu0 %v4289
        %4314 = vmatpush.msra.mxu0 %v4288
        %4315 = vmatmul.f32.gmra.mxu0 %v4297
        %v4316 = vpop.f32.mrf.mxu0
        %v4317 = vadd.f32 0.0, %v4316
        %4318 = vdwg.mxu0
        %4319 = vmatpush.msra.mxu0 0.0
        %4320 = vmatpush.msra.mxu0 0.0
        %4321 = vmatpush.msra.mxu0 0.0
        %4322 = vmatpush.msra.mxu0 0.0
        %4323 = vmatpush.msra.mxu0 0.0
        %4324 = vmatpush.msra.mxu0 0.0
        %4325 = vmatpush.msra.mxu0 0.0
        %4326 = vmatpush.msra.mxu0 0.0
        %4327 = vmatpush.msra.mxu0 %v4287
        %4328 = vmatpush.msra.mxu0 %v4286
        %4329 = vmatpush.msra.mxu0 %v4285
        %4330 = vmatpush.msra.mxu0 %v4284
        %4331 = vmatpush.msra.mxu0 %v4283
        %4332 = vmatpush.msra.mxu0 %v4282
        %4333 = vmatpush.msra.mxu0 %v4281
        %4334 = vmatpush.msra.mxu0 %v4280
        %4335 = vmatmul.f32.gmra.mxu0 %v2449
        %v4336 = vpop.f32.mrf.mxu0
        %v4337 = vadd.f32 %v4317, %v4336
        %4338 = vdwg.mxu0
        %v4339 = vld [vmem:[#allocation7] sm:$0x1]
        %v4340 = vadd.f32 %v4337, %v4339
        %v4341 = vmax.f32 %v4340, 0.0
        %v4342 = vld [vmem:[%s59] sm:$0xff]
        %v4343 = vld [vmem:[%s59 + $0x8] sm:$0xff]
        %v4344 = vld [vmem:[%s59 + $0x10] sm:$0xff]
        %v4345 = vld [vmem:[%s59 + $0x18] sm:$0xff]
        %v4346 = vld [vmem:[%s59 + $0x20] sm:$0xff]
        %v4347 = vld [vmem:[%s59 + $0x28] sm:$0xff]
        %v4348 = vld [vmem:[%s59 + $0x30] sm:$0xff]
        %v4349 = vld [vmem:[%s59 + $0x38] sm:$0xff]
        %v4351 = vsel %vm1764, %v4341, 0
        %4353 = vmatpush.msra.mxu0 0.0
        %4354 = vmatpush.msra.mxu0 0.0
        %4355 = vmatpush.msra.mxu0 0.0
        %4356 = vmatpush.msra.mxu0 0.0
        %4357 = vmatpush.msra.mxu0 0.0
        %4358 = vmatpush.msra.mxu0 0.0
        %4359 = vmatpush.msra.mxu0 0.0
        %4360 = vmatpush.msra.mxu0 0.0
        %4361 = vmatpush.msra.mxu0 %v4349
        %4362 = vmatpush.msra.mxu0 %v4348
        %4363 = vmatpush.msra.mxu0 %v4347
        %4364 = vmatpush.msra.mxu0 %v4346
        %4365 = vmatpush.msra.mxu0 %v4345
        %4366 = vmatpush.msra.mxu0 %v4344
        %4367 = vmatpush.msra.mxu0 %v4343
        %4368 = vmatpush.msra.mxu0 %v4342
        %4369 = vmatmul.f32.gmra.mxu0 %v4351
        %v4370 = vpop.f32.mrf.mxu0
        %v4371 = vadd.f32 0.0, %v4370
        %4372 = vdwg.mxu0
        %v4373 = vsub.f32 0.0, %v4371
        %v4374 = vmul.f32 %v4373, 1.442695
        %v4375 = vpow.pop %v4374
        %v4376 = vadd.f32 %v4375, 1.0
        %v4377 = vrcp.pop %v4376
        %v4378 = vmul.f32 %v4376, %v4377
        %v4379 = vsub.f32 1.0, %v4378
        %v4380 = vmul.f32 %v4377, %v4379
        %v4381 = vadd.f32 %v4377, %v4380
        %vm4382 = vweird.f32 %v4376
        %vm4383 = vweird.f32 %v4377
        %vm4384 = vmor %vm4382, %vm4383
        %v4385 = vsel %vm4384, %v4377, %v4381
        %v4386 = vand.u32 2147483647, %v4376
        %vm4387 = vcmp.eq.f32.partialorder %v4386, 8.507059e+37
        %v4388 = vand.u32 %v4376, 2147483648
        %v4389 = vor.u32 1.1754944e-38, %v4388
        %v4390 = vsel %vm4387, %v4389, %v4385
        %v4391 = vmul.f32 1.0, %v4390
        %v4392 = vld [vmem:[%s75] sm:$0xff]
        %v4393 = vld [vmem:[%s75 + $0x8] sm:$0xff]
        %v4394 = vld [vmem:[%s75 + $0x10] sm:$0xff]
        %v4395 = vld [vmem:[%s75 + $0x18] sm:$0xff]
        %v4396 = vld [vmem:[%s75 + $0x20] sm:$0xff]
        %v4397 = vld [vmem:[%s75 + $0x28] sm:$0xff]
        %v4398 = vld [vmem:[%s75 + $0x30] sm:$0xff]
        %v4399 = vld [vmem:[%s75 + $0x38] sm:$0xff]
        %v4400 = vld [vmem:[%s73] sm:$0xff]
        %v4401 = vld [vmem:[%s73 + $0x8] sm:$0xff]
        %v4402 = vld [vmem:[%s73 + $0x10] sm:$0xff]
        %v4403 = vld [vmem:[%s73 + $0x18] sm:$0xff]
        %v4404 = vld [vmem:[%s73 + $0x20] sm:$0xff]
        %v4405 = vld [vmem:[%s73 + $0x28] sm:$0xff]
        %v4406 = vld [vmem:[%s73 + $0x30] sm:$0xff]
        %v4407 = vld [vmem:[%s73 + $0x38] sm:$0xff]
        %s4409 = vtos %v4391
        %v4410 = vstv %s4409
        %v4412 = vmul.f32 %v4410, %v4400
        %v4413 = vmul.f32 %v4410, %v4401
        %v4414 = vmul.f32 %v4410, %v4402
        %v4415 = vmul.f32 %v4410, %v4403
        %v4416 = vmul.f32 %v4410, %v4404
        %v4417 = vmul.f32 %v4410, %v4405
        %v4418 = vmul.f32 %v4410, %v4406
        %v4419 = vmul.f32 %v4410, %v4407
        %v4420 = vadd.f32 %v4392, %v4412
        %v4421 = vadd.f32 %v4393, %v4413
        %v4422 = vadd.f32 %v4394, %v4414
        %v4423 = vadd.f32 %v4395, %v4415
        %v4424 = vadd.f32 %v4396, %v4416
        %v4425 = vadd.f32 %v4397, %v4417
        %v4426 = vadd.f32 %v4398, %v4418
        %v4427 = vadd.f32 %v4399, %v4419
        %s4428 = scalar_lea.vmem %s73, 64
        %v4429 = vld [vmem:[%s4428] sm:$0xff]
        %v4430 = vld [vmem:[%s4428 + $0x8] sm:$0xff]
        %v4431 = vld [vmem:[%s4428 + $0x10] sm:$0xff]
        %v4432 = vld [vmem:[%s4428 + $0x18] sm:$0xff]
        %v4433 = vld [vmem:[%s4428 + $0x20] sm:$0xff]
        %v4434 = vld [vmem:[%s4428 + $0x28] sm:$0xff]
        %v4435 = vld [vmem:[%s4428 + $0x30] sm:$0xff]
        %v4436 = vld [vmem:[%s4428 + $0x38] sm:$0xff]
        %4437 = vrot.lane.b32.xlu0 %v4391, 127
        %v4438 = vpop.permute.xlu0 %4437
        %s4439 = vtos %v4438
        %v4440 = vstv %s4439
        %v4442 = vmul.f32 %v4440, %v4429
        %v4443 = vmul.f32 %v4440, %v4430
        %v4444 = vmul.f32 %v4440, %v4431
        %v4445 = vmul.f32 %v4440, %v4432
        %v4446 = vmul.f32 %v4440, %v4433
        %v4447 = vmul.f32 %v4440, %v4434
        %v4448 = vmul.f32 %v4440, %v4435
        %v4449 = vmul.f32 %v4440, %v4436
        %v4450 = vadd.f32 %v4420, %v4442
        %v4451 = vadd.f32 %v4421, %v4443
        %v4452 = vadd.f32 %v4422, %v4444
        %v4453 = vadd.f32 %v4423, %v4445
        %v4454 = vadd.f32 %v4424, %v4446
        %v4455 = vadd.f32 %v4425, %v4447
        %v4456 = vadd.f32 %v4426, %v4448
        %v4457 = vadd.f32 %v4427, %v4449
        %s4458 = scalar_lea.vmem %s73, 128
        %v4459 = vld [vmem:[%s4458] sm:$0xff]
        %v4460 = vld [vmem:[%s4458 + $0x8] sm:$0xff]
        %v4461 = vld [vmem:[%s4458 + $0x10] sm:$0xff]
        %v4462 = vld [vmem:[%s4458 + $0x18] sm:$0xff]
        %v4463 = vld [vmem:[%s4458 + $0x20] sm:$0xff]
        %v4464 = vld [vmem:[%s4458 + $0x28] sm:$0xff]
        %v4465 = vld [vmem:[%s4458 + $0x30] sm:$0xff]
        %v4466 = vld [vmem:[%s4458 + $0x38] sm:$0xff]
        %4467 = vrot.lane.b32.xlu0 %v4391, 126
        %v4468 = vpop.permute.xlu0 %4467
        %s4469 = vtos %v4468
        %v4470 = vstv %s4469
        %v4472 = vmul.f32 %v4470, %v4459
        %v4473 = vmul.f32 %v4470, %v4460
        %v4474 = vmul.f32 %v4470, %v4461
        %v4475 = vmul.f32 %v4470, %v4462
        %v4476 = vmul.f32 %v4470, %v4463
        %v4477 = vmul.f32 %v4470, %v4464
        %v4478 = vmul.f32 %v4470, %v4465
        %v4479 = vmul.f32 %v4470, %v4466
        %v4480 = vadd.f32 %v4450, %v4472
        %v4481 = vadd.f32 %v4451, %v4473
        %v4482 = vadd.f32 %v4452, %v4474
        %v4483 = vadd.f32 %v4453, %v4475
        %v4484 = vadd.f32 %v4454, %v4476
        %v4485 = vadd.f32 %v4455, %v4477
        %v4486 = vadd.f32 %v4456, %v4478
        %v4487 = vadd.f32 %v4457, %v4479
        %s4488 = scalar_lea.vmem %s73, 192
        %v4489 = vld [vmem:[%s4488] sm:$0xff]
        %v4490 = vld [vmem:[%s4488 + $0x8] sm:$0xff]
        %v4491 = vld [vmem:[%s4488 + $0x10] sm:$0xff]
        %v4492 = vld [vmem:[%s4488 + $0x18] sm:$0xff]
        %v4493 = vld [vmem:[%s4488 + $0x20] sm:$0xff]
        %v4494 = vld [vmem:[%s4488 + $0x28] sm:$0xff]
        %v4495 = vld [vmem:[%s4488 + $0x30] sm:$0xff]
        %v4496 = vld [vmem:[%s4488 + $0x38] sm:$0xff]
        %4497 = vrot.lane.b32.xlu0 %v4391, 125
        %v4498 = vpop.permute.xlu0 %4497
        %s4499 = vtos %v4498
        %v4500 = vstv %s4499
        %v4502 = vmul.f32 %v4500, %v4489
        %v4503 = vmul.f32 %v4500, %v4490
        %v4504 = vmul.f32 %v4500, %v4491
        %v4505 = vmul.f32 %v4500, %v4492
        %v4506 = vmul.f32 %v4500, %v4493
        %v4507 = vmul.f32 %v4500, %v4494
        %v4508 = vmul.f32 %v4500, %v4495
        %v4509 = vmul.f32 %v4500, %v4496
        %v4510 = vadd.f32 %v4480, %v4502
        %v4511 = vadd.f32 %v4481, %v4503
        %v4512 = vadd.f32 %v4482, %v4504
        %v4513 = vadd.f32 %v4483, %v4505
        %v4514 = vadd.f32 %v4484, %v4506
        %v4515 = vadd.f32 %v4485, %v4507
        %v4516 = vadd.f32 %v4486, %v4508
        %v4517 = vadd.f32 %v4487, %v4509
        %v4518 = vld [vmem:[#allocation13] sm:$0x1]
        %v4520 = vperm.slane %v4518, 0
        %v4522 = vsel %vm1764, %v4235, 0
        %v4524 = vsel %vm1764, %v4237, 0
        %v4526 = vsel %vm1764, %v4239, 0
        %v4528 = vsel %vm1764, %v4241, 0
        %v4530 = vsel %vm1764, %v4243, 0
        %v4532 = vsel %vm1764, %v4245, 0
        %v4534 = vsel %vm1764, %v4247, 0
        %v4536 = vsel %vm1764, %v4249, 0
        %4538 = vmatpush.msra.mxu0 0.0
        %4539 = vmatpush.msra.mxu0 0.0
        %4540 = vmatpush.msra.mxu0 0.0
        %4541 = vmatpush.msra.mxu0 0.0
        %4542 = vmatpush.msra.mxu0 0.0
        %4543 = vmatpush.msra.mxu0 0.0
        %4544 = vmatpush.msra.mxu0 0.0
        %4545 = vmatpush.msra.mxu0 0.0
        %4546 = vmatpush.msra.mxu0 %v4517
        %4547 = vmatpush.msra.mxu0 %v4516
        %4548 = vmatpush.msra.mxu0 %v4515
        %4549 = vmatpush.msra.mxu0 %v4514
        %4550 = vmatpush.msra.mxu0 %v4513
        %4551 = vmatpush.msra.mxu0 %v4512
        %4552 = vmatpush.msra.mxu0 %v4511
        %4553 = vmatpush.msra.mxu0 %v4510
        %4554 = vmatmul.f32.gmra.mxu0 %v4522
        %v4555 = vpop.f32.mrf.mxu0
        %v4556 = vadd.f32 %v4520, %v4555
        %4557 = vmatmul.f32.gmra.mxu0 %v4524
        %v4558 = vpop.f32.mrf.mxu0
        %v4559 = vadd.f32 %v4520, %v4558
        %4560 = vmatmul.f32.gmra.mxu0 %v4526
        %v4561 = vpop.f32.mrf.mxu0
        %v4562 = vadd.f32 %v4520, %v4561
        %4563 = vmatmul.f32.gmra.mxu0 %v4528
        %v4564 = vpop.f32.mrf.mxu0
        %v4565 = vadd.f32 %v4520, %v4564
        %4566 = vmatmul.f32.gmra.mxu0 %v4530
        %v4567 = vpop.f32.mrf.mxu0
        %v4568 = vadd.f32 %v4520, %v4567
        %4569 = vmatmul.f32.gmra.mxu0 %v4532
        %v4570 = vpop.f32.mrf.mxu0
        %v4571 = vadd.f32 %v4520, %v4570
        %4572 = vmatmul.f32.gmra.mxu0 %v4534
        %v4573 = vpop.f32.mrf.mxu0
        %v4574 = vadd.f32 %v4520, %v4573
        %4575 = vmatmul.f32.gmra.mxu0 %v4536
        %v4576 = vpop.f32.mrf.mxu0
        %v4577 = vadd.f32 %v4520, %v4576
        %4578 = vdwg.mxu0
        %v4579 = vsel %vm1788, %v4556, 0.0
        %4580 = vadd.xlane.f32.xlu0 %v4579
        %v4581 = vpop.xlane.xlu0 %4580
        %v4582 = vsel %vm1788, %v4559, 0.0
        %4583 = vadd.xlane.f32.xlu0 %v4582
        %v4584 = vpop.xlane.xlu0 %4583
        %v4585 = vsel %vm1788, %v4562, 0.0
        %4586 = vadd.xlane.f32.xlu0 %v4585
        %v4587 = vpop.xlane.xlu0 %4586
        %v4588 = vsel %vm1788, %v4565, 0.0
        %4589 = vadd.xlane.f32.xlu0 %v4588
        %v4590 = vpop.xlane.xlu0 %4589
        %v4591 = vsel %vm1788, %v4568, 0.0
        %4592 = vadd.xlane.f32.xlu0 %v4591
        %v4593 = vpop.xlane.xlu0 %4592
        %v4594 = vsel %vm1788, %v4571, 0.0
        %4595 = vadd.xlane.f32.xlu0 %v4594
        %v4596 = vpop.xlane.xlu0 %4595
        %v4597 = vsel %vm1788, %v4574, 0.0
        %4598 = vadd.xlane.f32.xlu0 %v4597
        %v4599 = vpop.xlane.xlu0 %4598
        %v4600 = vsel %vm1788, %v4577, 0.0
        %4601 = vadd.xlane.f32.xlu0 %v4600
        %v4602 = vpop.xlane.xlu0 %4601
        %v4603 = vrcp.pop 32.0
        %v4604 = vmul.f32 32.0, %v4603
        %v4605 = vsub.f32 1.0, %v4604
        %v4606 = vmul.f32 %v4603, %v4605
        %v4607 = vadd.f32 %v4603, %v4606
        %vm4608 = vweird.f32 %v4603
        %v4609 = vsel %vm4608, %v4603, %v4607
        %v4610 = vmul.f32 %v4581, %v4609
        %v4611 = vmul.f32 %v4584, %v4609
        %v4612 = vmul.f32 %v4587, %v4609
        %v4613 = vmul.f32 %v4590, %v4609
        %v4614 = vmul.f32 %v4593, %v4609
        %v4615 = vmul.f32 %v4596, %v4609
        %v4616 = vmul.f32 %v4599, %v4609
        %v4617 = vmul.f32 %v4602, %v4609
        %v4618 = vadd.f32 %v4610, %v4611
        %v4619 = vadd.f32 %v4618, %v4612
        %v4620 = vadd.f32 %v4619, %v4613
        %v4621 = vadd.f32 %v4620, %v4614
        %v4622 = vadd.f32 %v4621, %v4615
        %v4623 = vadd.f32 %v4622, %v4616
        %v4624 = vadd.f32 %v4623, %v4617
        %v4625 = vrot.slane %v4624, 4
        %v4626 = vadd.f32 %v4624, %v4625
        %v4627 = vrot.slane %v4626, 2
        %v4628 = vadd.f32 %v4626, %v4627
        %v4629 = vrot.slane %v4628, 1
        %v4630 = vadd.f32 %v4628, %v4629
        %v4631 = vmul.f32 %v4630, %v1728
        %v4632 = vsub.f32 %v4556, %v4631
        %v4633 = vsub.f32 %v4559, %v4631
        %v4634 = vsub.f32 %v4562, %v4631
        %v4635 = vsub.f32 %v4565, %v4631
        %v4636 = vsub.f32 %v4568, %v4631
        %v4637 = vsub.f32 %v4571, %v4631
        %v4638 = vsub.f32 %v4574, %v4631
        %v4639 = vsub.f32 %v4577, %v4631
        %v4640 = vmul.f32 %v4632, %v4632
        %v4641 = vmul.f32 %v4633, %v4633
        %v4642 = vmul.f32 %v4634, %v4634
        %v4643 = vmul.f32 %v4635, %v4635
        %v4644 = vmul.f32 %v4636, %v4636
        %v4645 = vmul.f32 %v4637, %v4637
        %v4646 = vmul.f32 %v4638, %v4638
        %v4647 = vmul.f32 %v4639, %v4639
        %v4648 = vsel %vm1788, %v4640, 0.0
        %4649 = vadd.xlane.f32.xlu0 %v4648
        %v4650 = vpop.xlane.xlu0 %4649
        %v4651 = vsel %vm1788, %v4641, 0.0
        %4652 = vadd.xlane.f32.xlu0 %v4651
        %v4653 = vpop.xlane.xlu0 %4652
        %v4654 = vsel %vm1788, %v4642, 0.0
        %4655 = vadd.xlane.f32.xlu0 %v4654
        %v4656 = vpop.xlane.xlu0 %4655
        %v4657 = vsel %vm1788, %v4643, 0.0
        %4658 = vadd.xlane.f32.xlu0 %v4657
        %v4659 = vpop.xlane.xlu0 %4658
        %v4660 = vsel %vm1788, %v4644, 0.0
        %4661 = vadd.xlane.f32.xlu0 %v4660
        %v4662 = vpop.xlane.xlu0 %4661
        %v4663 = vsel %vm1788, %v4645, 0.0
        %4664 = vadd.xlane.f32.xlu0 %v4663
        %v4665 = vpop.xlane.xlu0 %4664
        %v4666 = vsel %vm1788, %v4646, 0.0
        %4667 = vadd.xlane.f32.xlu0 %v4666
        %v4668 = vpop.xlane.xlu0 %4667
        %v4669 = vsel %vm1788, %v4647, 0.0
        %4670 = vadd.xlane.f32.xlu0 %v4669
        %v4671 = vpop.xlane.xlu0 %4670
        %v4672 = vmul.f32 %v4650, %v4609
        %v4673 = vmul.f32 %v4653, %v4609
        %v4674 = vmul.f32 %v4656, %v4609
        %v4675 = vmul.f32 %v4659, %v4609
        %v4676 = vmul.f32 %v4662, %v4609
        %v4677 = vmul.f32 %v4665, %v4609
        %v4678 = vmul.f32 %v4668, %v4609
        %v4679 = vmul.f32 %v4671, %v4609
        %v4680 = vadd.f32 %v4672, %v4673
        %v4681 = vadd.f32 %v4680, %v4674
        %v4682 = vadd.f32 %v4681, %v4675
        %v4683 = vadd.f32 %v4682, %v4676
        %v4684 = vadd.f32 %v4683, %v4677
        %v4685 = vadd.f32 %v4684, %v4678
        %v4686 = vadd.f32 %v4685, %v4679
        %v4687 = vrot.slane %v4686, 4
        %v4688 = vadd.f32 %v4686, %v4687
        %v4689 = vrot.slane %v4688, 2
        %v4690 = vadd.f32 %v4688, %v4689
        %v4691 = vrot.slane %v4690, 1
        %v4692 = vadd.f32 %v4690, %v4691
        %v4693 = vmul.f32 %v4692, %v1728
        %v4694 = vadd.f32 %v4693, 1e-05
        %v4695 = vrsqrt.pop %v4694
        %v4696 = vmul.f32 %v4695, %v4694
        %v4697 = vmul.f32 %v4696, %v4695
        %v4698 = vmul.f32 0.5, %v4697
        %v4699 = vsub.f32 1.5, %v4698
        %v4700 = vmul.f32 %v4695, %v4699
        %vm4701 = vweird.f32 %v4694
        %vm4702 = vweird.f32 %v4695
        %vm4703 = vmor %vm4701, %vm4702
        %v4704 = vsel %vm4703, %v4695, %v4700
        %v4705 = vmul.f32 %v4632, %v4704
        %v4706 = vmul.f32 %v4633, %v4704
        %v4707 = vmul.f32 %v4634, %v4704
        %v4708 = vmul.f32 %v4635, %v4704
        %v4709 = vmul.f32 %v4636, %v4704
        %v4710 = vmul.f32 %v4637, %v4704
        %v4711 = vmul.f32 %v4638, %v4704
        %v4712 = vmul.f32 %v4639, %v4704
        %v4713 = vld [vmem:[#allocation15] sm:$0x1]
        %v4715 = vperm.slane %v4713, 0
        %v4717 = vmul.f32 %v4705, %v4715
        %v4718 = vmul.f32 %v4706, %v4715
        %v4719 = vmul.f32 %v4707, %v4715
        %v4720 = vmul.f32 %v4708, %v4715
        %v4721 = vmul.f32 %v4709, %v4715
        %v4722 = vmul.f32 %v4710, %v4715
        %v4723 = vmul.f32 %v4711, %v4715
        %v4724 = vmul.f32 %v4712, %v4715
        %v4725 = vld [vmem:[#allocation16] sm:$0x1]
        %v4727 = vperm.slane %v4725, 0
        %v4729 = vadd.f32 %v4717, %v4727
        %v4730 = vadd.f32 %v4718, %v4727
        %v4731 = vadd.f32 %v4719, %v4727
        %v4732 = vadd.f32 %v4720, %v4727
        %v4733 = vadd.f32 %v4721, %v4727
        %v4734 = vadd.f32 %v4722, %v4727
        %v4735 = vadd.f32 %v4723, %v4727
        %v4736 = vadd.f32 %v4724, %v4727
        %v4737 = vld [vmem:[#allocation18] sm:$0xff]
        %v4738 = vld [vmem:[#allocation18 + $0x8] sm:$0xff]
        %v4739 = vld [vmem:[#allocation18 + $0x10] sm:$0xff]
        %v4740 = vld [vmem:[#allocation18 + $0x18] sm:$0xff]
        %v4741 = vld [vmem:[#allocation19] sm:$0x1]
        %v4743 = vperm.slane %v4741, 0
        %v4746 = vsel %vm1788, %v4729, 0
        %v4749 = vsel %vm1788, %v4730, 0
        %v4752 = vsel %vm1788, %v4731, 0
        %v4755 = vsel %vm1788, %v4732, 0
        %v4758 = vsel %vm1788, %v4733, 0
        %v4761 = vsel %vm1788, %v4734, 0
        %v4764 = vsel %vm1788, %v4735, 0
        %v4767 = vsel %vm1788, %v4736, 0
        %4769 = vmatpush.msra.mxu0 0.0
        %4770 = vmatpush.msra.mxu0 0.0
        %4771 = vmatpush.msra.mxu0 0.0
        %4772 = vmatpush.msra.mxu0 0.0
        %4773 = vmatpush.msra.mxu0 0.0
        %4774 = vmatpush.msra.mxu0 0.0
        %4775 = vmatpush.msra.mxu0 0.0
        %4776 = vmatpush.msra.mxu0 0.0
        %4777 = vmatpush.msra.mxu0 0.0
        %4778 = vmatpush.msra.mxu0 0.0
        %4779 = vmatpush.msra.mxu0 0.0
        %4780 = vmatpush.msra.mxu0 0.0
        %4781 = vmatpush.msra.mxu0 %v4740
        %4782 = vmatpush.msra.mxu0 %v4739
        %4783 = vmatpush.msra.mxu0 %v4738
        %4784 = vmatpush.msra.mxu0 %v4737
        %4785 = vmatmul.f32.gmra.mxu0 %v4746
        %v4786 = vpop.f32.mrf.mxu0
        %v4787 = vadd.f32 %v4743, %v4786
        %4788 = vmatmul.f32.gmra.mxu0 %v4749
        %v4789 = vpop.f32.mrf.mxu0
        %v4790 = vadd.f32 %v4743, %v4789
        %4791 = vmatmul.f32.gmra.mxu0 %v4752
        %v4792 = vpop.f32.mrf.mxu0
        %v4793 = vadd.f32 %v4743, %v4792
        %4794 = vmatmul.f32.gmra.mxu0 %v4755
        %v4795 = vpop.f32.mrf.mxu0
        %v4796 = vadd.f32 %v4743, %v4795
        %4797 = vmatmul.f32.gmra.mxu0 %v4758
        %v4798 = vpop.f32.mrf.mxu0
        %v4799 = vadd.f32 %v4743, %v4798
        %4800 = vmatmul.f32.gmra.mxu0 %v4761
        %v4801 = vpop.f32.mrf.mxu0
        %v4802 = vadd.f32 %v4743, %v4801
        %4803 = vmatmul.f32.gmra.mxu0 %v4764
        %v4804 = vpop.f32.mrf.mxu0
        %v4805 = vadd.f32 %v4743, %v4804
        %4806 = vmatmul.f32.gmra.mxu0 %v4767
        %v4807 = vpop.f32.mrf.mxu0
        %v4808 = vadd.f32 %v4743, %v4807
        %4809 = vdwg.mxu0
        %v4810 = vmul.f32 %v4787, 0.5
        %v4811 = vmul.f32 %v4790, 0.5
        %v4812 = vmul.f32 %v4793, 0.5
        %v4813 = vmul.f32 %v4796, 0.5
        %v4814 = vmul.f32 %v4799, 0.5
        %v4815 = vmul.f32 %v4802, 0.5
        %v4816 = vmul.f32 %v4805, 0.5
        %v4817 = vmul.f32 %v4808, 0.5
        %v4818 = vmul.f32 %v4787, 0.70710677
        %v4819 = vmul.f32 %v4790, 0.70710677
        %v4820 = vmul.f32 %v4793, 0.70710677
        %v4821 = vmul.f32 %v4796, 0.70710677
        %v4822 = vmul.f32 %v4799, 0.70710677
        %v4823 = vmul.f32 %v4802, 0.70710677
        %v4824 = vmul.f32 %v4805, 0.70710677
        %v4825 = vmul.f32 %v4808, 0.70710677
        %v4826 = vand.u32 2147483647, %v4818
        %v4827 = vand.u32 2147483647, %v4819
        %v4828 = vand.u32 2147483647, %v4820
        %v4829 = vand.u32 2147483647, %v4821
        %v4830 = vand.u32 2147483647, %v4822
        %v4831 = vand.u32 2147483647, %v4823
        %v4832 = vand.u32 2147483647, %v4824
        %v4833 = vand.u32 2147483647, %v4825
        %v4834 = vmul.f32 %v4826, 0.3275911
        %v4835 = vmul.f32 %v4827, 0.3275911
        %v4836 = vmul.f32 %v4828, 0.3275911
        %v4837 = vmul.f32 %v4829, 0.3275911
        %v4838 = vmul.f32 %v4830, 0.3275911
        %v4839 = vmul.f32 %v4831, 0.3275911
        %v4840 = vmul.f32 %v4832, 0.3275911
        %v4841 = vmul.f32 %v4833, 0.3275911
        %v4842 = vadd.f32 %v4834, 1.0
        %v4843 = vadd.f32 %v4835, 1.0
        %v4844 = vadd.f32 %v4836, 1.0
        %v4845 = vadd.f32 %v4837, 1.0
        %v4846 = vadd.f32 %v4838, 1.0
        %v4847 = vadd.f32 %v4839, 1.0
        %v4848 = vadd.f32 %v4840, 1.0
        %v4849 = vadd.f32 %v4841, 1.0
        %v4850 = vrcp.pop %v4842
        %v4851 = vmul.f32 %v4842, %v4850
        %v4852 = vsub.f32 1.0, %v4851
        %v4853 = vmul.f32 %v4850, %v4852
        %v4854 = vadd.f32 %v4850, %v4853
        %vm4855 = vweird.f32 %v4842
        %vm4856 = vweird.f32 %v4850
        %vm4857 = vmor %vm4855, %vm4856
        %v4858 = vsel %vm4857, %v4850, %v4854
        %v4859 = vand.u32 2147483647, %v4842
        %vm4860 = vcmp.eq.f32.partialorder %v4859, 8.507059e+37
        %v4861 = vand.u32 %v4842, 2147483648
        %v4862 = vor.u32 1.1754944e-38, %v4861
        %v4863 = vsel %vm4860, %v4862, %v4858
        %v4864 = vmul.f32 1.0, %v4863
        %v4865 = vrcp.pop %v4843
        %v4866 = vmul.f32 %v4843, %v4865
        %v4867 = vsub.f32 1.0, %v4866
        %v4868 = vmul.f32 %v4865, %v4867
        %v4869 = vadd.f32 %v4865, %v4868
        %vm4870 = vweird.f32 %v4843
        %vm4871 = vweird.f32 %v4865
        %vm4872 = vmor %vm4870, %vm4871
        %v4873 = vsel %vm4872, %v4865, %v4869
        %v4874 = vand.u32 2147483647, %v4843
        %vm4875 = vcmp.eq.f32.partialorder %v4874, 8.507059e+37
        %v4876 = vand.u32 %v4843, 2147483648
        %v4877 = vor.u32 1.1754944e-38, %v4876
        %v4878 = vsel %vm4875, %v4877, %v4873
        %v4879 = vmul.f32 1.0, %v4878
        %v4880 = vrcp.pop %v4844
        %v4881 = vmul.f32 %v4844, %v4880
        %v4882 = vsub.f32 1.0, %v4881
        %v4883 = vmul.f32 %v4880, %v4882
        %v4884 = vadd.f32 %v4880, %v4883
        %vm4885 = vweird.f32 %v4844
        %vm4886 = vweird.f32 %v4880
        %vm4887 = vmor %vm4885, %vm4886
        %v4888 = vsel %vm4887, %v4880, %v4884
        %v4889 = vand.u32 2147483647, %v4844
        %vm4890 = vcmp.eq.f32.partialorder %v4889, 8.507059e+37
        %v4891 = vand.u32 %v4844, 2147483648
        %v4892 = vor.u32 1.1754944e-38, %v4891
        %v4893 = vsel %vm4890, %v4892, %v4888
        %v4894 = vmul.f32 1.0, %v4893
        %v4895 = vrcp.pop %v4845
        %v4896 = vmul.f32 %v4845, %v4895
        %v4897 = vsub.f32 1.0, %v4896
        %v4898 = vmul.f32 %v4895, %v4897
        %v4899 = vadd.f32 %v4895, %v4898
        %vm4900 = vweird.f32 %v4845
        %vm4901 = vweird.f32 %v4895
        %vm4902 = vmor %vm4900, %vm4901
        %v4903 = vsel %vm4902, %v4895, %v4899
        %v4904 = vand.u32 2147483647, %v4845
        %vm4905 = vcmp.eq.f32.partialorder %v4904, 8.507059e+37
        %v4906 = vand.u32 %v4845, 2147483648
        %v4907 = vor.u32 1.1754944e-38, %v4906
        %v4908 = vsel %vm4905, %v4907, %v4903
        %v4909 = vmul.f32 1.0, %v4908
        %v4910 = vrcp.pop %v4846
        %v4911 = vmul.f32 %v4846, %v4910
        %v4912 = vsub.f32 1.0, %v4911
        %v4913 = vmul.f32 %v4910, %v4912
        %v4914 = vadd.f32 %v4910, %v4913
        %vm4915 = vweird.f32 %v4846
        %vm4916 = vweird.f32 %v4910
        %vm4917 = vmor %vm4915, %vm4916
        %v4918 = vsel %vm4917, %v4910, %v4914
        %v4919 = vand.u32 2147483647, %v4846
        %vm4920 = vcmp.eq.f32.partialorder %v4919, 8.507059e+37
        %v4921 = vand.u32 %v4846, 2147483648
        %v4922 = vor.u32 1.1754944e-38, %v4921
        %v4923 = vsel %vm4920, %v4922, %v4918
        %v4924 = vmul.f32 1.0, %v4923
        %v4925 = vrcp.pop %v4847
        %v4926 = vmul.f32 %v4847, %v4925
        %v4927 = vsub.f32 1.0, %v4926
        %v4928 = vmul.f32 %v4925, %v4927
        %v4929 = vadd.f32 %v4925, %v4928
        %vm4930 = vweird.f32 %v4847
        %vm4931 = vweird.f32 %v4925
        %vm4932 = vmor %vm4930, %vm4931
        %v4933 = vsel %vm4932, %v4925, %v4929
        %v4934 = vand.u32 2147483647, %v4847
        %vm4935 = vcmp.eq.f32.partialorder %v4934, 8.507059e+37
        %v4936 = vand.u32 %v4847, 2147483648
        %v4937 = vor.u32 1.1754944e-38, %v4936
        %v4938 = vsel %vm4935, %v4937, %v4933
        %v4939 = vmul.f32 1.0, %v4938
        %v4940 = vrcp.pop %v4848
        %v4941 = vmul.f32 %v4848, %v4940
        %v4942 = vsub.f32 1.0, %v4941
        %v4943 = vmul.f32 %v4940, %v4942
        %v4944 = vadd.f32 %v4940, %v4943
        %vm4945 = vweird.f32 %v4848
        %vm4946 = vweird.f32 %v4940
        %vm4947 = vmor %vm4945, %vm4946
        %v4948 = vsel %vm4947, %v4940, %v4944
        %v4949 = vand.u32 2147483647, %v4848
        %vm4950 = vcmp.eq.f32.partialorder %v4949, 8.507059e+37
        %v4951 = vand.u32 %v4848, 2147483648
        %v4952 = vor.u32 1.1754944e-38, %v4951
        %v4953 = vsel %vm4950, %v4952, %v4948
        %v4954 = vmul.f32 1.0, %v4953
        %v4955 = vrcp.pop %v4849
        %v4956 = vmul.f32 %v4849, %v4955
        %v4957 = vsub.f32 1.0, %v4956
        %v4958 = vmul.f32 %v4955, %v4957
        %v4959 = vadd.f32 %v4955, %v4958
        %vm4960 = vweird.f32 %v4849
        %vm4961 = vweird.f32 %v4955
        %vm4962 = vmor %vm4960, %vm4961
        %v4963 = vsel %vm4962, %v4955, %v4959
        %v4964 = vand.u32 2147483647, %v4849
        %vm4965 = vcmp.eq.f32.partialorder %v4964, 8.507059e+37
        %v4966 = vand.u32 %v4849, 2147483648
        %v4967 = vor.u32 1.1754944e-38, %v4966
        %v4968 = vsel %vm4965, %v4967, %v4963
        %v4969 = vmul.f32 1.0, %v4968
        %v4970 = vmul.f32 %v4864, 1.0614054
        %v4971 = vmul.f32 %v4879, 1.0614054
        %v4972 = vmul.f32 %v4894, 1.0614054
        %v4973 = vmul.f32 %v4909, 1.0614054
        %v4974 = vmul.f32 %v4924, 1.0614054
        %v4975 = vmul.f32 %v4939, 1.0614054
        %v4976 = vmul.f32 %v4954, 1.0614054
        %v4977 = vmul.f32 %v4969, 1.0614054
        %v4978 = vsub.f32 %v4970, 1.4531521
        %v4979 = vsub.f32 %v4971, 1.4531521
        %v4980 = vsub.f32 %v4972, 1.4531521
        %v4981 = vsub.f32 %v4973, 1.4531521
        %v4982 = vsub.f32 %v4974, 1.4531521
        %v4983 = vsub.f32 %v4975, 1.4531521
        %v4984 = vsub.f32 %v4976, 1.4531521
        %v4985 = vsub.f32 %v4977, 1.4531521
        %v4986 = vmul.f32 %v4978, %v4864
        %v4987 = vmul.f32 %v4979, %v4879
        %v4988 = vmul.f32 %v4980, %v4894
        %v4989 = vmul.f32 %v4981, %v4909
        %v4990 = vmul.f32 %v4982, %v4924
        %v4991 = vmul.f32 %v4983, %v4939
        %v4992 = vmul.f32 %v4984, %v4954
        %v4993 = vmul.f32 %v4985, %v4969
        %v4994 = vadd.f32 %v4986, 1.4214138
        %v4995 = vadd.f32 %v4987, 1.4214138
        %v4996 = vadd.f32 %v4988, 1.4214138
        %v4997 = vadd.f32 %v4989, 1.4214138
        %v4998 = vadd.f32 %v4990, 1.4214138
        %v4999 = vadd.f32 %v4991, 1.4214138
        %v5000 = vadd.f32 %v4992, 1.4214138
        %v5001 = vadd.f32 %v4993, 1.4214138
        %v5002 = vmul.f32 %v4994, %v4864
        %v5003 = vmul.f32 %v4995, %v4879
        %v5004 = vmul.f32 %v4996, %v4894
        %v5005 = vmul.f32 %v4997, %v4909
        %v5006 = vmul.f32 %v4998, %v4924
        %v5007 = vmul.f32 %v4999, %v4939
        %v5008 = vmul.f32 %v5000, %v4954
        %v5009 = vmul.f32 %v5001, %v4969
        %v5010 = vsub.f32 %v5002, 0.28449672
        %v5011 = vsub.f32 %v5003, 0.28449672
        %v5012 = vsub.f32 %v5004, 0.28449672
        %v5013 = vsub.f32 %v5005, 0.28449672
        %v5014 = vsub.f32 %v5006, 0.28449672
        %v5015 = vsub.f32 %v5007, 0.28449672
        %v5016 = vsub.f32 %v5008, 0.28449672
        %v5017 = vsub.f32 %v5009, 0.28449672
        %v5018 = vmul.f32 %v5010, %v4864
        %v5019 = vmul.f32 %v5011, %v4879
        %v5020 = vmul.f32 %v5012, %v4894
        %v5021 = vmul.f32 %v5013, %v4909
        %v5022 = vmul.f32 %v5014, %v4924
        %v5023 = vmul.f32 %v5015, %v4939
        %v5024 = vmul.f32 %v5016, %v4954
        %v5025 = vmul.f32 %v5017, %v4969
        %v5026 = vadd.f32 %v5018, 0.2548296
        %v5027 = vadd.f32 %v5019, 0.2548296
        %v5028 = vadd.f32 %v5020, 0.2548296
        %v5029 = vadd.f32 %v5021, 0.2548296
        %v5030 = vadd.f32 %v5022, 0.2548296
        %v5031 = vadd.f32 %v5023, 0.2548296
        %v5032 = vadd.f32 %v5024, 0.2548296
        %v5033 = vadd.f32 %v5025, 0.2548296
        %v5034 = vmul.f32 %v5026, %v4864
        %v5035 = vmul.f32 %v5027, %v4879
        %v5036 = vmul.f32 %v5028, %v4894
        %v5037 = vmul.f32 %v5029, %v4909
        %v5038 = vmul.f32 %v5030, %v4924
        %v5039 = vmul.f32 %v5031, %v4939
        %v5040 = vmul.f32 %v5032, %v4954
        %v5041 = vmul.f32 %v5033, %v4969
        %v5042 = vsub.f32 0.0, %v4826
        %v5043 = vsub.f32 0.0, %v4827
        %v5044 = vsub.f32 0.0, %v4828
        %v5045 = vsub.f32 0.0, %v4829
        %v5046 = vsub.f32 0.0, %v4830
        %v5047 = vsub.f32 0.0, %v4831
        %v5048 = vsub.f32 0.0, %v4832
        %v5049 = vsub.f32 0.0, %v4833
        %v5050 = vmul.f32 %v5042, %v4826
        %v5051 = vmul.f32 %v5043, %v4827
        %v5052 = vmul.f32 %v5044, %v4828
        %v5053 = vmul.f32 %v5045, %v4829
        %v5054 = vmul.f32 %v5046, %v4830
        %v5055 = vmul.f32 %v5047, %v4831
        %v5056 = vmul.f32 %v5048, %v4832
        %v5057 = vmul.f32 %v5049, %v4833
        %v5058 = vmul.f32 %v5050, 1.442695
        %v5059 = vpow.pop %v5058
        %v5060 = vmul.f32 %v5051, 1.442695
        %v5061 = vpow.pop %v5060
        %v5062 = vmul.f32 %v5052, 1.442695
        %v5063 = vpow.pop %v5062
        %v5064 = vmul.f32 %v5053, 1.442695
        %v5065 = vpow.pop %v5064
        %v5066 = vmul.f32 %v5054, 1.442695
        %v5067 = vpow.pop %v5066
        %v5068 = vmul.f32 %v5055, 1.442695
        %v5069 = vpow.pop %v5068
        %v5070 = vmul.f32 %v5056, 1.442695
        %v5071 = vpow.pop %v5070
        %v5072 = vmul.f32 %v5057, 1.442695
        %v5073 = vpow.pop %v5072
        %v5074 = vmul.f32 %v5034, %v5059
        %v5075 = vmul.f32 %v5035, %v5061
        %v5076 = vmul.f32 %v5036, %v5063
        %v5077 = vmul.f32 %v5037, %v5065
        %v5078 = vmul.f32 %v5038, %v5067
        %v5079 = vmul.f32 %v5039, %v5069
        %v5080 = vmul.f32 %v5040, %v5071
        %v5081 = vmul.f32 %v5041, %v5073
        %v5082 = vsub.f32 1.0, %v5074
        %v5083 = vsub.f32 1.0, %v5075
        %v5084 = vsub.f32 1.0, %v5076
        %v5085 = vsub.f32 1.0, %v5077
        %v5086 = vsub.f32 1.0, %v5078
        %v5087 = vsub.f32 1.0, %v5079
        %v5088 = vsub.f32 1.0, %v5080
        %v5089 = vsub.f32 1.0, %v5081
        %vm5090 = vcmp.ge.f32.partialorder %v4818, 0.0
        %vm5091 = vcmp.ge.f32.partialorder %v4819, 0.0
        %vm5092 = vcmp.ge.f32.partialorder %v4820, 0.0
        %vm5093 = vcmp.ge.f32.partialorder %v4821, 0.0
        %vm5094 = vcmp.ge.f32.partialorder %v4822, 0.0
        %vm5095 = vcmp.ge.f32.partialorder %v4823, 0.0
        %vm5096 = vcmp.ge.f32.partialorder %v4824, 0.0
        %vm5097 = vcmp.ge.f32.partialorder %v4825, 0.0
        %v5098 = vsub.f32 0.0, %v5082
        %v5099 = vsub.f32 0.0, %v5083
        %v5100 = vsub.f32 0.0, %v5084
        %v5101 = vsub.f32 0.0, %v5085
        %v5102 = vsub.f32 0.0, %v5086
        %v5103 = vsub.f32 0.0, %v5087
        %v5104 = vsub.f32 0.0, %v5088
        %v5105 = vsub.f32 0.0, %v5089
        %v5106 = vsel %vm5090, %v5082, %v5098
        %v5107 = vsel %vm5091, %v5083, %v5099
        %v5108 = vsel %vm5092, %v5084, %v5100
        %v5109 = vsel %vm5093, %v5085, %v5101
        %v5110 = vsel %vm5094, %v5086, %v5102
        %v5111 = vsel %vm5095, %v5087, %v5103
        %v5112 = vsel %vm5096, %v5088, %v5104
        %v5113 = vsel %vm5097, %v5089, %v5105
        %v5114 = vadd.f32 %v5106, 1.0
        %v5115 = vadd.f32 %v5107, 1.0
        %v5116 = vadd.f32 %v5108, 1.0
        %v5117 = vadd.f32 %v5109, 1.0
        %v5118 = vadd.f32 %v5110, 1.0
        %v5119 = vadd.f32 %v5111, 1.0
        %v5120 = vadd.f32 %v5112, 1.0
        %v5121 = vadd.f32 %v5113, 1.0
        %v5122 = vmul.f32 %v4810, %v5114
        %v5123 = vmul.f32 %v4811, %v5115
        %v5124 = vmul.f32 %v4812, %v5116
        %v5125 = vmul.f32 %v4813, %v5117
        %v5126 = vmul.f32 %v4814, %v5118
        %v5127 = vmul.f32 %v4815, %v5119
        %v5128 = vmul.f32 %v4816, %v5120
        %v5129 = vmul.f32 %v4817, %v5121
        %v5130 = vld [vmem:[#allocation21] sm:$0xff]
        %v5131 = vld [vmem:[#allocation21 + $0x8] sm:$0x1]
        %vm5132 = vcmask 785408
        %5133 = vst.msk [vmem:[#allocation3] sm:$0xff] %vm5132, 0.0
        %5134 = vst.msk [vmem:[#allocation3 + $0x8] sm:$0xff] %vm5132, 0.0
        %5135 = vst.msk [vmem:[#allocation3 + $0x10] sm:$0xff] %vm5132, 0.0
        %5136 = vst.msk [vmem:[#allocation3 + $0x18] sm:$0xff] %vm5132, 0.0
        %5137 = vst.msk [vmem:[#allocation3 + $0x20] sm:$0xff] %vm5132, 0.0
        %5138 = vst.msk [vmem:[#allocation3 + $0x28] sm:$0xff] %vm5132, 0.0
        %5139 = vst.msk [vmem:[#allocation3 + $0x30] sm:$0xff] %vm5132, 0.0
        %5140 = vst.msk [vmem:[#allocation3 + $0x38] sm:$0xff] %vm5132, 0.0
        %5141 = vst.msk [vmem:[#allocation3 + $0x40] sm:$0xff] %vm5132, 0.0
        %5142 = vst.msk [vmem:[#allocation3 + $0x48] sm:$0xff] %vm5132, 0.0
        %5143 = vst.msk [vmem:[#allocation3 + $0x50] sm:$0xff] %vm5132, 0.0
        %5144 = vst.msk [vmem:[#allocation3 + $0x58] sm:$0xff] %vm5132, 0.0
        %5145 = vst.msk [vmem:[#allocation3 + $0x10] sm:$0xff] %vm5132, %v5122
        %5146 = vst.msk [vmem:[#allocation3 + $0x18] sm:$0xff] %vm5132, %v5123
        %5147 = vst.msk [vmem:[#allocation3 + $0x20] sm:$0xff] %vm5132, %v5124
        %5148 = vst.msk [vmem:[#allocation3 + $0x28] sm:$0xff] %vm5132, %v5125
        %5149 = vst.msk [vmem:[#allocation3 + $0x30] sm:$0xff] %vm5132, %v5126
        %5150 = vst.msk [vmem:[#allocation3 + $0x38] sm:$0xff] %vm5132, %v5127
        %5151 = vst.msk [vmem:[#allocation3 + $0x40] sm:$0xff] %vm5132, %v5128
        %5152 = vst.msk [vmem:[#allocation3 + $0x48] sm:$0xff] %vm5132, %v5129
        %v5153 = vld [vmem:[#allocation3] sm:$0xff]
        %v5154 = vld [vmem:[#allocation3 + $0x8] sm:$0xff]
        %v5155 = vld [vmem:[#allocation3 + $0x10] sm:$0xff]
        %v5156 = vld [vmem:[#allocation3 + $0x18] sm:$0xff]
        %v5157 = vld [vmem:[#allocation3 + $0x20] sm:$0xff]
        %v5158 = vld [vmem:[#allocation3 + $0x28] sm:$0xff]
        %v5159 = vld [vmem:[#allocation3 + $0x30] sm:$0xff]
        %v5160 = vld [vmem:[#allocation3 + $0x38] sm:$0xff]
        %v5161 = vld [vmem:[#allocation3 + $0x40] sm:$0xff]
        %v5162 = vld [vmem:[#allocation3 + $0x48] sm:$0xff]
        %v5163 = vld [vmem:[#allocation3 + $0x50] sm:$0xff]
        %v5164 = vld [vmem:[#allocation3 + $0x58] sm:$0xff]
        %v5165 = vmul.f32 %v5153, %v3354
        %v5166 = vmul.f32 %v5154, %v3356
        %v5167 = vmul.f32 %v5155, %v3358
        %v5168 = vmul.f32 %v5156, %v3360
        %v5169 = vmul.f32 %v5157, %v3362
        %v5170 = vmul.f32 %v5158, %v3364
        %v5171 = vmul.f32 %v5159, %v3366
        %v5172 = vmul.f32 %v5160, %v3368
        %v5173 = vmul.f32 %v5161, %v3367
        %v5174 = vperm.slane %v5130, 0
        %v5175 = vmul.f32 %v5165, %v5174
        %v5176 = vmul.f32 %v5166, %v5174
        %v5177 = vmul.f32 %v5167, %v5174
        %v5178 = vmul.f32 %v5168, %v5174
        %v5179 = vmul.f32 %v5169, %v5174
        %v5180 = vmul.f32 %v5170, %v5174
        %v5181 = vmul.f32 %v5171, %v5174
        %v5182 = vmul.f32 %v5172, %v5174
        %v5183 = vmul.f32 %v5173, %v5174
        %v5184 = vadd.f32 %v5175, 0.0
        %v5185 = vadd.f32 %v5176, 0.0
        %v5186 = vadd.f32 %v5177, 0.0
        %v5187 = vadd.f32 %v5178, 0.0
        %v5188 = vadd.f32 %v5179, 0.0
        %v5189 = vadd.f32 %v5180, 0.0
        %v5190 = vadd.f32 %v5181, 0.0
        %v5191 = vadd.f32 %v5182, 0.0
        %v5192 = vadd.f32 %v5183, 0.0
        %v5193 = vperm.slane %v5130, 1
        %v5194 = vmul.f32 %v5154, %v5193
        %v5195 = vmul.f32 %v5155, %v5193
        %v5196 = vmul.f32 %v5156, %v5193
        %v5197 = vmul.f32 %v5157, %v5193
        %v5198 = vmul.f32 %v5158, %v5193
        %v5199 = vmul.f32 %v5159, %v5193
        %v5200 = vmul.f32 %v5160, %v5193
        %v5201 = vmul.f32 %v5161, %v5193
        %v5210 = vrot.slane %v5194, 1
        %v5211 = vrot.slane %v5195, 1
        %v5212 = vsel %vm3353, %v5210, %v5211
        %v5213 = vrot.slane %v5196, 1
        %v5214 = vsel %vm3353, %v5211, %v5213
        %v5215 = vrot.slane %v5197, 1
        %v5216 = vsel %vm3353, %v5213, %v5215
        %v5217 = vrot.slane %v5198, 1
        %v5218 = vsel %vm3353, %v5215, %v5217
        %v5219 = vrot.slane %v5199, 1
        %v5220 = vsel %vm3353, %v5217, %v5219
        %v5221 = vrot.slane %v5200, 1
        %v5222 = vsel %vm3353, %v5219, %v5221
        %v5223 = vrot.slane %v5201, 1
        %v5224 = vsel %vm3353, %v5221, %v5223
        %v5234 = vadd.f32 %v5184, %v5210
        %v5235 = vadd.f32 %v5185, %v5212
        %v5236 = vadd.f32 %v5186, %v5214
        %v5237 = vadd.f32 %v5187, %v5216
        %v5238 = vadd.f32 %v5188, %v5218
        %v5239 = vadd.f32 %v5189, %v5220
        %v5240 = vadd.f32 %v5190, %v5222
        %v5241 = vadd.f32 %v5191, %v5224
        %v5242 = vadd.f32 %v5192, %v5223
        %v5243 = vmul.f32 %v5154, %v3481
        %v5244 = vmul.f32 %v5155, %v3483
        %v5245 = vmul.f32 %v5156, %v3485
        %v5246 = vmul.f32 %v5157, %v3487
        %v5247 = vmul.f32 %v5158, %v3489
        %v5248 = vmul.f32 %v5159, %v3491
        %v5249 = vmul.f32 %v5160, %v3493
        %v5250 = vmul.f32 %v5161, %v3495
        %v5251 = vmul.f32 %v5162, %v3494
        %v5252 = vperm.slane %v5130, 2
        %v5253 = vmul.f32 %v5243, %v5252
        %v5254 = vmul.f32 %v5244, %v5252
        %v5255 = vmul.f32 %v5245, %v5252
        %v5256 = vmul.f32 %v5246, %v5252
        %v5257 = vmul.f32 %v5247, %v5252
        %v5258 = vmul.f32 %v5248, %v5252
        %v5259 = vmul.f32 %v5249, %v5252
        %v5260 = vmul.f32 %v5250, %v5252
        %v5261 = vmul.f32 %v5251, %v5252
        %v5271 = vrot.slane %v5253, 2
        %v5272 = vrot.slane %v5254, 2
        %v5273 = vsel %vm3533, %v5271, %v5272
        %v5274 = vrot.slane %v5255, 2
        %v5275 = vsel %vm3533, %v5272, %v5274
        %v5276 = vrot.slane %v5256, 2
        %v5277 = vsel %vm3533, %v5274, %v5276
        %v5278 = vrot.slane %v5257, 2
        %v5279 = vsel %vm3533, %v5276, %v5278
        %v5280 = vrot.slane %v5258, 2
        %v5281 = vsel %vm3533, %v5278, %v5280
        %v5282 = vrot.slane %v5259, 2
        %v5283 = vsel %vm3533, %v5280, %v5282
        %v5284 = vrot.slane %v5260, 2
        %v5285 = vsel %vm3533, %v5282, %v5284
        %v5286 = vrot.slane %v5261, 2
        %v5287 = vsel %vm3533, %v5284, %v5286
        %v5297 = vadd.f32 %v5234, %v5271
        %v5298 = vadd.f32 %v5235, %v5273
        %v5299 = vadd.f32 %v5236, %v5275
        %v5300 = vadd.f32 %v5237, %v5277
        %v5301 = vadd.f32 %v5238, %v5279
        %v5302 = vadd.f32 %v5239, %v5281
        %v5303 = vadd.f32 %v5240, %v5283
        %v5304 = vadd.f32 %v5241, %v5285
        %v5305 = vadd.f32 %v5242, %v5287
        %v5306 = vmul.f32 %v5154, %v3354
        %v5307 = vmul.f32 %v5155, %v3356
        %v5308 = vmul.f32 %v5156, %v3358
        %v5309 = vmul.f32 %v5157, %v3360
        %v5310 = vmul.f32 %v5158, %v3362
        %v5311 = vmul.f32 %v5159, %v3364
        %v5312 = vmul.f32 %v5160, %v3366
        %v5313 = vmul.f32 %v5161, %v3368
        %v5314 = vmul.f32 %v5162, %v3367
        %v5315 = vperm.slane %v5130, 3
        %v5316 = vmul.f32 %v5306, %v5315
        %v5317 = vmul.f32 %v5307, %v5315
        %v5318 = vmul.f32 %v5308, %v5315
        %v5319 = vmul.f32 %v5309, %v5315
        %v5320 = vmul.f32 %v5310, %v5315
        %v5321 = vmul.f32 %v5311, %v5315
        %v5322 = vmul.f32 %v5312, %v5315
        %v5323 = vmul.f32 %v5313, %v5315
        %v5324 = vmul.f32 %v5314, %v5315
        %v5325 = vadd.f32 %v5297, %v5316
        %v5326 = vadd.f32 %v5298, %v5317
        %v5327 = vadd.f32 %v5299, %v5318
        %v5328 = vadd.f32 %v5300, %v5319
        %v5329 = vadd.f32 %v5301, %v5320
        %v5330 = vadd.f32 %v5302, %v5321
        %v5331 = vadd.f32 %v5303, %v5322
        %v5332 = vadd.f32 %v5304, %v5323
        %v5333 = vadd.f32 %v5305, %v5324
        %v5334 = vperm.slane %v5130, 4
        %v5335 = vmul.f32 %v5155, %v5334
        %v5336 = vmul.f32 %v5156, %v5334
        %v5337 = vmul.f32 %v5157, %v5334
        %v5338 = vmul.f32 %v5158, %v5334
        %v5339 = vmul.f32 %v5159, %v5334
        %v5340 = vmul.f32 %v5160, %v5334
        %v5341 = vmul.f32 %v5161, %v5334
        %v5342 = vmul.f32 %v5162, %v5334
        %v5351 = vrot.slane %v5335, 1
        %v5352 = vrot.slane %v5336, 1
        %v5353 = vsel %vm3353, %v5351, %v5352
        %v5354 = vrot.slane %v5337, 1
        %v5355 = vsel %vm3353, %v5352, %v5354
        %v5356 = vrot.slane %v5338, 1
        %v5357 = vsel %vm3353, %v5354, %v5356
        %v5358 = vrot.slane %v5339, 1
        %v5359 = vsel %vm3353, %v5356, %v5358
        %v5360 = vrot.slane %v5340, 1
        %v5361 = vsel %vm3353, %v5358, %v5360
        %v5362 = vrot.slane %v5341, 1
        %v5363 = vsel %vm3353, %v5360, %v5362
        %v5364 = vrot.slane %v5342, 1
        %v5365 = vsel %vm3353, %v5362, %v5364
        %v5375 = vadd.f32 %v5325, %v5351
        %v5376 = vadd.f32 %v5326, %v5353
        %v5377 = vadd.f32 %v5327, %v5355
        %v5378 = vadd.f32 %v5328, %v5357
        %v5379 = vadd.f32 %v5329, %v5359
        %v5380 = vadd.f32 %v5330, %v5361
        %v5381 = vadd.f32 %v5331, %v5363
        %v5382 = vadd.f32 %v5332, %v5365
        %v5383 = vadd.f32 %v5333, %v5364
        %v5384 = vmul.f32 %v5155, %v3481
        %v5385 = vmul.f32 %v5156, %v3483
        %v5386 = vmul.f32 %v5157, %v3485
        %v5387 = vmul.f32 %v5158, %v3487
        %v5388 = vmul.f32 %v5159, %v3489
        %v5389 = vmul.f32 %v5160, %v3491
        %v5390 = vmul.f32 %v5161, %v3493
        %v5391 = vmul.f32 %v5162, %v3495
        %v5392 = vmul.f32 %v5163, %v3494
        %v5393 = vperm.slane %v5130, 5
        %v5394 = vmul.f32 %v5384, %v5393
        %v5395 = vmul.f32 %v5385, %v5393
        %v5396 = vmul.f32 %v5386, %v5393
        %v5397 = vmul.f32 %v5387, %v5393
        %v5398 = vmul.f32 %v5388, %v5393
        %v5399 = vmul.f32 %v5389, %v5393
        %v5400 = vmul.f32 %v5390, %v5393
        %v5401 = vmul.f32 %v5391, %v5393
        %v5402 = vmul.f32 %v5392, %v5393
        %v5412 = vrot.slane %v5394, 2
        %v5413 = vrot.slane %v5395, 2
        %v5414 = vsel %vm3533, %v5412, %v5413
        %v5415 = vrot.slane %v5396, 2
        %v5416 = vsel %vm3533, %v5413, %v5415
        %v5417 = vrot.slane %v5397, 2
        %v5418 = vsel %vm3533, %v5415, %v5417
        %v5419 = vrot.slane %v5398, 2
        %v5420 = vsel %vm3533, %v5417, %v5419
        %v5421 = vrot.slane %v5399, 2
        %v5422 = vsel %vm3533, %v5419, %v5421
        %v5423 = vrot.slane %v5400, 2
        %v5424 = vsel %vm3533, %v5421, %v5423
        %v5425 = vrot.slane %v5401, 2
        %v5426 = vsel %vm3533, %v5423, %v5425
        %v5427 = vrot.slane %v5402, 2
        %v5428 = vsel %vm3533, %v5425, %v5427
        %v5438 = vadd.f32 %v5375, %v5412
        %v5439 = vadd.f32 %v5376, %v5414
        %v5440 = vadd.f32 %v5377, %v5416
        %v5441 = vadd.f32 %v5378, %v5418
        %v5442 = vadd.f32 %v5379, %v5420
        %v5443 = vadd.f32 %v5380, %v5422
        %v5444 = vadd.f32 %v5381, %v5424
        %v5445 = vadd.f32 %v5382, %v5426
        %v5446 = vadd.f32 %v5383, %v5428
        %v5447 = vmul.f32 %v5155, %v3354
        %v5448 = vmul.f32 %v5156, %v3356
        %v5449 = vmul.f32 %v5157, %v3358
        %v5450 = vmul.f32 %v5158, %v3360
        %v5451 = vmul.f32 %v5159, %v3362
        %v5452 = vmul.f32 %v5160, %v3364
        %v5453 = vmul.f32 %v5161, %v3366
        %v5454 = vmul.f32 %v5162, %v3368
        %v5455 = vmul.f32 %v5163, %v3367
        %v5456 = vperm.slane %v5130, 6
        %v5457 = vmul.f32 %v5447, %v5456
        %v5458 = vmul.f32 %v5448, %v5456
        %v5459 = vmul.f32 %v5449, %v5456
        %v5460 = vmul.f32 %v5450, %v5456
        %v5461 = vmul.f32 %v5451, %v5456
        %v5462 = vmul.f32 %v5452, %v5456
        %v5463 = vmul.f32 %v5453, %v5456
        %v5464 = vmul.f32 %v5454, %v5456
        %v5465 = vmul.f32 %v5455, %v5456
        %v5466 = vadd.f32 %v5438, %v5457
        %v5467 = vadd.f32 %v5439, %v5458
        %v5468 = vadd.f32 %v5440, %v5459
        %v5469 = vadd.f32 %v5441, %v5460
        %v5470 = vadd.f32 %v5442, %v5461
        %v5471 = vadd.f32 %v5443, %v5462
        %v5472 = vadd.f32 %v5444, %v5463
        %v5473 = vadd.f32 %v5445, %v5464
        %v5474 = vadd.f32 %v5446, %v5465
        %v5475 = vperm.slane %v5130, 7
        %v5476 = vmul.f32 %v5156, %v5475
        %v5477 = vmul.f32 %v5157, %v5475
        %v5478 = vmul.f32 %v5158, %v5475
        %v5479 = vmul.f32 %v5159, %v5475
        %v5480 = vmul.f32 %v5160, %v5475
        %v5481 = vmul.f32 %v5161, %v5475
        %v5482 = vmul.f32 %v5162, %v5475
        %v5483 = vmul.f32 %v5163, %v5475
        %v5492 = vrot.slane %v5476, 1
        %v5493 = vrot.slane %v5477, 1
        %v5494 = vsel %vm3353, %v5492, %v5493
        %v5495 = vrot.slane %v5478, 1
        %v5496 = vsel %vm3353, %v5493, %v5495
        %v5497 = vrot.slane %v5479, 1
        %v5498 = vsel %vm3353, %v5495, %v5497
        %v5499 = vrot.slane %v5480, 1
        %v5500 = vsel %vm3353, %v5497, %v5499
        %v5501 = vrot.slane %v5481, 1
        %v5502 = vsel %vm3353, %v5499, %v5501
        %v5503 = vrot.slane %v5482, 1
        %v5504 = vsel %vm3353, %v5501, %v5503
        %v5505 = vrot.slane %v5483, 1
        %v5506 = vsel %vm3353, %v5503, %v5505
        %v5516 = vadd.f32 %v5466, %v5492
        %v5517 = vadd.f32 %v5467, %v5494
        %v5518 = vadd.f32 %v5468, %v5496
        %v5519 = vadd.f32 %v5469, %v5498
        %v5520 = vadd.f32 %v5470, %v5500
        %v5521 = vadd.f32 %v5471, %v5502
        %v5522 = vadd.f32 %v5472, %v5504
        %v5523 = vadd.f32 %v5473, %v5506
        %v5524 = vadd.f32 %v5474, %v5505
        %v5525 = vmul.f32 %v5156, %v3481
        %v5526 = vmul.f32 %v5157, %v3483
        %v5527 = vmul.f32 %v5158, %v3485
        %v5528 = vmul.f32 %v5159, %v3487
        %v5529 = vmul.f32 %v5160, %v3489
        %v5530 = vmul.f32 %v5161, %v3491
        %v5531 = vmul.f32 %v5162, %v3493
        %v5532 = vmul.f32 %v5163, %v3495
        %v5533 = vmul.f32 %v5164, %v3494
        %v5534 = vperm.slane %v5131, 0
        %v5535 = vmul.f32 %v5525, %v5534
        %v5536 = vmul.f32 %v5526, %v5534
        %v5537 = vmul.f32 %v5527, %v5534
        %v5538 = vmul.f32 %v5528, %v5534
        %v5539 = vmul.f32 %v5529, %v5534
        %v5540 = vmul.f32 %v5530, %v5534
        %v5541 = vmul.f32 %v5531, %v5534
        %v5542 = vmul.f32 %v5532, %v5534
        %v5543 = vmul.f32 %v5533, %v5534
        %v5553 = vrot.slane %v5535, 2
        %v5554 = vrot.slane %v5536, 2
        %v5555 = vsel %vm3533, %v5553, %v5554
        %v5556 = vrot.slane %v5537, 2
        %v5557 = vsel %vm3533, %v5554, %v5556
        %v5558 = vrot.slane %v5538, 2
        %v5559 = vsel %vm3533, %v5556, %v5558
        %v5560 = vrot.slane %v5539, 2
        %v5561 = vsel %vm3533, %v5558, %v5560
        %v5562 = vrot.slane %v5540, 2
        %v5563 = vsel %vm3533, %v5560, %v5562
        %v5564 = vrot.slane %v5541, 2
        %v5565 = vsel %vm3533, %v5562, %v5564
        %v5566 = vrot.slane %v5542, 2
        %v5567 = vsel %vm3533, %v5564, %v5566
        %v5568 = vrot.slane %v5543, 2
        %v5569 = vsel %vm3533, %v5566, %v5568
        %v5579 = vadd.f32 %v5516, %v5553
        %v5580 = vadd.f32 %v5517, %v5555
        %v5581 = vadd.f32 %v5518, %v5557
        %v5582 = vadd.f32 %v5519, %v5559
        %v5583 = vadd.f32 %v5520, %v5561
        %v5584 = vadd.f32 %v5521, %v5563
        %v5585 = vadd.f32 %v5522, %v5565
        %v5586 = vadd.f32 %v5523, %v5567
        %v5587 = vadd.f32 %v5524, %v5569
        %v5596 = vrot.slane %v5122, 1
        %v5597 = vrot.slane %v5123, 1
        %v5598 = vsel %vm3353, %v5596, %v5597
        %v5599 = vrot.slane %v5124, 1
        %v5600 = vsel %vm3353, %v5597, %v5599
        %v5601 = vrot.slane %v5125, 1
        %v5602 = vsel %vm3353, %v5599, %v5601
        %v5603 = vrot.slane %v5126, 1
        %v5604 = vsel %vm3353, %v5601, %v5603
        %v5605 = vrot.slane %v5127, 1
        %v5606 = vsel %vm3353, %v5603, %v5605
        %v5607 = vrot.slane %v5128, 1
        %v5608 = vsel %vm3353, %v5605, %v5607
        %v5609 = vrot.slane %v5129, 1
        %v5610 = vsel %vm3353, %v5607, %v5609
        %v5620 = vadd.f32 %v5579, %v5596
        %v5621 = vadd.f32 %v5580, %v5598
        %v5622 = vadd.f32 %v5581, %v5600
        %v5623 = vadd.f32 %v5582, %v5602
        %v5624 = vadd.f32 %v5583, %v5604
        %v5625 = vadd.f32 %v5584, %v5606
        %v5626 = vadd.f32 %v5585, %v5608
        %v5627 = vadd.f32 %v5586, %v5610
        %v5628 = vadd.f32 %v5587, %v5609
        %v5629 = vmul.f32 %v5620, %v5620
        %v5630 = vmul.f32 %v5621, %v5621
        %v5631 = vmul.f32 %v5622, %v5622
        %v5632 = vmul.f32 %v5623, %v5623
        %v5633 = vmul.f32 %v5624, %v5624
        %v5634 = vmul.f32 %v5625, %v5625
        %v5635 = vmul.f32 %v5626, %v5626
        %v5636 = vmul.f32 %v5627, %v5627
        %v5637 = vmul.f32 %v5628, %v5628
        %v5647 = vrot.slane %v5629, 7
        %v5648 = vrot.slane %v5630, 7
        %v5649 = vsel %vm3480, %v5647, %v5648
        %v5650 = vrot.slane %v5631, 7
        %v5651 = vsel %vm3480, %v5648, %v5650
        %v5652 = vrot.slane %v5632, 7
        %v5653 = vsel %vm3480, %v5650, %v5652
        %v5654 = vrot.slane %v5633, 7
        %v5655 = vsel %vm3480, %v5652, %v5654
        %v5656 = vrot.slane %v5634, 7
        %v5657 = vsel %vm3480, %v5654, %v5656
        %v5658 = vrot.slane %v5635, 7
        %v5659 = vsel %vm3480, %v5656, %v5658
        %v5660 = vrot.slane %v5636, 7
        %v5661 = vsel %vm3480, %v5658, %v5660
        %v5662 = vrot.slane %v5637, 7
        %v5663 = vsel %vm3480, %v5660, %v5662
        %v5672 = vsel %vm5132, %v5649, 0.0
        %v5673 = vsel %vm5132, %v5651, 0.0
        %v5674 = vadd.f32 %v5672, %v5673
        %v5675 = vsel %vm5132, %v5653, 0.0
        %v5676 = vadd.f32 %v5674, %v5675
        %v5677 = vsel %vm5132, %v5655, 0.0
        %v5678 = vadd.f32 %v5676, %v5677
        %v5679 = vsel %vm5132, %v5657, 0.0
        %v5680 = vadd.f32 %v5678, %v5679
        %v5681 = vsel %vm5132, %v5659, 0.0
        %v5682 = vadd.f32 %v5680, %v5681
        %v5683 = vsel %vm5132, %v5661, 0.0
        %v5684 = vadd.f32 %v5682, %v5683
        %v5685 = vsel %vm5132, %v5663, 0.0
        %v5686 = vadd.f32 %v5684, %v5685
        %v5687 = vrot.slane %v5686, 4
        %v5688 = vadd.f32 %v5686, %v5687
        %v5689 = vrot.slane %v5688, 2
        %v5690 = vadd.f32 %v5688, %v5689
        %v5691 = vrot.slane %v5690, 1
        %v5692 = vadd.f32 %v5690, %v5691
        %v5693 = vrsqrt.pop %v5692
        %v5694 = vmul.f32 %v5693, %v5692
        %v5695 = vmul.f32 %v5694, %v5693
        %v5696 = vmul.f32 0.5, %v5695
        %v5697 = vsub.f32 1.5, %v5696
        %v5698 = vmul.f32 %v5693, %v5697
        %v5699 = vmul.f32 %v5692, %v5698
        %vm5700 = vcmp.eq.f32.partialorder %v5692, inf
        %v5701 = vsel %vm5700, %v5692, %v5699
        %vm5702 = vcmp.eq.f32.partialorder %v5692, 0.0
        %v5703 = vand.u32 %v5692, 2147483648
        %v5704 = vsel %vm5702, %v5703, %v5701
        %v5705 = vadd.f32 %v5704, 1e-06
        %v5706 = vrcp.pop %v5705
        %v5707 = vmul.f32 %v5705, %v5706
        %v5708 = vsub.f32 1.0, %v5707
        %v5709 = vmul.f32 %v5706, %v5708
        %v5710 = vadd.f32 %v5706, %v5709
        %vm5711 = vweird.f32 %v5705
        %vm5712 = vweird.f32 %v5706
        %vm5713 = vmor %vm5711, %vm5712
        %v5714 = vsel %vm5713, %v5706, %v5710
        %v5715 = vand.u32 2147483647, %v5705
        %vm5716 = vcmp.eq.f32.partialorder %v5715, 8.507059e+37
        %v5717 = vand.u32 %v5705, 2147483648
        %v5718 = vor.u32 1.1754944e-38, %v5717
        %v5719 = vsel %vm5716, %v5718, %v5714
        %v5720 = vmul.f32 %v5704, %v5719
        %v5721 = vld [vmem:[#allocation22] sm:$0x1]
        %v5722 = vmul.f32 %v5620, %v5720
        %v5723 = vmul.f32 %v5621, %v5720
        %v5724 = vmul.f32 %v5622, %v5720
        %v5725 = vmul.f32 %v5623, %v5720
        %v5726 = vmul.f32 %v5624, %v5720
        %v5727 = vmul.f32 %v5625, %v5720
        %v5728 = vmul.f32 %v5626, %v5720
        %v5729 = vmul.f32 %v5627, %v5720
        %v5730 = vmul.f32 %v5628, %v5720
        %v5732 = vperm.slane %v5721, 0
        %v5734 = vmul.f32 %v5732, %v5722
        %v5735 = vmul.f32 %v5732, %v5723
        %v5736 = vmul.f32 %v5732, %v5724
        %v5737 = vmul.f32 %v5732, %v5725
        %v5738 = vmul.f32 %v5732, %v5726
        %v5739 = vmul.f32 %v5732, %v5727
        %v5740 = vmul.f32 %v5732, %v5728
        %v5741 = vmul.f32 %v5732, %v5729
        %v5742 = vmul.f32 %v5732, %v5730
        %v5743 = vld [vmem:[#allocation24] sm:$0x1]
        %v5745 = vperm.slane %v5743, 0
        %v5747 = vadd.f32 %v5734, %v5745
        %v5748 = vadd.f32 %v5735, %v5745
        %v5749 = vadd.f32 %v5736, %v5745
        %v5750 = vadd.f32 %v5737, %v5745
        %v5751 = vadd.f32 %v5738, %v5745
        %v5752 = vadd.f32 %v5739, %v5745
        %v5753 = vadd.f32 %v5740, %v5745
        %v5754 = vadd.f32 %v5741, %v5745
        %v5755 = vadd.f32 %v5742, %v5745
        %v5756 = vadd.f32 %v5747, %v5620
        %v5757 = vadd.f32 %v5748, %v5621
        %v5758 = vadd.f32 %v5749, %v5622
        %v5759 = vadd.f32 %v5750, %v5623
        %v5760 = vadd.f32 %v5751, %v5624
        %v5761 = vadd.f32 %v5752, %v5625
        %v5762 = vadd.f32 %v5753, %v5626
        %v5763 = vadd.f32 %v5754, %v5627
        %v5764 = vadd.f32 %v5755, %v5628
        %v5765 = vmul.f32 %v5756, 0.5
        %v5766 = vmul.f32 %v5757, 0.5
        %v5767 = vmul.f32 %v5758, 0.5
        %v5768 = vmul.f32 %v5759, 0.5
        %v5769 = vmul.f32 %v5760, 0.5
        %v5770 = vmul.f32 %v5761, 0.5
        %v5771 = vmul.f32 %v5762, 0.5
        %v5772 = vmul.f32 %v5763, 0.5
        %v5773 = vmul.f32 %v5764, 0.5
        %v5774 = vmul.f32 %v5756, 0.70710677
        %v5775 = vmul.f32 %v5757, 0.70710677
        %v5776 = vmul.f32 %v5758, 0.70710677
        %v5777 = vmul.f32 %v5759, 0.70710677
        %v5778 = vmul.f32 %v5760, 0.70710677
        %v5779 = vmul.f32 %v5761, 0.70710677
        %v5780 = vmul.f32 %v5762, 0.70710677
        %v5781 = vmul.f32 %v5763, 0.70710677
        %v5782 = vmul.f32 %v5764, 0.70710677
        %v5783 = vand.u32 2147483647, %v5774
        %v5784 = vand.u32 2147483647, %v5775
        %v5785 = vand.u32 2147483647, %v5776
        %v5786 = vand.u32 2147483647, %v5777
        %v5787 = vand.u32 2147483647, %v5778
        %v5788 = vand.u32 2147483647, %v5779
        %v5789 = vand.u32 2147483647, %v5780
        %v5790 = vand.u32 2147483647, %v5781
        %v5791 = vand.u32 2147483647, %v5782
        %v5792 = vmul.f32 %v5783, 0.3275911
        %v5793 = vmul.f32 %v5784, 0.3275911
        %v5794 = vmul.f32 %v5785, 0.3275911
        %v5795 = vmul.f32 %v5786, 0.3275911
        %v5796 = vmul.f32 %v5787, 0.3275911
        %v5797 = vmul.f32 %v5788, 0.3275911
        %v5798 = vmul.f32 %v5789, 0.3275911
        %v5799 = vmul.f32 %v5790, 0.3275911
        %v5800 = vmul.f32 %v5791, 0.3275911
        %v5801 = vadd.f32 %v5792, 1.0
        %v5802 = vadd.f32 %v5793, 1.0
        %v5803 = vadd.f32 %v5794, 1.0
        %v5804 = vadd.f32 %v5795, 1.0
        %v5805 = vadd.f32 %v5796, 1.0
        %v5806 = vadd.f32 %v5797, 1.0
        %v5807 = vadd.f32 %v5798, 1.0
        %v5808 = vadd.f32 %v5799, 1.0
        %v5809 = vadd.f32 %v5800, 1.0
        %v5810 = vrcp.pop %v5801
        %v5811 = vmul.f32 %v5801, %v5810
        %v5812 = vsub.f32 1.0, %v5811
        %v5813 = vmul.f32 %v5810, %v5812
        %v5814 = vadd.f32 %v5810, %v5813
        %vm5815 = vweird.f32 %v5801
        %vm5816 = vweird.f32 %v5810
        %vm5817 = vmor %vm5815, %vm5816
        %v5818 = vsel %vm5817, %v5810, %v5814
        %v5819 = vand.u32 2147483647, %v5801
        %vm5820 = vcmp.eq.f32.partialorder %v5819, 8.507059e+37
        %v5821 = vand.u32 %v5801, 2147483648
        %v5822 = vor.u32 1.1754944e-38, %v5821
        %v5823 = vsel %vm5820, %v5822, %v5818
        %v5824 = vmul.f32 1.0, %v5823
        %v5825 = vrcp.pop %v5802
        %v5826 = vmul.f32 %v5802, %v5825
        %v5827 = vsub.f32 1.0, %v5826
        %v5828 = vmul.f32 %v5825, %v5827
        %v5829 = vadd.f32 %v5825, %v5828
        %vm5830 = vweird.f32 %v5802
        %vm5831 = vweird.f32 %v5825
        %vm5832 = vmor %vm5830, %vm5831
        %v5833 = vsel %vm5832, %v5825, %v5829
        %v5834 = vand.u32 2147483647, %v5802
        %vm5835 = vcmp.eq.f32.partialorder %v5834, 8.507059e+37
        %v5836 = vand.u32 %v5802, 2147483648
        %v5837 = vor.u32 1.1754944e-38, %v5836
        %v5838 = vsel %vm5835, %v5837, %v5833
        %v5839 = vmul.f32 1.0, %v5838
        %v5840 = vrcp.pop %v5803
        %v5841 = vmul.f32 %v5803, %v5840
        %v5842 = vsub.f32 1.0, %v5841
        %v5843 = vmul.f32 %v5840, %v5842
        %v5844 = vadd.f32 %v5840, %v5843
        %vm5845 = vweird.f32 %v5803
        %vm5846 = vweird.f32 %v5840
        %vm5847 = vmor %vm5845, %vm5846
        %v5848 = vsel %vm5847, %v5840, %v5844
        %v5849 = vand.u32 2147483647, %v5803
        %vm5850 = vcmp.eq.f32.partialorder %v5849, 8.507059e+37
        %v5851 = vand.u32 %v5803, 2147483648
        %v5852 = vor.u32 1.1754944e-38, %v5851
        %v5853 = vsel %vm5850, %v5852, %v5848
        %v5854 = vmul.f32 1.0, %v5853
        %v5855 = vrcp.pop %v5804
        %v5856 = vmul.f32 %v5804, %v5855
        %v5857 = vsub.f32 1.0, %v5856
        %v5858 = vmul.f32 %v5855, %v5857
        %v5859 = vadd.f32 %v5855, %v5858
        %vm5860 = vweird.f32 %v5804
        %vm5861 = vweird.f32 %v5855
        %vm5862 = vmor %vm5860, %vm5861
        %v5863 = vsel %vm5862, %v5855, %v5859
        %v5864 = vand.u32 2147483647, %v5804
        %vm5865 = vcmp.eq.f32.partialorder %v5864, 8.507059e+37
        %v5866 = vand.u32 %v5804, 2147483648
        %v5867 = vor.u32 1.1754944e-38, %v5866
        %v5868 = vsel %vm5865, %v5867, %v5863
        %v5869 = vmul.f32 1.0, %v5868
        %v5870 = vrcp.pop %v5805
        %v5871 = vmul.f32 %v5805, %v5870
        %v5872 = vsub.f32 1.0, %v5871
        %v5873 = vmul.f32 %v5870, %v5872
        %v5874 = vadd.f32 %v5870, %v5873
        %vm5875 = vweird.f32 %v5805
        %vm5876 = vweird.f32 %v5870
        %vm5877 = vmor %vm5875, %vm5876
        %v5878 = vsel %vm5877, %v5870, %v5874
        %v5879 = vand.u32 2147483647, %v5805
        %vm5880 = vcmp.eq.f32.partialorder %v5879, 8.507059e+37
        %v5881 = vand.u32 %v5805, 2147483648
        %v5882 = vor.u32 1.1754944e-38, %v5881
        %v5883 = vsel %vm5880, %v5882, %v5878
        %v5884 = vmul.f32 1.0, %v5883
        %v5885 = vrcp.pop %v5806
        %v5886 = vmul.f32 %v5806, %v5885
        %v5887 = vsub.f32 1.0, %v5886
        %v5888 = vmul.f32 %v5885, %v5887
        %v5889 = vadd.f32 %v5885, %v5888
        %vm5890 = vweird.f32 %v5806
        %vm5891 = vweird.f32 %v5885
        %vm5892 = vmor %vm5890, %vm5891
        %v5893 = vsel %vm5892, %v5885, %v5889
        %v5894 = vand.u32 2147483647, %v5806
        %vm5895 = vcmp.eq.f32.partialorder %v5894, 8.507059e+37
        %v5896 = vand.u32 %v5806, 2147483648
        %v5897 = vor.u32 1.1754944e-38, %v5896
        %v5898 = vsel %vm5895, %v5897, %v5893
        %v5899 = vmul.f32 1.0, %v5898
        %v5900 = vrcp.pop %v5807
        %v5901 = vmul.f32 %v5807, %v5900
        %v5902 = vsub.f32 1.0, %v5901
        %v5903 = vmul.f32 %v5900, %v5902
        %v5904 = vadd.f32 %v5900, %v5903
        %vm5905 = vweird.f32 %v5807
        %vm5906 = vweird.f32 %v5900
        %vm5907 = vmor %vm5905, %vm5906
        %v5908 = vsel %vm5907, %v5900, %v5904
        %v5909 = vand.u32 2147483647, %v5807
        %vm5910 = vcmp.eq.f32.partialorder %v5909, 8.507059e+37
        %v5911 = vand.u32 %v5807, 2147483648
        %v5912 = vor.u32 1.1754944e-38, %v5911
        %v5913 = vsel %vm5910, %v5912, %v5908
        %v5914 = vmul.f32 1.0, %v5913
        %v5915 = vrcp.pop %v5808
        %v5916 = vmul.f32 %v5808, %v5915
        %v5917 = vsub.f32 1.0, %v5916
        %v5918 = vmul.f32 %v5915, %v5917
        %v5919 = vadd.f32 %v5915, %v5918
        %vm5920 = vweird.f32 %v5808
        %vm5921 = vweird.f32 %v5915
        %vm5922 = vmor %vm5920, %vm5921
        %v5923 = vsel %vm5922, %v5915, %v5919
        %v5924 = vand.u32 2147483647, %v5808
        %vm5925 = vcmp.eq.f32.partialorder %v5924, 8.507059e+37
        %v5926 = vand.u32 %v5808, 2147483648
        %v5927 = vor.u32 1.1754944e-38, %v5926
        %v5928 = vsel %vm5925, %v5927, %v5923
        %v5929 = vmul.f32 1.0, %v5928
        %v5930 = vrcp.pop %v5809
        %v5931 = vmul.f32 %v5809, %v5930
        %v5932 = vsub.f32 1.0, %v5931
        %v5933 = vmul.f32 %v5930, %v5932
        %v5934 = vadd.f32 %v5930, %v5933
        %vm5935 = vweird.f32 %v5809
        %vm5936 = vweird.f32 %v5930
        %vm5937 = vmor %vm5935, %vm5936
        %v5938 = vsel %vm5937, %v5930, %v5934
        %v5939 = vand.u32 2147483647, %v5809
        %vm5940 = vcmp.eq.f32.partialorder %v5939, 8.507059e+37
        %v5941 = vand.u32 %v5809, 2147483648
        %v5942 = vor.u32 1.1754944e-38, %v5941
        %v5943 = vsel %vm5940, %v5942, %v5938
        %v5944 = vmul.f32 1.0, %v5943
        %v5945 = vmul.f32 %v5824, 1.0614054
        %v5946 = vmul.f32 %v5839, 1.0614054
        %v5947 = vmul.f32 %v5854, 1.0614054
        %v5948 = vmul.f32 %v5869, 1.0614054
        %v5949 = vmul.f32 %v5884, 1.0614054
        %v5950 = vmul.f32 %v5899, 1.0614054
        %v5951 = vmul.f32 %v5914, 1.0614054
        %v5952 = vmul.f32 %v5929, 1.0614054
        %v5953 = vmul.f32 %v5944, 1.0614054
        %v5954 = vsub.f32 %v5945, 1.4531521
        %v5955 = vsub.f32 %v5946, 1.4531521
        %v5956 = vsub.f32 %v5947, 1.4531521
        %v5957 = vsub.f32 %v5948, 1.4531521
        %v5958 = vsub.f32 %v5949, 1.4531521
        %v5959 = vsub.f32 %v5950, 1.4531521
        %v5960 = vsub.f32 %v5951, 1.4531521
        %v5961 = vsub.f32 %v5952, 1.4531521
        %v5962 = vsub.f32 %v5953, 1.4531521
        %v5963 = vmul.f32 %v5954, %v5824
        %v5964 = vmul.f32 %v5955, %v5839
        %v5965 = vmul.f32 %v5956, %v5854
        %v5966 = vmul.f32 %v5957, %v5869
        %v5967 = vmul.f32 %v5958, %v5884
        %v5968 = vmul.f32 %v5959, %v5899
        %v5969 = vmul.f32 %v5960, %v5914
        %v5970 = vmul.f32 %v5961, %v5929
        %v5971 = vmul.f32 %v5962, %v5944
        %v5972 = vadd.f32 %v5963, 1.4214138
        %v5973 = vadd.f32 %v5964, 1.4214138
        %v5974 = vadd.f32 %v5965, 1.4214138
        %v5975 = vadd.f32 %v5966, 1.4214138
        %v5976 = vadd.f32 %v5967, 1.4214138
        %v5977 = vadd.f32 %v5968, 1.4214138
        %v5978 = vadd.f32 %v5969, 1.4214138
        %v5979 = vadd.f32 %v5970, 1.4214138
        %v5980 = vadd.f32 %v5971, 1.4214138
        %v5981 = vmul.f32 %v5972, %v5824
        %v5982 = vmul.f32 %v5973, %v5839
        %v5983 = vmul.f32 %v5974, %v5854
        %v5984 = vmul.f32 %v5975, %v5869
        %v5985 = vmul.f32 %v5976, %v5884
        %v5986 = vmul.f32 %v5977, %v5899
        %v5987 = vmul.f32 %v5978, %v5914
        %v5988 = vmul.f32 %v5979, %v5929
        %v5989 = vmul.f32 %v5980, %v5944
        %v5990 = vsub.f32 %v5981, 0.28449672
        %v5991 = vsub.f32 %v5982, 0.28449672
        %v5992 = vsub.f32 %v5983, 0.28449672
        %v5993 = vsub.f32 %v5984, 0.28449672
        %v5994 = vsub.f32 %v5985, 0.28449672
        %v5995 = vsub.f32 %v5986, 0.28449672
        %v5996 = vsub.f32 %v5987, 0.28449672
        %v5997 = vsub.f32 %v5988, 0.28449672
        %v5998 = vsub.f32 %v5989, 0.28449672
        %v5999 = vmul.f32 %v5990, %v5824
        %v6000 = vmul.f32 %v5991, %v5839
        %v6001 = vmul.f32 %v5992, %v5854
        %v6002 = vmul.f32 %v5993, %v5869
        %v6003 = vmul.f32 %v5994, %v5884
        %v6004 = vmul.f32 %v5995, %v5899
        %v6005 = vmul.f32 %v5996, %v5914
        %v6006 = vmul.f32 %v5997, %v5929
        %v6007 = vmul.f32 %v5998, %v5944
        %v6008 = vadd.f32 %v5999, 0.2548296
        %v6009 = vadd.f32 %v6000, 0.2548296
        %v6010 = vadd.f32 %v6001, 0.2548296
        %v6011 = vadd.f32 %v6002, 0.2548296
        %v6012 = vadd.f32 %v6003, 0.2548296
        %v6013 = vadd.f32 %v6004, 0.2548296
        %v6014 = vadd.f32 %v6005, 0.2548296
        %v6015 = vadd.f32 %v6006, 0.2548296
        %v6016 = vadd.f32 %v6007, 0.2548296
        %v6017 = vmul.f32 %v6008, %v5824
        %v6018 = vmul.f32 %v6009, %v5839
        %v6019 = vmul.f32 %v6010, %v5854
        %v6020 = vmul.f32 %v6011, %v5869
        %v6021 = vmul.f32 %v6012, %v5884
        %v6022 = vmul.f32 %v6013, %v5899
        %v6023 = vmul.f32 %v6014, %v5914
        %v6024 = vmul.f32 %v6015, %v5929
        %v6025 = vmul.f32 %v6016, %v5944
        %v6026 = vsub.f32 0.0, %v5783
        %v6027 = vsub.f32 0.0, %v5784
        %v6028 = vsub.f32 0.0, %v5785
        %v6029 = vsub.f32 0.0, %v5786
        %v6030 = vsub.f32 0.0, %v5787
        %v6031 = vsub.f32 0.0, %v5788
        %v6032 = vsub.f32 0.0, %v5789
        %v6033 = vsub.f32 0.0, %v5790
        %v6034 = vsub.f32 0.0, %v5791
        %v6035 = vmul.f32 %v6026, %v5783
        %v6036 = vmul.f32 %v6027, %v5784
        %v6037 = vmul.f32 %v6028, %v5785
        %v6038 = vmul.f32 %v6029, %v5786
        %v6039 = vmul.f32 %v6030, %v5787
        %v6040 = vmul.f32 %v6031, %v5788
        %v6041 = vmul.f32 %v6032, %v5789
        %v6042 = vmul.f32 %v6033, %v5790
        %v6043 = vmul.f32 %v6034, %v5791
        %v6044 = vmul.f32 %v6035, 1.442695
        %v6045 = vpow.pop %v6044
        %v6046 = vmul.f32 %v6036, 1.442695
        %v6047 = vpow.pop %v6046
        %v6048 = vmul.f32 %v6037, 1.442695
        %v6049 = vpow.pop %v6048
        %v6050 = vmul.f32 %v6038, 1.442695
        %v6051 = vpow.pop %v6050
        %v6052 = vmul.f32 %v6039, 1.442695
        %v6053 = vpow.pop %v6052
        %v6054 = vmul.f32 %v6040, 1.442695
        %v6055 = vpow.pop %v6054
        %v6056 = vmul.f32 %v6041, 1.442695
        %v6057 = vpow.pop %v6056
        %v6058 = vmul.f32 %v6042, 1.442695
        %v6059 = vpow.pop %v6058
        %v6060 = vmul.f32 %v6043, 1.442695
        %v6061 = vpow.pop %v6060
        %v6062 = vmul.f32 %v6017, %v6045
        %v6063 = vmul.f32 %v6018, %v6047
        %v6064 = vmul.f32 %v6019, %v6049
        %v6065 = vmul.f32 %v6020, %v6051
        %v6066 = vmul.f32 %v6021, %v6053
        %v6067 = vmul.f32 %v6022, %v6055
        %v6068 = vmul.f32 %v6023, %v6057
        %v6069 = vmul.f32 %v6024, %v6059
        %v6070 = vmul.f32 %v6025, %v6061
        %v6071 = vsub.f32 1.0, %v6062
        %v6072 = vsub.f32 1.0, %v6063
        %v6073 = vsub.f32 1.0, %v6064
        %v6074 = vsub.f32 1.0, %v6065
        %v6075 = vsub.f32 1.0, %v6066
        %v6076 = vsub.f32 1.0, %v6067
        %v6077 = vsub.f32 1.0, %v6068
        %v6078 = vsub.f32 1.0, %v6069
        %v6079 = vsub.f32 1.0, %v6070
        %vm6080 = vcmp.ge.f32.partialorder %v5774, 0.0
        %vm6081 = vcmp.ge.f32.partialorder %v5775, 0.0
        %vm6082 = vcmp.ge.f32.partialorder %v5776, 0.0
        %vm6083 = vcmp.ge.f32.partialorder %v5777, 0.0
        %vm6084 = vcmp.ge.f32.partialorder %v5778, 0.0
        %vm6085 = vcmp.ge.f32.partialorder %v5779, 0.0
        %vm6086 = vcmp.ge.f32.partialorder %v5780, 0.0
        %vm6087 = vcmp.ge.f32.partialorder %v5781, 0.0
        %vm6088 = vcmp.ge.f32.partialorder %v5782, 0.0
        %v6089 = vsub.f32 0.0, %v6071
        %v6090 = vsub.f32 0.0, %v6072
        %v6091 = vsub.f32 0.0, %v6073
        %v6092 = vsub.f32 0.0, %v6074
        %v6093 = vsub.f32 0.0, %v6075
        %v6094 = vsub.f32 0.0, %v6076
        %v6095 = vsub.f32 0.0, %v6077
        %v6096 = vsub.f32 0.0, %v6078
        %v6097 = vsub.f32 0.0, %v6079
        %v6098 = vsel %vm6080, %v6071, %v6089
        %v6099 = vsel %vm6081, %v6072, %v6090
        %v6100 = vsel %vm6082, %v6073, %v6091
        %v6101 = vsel %vm6083, %v6074, %v6092
        %v6102 = vsel %vm6084, %v6075, %v6093
        %v6103 = vsel %vm6085, %v6076, %v6094
        %v6104 = vsel %vm6086, %v6077, %v6095
        %v6105 = vsel %vm6087, %v6078, %v6096
        %v6106 = vsel %vm6088, %v6079, %v6097
        %v6107 = vadd.f32 %v6098, 1.0
        %v6108 = vadd.f32 %v6099, 1.0
        %v6109 = vadd.f32 %v6100, 1.0
        %v6110 = vadd.f32 %v6101, 1.0
        %v6111 = vadd.f32 %v6102, 1.0
        %v6112 = vadd.f32 %v6103, 1.0
        %v6113 = vadd.f32 %v6104, 1.0
        %v6114 = vadd.f32 %v6105, 1.0
        %v6115 = vadd.f32 %v6106, 1.0
        %v6116 = vmul.f32 %v5765, %v6107
        %v6117 = vmul.f32 %v5766, %v6108
        %v6118 = vmul.f32 %v5767, %v6109
        %v6119 = vmul.f32 %v5768, %v6110
        %v6120 = vmul.f32 %v5769, %v6111
        %v6121 = vmul.f32 %v5770, %v6112
        %v6122 = vmul.f32 %v5771, %v6113
        %v6123 = vmul.f32 %v5772, %v6114
        %v6124 = vmul.f32 %v5773, %v6115
        %v6125 = vld [vmem:[%s93] sm:$0xff]
        %v6126 = vld [vmem:[%s93 + $0x8] sm:$0xff]
        %v6127 = vld [vmem:[%s93 + $0x10] sm:$0xff]
        %v6128 = vld [vmem:[%s93 + $0x18] sm:$0xff]
        %v6129 = vld [vmem:[%s93 + $0x20] sm:$0xff]
        %v6130 = vld [vmem:[%s93 + $0x28] sm:$0xff]
        %v6131 = vld [vmem:[%s93 + $0x30] sm:$0xff]
        %v6132 = vld [vmem:[%s93 + $0x38] sm:$0xff]
        %v6133 = vld [vmem:[%s93 + $0x40] sm:$0xff]
        %v6134 = vld [vmem:[%s93 + $0x48] sm:$0xff]
        %v6135 = vld [vmem:[%s93 + $0x50] sm:$0xff]
        %v6136 = vld [vmem:[%s93 + $0x58] sm:$0xff]
        %v6137 = vld [vmem:[#allocation25] sm:$0x1]
        %v6139 = vperm.slane %v6137, 0
        %v6150 = vrot.slane %v6116, 7
        %v6151 = vrot.slane %v6117, 7
        %v6152 = vsel %vm3480, %v6150, %v6151
        %v6153 = vrot.slane %v6118, 7
        %v6154 = vsel %vm3480, %v6151, %v6153
        %v6155 = vrot.slane %v6119, 7
        %v6156 = vsel %vm3480, %v6153, %v6155
        %v6157 = vrot.slane %v6120, 7
        %v6158 = vsel %vm3480, %v6155, %v6157
        %v6159 = vrot.slane %v6121, 7
        %v6160 = vsel %vm3480, %v6157, %v6159
        %v6161 = vrot.slane %v6122, 7
        %v6162 = vsel %vm3480, %v6159, %v6161
        %v6163 = vrot.slane %v6123, 7
        %v6164 = vsel %vm3480, %v6161, %v6163
        %v6165 = vrot.slane %v6124, 7
        %v6166 = vsel %vm3480, %v6163, %v6165
        %v6167 = vsel %vm5132, %v6152, 0
        %v6169 = vsel %vm5132, %v6154, 0
        %v6171 = vsel %vm5132, %v6156, 0
        %v6173 = vsel %vm5132, %v6158, 0
        %v6175 = vsel %vm5132, %v6160, 0
        %v6177 = vsel %vm5132, %v6162, 0
        %v6179 = vsel %vm5132, %v6164, 0
        %v6181 = vsel %vm5132, %v6166, 0
        %6183 = vmatpush.msra.mxu0 0.0
        %6184 = vmatpush.msra.mxu0 0.0
        %6185 = vmatpush.msra.mxu0 0.0
        %6186 = vmatpush.msra.mxu0 0.0
        %6187 = vmatpush.msra.mxu0 %v6136
        %6188 = vmatpush.msra.mxu0 %v6135
        %6189 = vmatpush.msra.mxu0 %v6134
        %6190 = vmatpush.msra.mxu0 %v6133
        %6191 = vmatpush.msra.mxu0 %v6132
        %6192 = vmatpush.msra.mxu0 %v6131
        %6193 = vmatpush.msra.mxu0 %v6130
        %6194 = vmatpush.msra.mxu0 %v6129
        %6195 = vmatpush.msra.mxu0 %v6128
        %6196 = vmatpush.msra.mxu0 %v6127
        %6197 = vmatpush.msra.mxu0 %v6126
        %6198 = vmatpush.msra.mxu0 %v6125
        %6199 = vmatmul.f32.gmra.mxu0 %v6167
        %v6200 = vpop.f32.mrf.mxu0
        %v6201 = vadd.f32 %v6139, %v6200
        %6202 = vmatmul.f32.gmra.mxu0 %v6169
        %v6203 = vpop.f32.mrf.mxu0
        %v6204 = vadd.f32 %v6139, %v6203
        %6205 = vmatmul.f32.gmra.mxu0 %v6171
        %v6206 = vpop.f32.mrf.mxu0
        %v6207 = vadd.f32 %v6139, %v6206
        %6208 = vmatmul.f32.gmra.mxu0 %v6173
        %v6209 = vpop.f32.mrf.mxu0
        %v6210 = vadd.f32 %v6139, %v6209
        %6211 = vmatmul.f32.gmra.mxu0 %v6175
        %v6212 = vpop.f32.mrf.mxu0
        %v6213 = vadd.f32 %v6139, %v6212
        %6214 = vmatmul.f32.gmra.mxu0 %v6177
        %v6215 = vpop.f32.mrf.mxu0
        %v6216 = vadd.f32 %v6139, %v6215
        %6217 = vmatmul.f32.gmra.mxu0 %v6179
        %v6218 = vpop.f32.mrf.mxu0
        %v6219 = vadd.f32 %v6139, %v6218
        %6220 = vmatmul.f32.gmra.mxu0 %v6181
        %v6221 = vpop.f32.mrf.mxu0
        %v6222 = vadd.f32 %v6139, %v6221
        %6223 = vdwg.mxu0
        %v6224 = vadd.f32 %v6201, %v4556
        %v6225 = vadd.f32 %v6204, %v4559
        %v6226 = vadd.f32 %v6207, %v4562
        %v6227 = vadd.f32 %v6210, %v4565
        %v6228 = vadd.f32 %v6213, %v4568
        %v6229 = vadd.f32 %v6216, %v4571
        %v6230 = vadd.f32 %v6219, %v4574
        %v6231 = vadd.f32 %v6222, %v4577
        %6232 = vst.msk [vmem:[%s1689] sm:$0xff] %vm1788, %v6224
        %6233 = vst.msk [vmem:[%s1689 + $0x8] sm:$0xff] %vm1788, %v6225
        %6234 = vst.msk [vmem:[%s1689 + $0x10] sm:$0xff] %vm1788, %v6226
        %6235 = vst.msk [vmem:[%s1689 + $0x18] sm:$0xff] %vm1788, %v6227
        %6236 = vst.msk [vmem:[%s1689 + $0x20] sm:$0xff] %vm1788, %v6228
        %6237 = vst.msk [vmem:[%s1689 + $0x28] sm:$0xff] %vm1788, %v6229
        %6238 = vst.msk [vmem:[%s1689 + $0x30] sm:$0xff] %vm1788, %v6230
        %6239 = vst.msk [vmem:[%s1689 + $0x38] sm:$0xff] %vm1788, %v6231
        %s6240 = sand.u32 %s1151, 1
        %s6241 = scalar_lea.sflag [#allocation6], %s6240
        %s6242 = sand.u32 %s1151, 1
        %s6243 = smul.addr %s6242, 4
        %s6244 = scalar_lea.vmem [#allocation27], %s6243
        %s6245 = sand.u32 %s1177, 1
        %s6246 = scalar_lea.sflag [#allocation29], %s6245
        %s6247 = sand.u32 %s1177, 1
        %s6248 = smul.addr %s6247, 64
        %s6249 = scalar_lea.vmem [#allocation28], %s6248
        // Predicated region
        $region269: #{dmf_block_forward.1} parent=211 // pred_check
          %p6250 = pneg %p1161
        $region270: #{dmf_block_forward.1} parent=211 // pred_check_branch
          %6252 = sbr.rel (%p6250) target = $region272
        $region271: #{dmf_block_forward.1} parent=211 // pred_region
          %6254 = vsyncadd %s6241, 0
          %s6255 = smul.addr %s125, 4
          %s6256 = scalar_lea.hbm %s97, %s6255
          %s6258 = sshll.u32 %s6244, 4
          %s6259 = int_to_ptr.vmem [resolvable:$true] %s6258
          %s6260 = sshll.u32 %s6256, 4
          %s6261 = int_to_ptr.hbm [resolvable:$true] %s6260
          %6263 = dma.vmem_to_hbm [thread:$0]  %s6259, 64, %s6261, %s6241
        $region272: #{dmf_block_forward.1} parent=211 // pred_fallthru
          _
        // Predicated region
        $region273: #{dmf_block_forward.1} parent=211 // pred_check
          %p6264 = pneg %p1187
        $region274: #{dmf_block_forward.1} parent=211 // pred_check_branch
          %6266 = sbr.rel (%p6264) target = $region276
        $region275: #{dmf_block_forward.1} parent=211 // pred_region
          %6268 = vsyncadd %s6246, 0
          %s6269 = smul.addr %s125, 8
          %s6270 = smul.addr %s6269, 8
          %s6271 = scalar_lea.hbm %s99, %s6270
          %s6272 = sshll.u32 %s6249, 4
          %s6273 = int_to_ptr.vmem [resolvable:$true] %s6272
          %s6274 = sshll.u32 %s6271, 4
          %s6275 = int_to_ptr.hbm [resolvable:$true] %s6274
          %6280 = dma.vmem_to_hbm [thread:$0]  %s6273, 1024, %s6275, %s6246, 128, 128, 8
        $region276: #{dmf_block_forward.1} parent=211 // pred_fallthru
          _
      $region212: #{dmf_block_forward.1} parent=5 // pred_fallthru
        _
      %p6281 = scmp.le.s32.totalorder 2, %s120
      // Predicated region
      $region277: #{dmf_block_forward.1} parent=5 // pred_check
        %p6282 = pneg %p6281
      $region278: #{dmf_block_forward.1} parent=5 // pred_check_branch
        %6284 = sbr.rel (%p6282) target = $region280
      $region279: #{dmf_block_forward.1} parent=5 // pred_region
        %s6285 = ssub.s32 %s120, 2
        // Predicated region
        $region281: #{dmf_block_forward.1} parent=279 // pred_check
          %p6286 = pneg %p1167
        $region282: #{dmf_block_forward.1} parent=279 // pred_check_branch
          %6288 = sbr.rel (%p6286) target = $region284
        $region283: #{dmf_block_forward.1} parent=279 // pred_region
          %s6289 = sand.u32 %s1152, 1
          %s6290 = scalar_lea.sflag [#allocation6], %s6289
          %s6291 = sand.u32 %s1152, 1
          %s6292 = smul.addr %s6291, 4
          %s6293 = scalar_lea.vmem [#allocation27], %s6292
          %6295 = dma.done %s6290, 64
        $region284: #{dmf_block_forward.1} parent=279 // pred_fallthru
          _
        // Predicated region
        $region285: #{dmf_block_forward.1} parent=279 // pred_check
          %p6296 = pneg %p1193
        $region286: #{dmf_block_forward.1} parent=279 // pred_check_branch
          %6298 = sbr.rel (%p6296) target = $region288
        $region287: #{dmf_block_forward.1} parent=279 // pred_region
          %s6299 = sand.u32 %s1178, 1
          %s6300 = scalar_lea.sflag [#allocation29], %s6299
          %s6301 = sand.u32 %s1178, 1
          %s6302 = smul.addr %s6301, 64
          %s6303 = scalar_lea.vmem [#allocation28], %s6302
          %6305 = dma.done %s6300, 1024
        $region288: #{dmf_block_forward.1} parent=279 // pred_fallthru
          _
      $region280: #{dmf_block_forward.1} parent=5 // pred_fallthru
        _
    $region6: #{dmf_block_forward.1} parent=1 // loop_footer
      %s124 = sadd.s32 1, %s120
    $region7: #{dmf_block_forward.1} parent=1 // loop_footer_branch
      %119 = sbr.rel target = $region3
    $region8: #{dmf_block_forward.1} parent=1 // loop_exit
      _
    %6306 = vsyncpa [#allocation5], 1
    %s6307 = scalar_lea.sflag [#allocation5], 1
    %6308 = vsyncpa %s6307, 1
    %6309 = vsyncpa [#allocation8], 1
    %6310 = vsyncpa [#allocation11], 1
    %6311 = vsyncpa [#allocation14], 1
    %6312 = vsyncpa [#allocation17], 1
    %6313 = vsyncpa [#allocation20], 1
    %6314 = vsyncpa [#allocation23], 1
    %6315 = vsyncpa [#allocation26], 1
    %6316 = vsyncpa [#allocation6], 1
    %s6317 = scalar_lea.sflag [#allocation6], 1
    %6318 = vsyncpa %s6317, 1
    %6319 = vsyncpa [#allocation29], 1
    %s6320 = scalar_lea.sflag [#allocation29], 1
    %6321 = vsyncpa %s6320, 1

</llo_original>
